<compile_context>
chip_gen: v7x
topology: tpu7x:2x2x1
jax: 0.10.0
libtpu: 0.0.40
codegen_flags: <defaults>
</compile_context>

<pallas_src>
import jax
import jax.numpy as jnp
from jax.experimental import pallas as pl
from jax.experimental.pallas import tpu as pltpu

# ------------------------- model hyper-params (small, synthetic) -------------------------
ENC_HIDDEN = 16
MEL_DIM = 8
ATT_HIDDEN = 16
VOCAB_SIZE = 12
SPKR_HIDDEN = 64            # hard-coded in the PyTorch module
NUM_LAYERS = 6              # num_spec_enc_layers (hard-coded)
SPEC_ENC_HIDDEN = 2 * ATT_HIDDEN


def _log_sigmoid(x):
    # stable log(sigmoid(x)) built from elementwise ops that lower cleanly in Mosaic
    return jnp.minimum(x, 0.0) - jnp.log(1.0 + jnp.exp(-jnp.abs(x)))


# ------------------------------------ Pallas kernels ------------------------------------
def _ref_stack_kernel(x0_ref, maskf_ref, mprev_ref, mnext_ref, red_ref, bcast_ref,
                      convw_ref, convb_ref, gamma_ref, beta_ref, bias_ref, o_ref):
    """One grid step = one full 6-layer stack (main or aux). Layers unrolled in-kernel."""
    f32 = jnp.float32
    ntp = x0_ref.shape[1]
    num_layers = gamma_ref.shape[1]

    mask = maskf_ref[...]            # (1, NTP) valid-frame mask (spec_lengths + lane padding)
    mprev = mprev_ref[...]           # (1, NTP) zero at t==0 of every sample (conv left pad)
    mnext = mnext_ref[...]           # (1, NTP) zero at t==T-1 of every sample (conv right pad)
    red = red_ref[...]               # (NTP, N) per-sample mean-over-T reduction matrix (1/T)
    bcast = bcast_ref[...]           # (N, NTP) per-sample broadcast matrix

    act = x0_ref[...]                # (C, NTP) activation stays in registers/VMEM values
    for l in range(num_layers):
        x = act * mask
        # conv taps via XLU lane rotation + boundary masks (no O(NT^2) shift matrices)
        xp = pltpu.roll(x, shift=1, axis=1) * mprev            # x[t-1], zero pad per sample
        xn = pltpu.roll(x, shift=ntp - 1, axis=1) * mnext      # x[t+1], zero pad per sample
        # Conv1d(k=3, p=1): three accumulating (C,C)@(C,NTP) dots (no im2col concat)
        y = (jnp.dot(convw_ref[0, 3 * l + 0], xp, preferred_element_type=f32)
             + jnp.dot(convw_ref[0, 3 * l + 1], x, preferred_element_type=f32)
             + jnp.dot(convw_ref[0, 3 * l + 2], xn, preferred_element_type=f32)
             + convb_ref[0, l])
        # GroupNorm(C, C): per-(channel, sample) stats over all T frames (as torch)
        mean = jnp.dot(jnp.dot(y, red, preferred_element_type=f32), bcast,
                       preferred_element_type=f32)
        yc = y - mean
        var = jnp.dot(jnp.dot(yc * yc, red, preferred_element_type=f32), bcast,
                      preferred_element_type=f32)
        y = yc * jax.lax.rsqrt(var + 1e-5)
        y = jnp.maximum(y * gamma_ref[0, l] + beta_ref[0, l], 0.0)     # affine + ReLU
        out = y + bias_ref[0, l]                                       # hoisted spkr/gst bias
        if l % 2 == 1:                                                 # residual on odd layers
            out = out + x
        act = out
    o_ref[0] = act                                                     # single lane-dense store


def ref_encoder_stacks(x0, maskf, mprev, mnext, red, bcast,
                       conv_w, conv_b, gamma, beta, bias_full):
    C = SPEC_ENC_HIDDEN
    NTP = x0.shape[1]

    def fixed(shape):
        nd = len(shape)
        return pl.BlockSpec(shape, lambda s, _nd=nd: (0,) * _nd)

    def per_stack(tail):
        nd = len(tail)
        return pl.BlockSpec((1,) + tail, lambda s, _nd=nd: (s,) + (0,) * _nd)

    return pl.pallas_call(
        _ref_stack_kernel,
        out_shape=jax.ShapeDtypeStruct((2, C, NTP), jnp.float32),
        grid=(2,),
        in_specs=[
            fixed(x0.shape), fixed(maskf.shape), fixed(mprev.shape), fixed(mnext.shape),
            fixed(red.shape), fixed(bcast.shape),
            per_stack(conv_w.shape[1:]), per_stack(conv_b.shape[1:]),
            per_stack(gamma.shape[1:]), per_stack(beta.shape[1:]),
            per_stack(bias_full.shape[1:]),
        ],
        out_specs=pl.BlockSpec((1, C, NTP), lambda s: (s, 0, 0)),
        compiler_params=pltpu.CompilerParams(dimension_semantics=("parallel",)),
    )(x0, maskf, mprev, mnext, red, bcast, conv_w, conv_b, gamma, beta, bias_full)


def _heads_sim_kernel(ss_ref, text_ref, encw_ref, encb_ref, stk_ref, energy_ref, esel_ref,
                      wq_ref, bq_ref, cw_ref, cb_ref, ckey_ref,
                      lsig_ref, nlsig_ref, lsigc_ref, clogit_ref):
    """Fused heads + both batched similarities (single invocation, lane-dense outputs)."""
    f32 = jnp.float32
    scale = ss_ref[0]
    shift = ss_ref[1]

    # key = L2-normalize(text @ enc_w + enc_b) per (n, t_enc) row
    k = jnp.dot(text_ref[...], encw_ref[...], preferred_element_type=f32) + encb_ref[...]
    knorm = jnp.sqrt(jnp.sum(k * k, axis=1, keepdims=True))
    key = k / jnp.maximum(knorm, 1e-8)                        # (N*Te, A)

    out_main = stk_ref[0]                                     # (C, NTP)
    out_aux = stk_ref[1]

    # query (transposed layout (A, NTP)); energy row injected via a one-hot row selector
    q = (jnp.dot(wq_ref[...], out_main, preferred_element_type=f32) + bq_ref[...]
         + esel_ref[...] * energy_ref[...])
    qnorm = jnp.sqrt(jnp.sum(q * q, axis=0, keepdims=True))
    qT = q / jnp.maximum(qnorm, 1e-8)                         # (A, NTP)

    # full cross similarity (per-sample diagonal blocks extracted in the wrapper)
    s = scale * jnp.dot(key, qT, preferred_element_type=f32) + shift    # (N*Te, NTP)
    lsig_ref[...] = _log_sigmoid(s)
    nlsig_ref[...] = _log_sigmoid(-s)

    # ctc logits (V, NTP), softmax over vocab, then one-hot key cross similarity
    lg = jnp.dot(cw_ref[...], out_aux, preferred_element_type=f32) + cb_ref[...]
    clogit_ref[...] = lg
    m = jnp.max(lg, axis=0, keepdims=True)
    e = jnp.exp(lg - m)
    cq = e / jnp.sum(e, axis=0, keepdims=True)
    sc = jnp.dot(ckey_ref[...], cq, preferred_element_type=f32)         # (N*Te, NTP), unscaled
    lsigc_ref[...] = _log_sigmoid(sc)


def heads_sim_pallas(scale_shift, text_flat, enc_w, enc_b, stack_out, energy_row, esel,
                     wq_ext, bq_ext, ctc_wT, ctc_b, ctc_key_flat):
    n_te = text_flat.shape[0]
    ntp = stack_out.shape[-1]
    smem = pl.BlockSpec(memory_space=pltpu.MemorySpace.SMEM)
    vmem = pl.BlockSpec(memory_space=pltpu.MemorySpace.VMEM)
    return pl.pallas_call(
        _heads_sim_kernel,
        out_shape=(jax.ShapeDtypeStruct((n_te, ntp), jnp.float32),
                   jax.ShapeDtypeStruct((n_te, ntp), jnp.float32),
                   jax.ShapeDtypeStruct((n_te, ntp), jnp.float32),
                   jax.ShapeDtypeStruct((VOCAB_SIZE, ntp), jnp.float32)),
        in_specs=[smem] + [vmem] * 11,
    )(scale_shift, text_flat, enc_w, enc_b, stack_out, energy_row, esel,
      wq_ext, bq_ext, ctc_wT, ctc_b, ctc_key_flat)


# -------------------- plain-JAX sequential DPs (not Pallas-friendly) --------------------
# TODO(synk): maximum_path is an external monotonic-alignment-search dependency of the
# PyTorch module (glow-tts variant assumed); it is a sequential DP, implemented with
# lax.scan in plain JAX rather than a Pallas kernel.
def maximum_path_jax(value, mask):
    value = value * mask
    B, Tx, Ty = value.shape
    neg = jnp.float32(-1e9)
    x_range = jnp.arange(Tx)[None, :]
    value_t = jnp.transpose(value, (2, 0, 1))             # (Ty, B, Tx)

    def fwd(v, inp):
        vcol, j = inp
        v0 = jnp.concatenate([jnp.full((B, 1), neg), v[:, :-1]], axis=1)
        max_mask = v >= v0
        v_max = jnp.where(max_mask, v, v0)
        v_new = jnp.where(x_range <= j, v_max + vcol, neg)
        return v_new, max_mask

    _, dirs = jax.lax.scan(fwd, jnp.zeros((B, Tx), jnp.float32),
                           (value_t, jnp.arange(Ty)))
    direction = jnp.transpose(dirs, (1, 2, 0)).astype(jnp.int32)
    direction = jnp.where(mask > 0, direction, 1)

    index = jnp.sum(mask[:, :, 0], axis=1).astype(jnp.int32) - 1
    batch_idx = jnp.arange(B)
    dir_t = jnp.transpose(direction, (2, 0, 1))           # (Ty, B, Tx)

    def bwd(idx, dcol):
        row = (jnp.arange(Tx)[None, :] == idx[:, None]).astype(jnp.float32)
        d = dcol[batch_idx, idx]
        return idx + d - 1, row

    _, rows = jax.lax.scan(bwd, index, dir_t, reverse=True)
    path = jnp.transpose(rows, (1, 2, 0))
    return path * mask


# TODO(synk): F.ctc_loss is a sequential forward-algorithm DP; implemented in plain JAX.
def ctc_loss_jax(log_probs, targets, input_lengths, target_lengths, blank=0):
    T, N, C = log_probs.shape
    S = targets.shape[1]
    L = 2 * S + 1
    neg = jnp.float32(-1e30)
    labels_ext = jnp.zeros((N, L), jnp.int32).at[:, 1::2].set(targets.astype(jnp.int32))
    same_as_prev = jnp.concatenate(
        [jnp.zeros((N, 2), bool), labels_ext[:, 2:] == labels_ext[:, :-2]], axis=1)
    allow_skip = (labels_ext != blank) & jnp.logical_not(same_as_prev)

    lp_nt = jnp.transpose(log_probs, (1, 0, 2))                       # (N, T, C)
    idx = jnp.broadcast_to(labels_ext[:, None, :], (N, T, L))
    emit = jnp.take_along_axis(lp_nt, idx, axis=2)                    # (N, T, L)
    emit_t = jnp.transpose(emit, (1, 0, 2))                           # (T, N, L)

    alpha0 = jnp.full((N, L), neg)
    alpha0 = alpha0.at[:, 0].set(emit_t[0, :, 0])
    alpha0 = alpha0.at[:, 1].set(jnp.where(target_lengths > 0, emit_t[0, :, 1], neg))

    def step(alpha, inp):
        e, t = inp
        a1 = jnp.concatenate([jnp.full((N, 1), neg), alpha[:, :-1]], axis=1)
        a2 = jnp.concatenate([jnp.full((N, 2), neg), alpha[:, :-2]], axis=1)
        a2 = jnp.where(allow_skip, a2, neg)
        new = jnp.logaddexp(jnp.logaddexp(alpha, a1), a2) + e
        active = (t < input_lengths)[:, None]
        return jnp.where(active, new, alpha), None

    alpha, _ = jax.lax.scan(step, alpha0, (emit_t[1:], jnp.arange(1, T)))
    tl = target_lengths.astype(jnp.int32)
    last = jnp.take_along_axis(alpha, (2 * tl)[:, None], axis=1)[:, 0]
    prev = jnp.take_along_axis(alpha, (2 * tl - 1)[:, None], axis=1)[:, 0]
    loss = -jnp.logaddexp(last, prev)
    return jnp.mean(loss / jnp.maximum(tl, 1).astype(jnp.float32))


# -------------------------------------- parameters --------------------------------------
def init_params(key):
    keys = iter(jax.random.split(key, 64))

    def nrm(shape, scale=0.1):
        return scale * jax.random.normal(next(keys), shape, dtype=jnp.float32)

    C = SPEC_ENC_HIDDEN

    def conv_weights():
        # (NUM_LAYERS, 3, C_out, C_in) ; layer-0 input channels beyond MEL_DIM are zero
        w = nrm((NUM_LAYERS, 3, C, C))
        in_mask = (jnp.arange(C) < MEL_DIM).astype(jnp.float32)
        return w.at[0].set(w[0] * in_mask[None, None, :])

    def one_stack():
        return dict(
            conv_w=conv_weights(),
            conv_b=nrm((NUM_LAYERS, C, 1)),
            gamma=jnp.ones((NUM_LAYERS, C, 1), jnp.float32),
            beta=jnp.zeros((NUM_LAYERS, C, 1), jnp.float32),
            # spkr bias MLP: Linear(64,64)->ReLU->Linear(64,C)->ReLU   (weights (out,in))
            spkr_w1=nrm((NUM_LAYERS, SPKR_HIDDEN, SPKR_HIDDEN)),
            spkr_b1=nrm((NUM_LAYERS, SPKR_HIDDEN)),
            spkr_w2=nrm((NUM_LAYERS, C, SPKR_HIDDEN)),
            spkr_b2=nrm((NUM_LAYERS, C)),
            # gst bias MLP: Linear(ENC_HIDDEN,64)->ReLU->Linear(64,C)->ReLU
            gst_w1=nrm((NUM_LAYERS, SPKR_HIDDEN, ENC_HIDDEN)),
            gst_b1=nrm((NUM_LAYERS, SPKR_HIDDEN)),
            gst_w2=nrm((NUM_LAYERS, C, SPKR_HIDDEN)),
            gst_b2=nrm((NUM_LAYERS, C)),
        )

    main = one_stack()
    aux = one_stack()
    stack = {k: jnp.stack([main[k], aux[k]]) for k in main}

    return dict(
        enc_proj_w=nrm((ENC_HIDDEN, ATT_HIDDEN)), enc_proj_b=nrm((ATT_HIDDEN,)),
        query_proj_w=nrm((ATT_HIDDEN - 1, SPEC_ENC_HIDDEN)),   # torch layout (out, in)
        query_proj_b=nrm((ATT_HIDDEN - 1,)),
        ctc_proj_w=nrm((VOCAB_SIZE, SPEC_ENC_HIDDEN)),         # torch layout (out, in)
        ctc_proj_b=nrm((VOCAB_SIZE,)),
        sim_proj_w=jnp.float32(0.0),
        sim_proj_b=jnp.float32(-5.0),
        stack=stack,
    )


# --------------------------------------- forward ----------------------------------------
def attention_forward(params, text, spec, text_lengths, spec_lengths,
                      spkr_vec, gst_vec, enc_input):
    N, T_dec, _ = spec.shape
    T_enc = text.shape[1]
    NT = N * T_dec
    NTP = ((NT + 127) // 128) * 128                 # lane-dense (multiple of 128)
    C = SPEC_ENC_HIDDEN
    f32 = jnp.float32

    # ---- tiny layout / structural prep (constant-folded by XLA) ----
    x0 = jnp.transpose(spec, (2, 0, 1)).reshape(MEL_DIM, NT)           # (mel, N*T) channels-first
    x0 = jnp.pad(x0, ((0, C - MEL_DIM), (0, NTP - NT)))                # pad channels + lanes

    col = jnp.arange(NTP)
    samp = col // T_dec
    t_in = col % T_dec
    in_range = col < NT
    samp_c = jnp.clip(samp, 0, N - 1)
    maskf = (in_range & (t_in < spec_lengths[samp_c])).astype(f32).reshape(1, NTP)
    mprev = (in_range & (t_in != 0)).astype(f32).reshape(1, NTP)
    mnext = (in_range & (t_in != T_dec - 1)).astype(f32).reshape(1, NTP)
    seg_onehot = ((samp[:, None] == jnp.arange(N)[None, :]) & in_range[:, None]).astype(f32)
    red = seg_onehot / T_dec                                           # (NTP, N)
    bcast = seg_onehot.T                                               # (N, NTP)

    # ---- hoisted per-(stack, layer) spkr/gst bias MLPs (batched, outside the kernel) ----
    st = params['stack']
    hs = jax.nn.relu(jnp.einsum('slij,nj->slni', st['spkr_w1'], spkr_vec)
                     + st['spkr_b1'][:, :, None, :])
    bias_nc = jax.nn.relu(jnp.einsum('slcj,slnj->slnc', st['spkr_w2'], hs)
                          + st['spkr_b2'][:, :, None, :])
    hg = jax.nn.relu(jnp.einsum('slij,nj->slni', st['gst_w1'], gst_vec)
                     + st['gst_b1'][:, :, None, :])
    bias_nc = bias_nc + jax.nn.relu(jnp.einsum('slcj,slnj->slnc', st['gst_w2'], hg)
                                    + st['gst_b2'][:, :, None, :])     # (2, 6, N, C)
    bias_cn = jnp.transpose(bias_nc, (0, 1, 3, 2))                     # (2, 6, C, N)
    bias_full = jnp.pad(jnp.repeat(bias_cn, T_dec, axis=-1),
                        ((0, 0), (0, 0), (0, 0), (0, NTP - NT)))       # (2, 6, C, NTP)

    conv_w = st['conv_w'].reshape(2, NUM_LAYERS * 3, C, C)             # [l*3 + tap]

    # ---- fused 2-stack x 6-layer reference encoder (single pallas_call, grid=(2,)) ----
    stack_out = ref_encoder_stacks(x0, maskf, mprev, mnext, red, bcast,
                                   conv_w, st['conv_b'], st['gamma'], st['beta'],
                                   bias_full)                          # (2, C, NTP)

    # ---- fused heads + similarities (single pallas_call) ----
    text_flat = text.reshape(N * T_enc, ENC_HIDDEN)
    energy_row = jnp.pad(jnp.mean(spec, axis=2).reshape(1, NT), ((0, 0), (0, NTP - NT)))
    esel = (jnp.arange(ATT_HIDDEN) == ATT_HIDDEN - 1).astype(f32).reshape(ATT_HIDDEN, 1)
    wq_ext = jnp.pad(params['query_proj_w'], ((0, 1), (0, 0)))         # (A, C), zero energy row
    bq_ext = jnp.pad(params['query_proj_b'], (0, 1)).reshape(ATT_HIDDEN, 1)
    ctc_key_flat = jax.nn.one_hot(enc_input, VOCAB_SIZE, dtype=f32).reshape(
        N * T_enc, VOCAB_SIZE)
    scale_shift = jnp.stack([10.0 * jnp.exp(params['sim_proj_w']),
                             params['sim_proj_b']]).astype(f32)

    lsig_full, nlsig_full, lsigc_full, ctc_logitT = heads_sim_pallas(
        scale_shift, text_flat, params['enc_proj_w'], params['enc_proj_b'].reshape(1, -1),
        stack_out, energy_row, esel, wq_ext, bq_ext,
        params['ctc_proj_w'], params['ctc_proj_b'].reshape(-1, 1), ctc_key_flat)

    def diag_blocks(full):
        # (N*Te, NTP) full cross product -> (N, Te, Td) per-sample diagonal blocks
        blk = full[:, :N * T_dec].reshape(N, T_enc, N, T_dec)
        return blk[jnp.arange(N), :, jnp.arange(N), :]

    logsig_sim = diag_blocks(lsig_full)
    neg_logsig_sim = diag_blocks(nlsig_full)
    logsig_ctc = diag_blocks(lsigc_full)

    # ---- masks, monotonic alignment, losses (plain JAX / sequential DPs) ----
    text_mask = (jnp.arange(T_enc)[None, :] < text_lengths[:, None]).astype(f32)
    spec_mask = (jnp.arange(T_dec)[None, :] < spec_lengths[:, None]).astype(f32)
    att_mask = text_mask[:, :, None] * spec_mask[:, None, :]

    # NOTE: exact-zero test mirrors torch.eq(lsmx, 0) in the reference implementation.
    lsmx = logsig_sim * att_mask
    lsmx_att = lsmx - (lsmx == 0).astype(f32) * jnp.min(lsmx)
    match_mask = maximum_path_jax(lsmx_att, att_mask)
    attention = match_mask

    lsmx2 = logsig_ctc * att_mask
    lsmx_aux = lsmx2 - (lsmx2 == 0).astype(f32) * jnp.min(lsmx2)
    attention_aux = maximum_path_jax(lsmx_aux, att_mask)
    # F.conv2d with ones(1,1,3,1), padding (1,0): 3-tap sum along the T_enc axis
    a_pad = jnp.pad(attention_aux, ((0, 0), (1, 1), (0, 0)))
    attention_aux = (a_pad[:, :-2] + a_pad[:, 1:-1] + a_pad[:, 2:]) * att_mask

    denom = jnp.sum(att_mask, axis=(1, 2))
    inter = -(match_mask * logsig_sim + (1.0 - match_mask) * att_mask * neg_logsig_sim)
    nll = jnp.mean(jnp.sum(inter, axis=(1, 2)) / denom)
    att_loss = nll

    lmda = 0.5
    aux_loss = -(attention_aux * logsig_sim + (1.0 - attention_aux) * att_mask * neg_logsig_sim)
    att_loss = att_loss + jnp.mean(jnp.sum(aux_loss, axis=(1, 2)) / denom * lmda)

    ctc_input = jnp.transpose(ctc_logitT[:, :NT].reshape(VOCAB_SIZE, N, T_dec), (2, 1, 0))
    ctc_input = jax.nn.log_softmax(ctc_input, axis=2)                  # (T, N, V)
    att_loss = att_loss + ctc_loss_jax(ctc_input, enc_input, spec_lengths, text_lengths)

    return attention, att_loss, att_mask, nll


# ----------------------------------------- main -----------------------------------------
if __name__ == "__main__":
    N, T_enc, T_dec = 2, 8, 32
    root = jax.random.PRNGKey(0)
    k_par, k_text, k_spec, k_spkr, k_gst, k_ids = jax.random.split(root, 6)

    params = init_params(k_par)
    text = jax.random.normal(k_text, (N, T_enc, ENC_HIDDEN), jnp.float32)
    spec = jax.random.normal(k_spec, (N, T_dec, MEL_DIM), jnp.float32)
    spkr_vec = jax.random.normal(k_spkr, (N, SPKR_HIDDEN), jnp.float32)
    gst_vec = jax.random.normal(k_gst, (N, ENC_HIDDEN), jnp.float32)
    enc_input = jax.random.randint(k_ids, (N, T_enc), 1, VOCAB_SIZE)
    text_lengths = jnp.array([8, 6], jnp.int32)
    spec_lengths = jnp.array([32, 24], jnp.int32)

    fwd = jax.jit(attention_forward)
    attention, att_loss, att_mask, nll = fwd(params, text, spec, text_lengths,
                                             spec_lengths, spkr_vec, gst_vec, enc_input)
    jax.block_until_ready((attention, att_loss, att_mask, nll))
    print("KERNEL_OK")
</pallas_src>

<mosaic_0001>
module attributes {stable_mosaic.version = 11 : i64} {
  func.func private @main(%arg0: i32) attributes {dimension_semantics = [#tpu.dimension_semantics<core_parallel>], iteration_bounds = array<i64: 2>, tpu.core_type = #tpu.core_type<sc_scalar_subcore>, window_params = []} {
    return
  }
}

module attributes {stable_mosaic.version = 11 : i64} {
  func.func private @main(%arg0: i32) attributes {dimension_semantics = [#tpu.dimension_semantics<core_parallel>], iteration_bounds = array<i64: 2>, tpu.core_type = #tpu.core_type<sc_scalar_subcore>, window_params = []} {
    return
  }
}

module attributes {stable_mosaic.version = 11 : i64} {
  func.func @_heads_sim_kernel(%arg0: memref<2xf32, #tpu.memory_space<smem>>, %arg1: memref<16x16xf32, #tpu.memory_space<vmem>>, %arg2: memref<16x16xf32, #tpu.memory_space<vmem>>, %arg3: memref<1x16xf32, #tpu.memory_space<vmem>>, %arg4: memref<2x32x128xf32, #tpu.memory_space<vmem>>, %arg5: memref<1x128xf32, #tpu.memory_space<vmem>>, %arg6: memref<16x1xf32, #tpu.memory_space<vmem>>, %arg7: memref<16x32xf32, #tpu.memory_space<vmem>>, %arg8: memref<16x1xf32, #tpu.memory_space<vmem>>, %arg9: memref<12x32xf32, #tpu.memory_space<vmem>>, %arg10: memref<12x1xf32, #tpu.memory_space<vmem>>, %arg11: memref<16x12xf32, #tpu.memory_space<vmem>>, %arg12: memref<16x128xf32, #tpu.memory_space<vmem>>, %arg13: memref<16x128xf32, #tpu.memory_space<vmem>>, %arg14: memref<16x128xf32, #tpu.memory_space<vmem>>, %arg15: memref<12x128xf32, #tpu.memory_space<vmem>>) attributes {dimension_semantics = [], scalar_prefetch = 0 : i64, scratch_operands = 0 : i64, tpu.core_type = #tpu.core_type<tc>} {
    %c0 = arith.constant 0 : index
    %0 = memref.load %arg0[%c0] : memref<2xf32, #tpu.memory_space<smem>>
    %c1 = arith.constant 1 : index
    %1 = memref.load %arg0[%c1] : memref<2xf32, #tpu.memory_space<smem>>
    %c0_0 = arith.constant 0 : index
    %c0_1 = arith.constant 0 : index
    %2 = vector.load %arg1[%c0_0, %c0_1] : memref<16x16xf32, #tpu.memory_space<vmem>>, vector<16x16xf32>
    %c0_2 = arith.constant 0 : index
    %c0_3 = arith.constant 0 : index
    %3 = vector.load %arg2[%c0_2, %c0_3] : memref<16x16xf32, #tpu.memory_space<vmem>>, vector<16x16xf32>
    %cst = arith.constant dense<0.000000e+00> : vector<16x16xf32>
    %4 = tpu.matmul %2, %3, %cst {dimension_numbers = #tpu.dot_dimension_numbers<[1], [0], [0], [1], [0, 0, 1, 1], [], []>} : vector<16x16xf32>, vector<16x16xf32>, vector<16x16xf32> -> vector<16x16xf32>
    %c0_4 = arith.constant 0 : index
    %c0_5 = arith.constant 0 : index
    %5 = vector.load %arg3[%c0_4, %c0_5] : memref<1x16xf32, #tpu.memory_space<vmem>>, vector<1x16xf32>
    %6 = vector.broadcast %5 : vector<1x16xf32> to vector<16x16xf32>
    %7 = arith.addf %4, %6 : vector<16x16xf32>
    %8 = arith.mulf %7, %7 : vector<16x16xf32>
    %cst_6 = arith.constant dense<0.000000e+00> : vector<16xf32>
    %9 = vector.multi_reduction <add>, %8, %cst_6 [1] : vector<16x16xf32> to vector<16xf32>
    %10 = vector.shape_cast %9 : vector<16xf32> to vector<16x1xf32>
    %11 = math.sqrt %10 : vector<16x1xf32>
    %cst_7 = arith.constant 9.99999993E-9 : f32
    %12 = vector.broadcast %cst_7 : f32 to vector<16x1xf32>
    %13 = arith.maximumf %11, %12 : vector<16x1xf32>
    %14 = vector.broadcast %13 : vector<16x1xf32> to vector<16x16xf32>
    %15 = arith.divf %7, %14 : vector<16x16xf32>
    %c0_8 = arith.constant 0 : index
    %c0_9 = arith.constant 0 : index
    %c0_10 = arith.constant 0 : index
    %16 = vector.load %arg4[%c0_8, %c0_9, %c0_10] : memref<2x32x128xf32, #tpu.memory_space<vmem>>, vector<1x32x128xf32>
    %17 = vector.shape_cast %16 : vector<1x32x128xf32> to vector<32x128xf32>
    %c1_11 = arith.constant 1 : index
    %c0_12 = arith.constant 0 : index
    %c0_13 = arith.constant 0 : index
    %18 = vector.load %arg4[%c1_11, %c0_12, %c0_13] : memref<2x32x128xf32, #tpu.memory_space<vmem>>, vector<1x32x128xf32>
    %19 = vector.shape_cast %18 : vector<1x32x128xf32> to vector<32x128xf32>
    %c0_14 = arith.constant 0 : index
    %c0_15 = arith.constant 0 : index
    %20 = vector.load %arg7[%c0_14, %c0_15] : memref<16x32xf32, #tpu.memory_space<vmem>>, vector<16x32xf32>
    %cst_16 = arith.constant dense<0.000000e+00> : vector<16x128xf32>
    %21 = tpu.matmul %20, %17, %cst_16 {dimension_numbers = #tpu.dot_dimension_numbers<[1], [0], [0], [1], [0, 0, 1, 1], [], []>} : vector<16x32xf32>, vector<32x128xf32>, vector<16x128xf32> -> vector<16x128xf32>
    %c0_17 = arith.constant 0 : index
    %c0_18 = arith.constant 0 : index
    %22 = vector.load %arg8[%c0_17, %c0_18] : memref<16x1xf32, #tpu.memory_space<vmem>>, vector<16x1xf32>
    %23 = vector.broadcast %22 : vector<16x1xf32> to vector<16x128xf32>
    %24 = arith.addf %21, %23 : vector<16x128xf32>
    %c0_19 = arith.constant 0 : index
    %c0_20 = arith.constant 0 : index
    %25 = vector.load %arg6[%c0_19, %c0_20] : memref<16x1xf32, #tpu.memory_space<vmem>>, vector<16x1xf32>
    %c0_21 = arith.constant 0 : index
    %c0_22 = arith.constant 0 : index
    %26 = vector.load %arg5[%c0_21, %c0_22] : memref<1x128xf32, #tpu.memory_space<vmem>>, vector<1x128xf32>
    %27 = vector.broadcast %25 : vector<16x1xf32> to vector<16x128xf32>
    %28 = vector.broadcast %26 : vector<1x128xf32> to vector<16x128xf32>
    %29 = arith.mulf %27, %28 : vector<16x128xf32>
    %30 = arith.addf %24, %29 : vector<16x128xf32>
    %31 = arith.mulf %30, %30 : vector<16x128xf32>
    %cst_23 = arith.constant dense<0.000000e+00> : vector<128xf32>
    %32 = vector.multi_reduction <add>, %31, %cst_23 [0] : vector<16x128xf32> to vector<128xf32>
    %33 = vector.shape_cast %32 : vector<128xf32> to vector<1x128xf32>
    %34 = math.sqrt %33 : vector<1x128xf32>
    %cst_24 = arith.constant 9.99999993E-9 : f32
    %35 = vector.broadcast %cst_24 : f32 to vector<1x128xf32>
    %36 = arith.maximumf %34, %35 : vector<1x128xf32>
    %37 = vector.broadcast %36 : vector<1x128xf32> to vector<16x128xf32>
    %38 = arith.divf %30, %37 : vector<16x128xf32>
    %cst_25 = arith.constant dense<0.000000e+00> : vector<16x128xf32>
    %39 = tpu.matmul %15, %38, %cst_25 {dimension_numbers = #tpu.dot_dimension_numbers<[1], [0], [0], [1], [0, 0, 1, 1], [], []>} : vector<16x16xf32>, vector<16x128xf32>, vector<16x128xf32> -> vector<16x128xf32>
    %40 = vector.broadcast %0 : f32 to vector<16x128xf32>
    %41 = arith.mulf %40, %39 : vector<16x128xf32>
    %42 = vector.broadcast %1 : f32 to vector<16x128xf32>
    %43 = arith.addf %41, %42 : vector<16x128xf32>
    %cst_26 = arith.constant 0.000000e+00 : f32
    %44 = vector.broadcast %cst_26 : f32 to vector<16x128xf32>
    %45 = arith.minimumf %43, %44 : vector<16x128xf32>
    %46 = math.absf %43 : vector<16x128xf32>
    %cst_27 = arith.constant 0.000000e+00 : f32
    %47 = vector.broadcast %cst_27 : f32 to vector<16x128xf32>
    %48 = arith.subf %47, %46 : vector<16x128xf32>
    %49 = math.exp %48 : vector<16x128xf32>
    %cst_28 = arith.constant 1.000000e+00 : f32
    %50 = vector.broadcast %cst_28 : f32 to vector<16x128xf32>
    %51 = arith.addf %50, %49 : vector<16x128xf32>
    %52 = math.log %51 : vector<16x128xf32>
    %53 = arith.subf %45, %52 : vector<16x128xf32>
    %c0_29 = arith.constant 0 : index
    %c0_30 = arith.constant 0 : index
    %54 = vector.load %arg12[%c0_29, %c0_30] : memref<16x128xf32, #tpu.memory_space<vmem>>, vector<16x128xf32>
    tpu.vector_store %arg12[%c0_29, %c0_30], %53 {strides = array<i32>} : memref<16x128xf32, #tpu.memory_space<vmem>>, vector<16x128xf32>,
    %cst_31 = arith.constant 0.000000e+00 : f32
    %55 = vector.broadcast %cst_31 : f32 to vector<16x128xf32>
    %56 = arith.subf %55, %43 : vector<16x128xf32>
    %cst_32 = arith.constant 0.000000e+00 : f32
    %57 = vector.broadcast %cst_32 : f32 to vector<16x128xf32>
    %58 = arith.minimumf %56, %57 : vector<16x128xf32>
    %59 = math.absf %56 : vector<16x128xf32>
    %cst_33 = arith.constant 0.000000e+00 : f32
    %60 = vector.broadcast %cst_33 : f32 to vector<16x128xf32>
    %61 = arith.subf %60, %59 : vector<16x128xf32>
    %62 = math.exp %61 : vector<16x128xf32>
    %cst_34 = arith.constant 1.000000e+00 : f32
    %63 = vector.broadcast %cst_34 : f32 to vector<16x128xf32>
    %64 = arith.addf %63, %62 : vector<16x128xf32>
    %65 = math.log %64 : vector<16x128xf32>
    %66 = arith.subf %58, %65 : vector<16x128xf32>
    %c0_35 = arith.constant 0 : index
    %c0_36 = arith.constant 0 : index
    %67 = vector.load %arg13[%c0_35, %c0_36] : memref<16x128xf32, #tpu.memory_space<vmem>>, vector<16x128xf32>
    tpu.vector_store %arg13[%c0_35, %c0_36], %66 {strides = array<i32>} : memref<16x128xf32, #tpu.memory_space<vmem>>, vector<16x128xf32>,
    %c0_37 = arith.constant 0 : index
    %c0_38 = arith.constant 0 : index
    %68 = vector.load %arg9[%c0_37, %c0_38] : memref<12x32xf32, #tpu.memory_space<vmem>>, vector<12x32xf32>
    %cst_39 = arith.constant dense<0.000000e+00> : vector<12x128xf32>
    %69 = tpu.matmul %68, %19, %cst_39 {dimension_numbers = #tpu.dot_dimension_numbers<[1], [0], [0], [1], [0, 0, 1, 1], [], []>} : vector<12x32xf32>, vector<32x128xf32>, vector<12x128xf32> -> vector<12x128xf32>
    %c0_40 = arith.constant 0 : index
    %c0_41 = arith.constant 0 : index
    %70 = vector.load %arg10[%c0_40, %c0_41] : memref<12x1xf32, #tpu.memory_space<vmem>>, vector<12x1xf32>
    %71 = vector.broadcast %70 : vector<12x1xf32> to vector<12x128xf32>
    %72 = arith.addf %69, %71 : vector<12x128xf32>
    %c0_42 = arith.constant 0 : index
    %c0_43 = arith.constant 0 : index
    %73 = vector.load %arg15[%c0_42, %c0_43] : memref<12x128xf32, #tpu.memory_space<vmem>>, vector<12x128xf32>
    tpu.vector_store %arg15[%c0_42, %c0_43], %72 {strides = array<i32>} : memref<12x128xf32, #tpu.memory_space<vmem>>, vector<12x128xf32>,
    %cst_44 = arith.constant dense<0xFF800000> : vector<128xf32>
    %74 = vector.multi_reduction <maximumf>, %72, %cst_44 [0] : vector<12x128xf32> to vector<128xf32>
    %75 = vector.shape_cast %74 : vector<128xf32> to vector<1x128xf32>
    %76 = vector.broadcast %75 : vector<1x128xf32> to vector<12x128xf32>
    %77 = arith.subf %72, %76 : vector<12x128xf32>
    %78 = math.exp %77 : vector<12x128xf32>
    %cst_45 = arith.constant dense<0.000000e+00> : vector<128xf32>
    %79 = vector.multi_reduction <add>, %78, %cst_45 [0] : vector<12x128xf32> to vector<128xf32>
    %80 = vector.shape_cast %79 : vector<128xf32> to vector<1x128xf32>
    %81 = vector.broadcast %80 : vector<1x128xf32> to vector<12x128xf32>
    %82 = arith.divf %78, %81 : vector<12x128xf32>
    %c0_46 = arith.constant 0 : index
    %c0_47 = arith.constant 0 : index
    %83 = vector.load %arg11[%c0_46, %c0_47] : memref<16x12xf32, #tpu.memory_space<vmem>>, vector<16x12xf32>
    %cst_48 = arith.constant dense<0.000000e+00> : vector<16x128xf32>
    %84 = tpu.matmul %83, %82, %cst_48 {dimension_numbers = #tpu.dot_dimension_numbers<[1], [0], [0], [1], [0, 0, 1, 1], [], []>} : vector<16x12xf32>, vector<12x128xf32>, vector<16x128xf32> -> vector<16x128xf32>
    %cst_49 = arith.constant 0.000000e+00 : f32
    %85 = vector.broadcast %cst_49 : f32 to vector<16x128xf32>
    %86 = arith.minimumf %84, %85 : vector<16x128xf32>
    %87 = math.absf %84 : vector<16x128xf32>
    %cst_50 = arith.constant 0.000000e+00 : f32
    %88 = vector.broadcast %cst_50 : f32 to vector<16x128xf32>
    %89 = arith.subf %88, %87 : vector<16x128xf32>
    %90 = math.exp %89 : vector<16x128xf32>
    %cst_51 = arith.constant 1.000000e+00 : f32
    %91 = vector.broadcast %cst_51 : f32 to vector<16x128xf32>
    %92 = arith.addf %91, %90 : vector<16x128xf32>
    %93 = math.log %92 : vector<16x128xf32>
    %94 = arith.subf %86, %93 : vector<16x128xf32>
    %c0_52 = arith.constant 0 : index
    %c0_53 = arith.constant 0 : index
    %95 = vector.load %arg14[%c0_52, %c0_53] : memref<16x128xf32, #tpu.memory_space<vmem>>, vector<16x128xf32>
    tpu.vector_store %arg14[%c0_52, %c0_53], %94 {strides = array<i32>} : memref<16x128xf32, #tpu.memory_space<vmem>>, vector<16x128xf32>,
    return
  }
}

module attributes {stable_mosaic.version = 11 : i64} {
  func.func @_ref_stack_kernel(%arg0: i32, %arg1: memref<32x128xf32, #tpu.memory_space<vmem>>, %arg2: memref<1x128xf32, #tpu.memory_space<vmem>>, %arg3: memref<1x128xf32, #tpu.memory_space<vmem>>, %arg4: memref<1x128xf32, #tpu.memory_space<vmem>>, %arg5: memref<128x2xf32, #tpu.memory_space<vmem>>, %arg6: memref<2x128xf32, #tpu.memory_space<vmem>>, %arg7: memref<1x18x32x32xf32, #tpu.memory_space<vmem>>, %arg8: memref<1x6x32x1xf32, #tpu.memory_space<vmem>>, %arg9: memref<1x6x32x1xf32, #tpu.memory_space<vmem>>, %arg10: memref<1x6x32x1xf32, #tpu.memory_space<vmem>>, %arg11: memref<1x6x32x128xf32, #tpu.memory_space<vmem>>, %arg12: memref<1x32x128xf32, #tpu.memory_space<vmem>>) attributes {dimension_semantics = [#tpu.dimension_semantics<parallel>], iteration_bounds = array<i64: 2>, scalar_prefetch = 0 : i64, scratch_operands = 0 : i64, tpu.core_type = #tpu.core_type<tc>, window_params = [{pipeline_mode = #tpu.pipeline_mode<synchronous>, transform_indices = @transform_0, window_bounds = array<i64: 32, 128>}, {pipeline_mode = #tpu.pipeline_mode<synchronous>, transform_indices = @transform_1, window_bounds = array<i64: 1, 128>}, {pipeline_mode = #tpu.pipeline_mode<synchronous>, transform_indices = @transform_2, window_bounds = array<i64: 1, 128>}, {pipeline_mode = #tpu.pipeline_mode<synchronous>, transform_indices = @transform_3, window_bounds = array<i64: 1, 128>}, {pipeline_mode = #tpu.pipeline_mode<synchronous>, transform_indices = @transform_4, window_bounds = array<i64: 128, 2>}, {pipeline_mode = #tpu.pipeline_mode<synchronous>, transform_indices = @transform_5, window_bounds = array<i64: 2, 128>}, {transform_indices = @transform_6, window_bounds = array<i64: 1, 18, 32, 32>}, {transform_indices = @transform_7, window_bounds = array<i64: 1, 6, 32, 1>}, {transform_indices = @transform_8, window_bounds = array<i64: 1, 6, 32, 1>}, {transform_indices = @transform_9, window_bounds = array<i64: 1, 6, 32, 1>}, {transform_indices = @transform_10, window_bounds = array<i64: 1, 6, 32, 128>}, {transform_indices = @transform_11, window_bounds = array<i64: 1, 32, 128>}]} {
    %c0 = arith.constant 0 : index
    %c0_0 = arith.constant 0 : index
    %0 = vector.load %arg2[%c0, %c0_0] : memref<1x128xf32, #tpu.memory_space<vmem>>, vector<1x128xf32>
    %c0_1 = arith.constant 0 : index
    %c0_2 = arith.constant 0 : index
    %1 = vector.load %arg3[%c0_1, %c0_2] : memref<1x128xf32, #tpu.memory_space<vmem>>, vector<1x128xf32>
    %c0_3 = arith.constant 0 : index
    %c0_4 = arith.constant 0 : index
    %2 = vector.load %arg4[%c0_3, %c0_4] : memref<1x128xf32, #tpu.memory_space<vmem>>, vector<1x128xf32>
    %c0_5 = arith.constant 0 : index
    %c0_6 = arith.constant 0 : index
    %3 = vector.load %arg5[%c0_5, %c0_6] : memref<128x2xf32, #tpu.memory_space<vmem>>, vector<128x2xf32>
    %c0_7 = arith.constant 0 : index
    %c0_8 = arith.constant 0 : index
    %4 = vector.load %arg6[%c0_7, %c0_8] : memref<2x128xf32, #tpu.memory_space<vmem>>, vector<2x128xf32>
    %c0_9 = arith.constant 0 : index
    %c0_10 = arith.constant 0 : index
    %5 = vector.load %arg1[%c0_9, %c0_10] : memref<32x128xf32, #tpu.memory_space<vmem>>, vector<32x128xf32>
    %6 = vector.broadcast %0 : vector<1x128xf32> to vector<32x128xf32>
    %7 = arith.mulf %5, %6 : vector<32x128xf32>
    %c1_i32 = arith.constant 1 : i32
    %8 = tpu.dynamic_rotate %7 by %c1_i32 dim 1 : vector<32x128xf32>, i32 -> vector<32x128xf32>
    %9 = vector.broadcast %1 : vector<1x128xf32> to vector<32x128xf32>
    %10 = arith.mulf %8, %9 : vector<32x128xf32>
    %c127_i32 = arith.constant 127 : i32
    %11 = tpu.dynamic_rotate %7 by %c127_i32 dim 1 : vector<32x128xf32>, i32 -> vector<32x128xf32>
    %12 = vector.broadcast %2 : vector<1x128xf32> to vector<32x128xf32>
    %13 = arith.mulf %11, %12 : vector<32x128xf32>
    %c0_11 = arith.constant 0 : index
    %c0_12 = arith.constant 0 : index
    %c0_13 = arith.constant 0 : index
    %c0_14 = arith.constant 0 : index
    %14 = vector.load %arg7[%c0_11, %c0_12, %c0_13, %c0_14] : memref<1x18x32x32xf32, #tpu.memory_space<vmem>>, vector<1x1x32x32xf32>
    %15 = vector.shape_cast %14 : vector<1x1x32x32xf32> to vector<32x32xf32>
    %cst = arith.constant dense<0.000000e+00> : vector<32x128xf32>
    %16 = tpu.matmul %15, %10, %cst {dimension_numbers = #tpu.dot_dimension_numbers<[1], [0], [0], [1], [0, 0, 1, 1], [], []>} : vector<32x32xf32>, vector<32x128xf32>, vector<32x128xf32> -> vector<32x128xf32>
    %c0_15 = arith.constant 0 : index
    %c1 = arith.constant 1 : index
    %c0_16 = arith.constant 0 : index
    %c0_17 = arith.constant 0 : index
    %17 = vector.load %arg7[%c0_15, %c1, %c0_16, %c0_17] : memref<1x18x32x32xf32, #tpu.memory_space<vmem>>, vector<1x1x32x32xf32>
    %18 = vector.shape_cast %17 : vector<1x1x32x32xf32> to vector<32x32xf32>
    %cst_18 = arith.constant dense<0.000000e+00> : vector<32x128xf32>
    %19 = tpu.matmul %18, %7, %cst_18 {dimension_numbers = #tpu.dot_dimension_numbers<[1], [0], [0], [1], [0, 0, 1, 1], [], []>} : vector<32x32xf32>, vector<32x128xf32>, vector<32x128xf32> -> vector<32x128xf32>
    %20 = arith.addf %16, %19 : vector<32x128xf32>
    %c0_19 = arith.constant 0 : index
    %c2 = arith.constant 2 : index
    %c0_20 = arith.constant 0 : index
    %c0_21 = arith.constant 0 : index
    %21 = vector.load %arg7[%c0_19, %c2, %c0_20, %c0_21] : memref<1x18x32x32xf32, #tpu.memory_space<vmem>>, vector<1x1x32x32xf32>
    %22 = vector.shape_cast %21 : vector<1x1x32x32xf32> to vector<32x32xf32>
    %cst_22 = arith.constant dense<0.000000e+00> : vector<32x128xf32>
    %23 = tpu.matmul %22, %13, %cst_22 {dimension_numbers = #tpu.dot_dimension_numbers<[1], [0], [0], [1], [0, 0, 1, 1], [], []>} : vector<32x32xf32>, vector<32x128xf32>, vector<32x128xf32> -> vector<32x128xf32>
    %24 = arith.addf %20, %23 : vector<32x128xf32>
    %c0_23 = arith.constant 0 : index
    %c0_24 = arith.constant 0 : index
    %c0_25 = arith.constant 0 : index
    %c0_26 = arith.constant 0 : index
    %25 = vector.load %arg8[%c0_23, %c0_24, %c0_25, %c0_26] : memref<1x6x32x1xf32, #tpu.memory_space<vmem>>, vector<1x1x32x1xf32>
    %26 = vector.shape_cast %25 : vector<1x1x32x1xf32> to vector<32x1xf32>
    %27 = vector.broadcast %26 : vector<32x1xf32> to vector<32x128xf32>
    %28 = arith.addf %24, %27 : vector<32x128xf32>
    %cst_27 = arith.constant dense<0.000000e+00> : vector<32x2xf32>
    %29 = tpu.matmul %28, %3, %cst_27 {dimension_numbers = #tpu.dot_dimension_numbers<[1], [0], [0], [1], [0, 0, 1, 1], [], []>} : vector<32x128xf32>, vector<128x2xf32>, vector<32x2xf32> -> vector<32x2xf32>
    %cst_28 = arith.constant dense<0.000000e+00> : vector<32x128xf32>
    %30 = tpu.matmul %29, %4, %cst_28 {dimension_numbers = #tpu.dot_dimension_numbers<[1], [0], [0], [1], [0, 0, 1, 1], [], []>} : vector<32x2xf32>, vector<2x128xf32>, vector<32x128xf32> -> vector<32x128xf32>
    %31 = arith.subf %28, %30 : vector<32x128xf32>
    %32 = arith.mulf %31, %31 : vector<32x128xf32>
    %cst_29 = arith.constant dense<0.000000e+00> : vector<32x2xf32>
    %33 = tpu.matmul %32, %3, %cst_29 {dimension_numbers = #tpu.dot_dimension_numbers<[1], [0], [0], [1], [0, 0, 1, 1], [], []>} : vector<32x128xf32>, vector<128x2xf32>, vector<32x2xf32> -> vector<32x2xf32>
    %cst_30 = arith.constant dense<0.000000e+00> : vector<32x128xf32>
    %34 = tpu.matmul %33, %4, %cst_30 {dimension_numbers = #tpu.dot_dimension_numbers<[1], [0], [0], [1], [0, 0, 1, 1], [], []>} : vector<32x2xf32>, vector<2x128xf32>, vector<32x128xf32> -> vector<32x128xf32>
    %cst_31 = arith.constant 9.99999974E-6 : f32
    %35 = vector.broadcast %cst_31 : f32 to vector<32x128xf32>
    %36 = arith.addf %34, %35 : vector<32x128xf32>
    %37 = math.rsqrt %36 : vector<32x128xf32>
    %38 = arith.mulf %31, %37 : vector<32x128xf32>
    %c0_32 = arith.constant 0 : index
    %c0_33 = arith.constant 0 : index
    %c0_34 = arith.constant 0 : index
    %c0_35 = arith.constant 0 : index
    %39 = vector.load %arg9[%c0_32, %c0_33, %c0_34, %c0_35] : memref<1x6x32x1xf32, #tpu.memory_space<vmem>>, vector<1x1x32x1xf32>
    %40 = vector.shape_cast %39 : vector<1x1x32x1xf32> to vector<32x1xf32>
    %41 = vector.broadcast %40 : vector<32x1xf32> to vector<32x128xf32>
    %42 = arith.mulf %38, %41 : vector<32x128xf32>
    %c0_36 = arith.constant 0 : index
    %c0_37 = arith.constant 0 : index
    %c0_38 = arith.constant 0 : index
    %c0_39 = arith.constant 0 : index
    %43 = vector.load %arg10[%c0_36, %c0_37, %c0_38, %c0_39] : memref<1x6x32x1xf32, #tpu.memory_space<vmem>>, vector<1x1x32x1xf32>
    %44 = vector.shape_cast %43 : vector<1x1x32x1xf32> to vector<32x1xf32>
    %45 = vector.broadcast %44 : vector<32x1xf32> to vector<32x128xf32>
    %46 = arith.addf %42, %45 : vector<32x128xf32>
    %cst_40 = arith.constant 0.000000e+00 : f32
    %47 = vector.broadcast %cst_40 : f32 to vector<32x128xf32>
    %48 = arith.maximumf %46, %47 : vector<32x128xf32>
    %c0_41 = arith.constant 0 : index
    %c0_42 = arith.constant 0 : index
    %c0_43 = arith.constant 0 : index
    %c0_44 = arith.constant 0 : index
    %49 = vector.load %arg11[%c0_41, %c0_42, %c0_43, %c0_44] : memref<1x6x32x128xf32, #tpu.memory_space<vmem>>, vector<1x1x32x128xf32>
    %50 = vector.shape_cast %49 : vector<1x1x32x128xf32> to vector<32x128xf32>
    %51 = arith.addf %48, %50 : vector<32x128xf32>
    %52 = vector.broadcast %0 : vector<1x128xf32> to vector<32x128xf32>
    %53 = arith.mulf %51, %52 : vector<32x128xf32>
    %c1_i32_45 = arith.constant 1 : i32
    %54 = tpu.dynamic_rotate %53 by %c1_i32_45 dim 1 : vector<32x128xf32>, i32 -> vector<32x128xf32>
    %55 = vector.broadcast %1 : vector<1x128xf32> to vector<32x128xf32>
    %56 = arith.mulf %54, %55 : vector<32x128xf32>
    %c127_i32_46 = arith.constant 127 : i32
    %57 = tpu.dynamic_rotate %53 by %c127_i32_46 dim 1 : vector<32x128xf32>, i32 -> vector<32x128xf32>
    %58 = vector.broadcast %2 : vector<1x128xf32> to vector<32x128xf32>
    %59 = arith.mulf %57, %58 : vector<32x128xf32>
    %c0_47 = arith.constant 0 : index
    %c3 = arith.constant 3 : index
    %c0_48 = arith.constant 0 : index
    %c0_49 = arith.constant 0 : index
    %60 = vector.load %arg7[%c0_47, %c3, %c0_48, %c0_49] : memref<1x18x32x32xf32, #tpu.memory_space<vmem>>, vector<1x1x32x32xf32>
    %61 = vector.shape_cast %60 : vector<1x1x32x32xf32> to vector<32x32xf32>
    %cst_50 = arith.constant dense<0.000000e+00> : vector<32x128xf32>
    %62 = tpu.matmul %61, %56, %cst_50 {dimension_numbers = #tpu.dot_dimension_numbers<[1], [0], [0], [1], [0, 0, 1, 1], [], []>} : vector<32x32xf32>, vector<32x128xf32>, vector<32x128xf32> -> vector<32x128xf32>
    %c0_51 = arith.constant 0 : index
    %c4 = arith.constant 4 : index
    %c0_52 = arith.constant 0 : index
    %c0_53 = arith.constant 0 : index
    %63 = vector.load %arg7[%c0_51, %c4, %c0_52, %c0_53] : memref<1x18x32x32xf32, #tpu.memory_space<vmem>>, vector<1x1x32x32xf32>
    %64 = vector.shape_cast %63 : vector<1x1x32x32xf32> to vector<32x32xf32>
    %cst_54 = arith.constant dense<0.000000e+00> : vector<32x128xf32>
    %65 = tpu.matmul %64, %53, %cst_54 {dimension_numbers = #tpu.dot_dimension_numbers<[1], [0], [0], [1], [0, 0, 1, 1], [], []>} : vector<32x32xf32>, vector<32x128xf32>, vector<32x128xf32> -> vector<32x128xf32>
    %66 = arith.addf %62, %65 : vector<32x128xf32>
    %c0_55 = arith.constant 0 : index
    %c5 = arith.constant 5 : index
    %c0_56 = arith.constant 0 : index
    %c0_57 = arith.constant 0 : index
    %67 = vector.load %arg7[%c0_55, %c5, %c0_56, %c0_57] : memref<1x18x32x32xf32, #tpu.memory_space<vmem>>, vector<1x1x32x32xf32>
    %68 = vector.shape_cast %67 : vector<1x1x32x32xf32> to vector<32x32xf32>
    %cst_58 = arith.constant dense<0.000000e+00> : vector<32x128xf32>
    %69 = tpu.matmul %68, %59, %cst_58 {dimension_numbers = #tpu.dot_dimension_numbers<[1], [0], [0], [1], [0, 0, 1, 1], [], []>} : vector<32x32xf32>, vector<32x128xf32>, vector<32x128xf32> -> vector<32x128xf32>
    %70 = arith.addf %66, %69 : vector<32x128xf32>
    %c0_59 = arith.constant 0 : index
    %c1_60 = arith.constant 1 : index
    %c0_61 = arith.constant 0 : index
    %c0_62 = arith.constant 0 : index
    %71 = vector.load %arg8[%c0_59, %c1_60, %c0_61, %c0_62] : memref<1x6x32x1xf32, #tpu.memory_space<vmem>>, vector<1x1x32x1xf32>
    %72 = vector.shape_cast %71 : vector<1x1x32x1xf32> to vector<32x1xf32>
    %73 = vector.broadcast %72 : vector<32x1xf32> to vector<32x128xf32>
    %74 = arith.addf %70, %73 : vector<32x128xf32>
    %cst_63 = arith.constant dense<0.000000e+00> : vector<32x2xf32>
    %75 = tpu.matmul %74, %3, %cst_63 {dimension_numbers = #tpu.dot_dimension_numbers<[1], [0], [0], [1], [0, 0, 1, 1], [], []>} : vector<32x128xf32>, vector<128x2xf32>, vector<32x2xf32> -> vector<32x2xf32>
    %cst_64 = arith.constant dense<0.000000e+00> : vector<32x128xf32>
    %76 = tpu.matmul %75, %4, %cst_64 {dimension_numbers = #tpu.dot_dimension_numbers<[1], [0], [0], [1], [0, 0, 1, 1], [], []>} : vector<32x2xf32>, vector<2x128xf32>, vector<32x128xf32> -> vector<32x128xf32>
    %77 = arith.subf %74, %76 : vector<32x128xf32>
    %78 = arith.mulf %77, %77 : vector<32x128xf32>
    %cst_65 = arith.constant dense<0.000000e+00> : vector<32x2xf32>
    %79 = tpu.matmul %78, %3, %cst_65 {dimension_numbers = #tpu.dot_dimension_numbers<[1], [0], [0], [1], [0, 0, 1, 1], [], []>} : vector<32x128xf32>, vector<128x2xf32>, vector<32x2xf32> -> vector<32x2xf32>
    %cst_66 = arith.constant dense<0.000000e+00> : vector<32x128xf32>
    %80 = tpu.matmul %79, %4, %cst_66 {dimension_numbers = #tpu.dot_dimension_numbers<[1], [0], [0], [1], [0, 0, 1, 1], [], []>} : vector<32x2xf32>, vector<2x128xf32>, vector<32x128xf32> -> vector<32x128xf32>
    %cst_67 = arith.constant 9.99999974E-6 : f32
    %81 = vector.broadcast %cst_67 : f32 to vector<32x128xf32>
    %82 = arith.addf %80, %81 : vector<32x128xf32>
    %83 = math.rsqrt %82 : vector<32x128xf32>
    %84 = arith.mulf %77, %83 : vector<32x128xf32>
    %c0_68 = arith.constant 0 : index
    %c1_69 = arith.constant 1 : index
    %c0_70 = arith.constant 0 : index
    %c0_71 = arith.constant 0 : index
    %85 = vector.load %arg9[%c0_68, %c1_69, %c0_70, %c0_71] : memref<1x6x32x1xf32, #tpu.memory_space<vmem>>, vector<1x1x32x1xf32>
    %86 = vector.shape_cast %85 : vector<1x1x32x1xf32> to vector<32x1xf32>
    %87 = vector.broadcast %86 : vector<32x1xf32> to vector<32x128xf32>
    %88 = arith.mulf %84, %87 : vector<32x128xf32>
    %c0_72 = arith.constant 0 : index
    %c1_73 = arith.constant 1 : index
    %c0_74 = arith.constant 0 : index
    %c0_75 = arith.constant 0 : index
    %89 = vector.load %arg10[%c0_72, %c1_73, %c0_74, %c0_75] : memref<1x6x32x1xf32, #tpu.memory_space<vmem>>, vector<1x1x32x1xf32>
    %90 = vector.shape_cast %89 : vector<1x1x32x1xf32> to vector<32x1xf32>
    %91 = vector.broadcast %90 : vector<32x1xf32> to vector<32x128xf32>
    %92 = arith.addf %88, %91 : vector<32x128xf32>
    %cst_76 = arith.constant 0.000000e+00 : f32
    %93 = vector.broadcast %cst_76 : f32 to vector<32x128xf32>
    %94 = arith.maximumf %92, %93 : vector<32x128xf32>
    %c0_77 = arith.constant 0 : index
    %c1_78 = arith.constant 1 : index
    %c0_79 = arith.constant 0 : index
    %c0_80 = arith.constant 0 : index
    %95 = vector.load %arg11[%c0_77, %c1_78, %c0_79, %c0_80] : memref<1x6x32x128xf32, #tpu.memory_space<vmem>>, vector<1x1x32x128xf32>
    %96 = vector.shape_cast %95 : vector<1x1x32x128xf32> to vector<32x128xf32>
    %97 = arith.addf %94, %96 : vector<32x128xf32>
    %98 = arith.addf %97, %53 : vector<32x128xf32>
    %99 = vector.broadcast %0 : vector<1x128xf32> to vector<32x128xf32>
    %100 = arith.mulf %98, %99 : vector<32x128xf32>
    %c1_i32_81 = arith.constant 1 : i32
    %101 = tpu.dynamic_rotate %100 by %c1_i32_81 dim 1 : vector<32x128xf32>, i32 -> vector<32x128xf32>
    %102 = vector.broadcast %1 : vector<1x128xf32> to vector<32x128xf32>
    %103 = arith.mulf %101, %102 : vector<32x128xf32>
    %c127_i32_82 = arith.constant 127 : i32
    %104 = tpu.dynamic_rotate %100 by %c127_i32_82 dim 1 : vector<32x128xf32>, i32 -> vector<32x128xf32>
    %105 = vector.broadcast %2 : vector<1x128xf32> to vector<32x128xf32>
    %106 = arith.mulf %104, %105 : vector<32x128xf32>
    %c0_83 = arith.constant 0 : index
    %c6 = arith.constant 6 : index
    %c0_84 = arith.constant 0 : index
    %c0_85 = arith.constant 0 : index
    %107 = vector.load %arg7[%c0_83, %c6, %c0_84, %c0_85] : memref<1x18x32x32xf32, #tpu.memory_space<vmem>>, vector<1x1x32x32xf32>
    %108 = vector.shape_cast %107 : vector<1x1x32x32xf32> to vector<32x32xf32>
    %cst_86 = arith.constant dense<0.000000e+00> : vector<32x128xf32>
    %109 = tpu.matmul %108, %103, %cst_86 {dimension_numbers = #tpu.dot_dimension_numbers<[1], [0], [0], [1], [0, 0, 1, 1], [], []>} : vector<32x32xf32>, vector<32x128xf32>, vector<32x128xf32> -> vector<32x128xf32>
    %c0_87 = arith.constant 0 : index
    %c7 = arith.constant 7 : index
    %c0_88 = arith.constant 0 : index
    %c0_89 = arith.constant 0 : index
    %110 = vector.load %arg7[%c0_87, %c7, %c0_88, %c0_89] : memref<1x18x32x32xf32, #tpu.memory_space<vmem>>, vector<1x1x32x32xf32>
    %111 = vector.shape_cast %110 : vector<1x1x32x32xf32> to vector<32x32xf32>
    %cst_90 = arith.constant dense<0.000000e+00> : vector<32x128xf32>
    %112 = tpu.matmul %111, %100, %cst_90 {dimension_numbers = #tpu.dot_dimension_numbers<[1], [0], [0], [1], [0, 0, 1, 1], [], []>} : vector<32x32xf32>, vector<32x128xf32>, vector<32x128xf32> -> vector<32x128xf32>
    %113 = arith.addf %109, %112 : vector<32x128xf32>
    %c0_91 = arith.constant 0 : index
    %c8 = arith.constant 8 : index
    %c0_92 = arith.constant 0 : index
    %c0_93 = arith.constant 0 : index
    %114 = vector.load %arg7[%c0_91, %c8, %c0_92, %c0_93] : memref<1x18x32x32xf32, #tpu.memory_space<vmem>>, vector<1x1x32x32xf32>
    %115 = vector.shape_cast %114 : vector<1x1x32x32xf32> to vector<32x32xf32>
    %cst_94 = arith.constant dense<0.000000e+00> : vector<32x128xf32>
    %116 = tpu.matmul %115, %106, %cst_94 {dimension_numbers = #tpu.dot_dimension_numbers<[1], [0], [0], [1], [0, 0, 1, 1], [], []>} : vector<32x32xf32>, vector<32x128xf32>, vector<32x128xf32> -> vector<32x128xf32>
    %117 = arith.addf %113, %116 : vector<32x128xf32>
    %c0_95 = arith.constant 0 : index
    %c2_96 = arith.constant 2 : index
    %c0_97 = arith.constant 0 : index
    %c0_98 = arith.constant 0 : index
    %118 = vector.load %arg8[%c0_95, %c2_96, %c0_97, %c0_98] : memref<1x6x32x1xf32, #tpu.memory_space<vmem>>, vector<1x1x32x1xf32>
    %119 = vector.shape_cast %118 : vector<1x1x32x1xf32> to vector<32x1xf32>
    %120 = vector.broadcast %119 : vector<32x1xf32> to vector<32x128xf32>
    %121 = arith.addf %117, %120 : vector<32x128xf32>
    %cst_99 = arith.constant dense<0.000000e+00> : vector<32x2xf32>
    %122 = tpu.matmul %121, %3, %cst_99 {dimension_numbers = #tpu.dot_dimension_numbers<[1], [0], [0], [1], [0, 0, 1, 1], [], []>} : vector<32x128xf32>, vector<128x2xf32>, vector<32x2xf32> -> vector<32x2xf32>
    %cst_100 = arith.constant dense<0.000000e+00> : vector<32x128xf32>
    %123 = tpu.matmul %122, %4, %cst_100 {dimension_numbers = #tpu.dot_dimension_numbers<[1], [0], [0], [1], [0, 0, 1, 1], [], []>} : vector<32x2xf32>, vector<2x128xf32>, vector<32x128xf32> -> vector<32x128xf32>
    %124 = arith.subf %121, %123 : vector<32x128xf32>
    %125 = arith.mulf %124, %124 : vector<32x128xf32>
    %cst_101 = arith.constant dense<0.000000e+00> : vector<32x2xf32>
    %126 = tpu.matmul %125, %3, %cst_101 {dimension_numbers = #tpu.dot_dimension_numbers<[1], [0], [0], [1], [0, 0, 1, 1], [], []>} : vector<32x128xf32>, vector<128x2xf32>, vector<32x2xf32> -> vector<32x2xf32>
    %cst_102 = arith.constant dense<0.000000e+00> : vector<32x128xf32>
    %127 = tpu.matmul %126, %4, %cst_102 {dimension_numbers = #tpu.dot_dimension_numbers<[1], [0], [0], [1], [0, 0, 1, 1], [], []>} : vector<32x2xf32>, vector<2x128xf32>, vector<32x128xf32> -> vector<32x128xf32>
    %cst_103 = arith.constant 9.99999974E-6 : f32
    %128 = vector.broadcast %cst_103 : f32 to vector<32x128xf32>
    %129 = arith.addf %127, %128 : vector<32x128xf32>
    %130 = math.rsqrt %129 : vector<32x128xf32>
    %131 = arith.mulf %124, %130 : vector<32x128xf32>
    %c0_104 = arith.constant 0 : index
    %c2_105 = arith.constant 2 : index
    %c0_106 = arith.constant 0 : index
    %c0_107 = arith.constant 0 : index
    %132 = vector.load %arg9[%c0_104, %c2_105, %c0_106, %c0_107] : memref<1x6x32x1xf32, #tpu.memory_space<vmem>>, vector<1x1x32x1xf32>
    %133 = vector.shape_cast %132 : vector<1x1x32x1xf32> to vector<32x1xf32>
    %134 = vector.broadcast %133 : vector<32x1xf32> to vector<32x128xf32>
    %135 = arith.mulf %131, %134 : vector<32x128xf32>
    %c0_108 = arith.constant 0 : index
    %c2_109 = arith.constant 2 : index
    %c0_110 = arith.constant 0 : index
    %c0_111 = arith.constant 0 : index
    %136 = vector.load %arg10[%c0_108, %c2_109, %c0_110, %c0_111] : memref<1x6x32x1xf32, #tpu.memory_space<vmem>>, vector<1x1x32x1xf32>
    %137 = vector.shape_cast %136 : vector<1x1x32x1xf32> to vector<32x1xf32>
    %138 = vector.broadcast %137 : vector<32x1xf32> to vector<32x128xf32>
    %139 = arith.addf %135, %138 : vector<32x128xf32>
    %cst_112 = arith.constant 0.000000e+00 : f32
    %140 = vector.broadcast %cst_112 : f32 to vector<32x128xf32>
    %141 = arith.maximumf %139, %140 : vector<32x128xf32>
    %c0_113 = arith.constant 0 : index
    %c2_114 = arith.constant 2 : index
    %c0_115 = arith.constant 0 : index
    %c0_116 = arith.constant 0 : index
    %142 = vector.load %arg11[%c0_113, %c2_114, %c0_115, %c0_116] : memref<1x6x32x128xf32, #tpu.memory_space<vmem>>, vector<1x1x32x128xf32>
    %143 = vector.shape_cast %142 : vector<1x1x32x128xf32> to vector<32x128xf32>
    %144 = arith.addf %141, %143 : vector<32x128xf32>
    %145 = vector.broadcast %0 : vector<1x128xf32> to vector<32x128xf32>
    %146 = arith.mulf %144, %145 : vector<32x128xf32>
    %c1_i32_117 = arith.constant 1 : i32
    %147 = tpu.dynamic_rotate %146 by %c1_i32_117 dim 1 : vector<32x128xf32>, i32 -> vector<32x128xf32>
    %148 = vector.broadcast %1 : vector<1x128xf32> to vector<32x128xf32>
    %149 = arith.mulf %147, %148 : vector<32x128xf32>
    %c127_i32_118 = arith.constant 127 : i32
    %150 = tpu.dynamic_rotate %146 by %c127_i32_118 dim 1 : vector<32x128xf32>, i32 -> vector<32x128xf32>
    %151 = vector.broadcast %2 : vector<1x128xf32> to vector<32x128xf32>
    %152 = arith.mulf %150, %151 : vector<32x128xf32>
    %c0_119 = arith.constant 0 : index
    %c9 = arith.constant 9 : index
    %c0_120 = arith.constant 0 : index
    %c0_121 = arith.constant 0 : index
    %153 = vector.load %arg7[%c0_119, %c9, %c0_120, %c0_121] : memref<1x18x32x32xf32, #tpu.memory_space<vmem>>, vector<1x1x32x32xf32>
    %154 = vector.shape_cast %153 : vector<1x1x32x32xf32> to vector<32x32xf32>
    %cst_122 = arith.constant dense<0.000000e+00> : vector<32x128xf32>
    %155 = tpu.matmul %154, %149, %cst_122 {dimension_numbers = #tpu.dot_dimension_numbers<[1], [0], [0], [1], [0, 0, 1, 1], [], []>} : vector<32x32xf32>, vector<32x128xf32>, vector<32x128xf32> -> vector<32x128xf32>
    %c0_123 = arith.constant 0 : index
    %c10 = arith.constant 10 : index
    %c0_124 = arith.constant 0 : index
    %c0_125 = arith.constant 0 : index
    %156 = vector.load %arg7[%c0_123, %c10, %c0_124, %c0_125] : memref<1x18x32x32xf32, #tpu.memory_space<vmem>>, vector<1x1x32x32xf32>
    %157 = vector.shape_cast %156 : vector<1x1x32x32xf32> to vector<32x32xf32>
    %cst_126 = arith.constant dense<0.000000e+00> : vector<32x128xf32>
    %158 = tpu.matmul %157, %146, %cst_126 {dimension_numbers = #tpu.dot_dimension_numbers<[1], [0], [0], [1], [0, 0, 1, 1], [], []>} : vector<32x32xf32>, vector<32x128xf32>, vector<32x128xf32> -> vector<32x128xf32>
    %159 = arith.addf %155, %158 : vector<32x128xf32>
    %c0_127 = arith.constant 0 : index
    %c11 = arith.constant 11 : index
    %c0_128 = arith.constant 0 : index
    %c0_129 = arith.constant 0 : index
    %160 = vector.load %arg7[%c0_127, %c11, %c0_128, %c0_129] : memref<1x18x32x32xf32, #tpu.memory_space<vmem>>, vector<1x1x32x32xf32>
    %161 = vector.shape_cast %160 : vector<1x1x32x32xf32> to vector<32x32xf32>
    %cst_130 = arith.constant dense<0.000000e+00> : vector<32x128xf32>
    %162 = tpu.matmul %161, %152, %cst_130 {dimension_numbers = #tpu.dot_dimension_numbers<[1], [0], [0], [1], [0, 0, 1, 1], [], []>} : vector<32x32xf32>, vector<32x128xf32>, vector<32x128xf32> -> vector<32x128xf32>
    %163 = arith.addf %159, %162 : vector<32x128xf32>
    %c0_131 = arith.constant 0 : index
    %c3_132 = arith.constant 3 : index
    %c0_133 = arith.constant 0 : index
    %c0_134 = arith.constant 0 : index
    %164 = vector.load %arg8[%c0_131, %c3_132, %c0_133, %c0_134] : memref<1x6x32x1xf32, #tpu.memory_space<vmem>>, vector<1x1x32x1xf32>
    %165 = vector.shape_cast %164 : vector<1x1x32x1xf32> to vector<32x1xf32>
    %166 = vector.broadcast %165 : vector<32x1xf32> to vector<32x128xf32>
    %167 = arith.addf %163, %166 : vector<32x128xf32>
    %cst_135 = arith.constant dense<0.000000e+00> : vector<32x2xf32>
    %168 = tpu.matmul %167, %3, %cst_135 {dimension_numbers = #tpu.dot_dimension_numbers<[1], [0], [0], [1], [0, 0, 1, 1], [], []>} : vector<32x128xf32>, vector<128x2xf32>, vector<32x2xf32> -> vector<32x2xf32>
    %cst_136 = arith.constant dense<0.000000e+00> : vector<32x128xf32>
    %169 = tpu.matmul %168, %4, %cst_136 {dimension_numbers = #tpu.dot_dimension_numbers<[1], [0], [0], [1], [0, 0, 1, 1], [], []>} : vector<32x2xf32>, vector<2x128xf32>, vector<32x128xf32> -> vector<32x128xf32>
    %170 = arith.subf %167, %169 : vector<32x128xf32>
    %171 = arith.mulf %170, %170 : vector<32x128xf32>
    %cst_137 = arith.constant dense<0.000000e+00> : vector<32x2xf32>
    %172 = tpu.matmul %171, %3, %cst_137 {dimension_numbers = #tpu.dot_dimension_numbers<[1], [0], [0], [1], [0, 0, 1, 1], [], []>} : vector<32x128xf32>, vector<128x2xf32>, vector<32x2xf32> -> vector<32x2xf32>
    %cst_138 = arith.constant dense<0.000000e+00> : vector<32x128xf32>
    %173 = tpu.matmul %172, %4, %cst_138 {dimension_numbers = #tpu.dot_dimension_numbers<[1], [0], [0], [1], [0, 0, 1, 1], [], []>} : vector<32x2xf32>, vector<2x128xf32>, vector<32x128xf32> -> vector<32x128xf32>
    %cst_139 = arith.constant 9.99999974E-6 : f32
    %174 = vector.broadcast %cst_139 : f32 to vector<32x128xf32>
    %175 = arith.addf %173, %174 : vector<32x128xf32>
    %176 = math.rsqrt %175 : vector<32x128xf32>
    %177 = arith.mulf %170, %176 : vector<32x128xf32>
    %c0_140 = arith.constant 0 : index
    %c3_141 = arith.constant 3 : index
    %c0_142 = arith.constant 0 : index
    %c0_143 = arith.constant 0 : index
    %178 = vector.load %arg9[%c0_140, %c3_141, %c0_142, %c0_143] : memref<1x6x32x1xf32, #tpu.memory_space<vmem>>, vector<1x1x32x1xf32>
    %179 = vector.shape_cast %178 : vector<1x1x32x1xf32> to vector<32x1xf32>
    %180 = vector.broadcast %179 : vector<32x1xf32> to vector<32x128xf32>
    %181 = arith.mulf %177, %180 : vector<32x128xf32>
    %c0_144 = arith.constant 0 : index
    %c3_145 = arith.constant 3 : index
    %c0_146 = arith.constant 0 : index
    %c0_147 = arith.constant 0 : index
    %182 = vector.load %arg10[%c0_144, %c3_145, %c0_146, %c0_147] : memref<1x6x32x1xf32, #tpu.memory_space<vmem>>, vector<1x1x32x1xf32>
    %183 = vector.shape_cast %182 : vector<1x1x32x1xf32> to vector<32x1xf32>
    %184 = vector.broadcast %183 : vector<32x1xf32> to vector<32x128xf32>
    %185 = arith.addf %181, %184 : vector<32x128xf32>
    %cst_148 = arith.constant 0.000000e+00 : f32
    %186 = vector.broadcast %cst_148 : f32 to vector<32x128xf32>
    %187 = arith.maximumf %185, %186 : vector<32x128xf32>
    %c0_149 = arith.constant 0 : index
    %c3_150 = arith.constant 3 : index
    %c0_151 = arith.constant 0 : index
    %c0_152 = arith.constant 0 : index
    %188 = vector.load %arg11[%c0_149, %c3_150, %c0_151, %c0_152] : memref<1x6x32x128xf32, #tpu.memory_space<vmem>>, vector<1x1x32x128xf32>
    %189 = vector.shape_cast %188 : vector<1x1x32x128xf32> to vector<32x128xf32>
    %190 = arith.addf %187, %189 : vector<32x128xf32>
    %191 = arith.addf %190, %146 : vector<32x128xf32>
    %192 = vector.broadcast %0 : vector<1x128xf32> to vector<32x128xf32>
    %193 = arith.mulf %191, %192 : vector<32x128xf32>
    %c1_i32_153 = arith.constant 1 : i32
    %194 = tpu.dynamic_rotate %193 by %c1_i32_153 dim 1 : vector<32x128xf32>, i32 -> vector<32x128xf32>
    %195 = vector.broadcast %1 : vector<1x128xf32> to vector<32x128xf32>
    %196 = arith.mulf %194, %195 : vector<32x128xf32>
    %c127_i32_154 = arith.constant 127 : i32
    %197 = tpu.dynamic_rotate %193 by %c127_i32_154 dim 1 : vector<32x128xf32>, i32 -> vector<32x128xf32>
    %198 = vector.broadcast %2 : vector<1x128xf32> to vector<32x128xf32>
    %199 = arith.mulf %197, %198 : vector<32x128xf32>
    %c0_155 = arith.constant 0 : index
    %c12 = arith.constant 12 : index
    %c0_156 = arith.constant 0 : index
    %c0_157 = arith.constant 0 : index
    %200 = vector.load %arg7[%c0_155, %c12, %c0_156, %c0_157] : memref<1x18x32x32xf32, #tpu.memory_space<vmem>>, vector<1x1x32x32xf32>
    %201 = vector.shape_cast %200 : vector<1x1x32x32xf32> to vector<32x32xf32>
    %cst_158 = arith.constant dense<0.000000e+00> : vector<32x128xf32>
    %202 = tpu.matmul %201, %196, %cst_158 {dimension_numbers = #tpu.dot_dimension_numbers<[1], [0], [0], [1], [0, 0, 1, 1], [], []>} : vector<32x32xf32>, vector<32x128xf32>, vector<32x128xf32> -> vector<32x128xf32>
    %c0_159 = arith.constant 0 : index
    %c13 = arith.constant 13 : index
    %c0_160 = arith.constant 0 : index
    %c0_161 = arith.constant 0 : index
    %203 = vector.load %arg7[%c0_159, %c13, %c0_160, %c0_161] : memref<1x18x32x32xf32, #tpu.memory_space<vmem>>, vector<1x1x32x32xf32>
    %204 = vector.shape_cast %203 : vector<1x1x32x32xf32> to vector<32x32xf32>
    %cst_162 = arith.constant dense<0.000000e+00> : vector<32x128xf32>
    %205 = tpu.matmul %204, %193, %cst_162 {dimension_numbers = #tpu.dot_dimension_numbers<[1], [0], [0], [1], [0, 0, 1, 1], [], []>} : vector<32x32xf32>, vector<32x128xf32>, vector<32x128xf32> -> vector<32x128xf32>
    %206 = arith.addf %202, %205 : vector<32x128xf32>
    %c0_163 = arith.constant 0 : index
    %c14 = arith.constant 14 : index
    %c0_164 = arith.constant 0 : index
    %c0_165 = arith.constant 0 : index
    %207 = vector.load %arg7[%c0_163, %c14, %c0_164, %c0_165] : memref<1x18x32x32xf32, #tpu.memory_space<vmem>>, vector<1x1x32x32xf32>
    %208 = vector.shape_cast %207 : vector<1x1x32x32xf32> to vector<32x32xf32>
    %cst_166 = arith.constant dense<0.000000e+00> : vector<32x128xf32>
    %209 = tpu.matmul %208, %199, %cst_166 {dimension_numbers = #tpu.dot_dimension_numbers<[1], [0], [0], [1], [0, 0, 1, 1], [], []>} : vector<32x32xf32>, vector<32x128xf32>, vector<32x128xf32> -> vector<32x128xf32>
    %210 = arith.addf %206, %209 : vector<32x128xf32>
    %c0_167 = arith.constant 0 : index
    %c4_168 = arith.constant 4 : index
    %c0_169 = arith.constant 0 : index
    %c0_170 = arith.constant 0 : index
    %211 = vector.load %arg8[%c0_167, %c4_168, %c0_169, %c0_170] : memref<1x6x32x1xf32, #tpu.memory_space<vmem>>, vector<1x1x32x1xf32>
    %212 = vector.shape_cast %211 : vector<1x1x32x1xf32> to vector<32x1xf32>
    %213 = vector.broadcast %212 : vector<32x1xf32> to vector<32x128xf32>
    %214 = arith.addf %210, %213 : vector<32x128xf32>
    %cst_171 = arith.constant dense<0.000000e+00> : vector<32x2xf32>
    %215 = tpu.matmul %214, %3, %cst_171 {dimension_numbers = #tpu.dot_dimension_numbers<[1], [0], [0], [1], [0, 0, 1, 1], [], []>} : vector<32x128xf32>, vector<128x2xf32>, vector<32x2xf32> -> vector<32x2xf32>
    %cst_172 = arith.constant dense<0.000000e+00> : vector<32x128xf32>
    %216 = tpu.matmul %215, %4, %cst_172 {dimension_numbers = #tpu.dot_dimension_numbers<[1], [0], [0], [1], [0, 0, 1, 1], [], []>} : vector<32x2xf32>, vector<2x128xf32>, vector<32x128xf32> -> vector<32x128xf32>
    %217 = arith.subf %214, %216 : vector<32x128xf32>
    %218 = arith.mulf %217, %217 : vector<32x128xf32>
    %cst_173 = arith.constant dense<0.000000e+00> : vector<32x2xf32>
    %219 = tpu.matmul %218, %3, %cst_173 {dimension_numbers = #tpu.dot_dimension_numbers<[1], [0], [0], [1], [0, 0, 1, 1], [], []>} : vector<32x128xf32>, vector<128x2xf32>, vector<32x2xf32> -> vector<32x2xf32>
    %cst_174 = arith.constant dense<0.000000e+00> : vector<32x128xf32>
    %220 = tpu.matmul %219, %4, %cst_174 {dimension_numbers = #tpu.dot_dimension_numbers<[1], [0], [0], [1], [0, 0, 1, 1], [], []>} : vector<32x2xf32>, vector<2x128xf32>, vector<32x128xf32> -> vector<32x128xf32>
    %cst_175 = arith.constant 9.99999974E-6 : f32
    %221 = vector.broadcast %cst_175 : f32 to vector<32x128xf32>
    %222 = arith.addf %220, %221 : vector<32x128xf32>
    %223 = math.rsqrt %222 : vector<32x128xf32>
    %224 = arith.mulf %217, %223 : vector<32x128xf32>
    %c0_176 = arith.constant 0 : index
    %c4_177 = arith.constant 4 : index
    %c0_178 = arith.constant 0 : index
    %c0_179 = arith.constant 0 : index
    %225 = vector.load %arg9[%c0_176, %c4_177, %c0_178, %c0_179] : memref<1x6x32x1xf32, #tpu.memory_space<vmem>>, vector<1x1x32x1xf32>
    %226 = vector.shape_cast %225 : vector<1x1x32x1xf32> to vector<32x1xf32>
    %227 = vector.broadcast %226 : vector<32x1xf32> to vector<32x128xf32>
    %228 = arith.mulf %224, %227 : vector<32x128xf32>
    %c0_180 = arith.constant 0 : index
    %c4_181 = arith.constant 4 : index
    %c0_182 = arith.constant 0 : index
    %c0_183 = arith.constant 0 : index
    %229 = vector.load %arg10[%c0_180, %c4_181, %c0_182, %c0_183] : memref<1x6x32x1xf32, #tpu.memory_space<vmem>>, vector<1x1x32x1xf32>
    %230 = vector.shape_cast %229 : vector<1x1x32x1xf32> to vector<32x1xf32>
    %231 = vector.broadcast %230 : vector<32x1xf32> to vector<32x128xf32>
    %232 = arith.addf %228, %231 : vector<32x128xf32>
    %cst_184 = arith.constant 0.000000e+00 : f32
    %233 = vector.broadcast %cst_184 : f32 to vector<32x128xf32>
    %234 = arith.maximumf %232, %233 : vector<32x128xf32>
    %c0_185 = arith.constant 0 : index
    %c4_186 = arith.constant 4 : index
    %c0_187 = arith.constant 0 : index
    %c0_188 = arith.constant 0 : index
    %235 = vector.load %arg11[%c0_185, %c4_186, %c0_187, %c0_188] : memref<1x6x32x128xf32, #tpu.memory_space<vmem>>, vector<1x1x32x128xf32>
    %236 = vector.shape_cast %235 : vector<1x1x32x128xf32> to vector<32x128xf32>
    %237 = arith.addf %234, %236 : vector<32x128xf32>
    %238 = vector.broadcast %0 : vector<1x128xf32> to vector<32x128xf32>
    %239 = arith.mulf %237, %238 : vector<32x128xf32>
    %c1_i32_189 = arith.constant 1 : i32
    %240 = tpu.dynamic_rotate %239 by %c1_i32_189 dim 1 : vector<32x128xf32>, i32 -> vector<32x128xf32>
    %241 = vector.broadcast %1 : vector<1x128xf32> to vector<32x128xf32>
    %242 = arith.mulf %240, %241 : vector<32x128xf32>
    %c127_i32_190 = arith.constant 127 : i32
    %243 = tpu.dynamic_rotate %239 by %c127_i32_190 dim 1 : vector<32x128xf32>, i32 -> vector<32x128xf32>
    %244 = vector.broadcast %2 : vector<1x128xf32> to vector<32x128xf32>
    %245 = arith.mulf %243, %244 : vector<32x128xf32>
    %c0_191 = arith.constant 0 : index
    %c15 = arith.constant 15 : index
    %c0_192 = arith.constant 0 : index
    %c0_193 = arith.constant 0 : index
    %246 = vector.load %arg7[%c0_191, %c15, %c0_192, %c0_193] : memref<1x18x32x32xf32, #tpu.memory_space<vmem>>, vector<1x1x32x32xf32>
    %247 = vector.shape_cast %246 : vector<1x1x32x32xf32> to vector<32x32xf32>
    %cst_194 = arith.constant dense<0.000000e+00> : vector<32x128xf32>
    %248 = tpu.matmul %247, %242, %cst_194 {dimension_numbers = #tpu.dot_dimension_numbers<[1], [0], [0], [1], [0, 0, 1, 1], [], []>} : vector<32x32xf32>, vector<32x128xf32>, vector<32x128xf32> -> vector<32x128xf32>
    %c0_195 = arith.constant 0 : index
    %c16 = arith.constant 16 : index
    %c0_196 = arith.constant 0 : index
    %c0_197 = arith.constant 0 : index
    %249 = vector.load %arg7[%c0_195, %c16, %c0_196, %c0_197] : memref<1x18x32x32xf32, #tpu.memory_space<vmem>>, vector<1x1x32x32xf32>
    %250 = vector.shape_cast %249 : vector<1x1x32x32xf32> to vector<32x32xf32>
    %cst_198 = arith.constant dense<0.000000e+00> : vector<32x128xf32>
    %251 = tpu.matmul %250, %239, %cst_198 {dimension_numbers = #tpu.dot_dimension_numbers<[1], [0], [0], [1], [0, 0, 1, 1], [], []>} : vector<32x32xf32>, vector<32x128xf32>, vector<32x128xf32> -> vector<32x128xf32>
    %252 = arith.addf %248, %251 : vector<32x128xf32>
    %c0_199 = arith.constant 0 : index
    %c17 = arith.constant 17 : index
    %c0_200 = arith.constant 0 : index
    %c0_201 = arith.constant 0 : index
    %253 = vector.load %arg7[%c0_199, %c17, %c0_200, %c0_201] : memref<1x18x32x32xf32, #tpu.memory_space<vmem>>, vector<1x1x32x32xf32>
    %254 = vector.shape_cast %253 : vector<1x1x32x32xf32> to vector<32x32xf32>
    %cst_202 = arith.constant dense<0.000000e+00> : vector<32x128xf32>
    %255 = tpu.matmul %254, %245, %cst_202 {dimension_numbers = #tpu.dot_dimension_numbers<[1], [0], [0], [1], [0, 0, 1, 1], [], []>} : vector<32x32xf32>, vector<32x128xf32>, vector<32x128xf32> -> vector<32x128xf32>
    %256 = arith.addf %252, %255 : vector<32x128xf32>
    %c0_203 = arith.constant 0 : index
    %c5_204 = arith.constant 5 : index
    %c0_205 = arith.constant 0 : index
    %c0_206 = arith.constant 0 : index
    %257 = vector.load %arg8[%c0_203, %c5_204, %c0_205, %c0_206] : memref<1x6x32x1xf32, #tpu.memory_space<vmem>>, vector<1x1x32x1xf32>
    %258 = vector.shape_cast %257 : vector<1x1x32x1xf32> to vector<32x1xf32>
    %259 = vector.broadcast %258 : vector<32x1xf32> to vector<32x128xf32>
    %260 = arith.addf %256, %259 : vector<32x128xf32>
    %cst_207 = arith.constant dense<0.000000e+00> : vector<32x2xf32>
    %261 = tpu.matmul %260, %3, %cst_207 {dimension_numbers = #tpu.dot_dimension_numbers<[1], [0], [0], [1], [0, 0, 1, 1], [], []>} : vector<32x128xf32>, vector<128x2xf32>, vector<32x2xf32> -> vector<32x2xf32>
    %cst_208 = arith.constant dense<0.000000e+00> : vector<32x128xf32>
    %262 = tpu.matmul %261, %4, %cst_208 {dimension_numbers = #tpu.dot_dimension_numbers<[1], [0], [0], [1], [0, 0, 1, 1], [], []>} : vector<32x2xf32>, vector<2x128xf32>, vector<32x128xf32> -> vector<32x128xf32>
    %263 = arith.subf %260, %262 : vector<32x128xf32>
    %264 = arith.mulf %263, %263 : vector<32x128xf32>
    %cst_209 = arith.constant dense<0.000000e+00> : vector<32x2xf32>
    %265 = tpu.matmul %264, %3, %cst_209 {dimension_numbers = #tpu.dot_dimension_numbers<[1], [0], [0], [1], [0, 0, 1, 1], [], []>} : vector<32x128xf32>, vector<128x2xf32>, vector<32x2xf32> -> vector<32x2xf32>
    %cst_210 = arith.constant dense<0.000000e+00> : vector<32x128xf32>
    %266 = tpu.matmul %265, %4, %cst_210 {dimension_numbers = #tpu.dot_dimension_numbers<[1], [0], [0], [1], [0, 0, 1, 1], [], []>} : vector<32x2xf32>, vector<2x128xf32>, vector<32x128xf32> -> vector<32x128xf32>
    %cst_211 = arith.constant 9.99999974E-6 : f32
    %267 = vector.broadcast %cst_211 : f32 to vector<32x128xf32>
    %268 = arith.addf %266, %267 : vector<32x128xf32>
    %269 = math.rsqrt %268 : vector<32x128xf32>
    %270 = arith.mulf %263, %269 : vector<32x128xf32>
    %c0_212 = arith.constant 0 : index
    %c5_213 = arith.constant 5 : index
    %c0_214 = arith.constant 0 : index
    %c0_215 = arith.constant 0 : index
    %271 = vector.load %arg9[%c0_212, %c5_213, %c0_214, %c0_215] : memref<1x6x32x1xf32, #tpu.memory_space<vmem>>, vector<1x1x32x1xf32>
    %272 = vector.shape_cast %271 : vector<1x1x32x1xf32> to vector<32x1xf32>
    %273 = vector.broadcast %272 : vector<32x1xf32> to vector<32x128xf32>
    %274 = arith.mulf %270, %273 : vector<32x128xf32>
    %c0_216 = arith.constant 0 : index
    %c5_217 = arith.constant 5 : index
    %c0_218 = arith.constant 0 : index
    %c0_219 = arith.constant 0 : index
    %275 = vector.load %arg10[%c0_216, %c5_217, %c0_218, %c0_219] : memref<1x6x32x1xf32, #tpu.memory_space<vmem>>, vector<1x1x32x1xf32>
    %276 = vector.shape_cast %275 : vector<1x1x32x1xf32> to vector<32x1xf32>
    %277 = vector.broadcast %276 : vector<32x1xf32> to vector<32x128xf32>
    %278 = arith.addf %274, %277 : vector<32x128xf32>
    %cst_220 = arith.constant 0.000000e+00 : f32
    %279 = vector.broadcast %cst_220 : f32 to vector<32x128xf32>
    %280 = arith.maximumf %278, %279 : vector<32x128xf32>
    %c0_221 = arith.constant 0 : index
    %c5_222 = arith.constant 5 : index
    %c0_223 = arith.constant 0 : index
    %c0_224 = arith.constant 0 : index
    %281 = vector.load %arg11[%c0_221, %c5_222, %c0_223, %c0_224] : memref<1x6x32x128xf32, #tpu.memory_space<vmem>>, vector<1x1x32x128xf32>
    %282 = vector.shape_cast %281 : vector<1x1x32x128xf32> to vector<32x128xf32>
    %283 = arith.addf %280, %282 : vector<32x128xf32>
    %284 = arith.addf %283, %239 : vector<32x128xf32>
    %c0_225 = arith.constant 0 : index
    %c0_226 = arith.constant 0 : index
    %c0_227 = arith.constant 0 : index
    %285 = vector.load %arg12[%c0_225, %c0_226, %c0_227] : memref<1x32x128xf32, #tpu.memory_space<vmem>>, vector<1x32x128xf32>
    %286 = vector.shape_cast %285 : vector<1x32x128xf32> to vector<32x128xf32>
    %287 = vector.shape_cast %284 : vector<32x128xf32> to vector<1x32x128xf32>
    tpu.vector_store %arg12[%c0_225, %c0_226, %c0_227], %287 {strides = array<i32>} : memref<1x32x128xf32, #tpu.memory_space<vmem>>, vector<1x32x128xf32>,
    return
  }
  func.func @transform_0(%arg0: i32) -> (i32, i32) {
    %c0_i32 = arith.constant 0 : i32
    %c0_i32_0 = arith.constant 0 : i32
    %c0_i32_1 = arith.constant 0 : i32
    return %c0_i32, %c0_i32_0 : i32, i32
  }
  func.func @transform_1(%arg0: i32) -> (i32, i32) {
    %c0_i32 = arith.constant 0 : i32
    %c0_i32_0 = arith.constant 0 : i32
    %c0_i32_1 = arith.constant 0 : i32
    return %c0_i32, %c0_i32_0 : i32, i32
  }
  func.func @transform_2(%arg0: i32) -> (i32, i32) {
    %c0_i32 = arith.constant 0 : i32
    %c0_i32_0 = arith.constant 0 : i32
    %c0_i32_1 = arith.constant 0 : i32
    return %c0_i32, %c0_i32_0 : i32, i32
  }
  func.func @transform_3(%arg0: i32) -> (i32, i32) {
    %c0_i32 = arith.constant 0 : i32
    %c0_i32_0 = arith.constant 0 : i32
    %c0_i32_1 = arith.constant 0 : i32
    return %c0_i32, %c0_i32_0 : i32, i32
  }
  func.func @transform_4(%arg0: i32) -> (i32, i32) {
    %c0_i32 = arith.constant 0 : i32
    %c0_i32_0 = arith.constant 0 : i32
    %c0_i32_1 = arith.constant 0 : i32
    return %c0_i32, %c0_i32_0 : i32, i32
  }
  func.func @transform_5(%arg0: i32) -> (i32, i32) {
    %c0_i32 = arith.constant 0 : i32
    %c0_i32_0 = arith.constant 0 : i32
    %c0_i32_1 = arith.constant 0 : i32
    return %c0_i32, %c0_i32_0 : i32, i32
  }
  func.func @transform_6(%arg0: i32) -> (i32, i32, i32, i32) {
    %c0_i32 = arith.constant 0 : i32
    %c0_i32_0 = arith.constant 0 : i32
    %c0_i32_1 = arith.constant 0 : i32
    %c0_i32_2 = arith.constant 0 : i32
    return %arg0, %c0_i32, %c0_i32_0, %c0_i32_1 : i32, i32, i32, i32
  }
  func.func @transform_7(%arg0: i32) -> (i32, i32, i32, i32) {
    %c0_i32 = arith.constant 0 : i32
    %c0_i32_0 = arith.constant 0 : i32
    %c0_i32_1 = arith.constant 0 : i32
    %c0_i32_2 = arith.constant 0 : i32
    return %arg0, %c0_i32, %c0_i32_0, %c0_i32_1 : i32, i32, i32, i32
  }
  func.func @transform_8(%arg0: i32) -> (i32, i32, i32, i32) {
    %c0_i32 = arith.constant 0 : i32
    %c0_i32_0 = arith.constant 0 : i32
    %c0_i32_1 = arith.constant 0 : i32
    %c0_i32_2 = arith.constant 0 : i32
    return %arg0, %c0_i32, %c0_i32_0, %c0_i32_1 : i32, i32, i32, i32
  }
  func.func @transform_9(%arg0: i32) -> (i32, i32, i32, i32) {
    %c0_i32 = arith.constant 0 : i32
    %c0_i32_0 = arith.constant 0 : i32
    %c0_i32_1 = arith.constant 0 : i32
    %c0_i32_2 = arith.constant 0 : i32
    return %arg0, %c0_i32, %c0_i32_0, %c0_i32_1 : i32, i32, i32, i32
  }
  func.func @transform_10(%arg0: i32) -> (i32, i32, i32, i32) {
    %c0_i32 = arith.constant 0 : i32
    %c0_i32_0 = arith.constant 0 : i32
    %c0_i32_1 = arith.constant 0 : i32
    %c0_i32_2 = arith.constant 0 : i32
    return %arg0, %c0_i32, %c0_i32_0, %c0_i32_1 : i32, i32, i32, i32
  }
  func.func @transform_11(%arg0: i32) -> (i32, i32, i32) {
    %c0_i32 = arith.constant 0 : i32
    %c0_i32_0 = arith.constant 0 : i32
    %c0_i32_1 = arith.constant 0 : i32
    return %arg0, %c0_i32, %c0_i32_0 : i32, i32, i32
  }
}

</mosaic_0001>

<llo_original>
// kernel: custom-call.17
$region0: #{custom-call.17}
  %s0 = inlined_call_operand.vmem [shape: f32[2,8], index: 0, kind: output, shape index: {}]

// kernel: attention_forward.3
$region0: #{attention_forward.3}
  #allocation0 [shape = 'u32[]', space=smem, size = 0x4, offset = 0x4, fixed_abs, tag = 'smem constant byte address 0x4 - core index']
  #allocation1 [shape = 'u32[144,128]{1,0:T(1,128)}', space=vmem, size = 0x12000, scoped, tag = 'internal scratch']
  %s0 = inlined_call_operand.vmem [shape: f32[2], index: 0, kind: input, shape index: {}]
  %s1 = inlined_call_operand.vmem [shape: f32[16,16], index: 1, kind: input, shape index: {}]
  %s2 = inlined_call_operand.vmem [shape: f32[16,16], index: 2, kind: input, shape index: {}]
  %s3 = inlined_call_operand.vmem [shape: f32[1,16], index: 3, kind: input, shape index: {}]
  %s4 = inlined_call_operand.vmem [shape: f32[2,32,128], index: 4, kind: input, shape index: {}]
  %s5 = inlined_call_operand.vmem [shape: f32[1,128], index: 5, kind: input, shape index: {}]
  %s6 = inlined_call_operand.vmem [shape: f32[16,1], index: 6, kind: input, shape index: {}]
  %s7 = inlined_call_operand.vmem [shape: f32[16,32], index: 7, kind: input, shape index: {}]
  %s8 = inlined_call_operand.vmem [shape: f32[16,1], index: 8, kind: input, shape index: {}]
  %s9 = inlined_call_operand.vmem [shape: f32[12,32], index: 9, kind: input, shape index: {}]
  %s10 = inlined_call_operand.vmem [shape: f32[12,1], index: 10, kind: input, shape index: {}]
  %s11 = inlined_call_operand.vmem [shape: f32[16,12], index: 11, kind: input, shape index: {}]
  %s12 = inlined_call_operand.vmem [shape: f32[16,128], index: 12, kind: output, shape index: {0}]
  %s13 = inlined_call_operand.vmem [shape: f32[16,128], index: 13, kind: output, shape index: {1}]
  %s14 = inlined_call_operand.vmem [shape: f32[16,128], index: 14, kind: output, shape index: {2}]
  %s15 = inlined_call_operand.vmem [shape: f32[12,128], index: 15, kind: output, shape index: {3}]
  %16 = xla_tuple %s12, %s13, %s14, %s15
  %s17 = sld [smem:[#allocation0]]
  $region86: #{attention_forward.3} parent=0
    _
  %s19 = ssub.s32 1, %s17
  %s20 = scalar_select 0, %s19, %s17
  $region1: #{attention_forward.3} parent=0
    #allocation2 [shape = 'u8[512]{0}', space=smem, size = 0x200, scoped, tag = 'input window, operand 0, single buffered']
    #allocation3 [shape = 's32[1]{0}', space=sflag, size = 0x4, scoped, tag = 'scoped memory for attention_forward.3']
    %21 = vsyncpa [#allocation3], 0
    // Predicated region
    $region2: #{attention_forward.3} parent=1 // pred_check
      _
    $region3: #{attention_forward.3} parent=1 // pred_check_branch
      %23 = sbr.rel (0) target = $region5
    $region4: #{attention_forward.3} parent=1 // pred_region
      %s25 = ssub.s32 16, 16
      %26 = vsyncadd [#allocation3], %s25
      %s28 = sshll.u32 %s0, 4
      %s29 = int_to_ptr.vmem [resolvable:$true] %s28
      %31 = dma.vmem_to_smem %s29, 16, [#allocation2], [#allocation3]
    $region5: #{attention_forward.3} parent=1 // pred_fallthru
      _
    // Predicated region
    $region6: #{attention_forward.3} parent=1 // pred_check
      _
    $region7: #{attention_forward.3} parent=1 // pred_check_branch
      %33 = sbr.rel (0) target = $region9
    $region8: #{attention_forward.3} parent=1 // pred_region
      _
    $region9: #{attention_forward.3} parent=1 // pred_fallthru
      _
    // Predicated region
    $region10: #{attention_forward.3} parent=1 // pred_check
      _
    $region11: #{attention_forward.3} parent=1 // pred_check_branch
      %35 = sbr.rel (0) target = $region13
    $region12: #{attention_forward.3} parent=1 // pred_region
      _
    $region13: #{attention_forward.3} parent=1 // pred_fallthru
      _
    // Predicated region
    $region14: #{attention_forward.3} parent=1 // pred_check
      _
    $region15: #{attention_forward.3} parent=1 // pred_check_branch
      %37 = sbr.rel (0) target = $region17
    $region16: #{attention_forward.3} parent=1 // pred_region
      _
    $region17: #{attention_forward.3} parent=1 // pred_fallthru
      _
    // Predicated region
    $region18: #{attention_forward.3} parent=1 // pred_check
      _
    $region19: #{attention_forward.3} parent=1 // pred_check_branch
      %39 = sbr.rel (0) target = $region21
    $region20: #{attention_forward.3} parent=1 // pred_region
      _
    $region21: #{attention_forward.3} parent=1 // pred_fallthru
      _
    // Predicated region
    $region22: #{attention_forward.3} parent=1 // pred_check
      _
    $region23: #{attention_forward.3} parent=1 // pred_check_branch
      %41 = sbr.rel (0) target = $region25
    $region24: #{attention_forward.3} parent=1 // pred_region
      _
    $region25: #{attention_forward.3} parent=1 // pred_fallthru
      _
    // Predicated region
    $region26: #{attention_forward.3} parent=1 // pred_check
      _
    $region27: #{attention_forward.3} parent=1 // pred_check_branch
      %43 = sbr.rel (0) target = $region29
    $region28: #{attention_forward.3} parent=1 // pred_region
      _
    $region29: #{attention_forward.3} parent=1 // pred_fallthru
      _
    // Predicated region
    $region30: #{attention_forward.3} parent=1 // pred_check
      _
    $region31: #{attention_forward.3} parent=1 // pred_check_branch
      %45 = sbr.rel (0) target = $region33
    $region32: #{attention_forward.3} parent=1 // pred_region
      _
    $region33: #{attention_forward.3} parent=1 // pred_fallthru
      _
    // Predicated region
    $region34: #{attention_forward.3} parent=1 // pred_check
      _
    $region35: #{attention_forward.3} parent=1 // pred_check_branch
      %47 = sbr.rel (0) target = $region37
    $region36: #{attention_forward.3} parent=1 // pred_region
      _
    $region37: #{attention_forward.3} parent=1 // pred_fallthru
      _
    // Predicated region
    $region38: #{attention_forward.3} parent=1 // pred_check
      _
    $region39: #{attention_forward.3} parent=1 // pred_check_branch
      %49 = sbr.rel (0) target = $region41
    $region40: #{attention_forward.3} parent=1 // pred_region
      _
    $region41: #{attention_forward.3} parent=1 // pred_fallthru
      _
    // Predicated region
    $region42: #{attention_forward.3} parent=1 // pred_check
      _
    $region43: #{attention_forward.3} parent=1 // pred_check_branch
      %51 = sbr.rel (0) target = $region45
    $region44: #{attention_forward.3} parent=1 // pred_region
      _
    $region45: #{attention_forward.3} parent=1 // pred_fallthru
      _
    // Predicated region
    $region46: #{attention_forward.3} parent=1 // pred_check
      _
    $region47: #{attention_forward.3} parent=1 // pred_check_branch
      %53 = sbr.rel (0) target = $region49
    $region48: #{attention_forward.3} parent=1 // pred_region
      _
    $region49: #{attention_forward.3} parent=1 // pred_fallthru
      _
    // Predicated region
    $region50: #{attention_forward.3} parent=1 // pred_check
      _
    $region51: #{attention_forward.3} parent=1 // pred_check_branch
      %55 = sbr.rel (0) target = $region53
    $region52: #{attention_forward.3} parent=1 // pred_region
      %56 = dma.done [#allocation3], 16
    $region53: #{attention_forward.3} parent=1 // pred_fallthru
      _
    %57 = sfence
    %s58 = sld [smem:[#allocation2]]
    %s59 = sld [smem:[#allocation2 + $0x1]]
    %v60 = vld [vmem:[%s1] sm:$0xff]
    %v61 = vld [vmem:[%s1 + $0x8] sm:$0xff]
    %v62 = vld [vmem:[%s2] sm:$0xff]
    %v63 = vld [vmem:[%s2 + $0x8] sm:$0xff]
    %v64 = vld [vmem:[%s3] sm:$0x1]
    %v66 = vlaneseq
    %v67 = vshrl.u32 %v66, 7
    %v68 = vsub.s32 0, %v67
    %v69 = vrot.slane %v64, %v68
    %vm71 = vcmask 130048
    %v73 = vsel %vm71, %v60, 0
    %v76 = vsel %vm71, %v61, 0
    %78 = vmatprep.subr.mxu0 0.0
    %79 = vmatpush1.msra.mxu0 %v62
    %80 = vmatprep.subr.mxu0 0.0
    %81 = vmatpush1.msra.mxu0 %v63
    %82 = vmatprep.subr.mxu0 0.0
    %83 = vmatpush1.msra.mxu0 0.0
    %84 = vmatprep.subr.mxu0 0.0
    %85 = vmatpush1.msra.mxu0 0.0
    %86 = vmatprep.subr.mxu0 0.0
    %87 = vmatpush1.msra.mxu0 0.0
    %88 = vmatprep.subr.mxu0 0.0
    %89 = vmatpush1.msra.mxu0 0.0
    %90 = vmatprep.subr.mxu0 0.0
    %91 = vmatpush1.msra.mxu0 0.0
    %92 = vmatprep.subr.mxu0 0.0
    %93 = vmatpush1.msra.mxu0 0.0
    %94 = vmatprep.subr.mxu0 0.0
    %95 = vmatpush1.msra.mxu0 0.0
    %96 = vmatprep.subr.mxu0 0.0
    %97 = vmatpush1.msra.mxu0 0.0
    %98 = vmatprep.subr.mxu0 0.0
    %99 = vmatpush1.msra.mxu0 0.0
    %100 = vmatprep.subr.mxu0 0.0
    %101 = vmatpush1.msra.mxu0 0.0
    %102 = vmatprep.subr.mxu0 0.0
    %103 = vmatpush1.msra.mxu0 0.0
    %104 = vmatprep.subr.mxu0 0.0
    %105 = vmatpush1.msra.mxu0 0.0
    %106 = vmatprep.subr.mxu0 0.0
    %107 = vmatpush1.msra.mxu0 0.0
    %108 = vmatprep.subr.mxu0 0.0
    %109 = vmatpush1.msra.mxu0 0.0
    %110 = vmatprep.subr.mxu0 0.0
    %111 = vmatpush1.msra.mxu0 0.0
    %112 = vmatprep.subr.mxu0 0.0
    %113 = vmatpush1.msra.mxu0 0.0
    %114 = vmatprep.subr.mxu0 0.0
    %115 = vmatpush1.msra.mxu0 0.0
    %116 = vmatprep.subr.mxu0 0.0
    %117 = vmatpush1.msra.mxu0 0.0
    %118 = vmatprep.subr.mxu0 0.0
    %119 = vmatpush1.msra.mxu0 0.0
    %120 = vmatprep.subr.mxu0 0.0
    %121 = vmatpush1.msra.mxu0 0.0
    %122 = vmatprep.subr.mxu0 0.0
    %123 = vmatpush1.msra.mxu0 0.0
    %124 = vmatprep.subr.mxu0 0.0
    %125 = vmatpush1.msra.mxu0 0.0
    %126 = vmatprep.subr.mxu0 0.0
    %127 = vmatpush1.msra.mxu0 0.0
    %128 = vmatprep.subr.mxu0 0.0
    %129 = vmatpush1.msra.mxu0 0.0
    %130 = vmatprep.subr.mxu0 0.0
    %131 = vmatpush1.msra.mxu0 0.0
    %132 = vmatprep.subr.mxu0 0.0
    %133 = vmatpush1.msra.mxu0 0.0
    %134 = vmatprep.subr.mxu0 0.0
    %135 = vmatpush1.msra.mxu0 0.0
    %136 = vmatprep.subr.mxu0 0.0
    %137 = vmatpush1.msra.mxu0 0.0
    %138 = vmatprep.subr.mxu0 0.0
    %139 = vmatpush1.msra.mxu0 0.0
    %140 = vmatprep.subr.mxu0 0.0
    %141 = vmatpush1.msra.mxu0 0.0
    %142 = vmatprep.mubr.f32.mxu0 0.0
    %143 = vmatmul.mubr.f32.gmra.mrb[0].mxu0 %v73
    %v144 = vpop.f32.mrb[0].mxu0
    %v145 = vadd.f32 %v69, %v144
    %v146 = vpop.f32.mrb[0].mxu0
    %147 = vmatprep.mubr.f32.mxu0 0.0
    %148 = vmatmul.mubr.f32.gmra.mrb[0].mxu0 %v76
    %v149 = vpop.f32.mrb[0].mxu0
    %v150 = vadd.f32 %v69, %v149
    %v151 = vpop.f32.mrb[0].mxu0
    %152 = vdwg.mxu0
    %v153 = vmul.f32 %v145, %v145
    %v154 = vmul.f32 %v150, %v150
    %v155 = vsel %vm71, %v153, 0.0
    %156 = vadd.xlane.f32.xlu0 %v155
    %v157 = vpop.xlane.xlu0 %156
    %v158 = vsel %vm71, %v154, 0.0
    %159 = vadd.xlane.f32.xlu0 %v158
    %v160 = vpop.xlane.xlu0 %159
    %v161 = vrsqrt.pop %v157
    %v162 = vmul.f32 %v157, %v161
    %vm163 = vcmp.eq.f32.partialorder %v157, inf
    %v164 = vsel %vm163, %v157, %v162
    %vm165 = vcmp.eq.f32.partialorder %v157, 0.0
    %v166 = vand.u32 %v157, 2147483648
    %v167 = vsel %vm165, %v166, %v164
    %v168 = vrsqrt.pop %v160
    %v169 = vmul.f32 %v160, %v168
    %vm170 = vcmp.eq.f32.partialorder %v160, inf
    %v171 = vsel %vm170, %v160, %v169
    %vm172 = vcmp.eq.f32.partialorder %v160, 0.0
    %v173 = vand.u32 %v160, 2147483648
    %v174 = vsel %vm172, %v173, %v171
    %v175 = vmax.f32 %v167, 1e-08
    %v176 = vmax.f32 %v174, 1e-08
    %v177 = vrcp.pop %v175
    %v178 = vmul.f32 %v145, %v177
    %v179 = vrcp.pop %v176
    %v180 = vmul.f32 %v150, %v179
    %v181 = vld [vmem:[%s4] sm:$0xff]
    %v182 = vld [vmem:[%s4 + $0x8] sm:$0xff]
    %v183 = vld [vmem:[%s4 + $0x10] sm:$0xff]
    %v184 = vld [vmem:[%s4 + $0x18] sm:$0xff]
    %s185 = scalar_lea.vmem %s4, 32
    %v186 = vld [vmem:[%s185] sm:$0xff]
    %v187 = vld [vmem:[%s185 + $0x8] sm:$0xff]
    %v188 = vld [vmem:[%s185 + $0x10] sm:$0xff]
    %v189 = vld [vmem:[%s185 + $0x18] sm:$0xff]
    %v190 = vld [vmem:[%s7] sm:$0xff]
    %v191 = vld [vmem:[%s7 + $0x8] sm:$0xff]
    %v192 = vld [vmem:[%s8] sm:$0xff]
    %v193 = vld [vmem:[%s8 + $0x8] sm:$0xff]
    %195 = vset.pattern.permute.xlu0 0
    %196 = vperm.xlu0 %195, %v192
    %v197 = vpop.permute.xlu0 %196
    %200 = vset.pattern.permute.xlu0 0
    %201 = vperm.xlu0 %200, %v193
    %v202 = vpop.permute.xlu0 %201
    %vm204 = vcmask 261120
    %v206 = vsel %vm204, %v190, 0
    %v209 = vsel %vm204, %v191, 0
    %211 = vmatprep.subr.mxu0 0.0
    %212 = vmatpush1.msra.mxu0 %v181
    %213 = vmatprep.subr.mxu0 0.0
    %214 = vmatpush1.msra.mxu0 %v182
    %215 = vmatprep.subr.mxu0 0.0
    %216 = vmatpush1.msra.mxu0 %v183
    %217 = vmatprep.subr.mxu0 0.0
    %218 = vmatpush1.msra.mxu0 %v184
    %219 = vmatprep.subr.mxu0 0.0
    %220 = vmatpush1.msra.mxu0 0.0
    %221 = vmatprep.subr.mxu0 0.0
    %222 = vmatpush1.msra.mxu0 0.0
    %223 = vmatprep.subr.mxu0 0.0
    %224 = vmatpush1.msra.mxu0 0.0
    %225 = vmatprep.subr.mxu0 0.0
    %226 = vmatpush1.msra.mxu0 0.0
    %227 = vmatprep.subr.mxu0 0.0
    %228 = vmatpush1.msra.mxu0 0.0
    %229 = vmatprep.subr.mxu0 0.0
    %230 = vmatpush1.msra.mxu0 0.0
    %231 = vmatprep.subr.mxu0 0.0
    %232 = vmatpush1.msra.mxu0 0.0
    %233 = vmatprep.subr.mxu0 0.0
    %234 = vmatpush1.msra.mxu0 0.0
    %235 = vmatprep.subr.mxu0 0.0
    %236 = vmatpush1.msra.mxu0 0.0
    %237 = vmatprep.subr.mxu0 0.0
    %238 = vmatpush1.msra.mxu0 0.0
    %239 = vmatprep.subr.mxu0 0.0
    %240 = vmatpush1.msra.mxu0 0.0
    %241 = vmatprep.subr.mxu0 0.0
    %242 = vmatpush1.msra.mxu0 0.0
    %243 = vmatprep.subr.mxu0 0.0
    %244 = vmatpush1.msra.mxu0 0.0
    %245 = vmatprep.subr.mxu0 0.0
    %246 = vmatpush1.msra.mxu0 0.0
    %247 = vmatprep.subr.mxu0 0.0
    %248 = vmatpush1.msra.mxu0 0.0
    %249 = vmatprep.subr.mxu0 0.0
    %250 = vmatpush1.msra.mxu0 0.0
    %251 = vmatprep.subr.mxu0 0.0
    %252 = vmatpush1.msra.mxu0 0.0
    %253 = vmatprep.subr.mxu0 0.0
    %254 = vmatpush1.msra.mxu0 0.0
    %255 = vmatprep.subr.mxu0 0.0
    %256 = vmatpush1.msra.mxu0 0.0
    %257 = vmatprep.subr.mxu0 0.0
    %258 = vmatpush1.msra.mxu0 0.0
    %259 = vmatprep.subr.mxu0 0.0
    %260 = vmatpush1.msra.mxu0 0.0
    %261 = vmatprep.subr.mxu0 0.0
    %262 = vmatpush1.msra.mxu0 0.0
    %263 = vmatprep.subr.mxu0 0.0
    %264 = vmatpush1.msra.mxu0 0.0
    %265 = vmatprep.subr.mxu0 0.0
    %266 = vmatpush1.msra.mxu0 0.0
    %267 = vmatprep.subr.mxu0 0.0
    %268 = vmatpush1.msra.mxu0 0.0
    %269 = vmatprep.subr.mxu0 0.0
    %270 = vmatpush1.msra.mxu0 0.0
    %271 = vmatprep.subr.mxu0 0.0
    %272 = vmatpush1.msra.mxu0 0.0
    %273 = vmatprep.subr.mxu0 0.0
    %274 = vmatpush1.msra.mxu0 0.0
    %275 = vmatprep.mubr.f32.mxu0 0.0
    %276 = vmatmul.mubr.f32.gmra.mrb[0].mxu0 %v206
    %v277 = vpop.f32.mrb[0].mxu0
    %v278 = vadd.f32 %v197, %v277
    %v279 = vpop.f32.mrb[0].mxu0
    %280 = vmatprep.mubr.f32.mxu0 0.0
    %281 = vmatmul.mubr.f32.gmra.mrb[0].mxu0 %v209
    %v282 = vpop.f32.mrb[0].mxu0
    %v283 = vadd.f32 %v202, %v282
    %v284 = vpop.f32.mrb[0].mxu0
    %285 = vdwg.mxu0
    %v286 = vld [vmem:[%s6] sm:$0xff]
    %v287 = vld [vmem:[%s6 + $0x8] sm:$0xff]
    %v288 = vld [vmem:[%s5] sm:$0x1]
    %290 = vset.pattern.permute.xlu0 0
    %291 = vperm.xlu0 %290, %v286
    %v292 = vpop.permute.xlu0 %291
    %295 = vset.pattern.permute.xlu0 0
    %296 = vperm.xlu0 %295, %v287
    %v297 = vpop.permute.xlu0 %296
    %v300 = vlaneseq
    %v301 = vshrl.u32 %v300, 7
    %v302 = vsub.s32 0, %v301
    %v303 = vrot.slane %v288, %v302
    %v305 = vmul.f32 %v292, %v303
    %v306 = vmul.f32 %v297, %v303
    %v307 = vadd.f32 %v278, %v305
    %v308 = vadd.f32 %v283, %v306
    %v309 = vmul.f32 %v307, %v307
    %v310 = vmul.f32 %v308, %v308
    %v311 = vadd.f32 %v309, %v310
    %v312 = vrot.slane %v311, 4
    %v313 = vadd.f32 %v311, %v312
    %v314 = vrot.slane %v313, 2
    %v315 = vadd.f32 %v313, %v314
    %v316 = vrot.slane %v315, 1
    %v317 = vadd.f32 %v315, %v316
    %v318 = vrsqrt.pop %v317
    %v319 = vmul.f32 %v317, %v318
    %vm320 = vcmp.eq.f32.partialorder %v317, inf
    %v321 = vsel %vm320, %v317, %v319
    %vm322 = vcmp.eq.f32.partialorder %v317, 0.0
    %v323 = vand.u32 %v317, 2147483648
    %v324 = vsel %vm322, %v323, %v321
    %v325 = vmax.f32 %v324, 1e-08
    %v326 = vrcp.pop %v325
    %v327 = vmul.f32 %v307, %v326
    %v328 = vmul.f32 %v308, %v326
    %v330 = vsel %vm71, %v178, 0
    %v333 = vsel %vm71, %v180, 0
    %335 = vmatprep.subr.mxu0 0.0
    %336 = vmatpush1.msra.mxu0 %v327
    %337 = vmatprep.subr.mxu0 0.0
    %338 = vmatpush1.msra.mxu0 %v328
    %339 = vmatprep.subr.mxu0 0.0
    %340 = vmatpush1.msra.mxu0 0.0
    %341 = vmatprep.subr.mxu0 0.0
    %342 = vmatpush1.msra.mxu0 0.0
    %343 = vmatprep.subr.mxu0 0.0
    %344 = vmatpush1.msra.mxu0 0.0
    %345 = vmatprep.subr.mxu0 0.0
    %346 = vmatpush1.msra.mxu0 0.0
    %347 = vmatprep.subr.mxu0 0.0
    %348 = vmatpush1.msra.mxu0 0.0
    %349 = vmatprep.subr.mxu0 0.0
    %350 = vmatpush1.msra.mxu0 0.0
    %351 = vmatprep.subr.mxu0 0.0
    %352 = vmatpush1.msra.mxu0 0.0
    %353 = vmatprep.subr.mxu0 0.0
    %354 = vmatpush1.msra.mxu0 0.0
    %355 = vmatprep.subr.mxu0 0.0
    %356 = vmatpush1.msra.mxu0 0.0
    %357 = vmatprep.subr.mxu0 0.0
    %358 = vmatpush1.msra.mxu0 0.0
    %359 = vmatprep.subr.mxu0 0.0
    %360 = vmatpush1.msra.mxu0 0.0
    %361 = vmatprep.subr.mxu0 0.0
    %362 = vmatpush1.msra.mxu0 0.0
    %363 = vmatprep.subr.mxu0 0.0
    %364 = vmatpush1.msra.mxu0 0.0
    %365 = vmatprep.subr.mxu0 0.0
    %366 = vmatpush1.msra.mxu0 0.0
    %367 = vmatprep.subr.mxu0 0.0
    %368 = vmatpush1.msra.mxu0 0.0
    %369 = vmatprep.subr.mxu0 0.0
    %370 = vmatpush1.msra.mxu0 0.0
    %371 = vmatprep.subr.mxu0 0.0
    %372 = vmatpush1.msra.mxu0 0.0
    %373 = vmatprep.subr.mxu0 0.0
    %374 = vmatpush1.msra.mxu0 0.0
    %375 = vmatprep.subr.mxu0 0.0
    %376 = vmatpush1.msra.mxu0 0.0
    %377 = vmatprep.subr.mxu0 0.0
    %378 = vmatpush1.msra.mxu0 0.0
    %379 = vmatprep.subr.mxu0 0.0
    %380 = vmatpush1.msra.mxu0 0.0
    %381 = vmatprep.subr.mxu0 0.0
    %382 = vmatpush1.msra.mxu0 0.0
    %383 = vmatprep.subr.mxu0 0.0
    %384 = vmatpush1.msra.mxu0 0.0
    %385 = vmatprep.subr.mxu0 0.0
    %386 = vmatpush1.msra.mxu0 0.0
    %387 = vmatprep.subr.mxu0 0.0
    %388 = vmatpush1.msra.mxu0 0.0
    %389 = vmatprep.subr.mxu0 0.0
    %390 = vmatpush1.msra.mxu0 0.0
    %391 = vmatprep.subr.mxu0 0.0
    %392 = vmatpush1.msra.mxu0 0.0
    %393 = vmatprep.subr.mxu0 0.0
    %394 = vmatpush1.msra.mxu0 0.0
    %395 = vmatprep.subr.mxu0 0.0
    %396 = vmatpush1.msra.mxu0 0.0
    %397 = vmatprep.subr.mxu0 0.0
    %398 = vmatpush1.msra.mxu0 0.0
    %399 = vmatprep.mubr.f32.mxu0 0.0
    %400 = vmatmul.mubr.f32.gmra.mrb[0].mxu0 %v330
    %v401 = vpop.f32.mrb[0].mxu0
    %v402 = vadd.f32 0.0, %v401
    %v403 = vpop.f32.mrb[0].mxu0
    %404 = vmatprep.mubr.f32.mxu0 0.0
    %405 = vmatmul.mubr.f32.gmra.mrb[0].mxu0 %v333
    %v406 = vpop.f32.mrb[0].mxu0
    %v407 = vadd.f32 0.0, %v406
    %v408 = vpop.f32.mrb[0].mxu0
    %409 = vdwg.mxu0
    %v410 = vstv %s58
    %v411 = vmul.f32 %v410, %v402
    %v412 = vmul.f32 %v410, %v407
    %v413 = vstv %s59
    %v414 = vadd.f32 %v411, %v413
    %v415 = vadd.f32 %v412, %v413
    %v416 = vmin.f32 %v414, 0.0
    %v417 = vmin.f32 %v415, 0.0
    %v418 = vand.u32 2147483647, %v414
    %v419 = vand.u32 2147483647, %v415
    %v420 = vsub.f32 0.0, %v418
    %v421 = vsub.f32 0.0, %v419
    %v422 = vmul.f32 %v420, 1.442695
    %v423 = vpow.pop %v422
    %v424 = vmul.f32 %v421, 1.442695
    %v425 = vpow.pop %v424
    %v426 = vadd.f32 %v423, 1.0
    %v427 = vadd.f32 %v425, 1.0
    %v428 = vlog2.pop %v426
    %v429 = vmul.f32 %v428, 0.6931472
    %v430 = vlog2.pop %v427
    %v431 = vmul.f32 %v430, 0.6931472
    %v432 = vsub.f32 %v416, %v429
    %v433 = vsub.f32 %v417, %v431
    %434 = vst [vmem:[%s12] sm:$0xff] %v432
    %435 = vst [vmem:[%s12 + $0x8] sm:$0xff] %v433
    %v436 = vsub.f32 0.0, %v414
    %v437 = vsub.f32 0.0, %v415
    %v438 = vmin.f32 %v436, 0.0
    %v439 = vmin.f32 %v437, 0.0
    %v440 = vand.u32 2147483647, %v436
    %v441 = vand.u32 2147483647, %v437
    %v442 = vsub.f32 0.0, %v440
    %v443 = vsub.f32 0.0, %v441
    %v444 = vmul.f32 %v442, 1.442695
    %v445 = vpow.pop %v444
    %v446 = vmul.f32 %v443, 1.442695
    %v447 = vpow.pop %v446
    %v448 = vadd.f32 %v445, 1.0
    %v449 = vadd.f32 %v447, 1.0
    %v450 = vlog2.pop %v448
    %v451 = vmul.f32 %v450, 0.6931472
    %v452 = vlog2.pop %v449
    %v453 = vmul.f32 %v452, 0.6931472
    %v454 = vsub.f32 %v438, %v451
    %v455 = vsub.f32 %v439, %v453
    %456 = vst [vmem:[%s13] sm:$0xff] %v454
    %457 = vst [vmem:[%s13 + $0x8] sm:$0xff] %v455
    %v458 = vld [vmem:[%s9] sm:$0xff]
    %v459 = vld [vmem:[%s9 + $0x8] sm:$0xf]
    %v460 = vld [vmem:[%s10] sm:$0xff]
    %v461 = vld [vmem:[%s10 + $0x8] sm:$0xf]
    %463 = vset.pattern.permute.xlu0 0
    %464 = vperm.xlu0 %463, %v460
    %v465 = vpop.permute.xlu0 %464
    %468 = vset.pattern.permute.xlu0 0
    %469 = vperm.xlu0 %468, %v461
    %v470 = vpop.permute.xlu0 %469
    %v473 = vsel %vm204, %v458, 0
    %v476 = vsel %vm204, %v459, 0
    %478 = vmatprep.subr.mxu0 0.0
    %479 = vmatpush1.msra.mxu0 %v186
    %480 = vmatprep.subr.mxu0 0.0
    %481 = vmatpush1.msra.mxu0 %v187
    %482 = vmatprep.subr.mxu0 0.0
    %483 = vmatpush1.msra.mxu0 %v188
    %484 = vmatprep.subr.mxu0 0.0
    %485 = vmatpush1.msra.mxu0 %v189
    %486 = vmatprep.subr.mxu0 0.0
    %487 = vmatpush1.msra.mxu0 0.0
    %488 = vmatprep.subr.mxu0 0.0
    %489 = vmatpush1.msra.mxu0 0.0
    %490 = vmatprep.subr.mxu0 0.0
    %491 = vmatpush1.msra.mxu0 0.0
    %492 = vmatprep.subr.mxu0 0.0
    %493 = vmatpush1.msra.mxu0 0.0
    %494 = vmatprep.subr.mxu0 0.0
    %495 = vmatpush1.msra.mxu0 0.0
    %496 = vmatprep.subr.mxu0 0.0
    %497 = vmatpush1.msra.mxu0 0.0
    %498 = vmatprep.subr.mxu0 0.0
    %499 = vmatpush1.msra.mxu0 0.0
    %500 = vmatprep.subr.mxu0 0.0
    %501 = vmatpush1.msra.mxu0 0.0
    %502 = vmatprep.subr.mxu0 0.0
    %503 = vmatpush1.msra.mxu0 0.0
    %504 = vmatprep.subr.mxu0 0.0
    %505 = vmatpush1.msra.mxu0 0.0
    %506 = vmatprep.subr.mxu0 0.0
    %507 = vmatpush1.msra.mxu0 0.0
    %508 = vmatprep.subr.mxu0 0.0
    %509 = vmatpush1.msra.mxu0 0.0
    %510 = vmatprep.subr.mxu0 0.0
    %511 = vmatpush1.msra.mxu0 0.0
    %512 = vmatprep.subr.mxu0 0.0
    %513 = vmatpush1.msra.mxu0 0.0
    %514 = vmatprep.subr.mxu0 0.0
    %515 = vmatpush1.msra.mxu0 0.0
    %516 = vmatprep.subr.mxu0 0.0
    %517 = vmatpush1.msra.mxu0 0.0
    %518 = vmatprep.subr.mxu0 0.0
    %519 = vmatpush1.msra.mxu0 0.0
    %520 = vmatprep.subr.mxu0 0.0
    %521 = vmatpush1.msra.mxu0 0.0
    %522 = vmatprep.subr.mxu0 0.0
    %523 = vmatpush1.msra.mxu0 0.0
    %524 = vmatprep.subr.mxu0 0.0
    %525 = vmatpush1.msra.mxu0 0.0
    %526 = vmatprep.subr.mxu0 0.0
    %527 = vmatpush1.msra.mxu0 0.0
    %528 = vmatprep.subr.mxu0 0.0
    %529 = vmatpush1.msra.mxu0 0.0
    %530 = vmatprep.subr.mxu0 0.0
    %531 = vmatpush1.msra.mxu0 0.0
    %532 = vmatprep.subr.mxu0 0.0
    %533 = vmatpush1.msra.mxu0 0.0
    %534 = vmatprep.subr.mxu0 0.0
    %535 = vmatpush1.msra.mxu0 0.0
    %536 = vmatprep.subr.mxu0 0.0
    %537 = vmatpush1.msra.mxu0 0.0
    %538 = vmatprep.subr.mxu0 0.0
    %539 = vmatpush1.msra.mxu0 0.0
    %540 = vmatprep.subr.mxu0 0.0
    %541 = vmatpush1.msra.mxu0 0.0
    %542 = vmatprep.mubr.f32.mxu0 0.0
    %543 = vmatmul.mubr.f32.gmra.mrb[0].mxu0 %v473
    %v544 = vpop.f32.mrb[0].mxu0
    %v545 = vadd.f32 %v465, %v544
    %v546 = vpop.f32.mrb[0].mxu0
    %547 = vmatprep.mubr.f32.mxu0 0.0
    %548 = vmatmul.mubr.f32.gmra.mrb[0].mxu0 %v476
    %v549 = vpop.f32.mrb[0].mxu0
    %v550 = vadd.f32 %v470, %v549
    %v551 = vpop.f32.mrb[0].mxu0
    %552 = vdwg.mxu0
    %553 = vst [vmem:[%s15] sm:$0xff] %v545
    %554 = vst [vmem:[%s15 + $0x8] sm:$0xf] %v550
    %vm555 = vcmask 1043456
    %v556 = vsel %vm555, %v550, -inf
    %v557 = vmax.f32 %v545, %v556
    %v558 = vrot.slane %v557, 4
    %v559 = vmax.f32 %v557, %v558
    %v560 = vrot.slane %v559, 2
    %v561 = vmax.f32 %v559, %v560
    %v562 = vrot.slane %v561, 1
    %v563 = vmax.f32 %v561, %v562
    %v564 = vsub.f32 %v545, %v563
    %v565 = vsub.f32 %v550, %v563
    %v566 = vmul.f32 %v564, 1.442695
    %v567 = vpow.pop %v566
    %v568 = vmul.f32 %v565, 1.442695
    %v569 = vpow.pop %v568
    %v570 = vsel %vm555, %v569, 0.0
    %v571 = vadd.f32 %v567, %v570
    %v572 = vrot.slane %v571, 4
    %v573 = vadd.f32 %v571, %v572
    %v574 = vrot.slane %v573, 2
    %v575 = vadd.f32 %v573, %v574
    %v576 = vrot.slane %v575, 1
    %v577 = vadd.f32 %v575, %v576
    %v578 = vrcp.pop %v577
    %v579 = vmul.f32 %v567, %v578
    %v580 = vmul.f32 %v569, %v578
    %v581 = vld [vmem:[%s11] sm:$0xff]
    %v582 = vld [vmem:[%s11 + $0x8] sm:$0xff]
    %vm583 = vcmask 97280
    %v585 = vsel %vm583, %v581, 0
    %v588 = vsel %vm583, %v582, 0
    %v591 = vsel %vm555, %v580, 0
    %593 = vmatprep.subr.mxu0 0.0
    %594 = vmatpush1.msra.mxu0 %v579
    %595 = vmatprep.subr.mxu0 0.0
    %596 = vmatpush1.msra.mxu0 %v591
    %597 = vmatprep.subr.mxu0 0.0
    %598 = vmatpush1.msra.mxu0 0.0
    %599 = vmatprep.subr.mxu0 0.0
    %600 = vmatpush1.msra.mxu0 0.0
    %601 = vmatprep.subr.mxu0 0.0
    %602 = vmatpush1.msra.mxu0 0.0
    %603 = vmatprep.subr.mxu0 0.0
    %604 = vmatpush1.msra.mxu0 0.0
    %605 = vmatprep.subr.mxu0 0.0
    %606 = vmatpush1.msra.mxu0 0.0
    %607 = vmatprep.subr.mxu0 0.0
    %608 = vmatpush1.msra.mxu0 0.0
    %609 = vmatprep.subr.mxu0 0.0
    %610 = vmatpush1.msra.mxu0 0.0
    %611 = vmatprep.subr.mxu0 0.0
    %612 = vmatpush1.msra.mxu0 0.0
    %613 = vmatprep.subr.mxu0 0.0
    %614 = vmatpush1.msra.mxu0 0.0
    %615 = vmatprep.subr.mxu0 0.0
    %616 = vmatpush1.msra.mxu0 0.0
    %617 = vmatprep.subr.mxu0 0.0
    %618 = vmatpush1.msra.mxu0 0.0
    %619 = vmatprep.subr.mxu0 0.0
    %620 = vmatpush1.msra.mxu0 0.0
    %621 = vmatprep.subr.mxu0 0.0
    %622 = vmatpush1.msra.mxu0 0.0
    %623 = vmatprep.subr.mxu0 0.0
    %624 = vmatpush1.msra.mxu0 0.0
    %625 = vmatprep.subr.mxu0 0.0
    %626 = vmatpush1.msra.mxu0 0.0
    %627 = vmatprep.subr.mxu0 0.0
    %628 = vmatpush1.msra.mxu0 0.0
    %629 = vmatprep.subr.mxu0 0.0
    %630 = vmatpush1.msra.mxu0 0.0
    %631 = vmatprep.subr.mxu0 0.0
    %632 = vmatpush1.msra.mxu0 0.0
    %633 = vmatprep.subr.mxu0 0.0
    %634 = vmatpush1.msra.mxu0 0.0
    %635 = vmatprep.subr.mxu0 0.0
    %636 = vmatpush1.msra.mxu0 0.0
    %637 = vmatprep.subr.mxu0 0.0
    %638 = vmatpush1.msra.mxu0 0.0
    %639 = vmatprep.subr.mxu0 0.0
    %640 = vmatpush1.msra.mxu0 0.0
    %641 = vmatprep.subr.mxu0 0.0
    %642 = vmatpush1.msra.mxu0 0.0
    %643 = vmatprep.subr.mxu0 0.0
    %644 = vmatpush1.msra.mxu0 0.0
    %645 = vmatprep.subr.mxu0 0.0
    %646 = vmatpush1.msra.mxu0 0.0
    %647 = vmatprep.subr.mxu0 0.0
    %648 = vmatpush1.msra.mxu0 0.0
    %649 = vmatprep.subr.mxu0 0.0
    %650 = vmatpush1.msra.mxu0 0.0
    %651 = vmatprep.subr.mxu0 0.0
    %652 = vmatpush1.msra.mxu0 0.0
    %653 = vmatprep.subr.mxu0 0.0
    %654 = vmatpush1.msra.mxu0 0.0
    %655 = vmatprep.subr.mxu0 0.0
    %656 = vmatpush1.msra.mxu0 0.0
    %657 = vmatprep.mubr.f32.mxu0 0.0
    %658 = vmatmul.mubr.f32.gmra.mrb[0].mxu0 %v585
    %v659 = vpop.f32.mrb[0].mxu0
    %v660 = vadd.f32 0.0, %v659
    %v661 = vpop.f32.mrb[0].mxu0
    %662 = vmatprep.mubr.f32.mxu0 0.0
    %663 = vmatmul.mubr.f32.gmra.mrb[0].mxu0 %v588
    %v664 = vpop.f32.mrb[0].mxu0
    %v665 = vadd.f32 0.0, %v664
    %v666 = vpop.f32.mrb[0].mxu0
    %667 = vdwg.mxu0
    %v668 = vmin.f32 %v660, 0.0
    %v669 = vmin.f32 %v665, 0.0
    %v670 = vand.u32 2147483647, %v660
    %v671 = vand.u32 2147483647, %v665
    %v672 = vsub.f32 0.0, %v670
    %v673 = vsub.f32 0.0, %v671
    %v674 = vmul.f32 %v672, 1.442695
    %v675 = vpow.pop %v674
    %v676 = vmul.f32 %v673, 1.442695
    %v677 = vpow.pop %v676
    %v678 = vadd.f32 %v675, 1.0
    %v679 = vadd.f32 %v677, 1.0
    %v680 = vlog2.pop %v678
    %v681 = vmul.f32 %v680, 0.6931472
    %v682 = vlog2.pop %v679
    %v683 = vmul.f32 %v682, 0.6931472
    %v684 = vsub.f32 %v668, %v681
    %v685 = vsub.f32 %v669, %v683
    %686 = vst [vmem:[%s14] sm:$0xff] %v684
    %687 = vst [vmem:[%s14 + $0x8] sm:$0xff] %v685
    // Predicated region
    $region54: #{attention_forward.3} parent=1 // pred_check
      _
    $region55: #{attention_forward.3} parent=1 // pred_check_branch
      %689 = sbr.rel (0) target = $region57
    $region56: #{attention_forward.3} parent=1 // pred_region
      _
    $region57: #{attention_forward.3} parent=1 // pred_fallthru
      _
    // Predicated region
    $region58: #{attention_forward.3} parent=1 // pred_check
      _
    $region59: #{attention_forward.3} parent=1 // pred_check_branch
      %691 = sbr.rel (0) target = $region61
    $region60: #{attention_forward.3} parent=1 // pred_region
      _
    $region61: #{attention_forward.3} parent=1 // pred_fallthru
      _
    // Predicated region
    $region62: #{attention_forward.3} parent=1 // pred_check
      _
    $region63: #{attention_forward.3} parent=1 // pred_check_branch
      %693 = sbr.rel (0) target = $region65
    $region64: #{attention_forward.3} parent=1 // pred_region
      _
    $region65: #{attention_forward.3} parent=1 // pred_fallthru
      _
    // Predicated region
    $region66: #{attention_forward.3} parent=1 // pred_check
      _
    $region67: #{attention_forward.3} parent=1 // pred_check_branch
      %695 = sbr.rel (0) target = $region69
    $region68: #{attention_forward.3} parent=1 // pred_region
      _
    $region69: #{attention_forward.3} parent=1 // pred_fallthru
      _
    // Predicated region
    $region70: #{attention_forward.3} parent=1 // pred_check
      _
    $region71: #{attention_forward.3} parent=1 // pred_check_branch
      %697 = sbr.rel (0) target = $region73
    $region72: #{attention_forward.3} parent=1 // pred_region
      _
    $region73: #{attention_forward.3} parent=1 // pred_fallthru
      _
    // Predicated region
    $region74: #{attention_forward.3} parent=1 // pred_check
      _
    $region75: #{attention_forward.3} parent=1 // pred_check_branch
      %699 = sbr.rel (0) target = $region77
    $region76: #{attention_forward.3} parent=1 // pred_region
      _
    $region77: #{attention_forward.3} parent=1 // pred_fallthru
      _
    // Predicated region
    $region78: #{attention_forward.3} parent=1 // pred_check
      _
    $region79: #{attention_forward.3} parent=1 // pred_check_branch
      %701 = sbr.rel (0) target = $region81
    $region80: #{attention_forward.3} parent=1 // pred_region
      _
    $region81: #{attention_forward.3} parent=1 // pred_fallthru
      _
    // Predicated region
    $region82: #{attention_forward.3} parent=1 // pred_check
      _
    $region83: #{attention_forward.3} parent=1 // pred_check_branch
      %703 = sbr.rel (0) target = $region85
    $region84: #{attention_forward.3} parent=1 // pred_region
      _
    $region85: #{attention_forward.3} parent=1 // pred_fallthru
      _
    %704 = vsyncpa [#allocation3], 1

// kernel: attention_forward.2
$region0: #{attention_forward.2}
  #allocation0 [shape = 'u32[]', space=smem, size = 0x4, offset = 0x4, fixed_abs, tag = 'smem constant byte address 0x4 - core index']
  #allocation1 [shape = 'u32[144,128]{1,0:T(1,128)}', space=vmem, size = 0x12000, scoped, tag = 'internal scratch']
  %s0 = inlined_call_operand.vmem [shape: f32[32,128], index: 0, kind: input, shape index: {}]
  %s1 = inlined_call_operand.vmem [shape: f32[1,128], index: 1, kind: input, shape index: {}]
  %s2 = inlined_call_operand.vmem [shape: f32[1,128], index: 2, kind: input, shape index: {}]
  %s3 = inlined_call_operand.vmem [shape: f32[1,128], index: 3, kind: input, shape index: {}]
  %s4 = inlined_call_operand.vmem [shape: f32[128,2], index: 4, kind: input, shape index: {}]
  %s5 = inlined_call_operand.vmem [shape: f32[2,128], index: 5, kind: input, shape index: {}]
  %s6 = inlined_call_operand.vmem [shape: f32[2,18,32,32], index: 6, kind: input, shape index: {}]
  %s7 = inlined_call_operand.vmem [shape: f32[2,6,32,1], index: 7, kind: input, shape index: {}]
  %s8 = inlined_call_operand.vmem [shape: f32[2,6,32,1], index: 8, kind: input, shape index: {}]
  %s9 = inlined_call_operand.vmem [shape: f32[2,6,32,1], index: 9, kind: input, shape index: {}]
  %s10 = inlined_call_operand.vmem [shape: f32[2,6,32,128], index: 10, kind: input, shape index: {}]
  %s11 = inlined_call_operand.vmem [shape: f32[2,32,128], index: 11, kind: output, shape index: {}]
  %s12 = sld [smem:[#allocation0]]
  $region77: #{attention_forward.2} parent=0
    _
  %s14 = ssub.s32 1, %s12
  %s15 = scalar_select 0, %s14, %s12
  loop: start=0, step=1, limit=4
  $region2: #{attention_forward.2} parent=0 // loop_pre_header
    _
  $region3: #{attention_forward.2} parent=0 // loop_header
    %s17 = sphi 0, %s21
    %p18 = scmp.ge.s32.totalorder %s17, 4
    %s25 = sphi 0, %s25
    %s27 = sphi 0, %s25
    %s28 = sphi 0, %s27
    %s42 = sphi 0, %s28
    %s46 = sphi 0, %s46
    %s48 = sphi 0, %s46
    %s49 = sphi 0, %s48
    %s63 = sphi 0, %s49
    %s67 = sphi 0, %s67
    %s69 = sphi 0, %s67
    %s70 = sphi 0, %s69
    %s84 = sphi 0, %s70
    %s88 = sphi 0, %s88
    %s90 = sphi 0, %s88
    %s91 = sphi 0, %s90
    %s105 = sphi 0, %s91
    %s109 = sphi 0, %s109
    %s111 = sphi 0, %s109
    %s112 = sphi 0, %s111
    %s126 = sphi 0, %s112
    %s130 = sphi 0, %s130
    %s132 = sphi 0, %s130
    %s133 = sphi 0, %s132
    %s147 = sphi 0, %s133
    %s153 = sphi 0, %s155
    %s156 = sphi 0, %s153
    %s157 = sphi 0, %s156
    %s173 = sphi 0, %s157
    %s179 = sphi 0, %s181
    %s182 = sphi 0, %s179
    %s183 = sphi 0, %s182
    %s199 = sphi 0, %s183
    %s205 = sphi 0, %s207
    %s208 = sphi 0, %s205
    %s209 = sphi 0, %s208
    %s225 = sphi 0, %s209
    %s231 = sphi 0, %s233
    %s234 = sphi 0, %s231
    %s235 = sphi 0, %s234
    %s251 = sphi 0, %s235
    %s257 = sphi 0, %s259
    %s260 = sphi 0, %s257
    %s261 = sphi 0, %s260
    %s277 = sphi 0, %s261
    %s283 = sphi 0, %s285
    %s286 = sphi 0, %s283
    %s287 = sphi 0, %s286
    %s303 = sphi 0, %s287
  $region4: #{attention_forward.2} parent=0 // loop_header_branch
    %20 = sbr.rel (%p18) target = $region8
  $region5: #{attention_forward.2} parent=0 // loop_body
    %s22 = ssub.s32 %s17, 1
    %s23 = ssub.s32 %s17, 2
    %s24 = sadd.s32 %s17, 1
    %s26 = sadd.s32 %s25, 1
    %p29 = scmp.eq.s32.totalorder %s17, 1
    %p30 = scmp.ne.s32.totalorder %s25, %s27
    %p31 = scmp.eq.s32.totalorder %s17, 0
    %p32 = por %p30, %p31
    %p33 = scmp.ne.s32.totalorder %s25, %s27
    %p34 = scmp.eq.s32.totalorder %s22, 1
    %p35 = por %p33, %p34
    %p36 = scmp.ne.s32.totalorder %s27, %s28
    %p37 = scmp.eq.s32.totalorder %s22, 0
    %p38 = por %p36, %p37
    %p39 = scmp.ne.s32.totalorder %s27, %s28
    %p40 = scmp.eq.s32.totalorder %s23, 1
    %p41 = por %p39, %p40
    %p43 = scmp.ne.s32.totalorder %s28, %s42
    %p44 = scmp.eq.s32.totalorder %s23, 0
    %p45 = por %p43, %p44
    %s47 = sadd.s32 %s46, 1
    %p50 = scmp.eq.s32.totalorder %s17, 1
    %p51 = scmp.ne.s32.totalorder %s46, %s48
    %p52 = scmp.eq.s32.totalorder %s17, 0
    %p53 = por %p51, %p52
    %p54 = scmp.ne.s32.totalorder %s46, %s48
    %p55 = scmp.eq.s32.totalorder %s22, 1
    %p56 = por %p54, %p55
    %p57 = scmp.ne.s32.totalorder %s48, %s49
    %p58 = scmp.eq.s32.totalorder %s22, 0
    %p59 = por %p57, %p58
    %p60 = scmp.ne.s32.totalorder %s48, %s49
    %p61 = scmp.eq.s32.totalorder %s23, 1
    %p62 = por %p60, %p61
    %p64 = scmp.ne.s32.totalorder %s49, %s63
    %p65 = scmp.eq.s32.totalorder %s23, 0
    %p66 = por %p64, %p65
    %s68 = sadd.s32 %s67, 1
    %p71 = scmp.eq.s32.totalorder %s17, 1
    %p72 = scmp.ne.s32.totalorder %s67, %s69
    %p73 = scmp.eq.s32.totalorder %s17, 0
    %p74 = por %p72, %p73
    %p75 = scmp.ne.s32.totalorder %s67, %s69
    %p76 = scmp.eq.s32.totalorder %s22, 1
    %p77 = por %p75, %p76
    %p78 = scmp.ne.s32.totalorder %s69, %s70
    %p79 = scmp.eq.s32.totalorder %s22, 0
    %p80 = por %p78, %p79
    %p81 = scmp.ne.s32.totalorder %s69, %s70
    %p82 = scmp.eq.s32.totalorder %s23, 1
    %p83 = por %p81, %p82
    %p85 = scmp.ne.s32.totalorder %s70, %s84
    %p86 = scmp.eq.s32.totalorder %s23, 0
    %p87 = por %p85, %p86
    %s89 = sadd.s32 %s88, 1
    %p92 = scmp.eq.s32.totalorder %s17, 1
    %p93 = scmp.ne.s32.totalorder %s88, %s90
    %p94 = scmp.eq.s32.totalorder %s17, 0
    %p95 = por %p93, %p94
    %p96 = scmp.ne.s32.totalorder %s88, %s90
    %p97 = scmp.eq.s32.totalorder %s22, 1
    %p98 = por %p96, %p97
    %p99 = scmp.ne.s32.totalorder %s90, %s91
    %p100 = scmp.eq.s32.totalorder %s22, 0
    %p101 = por %p99, %p100
    %p102 = scmp.ne.s32.totalorder %s90, %s91
    %p103 = scmp.eq.s32.totalorder %s23, 1
    %p104 = por %p102, %p103
    %p106 = scmp.ne.s32.totalorder %s91, %s105
    %p107 = scmp.eq.s32.totalorder %s23, 0
    %p108 = por %p106, %p107
    %s110 = sadd.s32 %s109, 1
    %p113 = scmp.eq.s32.totalorder %s17, 1
    %p114 = scmp.ne.s32.totalorder %s109, %s111
    %p115 = scmp.eq.s32.totalorder %s17, 0
    %p116 = por %p114, %p115
    %p117 = scmp.ne.s32.totalorder %s109, %s111
    %p118 = scmp.eq.s32.totalorder %s22, 1
    %p119 = por %p117, %p118
    %p120 = scmp.ne.s32.totalorder %s111, %s112
    %p121 = scmp.eq.s32.totalorder %s22, 0
    %p122 = por %p120, %p121
    %p123 = scmp.ne.s32.totalorder %s111, %s112
    %p124 = scmp.eq.s32.totalorder %s23, 1
    %p125 = por %p123, %p124
    %p127 = scmp.ne.s32.totalorder %s112, %s126
    %p128 = scmp.eq.s32.totalorder %s23, 0
    %p129 = por %p127, %p128
    %s131 = sadd.s32 %s130, 1
    %p134 = scmp.eq.s32.totalorder %s17, 1
    %p135 = scmp.ne.s32.totalorder %s130, %s132
    %p136 = scmp.eq.s32.totalorder %s17, 0
    %p137 = por %p135, %p136
    %p138 = scmp.ne.s32.totalorder %s130, %s132
    %p139 = scmp.eq.s32.totalorder %s22, 1
    %p140 = por %p138, %p139
    %p141 = scmp.ne.s32.totalorder %s132, %s133
    %p142 = scmp.eq.s32.totalorder %s22, 0
    %p143 = por %p141, %p142
    %p144 = scmp.ne.s32.totalorder %s132, %s133
    %p145 = scmp.eq.s32.totalorder %s23, 1
    %p146 = por %p144, %p145
    %p148 = scmp.ne.s32.totalorder %s133, %s147
    %p149 = scmp.eq.s32.totalorder %s23, 0
    %p150 = por %p148, %p149
    %s151 = ssub.s32 %s17, %s24
    %p152 = scmp.eq.s32.totalorder %s151, 0
    %s154 = sadd.s32 %s153, 1
    %s155 = scalar_select %p152, %s153, %s154
    %p158 = pneg %p152
    %p159 = scmp.eq.s32.totalorder %s17, 1
    %p160 = por %p158, %p159
    %p161 = scmp.ne.s32.totalorder %s153, %s156
    %p162 = scmp.eq.s32.totalorder %s17, 0
    %p163 = por %p161, %p162
    %p164 = scmp.ne.s32.totalorder %s153, %s156
    %p165 = scmp.eq.s32.totalorder %s22, 1
    %p166 = por %p164, %p165
    %p167 = scmp.ne.s32.totalorder %s156, %s157
    %p168 = scmp.eq.s32.totalorder %s22, 0
    %p169 = por %p167, %p168
    %p170 = scmp.ne.s32.totalorder %s156, %s157
    %p171 = scmp.eq.s32.totalorder %s23, 1
    %p172 = por %p170, %p171
    %p174 = scmp.ne.s32.totalorder %s157, %s173
    %p175 = scmp.eq.s32.totalorder %s23, 0
    %p176 = por %p174, %p175
    %s177 = ssub.s32 %s17, %s24
    %p178 = scmp.eq.s32.totalorder %s177, 0
    %s180 = sadd.s32 %s179, 1
    %s181 = scalar_select %p178, %s179, %s180
    %p184 = pneg %p178
    %p185 = scmp.eq.s32.totalorder %s17, 1
    %p186 = por %p184, %p185
    %p187 = scmp.ne.s32.totalorder %s179, %s182
    %p188 = scmp.eq.s32.totalorder %s17, 0
    %p189 = por %p187, %p188
    %p190 = scmp.ne.s32.totalorder %s179, %s182
    %p191 = scmp.eq.s32.totalorder %s22, 1
    %p192 = por %p190, %p191
    %p193 = scmp.ne.s32.totalorder %s182, %s183
    %p194 = scmp.eq.s32.totalorder %s22, 0
    %p195 = por %p193, %p194
    %p196 = scmp.ne.s32.totalorder %s182, %s183
    %p197 = scmp.eq.s32.totalorder %s23, 1
    %p198 = por %p196, %p197
    %p200 = scmp.ne.s32.totalorder %s183, %s199
    %p201 = scmp.eq.s32.totalorder %s23, 0
    %p202 = por %p200, %p201
    %s203 = ssub.s32 %s17, %s24
    %p204 = scmp.eq.s32.totalorder %s203, 0
    %s206 = sadd.s32 %s205, 1
    %s207 = scalar_select %p204, %s205, %s206
    %p210 = pneg %p204
    %p211 = scmp.eq.s32.totalorder %s17, 1
    %p212 = por %p210, %p211
    %p213 = scmp.ne.s32.totalorder %s205, %s208
    %p214 = scmp.eq.s32.totalorder %s17, 0
    %p215 = por %p213, %p214
    %p216 = scmp.ne.s32.totalorder %s205, %s208
    %p217 = scmp.eq.s32.totalorder %s22, 1
    %p218 = por %p216, %p217
    %p219 = scmp.ne.s32.totalorder %s208, %s209
    %p220 = scmp.eq.s32.totalorder %s22, 0
    %p221 = por %p219, %p220
    %p222 = scmp.ne.s32.totalorder %s208, %s209
    %p223 = scmp.eq.s32.totalorder %s23, 1
    %p224 = por %p222, %p223
    %p226 = scmp.ne.s32.totalorder %s209, %s225
    %p227 = scmp.eq.s32.totalorder %s23, 0
    %p228 = por %p226, %p227
    %s229 = ssub.s32 %s17, %s24
    %p230 = scmp.eq.s32.totalorder %s229, 0
    %s232 = sadd.s32 %s231, 1
    %s233 = scalar_select %p230, %s231, %s232
    %p236 = pneg %p230
    %p237 = scmp.eq.s32.totalorder %s17, 1
    %p238 = por %p236, %p237
    %p239 = scmp.ne.s32.totalorder %s231, %s234
    %p240 = scmp.eq.s32.totalorder %s17, 0
    %p241 = por %p239, %p240
    %p242 = scmp.ne.s32.totalorder %s231, %s234
    %p243 = scmp.eq.s32.totalorder %s22, 1
    %p244 = por %p242, %p243
    %p245 = scmp.ne.s32.totalorder %s234, %s235
    %p246 = scmp.eq.s32.totalorder %s22, 0
    %p247 = por %p245, %p246
    %p248 = scmp.ne.s32.totalorder %s234, %s235
    %p249 = scmp.eq.s32.totalorder %s23, 1
    %p250 = por %p248, %p249
    %p252 = scmp.ne.s32.totalorder %s235, %s251
    %p253 = scmp.eq.s32.totalorder %s23, 0
    %p254 = por %p252, %p253
    %s255 = ssub.s32 %s17, %s24
    %p256 = scmp.eq.s32.totalorder %s255, 0
    %s258 = sadd.s32 %s257, 1
    %s259 = scalar_select %p256, %s257, %s258
    %p262 = pneg %p256
    %p263 = scmp.eq.s32.totalorder %s17, 1
    %p264 = por %p262, %p263
    %p265 = scmp.ne.s32.totalorder %s257, %s260
    %p266 = scmp.eq.s32.totalorder %s17, 0
    %p267 = por %p265, %p266
    %p268 = scmp.ne.s32.totalorder %s257, %s260
    %p269 = scmp.eq.s32.totalorder %s22, 1
    %p270 = por %p268, %p269
    %p271 = scmp.ne.s32.totalorder %s260, %s261
    %p272 = scmp.eq.s32.totalorder %s22, 0
    %p273 = por %p271, %p272
    %p274 = scmp.ne.s32.totalorder %s260, %s261
    %p275 = scmp.eq.s32.totalorder %s23, 1
    %p276 = por %p274, %p275
    %p278 = scmp.ne.s32.totalorder %s261, %s277
    %p279 = scmp.eq.s32.totalorder %s23, 0
    %p280 = por %p278, %p279
    %s281 = ssub.s32 %s17, %s24
    %p282 = scmp.eq.s32.totalorder %s281, 0
    %s284 = sadd.s32 %s283, 1
    %s285 = scalar_select %p282, %s283, %s284
    %p288 = pneg %p282
    %p289 = scmp.eq.s32.totalorder %s17, 1
    %p290 = por %p288, %p289
    %p291 = scmp.ne.s32.totalorder %s283, %s286
    %p292 = scmp.eq.s32.totalorder %s17, 0
    %p293 = por %p291, %p292
    %p294 = scmp.ne.s32.totalorder %s283, %s286
    %p295 = scmp.eq.s32.totalorder %s22, 1
    %p296 = por %p294, %p295
    %p297 = scmp.ne.s32.totalorder %s286, %s287
    %p298 = scmp.eq.s32.totalorder %s22, 0
    %p299 = por %p297, %p298
    %p300 = scmp.ne.s32.totalorder %s286, %s287
    %p301 = scmp.eq.s32.totalorder %s23, 1
    %p302 = por %p300, %p301
    %p304 = scmp.ne.s32.totalorder %s287, %s303
    %p305 = scmp.eq.s32.totalorder %s23, 0
    %p306 = por %p304, %p305
    %p307 = scmp.le.s32.totalorder 1, %s17
    %p308 = scmp.lt.s32.totalorder %s17, 3
    %p309 = pnand %p307, %p308
    %p310 = pneg %p309
    // Predicated region
    $region9: #{attention_forward.2} parent=5 // pred_check
      _
    $region10: #{attention_forward.2} parent=5 // pred_check_branch
      %312 = sbr.rel (%p309) target = $region12
    $region11: #{attention_forward.2} parent=5 // pred_region
      %s313 = ssub.s32 %s17, 1
      // Predicated region
      $region13: #{attention_forward.2} parent=11 // pred_check
        %p314 = pneg %p38
      $region14: #{attention_forward.2} parent=11 // pred_check_branch
        %316 = sbr.rel (%p314) target = $region16
      $region15: #{attention_forward.2} parent=11 // pred_region
        _
      $region16: #{attention_forward.2} parent=11 // pred_fallthru
        _
      // Predicated region
      $region17: #{attention_forward.2} parent=11 // pred_check
        %p317 = pneg %p59
      $region18: #{attention_forward.2} parent=11 // pred_check_branch
        %319 = sbr.rel (%p317) target = $region20
      $region19: #{attention_forward.2} parent=11 // pred_region
        _
      $region20: #{attention_forward.2} parent=11 // pred_fallthru
        _
      // Predicated region
      $region21: #{attention_forward.2} parent=11 // pred_check
        %p320 = pneg %p80
      $region22: #{attention_forward.2} parent=11 // pred_check_branch
        %322 = sbr.rel (%p320) target = $region24
      $region23: #{attention_forward.2} parent=11 // pred_region
        _
      $region24: #{attention_forward.2} parent=11 // pred_fallthru
        _
      // Predicated region
      $region25: #{attention_forward.2} parent=11 // pred_check
        %p323 = pneg %p101
      $region26: #{attention_forward.2} parent=11 // pred_check_branch
        %325 = sbr.rel (%p323) target = $region28
      $region27: #{attention_forward.2} parent=11 // pred_region
        _
      $region28: #{attention_forward.2} parent=11 // pred_fallthru
        _
      // Predicated region
      $region29: #{attention_forward.2} parent=11 // pred_check
        %p326 = pneg %p122
      $region30: #{attention_forward.2} parent=11 // pred_check_branch
        %328 = sbr.rel (%p326) target = $region32
      $region31: #{attention_forward.2} parent=11 // pred_region
        _
      $region32: #{attention_forward.2} parent=11 // pred_fallthru
        _
      // Predicated region
      $region33: #{attention_forward.2} parent=11 // pred_check
        %p329 = pneg %p143
      $region34: #{attention_forward.2} parent=11 // pred_check_branch
        %331 = sbr.rel (%p329) target = $region36
      $region35: #{attention_forward.2} parent=11 // pred_region
        _
      $region36: #{attention_forward.2} parent=11 // pred_fallthru
        _
    $region12: #{attention_forward.2} parent=5 // pred_fallthru
      _
    %p332 = scmp.lt.s32.totalorder %s17, 2
    // Predicated region
    $region37: #{attention_forward.2} parent=5 // pred_check
      %p333 = pneg %p332
    $region38: #{attention_forward.2} parent=5 // pred_check_branch
      %335 = sbr.rel (%p333) target = $region40
    $region39: #{attention_forward.2} parent=5 // pred_region
      // Predicated region
      $region41: #{attention_forward.2} parent=39 // pred_check
        %p336 = pneg %p163
      $region42: #{attention_forward.2} parent=39 // pred_check_branch
        %338 = sbr.rel (%p336) target = $region44
      $region43: #{attention_forward.2} parent=39 // pred_region
        %p339 = scmp.lt.s32.totalorder %s17, 1
        %s340 = scalar_select %p339, %s17, 1
        %s341 = smul.addr %s340, 72
        %s342 = smul.addr %s341, 8
        %s343 = scalar_lea.vmem %s6, %s342
      $region44: #{attention_forward.2} parent=39 // pred_fallthru
        _
      // Predicated region
      $region45: #{attention_forward.2} parent=39 // pred_check
        %p344 = pneg %p189
      $region46: #{attention_forward.2} parent=39 // pred_check_branch
        %346 = sbr.rel (%p344) target = $region48
      $region47: #{attention_forward.2} parent=39 // pred_region
        %p347 = scmp.lt.s32.totalorder %s17, 1
        %s348 = scalar_select %p347, %s17, 1
        %s349 = smul.addr %s348, 24
        %s350 = smul.addr %s349, 8
        %s351 = scalar_lea.vmem %s7, %s350
      $region48: #{attention_forward.2} parent=39 // pred_fallthru
        _
      // Predicated region
      $region49: #{attention_forward.2} parent=39 // pred_check
        %p352 = pneg %p215
      $region50: #{attention_forward.2} parent=39 // pred_check_branch
        %354 = sbr.rel (%p352) target = $region52
      $region51: #{attention_forward.2} parent=39 // pred_region
        %p355 = scmp.lt.s32.totalorder %s17, 1
        %s356 = scalar_select %p355, %s17, 1
        %s357 = smul.addr %s356, 24
        %s358 = smul.addr %s357, 8
        %s359 = scalar_lea.vmem %s8, %s358
      $region52: #{attention_forward.2} parent=39 // pred_fallthru
        _
      // Predicated region
      $region53: #{attention_forward.2} parent=39 // pred_check
        %p360 = pneg %p241
      $region54: #{attention_forward.2} parent=39 // pred_check_branch
        %362 = sbr.rel (%p360) target = $region56
      $region55: #{attention_forward.2} parent=39 // pred_region
        %p363 = scmp.lt.s32.totalorder %s17, 1
        %s364 = scalar_select %p363, %s17, 1
        %s365 = smul.addr %s364, 24
        %s366 = smul.addr %s365, 8
        %s367 = scalar_lea.vmem %s9, %s366
      $region56: #{attention_forward.2} parent=39 // pred_fallthru
        _
      // Predicated region
      $region57: #{attention_forward.2} parent=39 // pred_check
        %p368 = pneg %p267
      $region58: #{attention_forward.2} parent=39 // pred_check_branch
        %370 = sbr.rel (%p368) target = $region60
      $region59: #{attention_forward.2} parent=39 // pred_region
        %p371 = scmp.lt.s32.totalorder %s17, 1
        %s372 = scalar_select %p371, %s17, 1
        %s373 = smul.addr %s372, 24
        %s374 = smul.addr %s373, 8
        %s375 = scalar_lea.vmem %s10, %s374
      $region60: #{attention_forward.2} parent=39 // pred_fallthru
        _
    $region40: #{attention_forward.2} parent=5 // pred_fallthru
      _
    %p376 = scmp.le.s32.totalorder 1, %s17
    %p377 = scmp.lt.s32.totalorder %s17, 3
    %p378 = pnand %p376, %p377
    %p379 = pneg %p378
    // Predicated region
    $region61: #{attention_forward.2} parent=5 // pred_check
      _
    $region62: #{attention_forward.2} parent=5 // pred_check_branch
      %381 = sbr.rel (%p378) target = $region64
    $region63: #{attention_forward.2} parent=5 // pred_region
      %s382 = ssub.s32 %s17, 1
      %p383 = pneg %p38
      %p384 = pneg %p35
      %p385 = pneg %p59
      %p386 = pneg %p56
      %p387 = pneg %p80
      %p388 = pneg %p77
      %p389 = pneg %p101
      %p390 = pneg %p98
      %p391 = pneg %p122
      %p392 = pneg %p119
      %p393 = pneg %p143
      %p394 = pneg %p140
      %p395 = scmp.lt.s32.totalorder %s22, 1
      %s396 = scalar_select %p395, %s22, 1
      %s397 = smul.addr %s396, 72
      %s398 = smul.addr %s397, 8
      %s399 = scalar_lea.vmem %s6, %s398
      %p400 = pneg %p169
      %p401 = pneg %p166
      %p402 = scmp.lt.s32.totalorder %s22, 1
      %s403 = scalar_select %p402, %s22, 1
      %s404 = smul.addr %s403, 24
      %s405 = smul.addr %s404, 8
      %s406 = scalar_lea.vmem %s7, %s405
      %p407 = pneg %p195
      %p408 = pneg %p192
      %p409 = scmp.lt.s32.totalorder %s22, 1
      %s410 = scalar_select %p409, %s22, 1
      %s411 = smul.addr %s410, 24
      %s412 = smul.addr %s411, 8
      %s413 = scalar_lea.vmem %s8, %s412
      %p414 = pneg %p221
      %p415 = pneg %p218
      %p416 = scmp.lt.s32.totalorder %s22, 1
      %s417 = scalar_select %p416, %s22, 1
      %s418 = smul.addr %s417, 24
      %s419 = smul.addr %s418, 8
      %s420 = scalar_lea.vmem %s9, %s419
      %p421 = pneg %p247
      %p422 = pneg %p244
      %p423 = scmp.lt.s32.totalorder %s22, 1
      %s424 = scalar_select %p423, %s22, 1
      %s425 = smul.addr %s424, 24
      %s426 = smul.addr %s425, 8
      %s427 = scalar_lea.vmem %s10, %s426
      %p428 = pneg %p273
      %p429 = pneg %p270
      %p430 = pneg %p299
      %p431 = pneg %p296
      %p432 = scmp.lt.s32.totalorder %s22, 1
      %s433 = scalar_select %p432, %s22, 1
      %s434 = smul.addr %s433, 4
      %s435 = smul.addr %s434, 8
      %s436 = scalar_lea.vmem %s11, %s435
      %p437 = scmp.lt.s32.totalorder %s22, 1
      %s438 = scalar_select %p437, %s22, 1
      %s439 = smul.addr %s438, 72
      %s440 = smul.addr %s439, 8
      %s441 = scalar_lea.vmem %s6, %s440
      %p442 = scmp.lt.s32.totalorder %s22, 1
      %s443 = scalar_select %p442, %s22, 1
      %s444 = smul.addr %s443, 24
      %s445 = smul.addr %s444, 8
      %s446 = scalar_lea.vmem %s7, %s445
      %p447 = scmp.lt.s32.totalorder %s22, 1
      %s448 = scalar_select %p447, %s22, 1
      %s449 = smul.addr %s448, 24
      %s450 = smul.addr %s449, 8
      %s451 = scalar_lea.vmem %s8, %s450
      %p452 = scmp.lt.s32.totalorder %s22, 1
      %s453 = scalar_select %p452, %s22, 1
      %s454 = smul.addr %s453, 24
      %s455 = smul.addr %s454, 8
      %s456 = scalar_lea.vmem %s9, %s455
      %p457 = scmp.lt.s32.totalorder %s22, 1
      %s458 = scalar_select %p457, %s22, 1
      %s459 = smul.addr %s458, 24
      %s460 = smul.addr %s459, 8
      %s461 = scalar_lea.vmem %s10, %s460
      %p462 = scmp.lt.s32.totalorder %s22, 1
      %s463 = scalar_select %p462, %s22, 1
      %s464 = smul.addr %s463, 4
      %s465 = smul.addr %s464, 8
      %s466 = scalar_lea.vmem %s11, %s465
      %v467 = vld [vmem:[%s1] sm:$0x1]
      %v468 = vld [vmem:[%s2] sm:$0x1]
      %v469 = vld [vmem:[%s3] sm:$0x1]
      %v470 = vld [vmem:[%s4] sm:$0xff]
      %v471 = vld [vmem:[%s4 + $0x8] sm:$0xff]
      %v472 = vld [vmem:[%s4 + $0x10] sm:$0xff]
      %v473 = vld [vmem:[%s4 + $0x18] sm:$0xff]
      %v474 = vld [vmem:[%s4 + $0x20] sm:$0xff]
      %v475 = vld [vmem:[%s4 + $0x28] sm:$0xff]
      %v476 = vld [vmem:[%s4 + $0x30] sm:$0xff]
      %v477 = vld [vmem:[%s4 + $0x38] sm:$0xff]
      %v478 = vld [vmem:[%s4 + $0x40] sm:$0xff]
      %v479 = vld [vmem:[%s4 + $0x48] sm:$0xff]
      %v480 = vld [vmem:[%s4 + $0x50] sm:$0xff]
      %v481 = vld [vmem:[%s4 + $0x58] sm:$0xff]
      %v482 = vld [vmem:[%s4 + $0x60] sm:$0xff]
      %v483 = vld [vmem:[%s4 + $0x68] sm:$0xff]
      %v484 = vld [vmem:[%s4 + $0x70] sm:$0xff]
      %v485 = vld [vmem:[%s4 + $0x78] sm:$0xff]
      %v486 = vld [vmem:[%s5] sm:$0x3]
      %v487 = vld [vmem:[%s0] sm:$0xff]
      %v488 = vld [vmem:[%s0 + $0x8] sm:$0xff]
      %v489 = vld [vmem:[%s0 + $0x10] sm:$0xff]
      %v490 = vld [vmem:[%s0 + $0x18] sm:$0xff]
      %v492 = vlaneseq
      %v493 = vshrl.u32 %v492, 7
      %v494 = vsub.s32 0, %v493
      %v495 = vrot.slane %v467, %v494
      %v497 = vmul.f32 %v487, %v495
      %v498 = vmul.f32 %v488, %v495
      %v499 = vmul.f32 %v489, %v495
      %v500 = vmul.f32 %v490, %v495
      %501 = vrot.lane.b32.xlu0 %v497, 1
      %v502 = vpop.permute.xlu0 %501
      %503 = vrot.lane.b32.xlu0 %v498, 1
      %v504 = vpop.permute.xlu0 %503
      %505 = vrot.lane.b32.xlu0 %v499, 1
      %v506 = vpop.permute.xlu0 %505
      %507 = vrot.lane.b32.xlu0 %v500, 1
      %v508 = vpop.permute.xlu0 %507
      %v510 = vlaneseq
      %v511 = vshrl.u32 %v510, 7
      %v512 = vsub.s32 0, %v511
      %v513 = vrot.slane %v468, %v512
      %v515 = vmul.f32 %v502, %v513
      %v516 = vmul.f32 %v504, %v513
      %v517 = vmul.f32 %v506, %v513
      %v518 = vmul.f32 %v508, %v513
      %519 = vrot.lane.b32.xlu0 %v497, 127
      %v520 = vpop.permute.xlu0 %519
      %521 = vrot.lane.b32.xlu0 %v498, 127
      %v522 = vpop.permute.xlu0 %521
      %523 = vrot.lane.b32.xlu0 %v499, 127
      %v524 = vpop.permute.xlu0 %523
      %525 = vrot.lane.b32.xlu0 %v500, 127
      %v526 = vpop.permute.xlu0 %525
      %v528 = vlaneseq
      %v529 = vshrl.u32 %v528, 7
      %v530 = vsub.s32 0, %v529
      %v531 = vrot.slane %v469, %v530
      %v533 = vmul.f32 %v520, %v531
      %v534 = vmul.f32 %v522, %v531
      %v535 = vmul.f32 %v524, %v531
      %v536 = vmul.f32 %v526, %v531
      %v537 = vld [vmem:[%s441] sm:$0xff]
      %v538 = vld [vmem:[%s441 + $0x8] sm:$0xff]
      %v539 = vld [vmem:[%s441 + $0x10] sm:$0xff]
      %v540 = vld [vmem:[%s441 + $0x18] sm:$0xff]
      %s541 = scalar_lea.vmem %s441, 32
      %v542 = vld [vmem:[%s541] sm:$0xff]
      %v543 = vld [vmem:[%s541 + $0x8] sm:$0xff]
      %v544 = vld [vmem:[%s541 + $0x10] sm:$0xff]
      %v545 = vld [vmem:[%s541 + $0x18] sm:$0xff]
      %vm546 = vcmask 261120
      %v548 = vsel %vm546, %v542, 0
      %v551 = vsel %vm546, %v543, 0
      %v554 = vsel %vm546, %v544, 0
      %v557 = vsel %vm546, %v545, 0
      %559 = vmatprep.subr.mxu0 0.0
      %560 = vmatpush1.msra.mxu0 %v497
      %561 = vmatprep.subr.mxu0 0.0
      %562 = vmatpush1.msra.mxu0 %v498
      %563 = vmatprep.subr.mxu0 0.0
      %564 = vmatpush1.msra.mxu0 %v499
      %565 = vmatprep.subr.mxu0 0.0
      %566 = vmatpush1.msra.mxu0 %v500
      %567 = vmatprep.subr.mxu0 0.0
      %568 = vmatpush1.msra.mxu0 0.0
      %569 = vmatprep.subr.mxu0 0.0
      %570 = vmatpush1.msra.mxu0 0.0
      %571 = vmatprep.subr.mxu0 0.0
      %572 = vmatpush1.msra.mxu0 0.0
      %573 = vmatprep.subr.mxu0 0.0
      %574 = vmatpush1.msra.mxu0 0.0
      %575 = vmatprep.subr.mxu0 0.0
      %576 = vmatpush1.msra.mxu0 0.0
      %577 = vmatprep.subr.mxu0 0.0
      %578 = vmatpush1.msra.mxu0 0.0
      %579 = vmatprep.subr.mxu0 0.0
      %580 = vmatpush1.msra.mxu0 0.0
      %581 = vmatprep.subr.mxu0 0.0
      %582 = vmatpush1.msra.mxu0 0.0
      %583 = vmatprep.subr.mxu0 0.0
      %584 = vmatpush1.msra.mxu0 0.0
      %585 = vmatprep.subr.mxu0 0.0
      %586 = vmatpush1.msra.mxu0 0.0
      %587 = vmatprep.subr.mxu0 0.0
      %588 = vmatpush1.msra.mxu0 0.0
      %589 = vmatprep.subr.mxu0 0.0
      %590 = vmatpush1.msra.mxu0 0.0
      %591 = vmatprep.subr.mxu0 0.0
      %592 = vmatpush1.msra.mxu0 0.0
      %593 = vmatprep.subr.mxu0 0.0
      %594 = vmatpush1.msra.mxu0 0.0
      %595 = vmatprep.subr.mxu0 0.0
      %596 = vmatpush1.msra.mxu0 0.0
      %597 = vmatprep.subr.mxu0 0.0
      %598 = vmatpush1.msra.mxu0 0.0
      %599 = vmatprep.subr.mxu0 0.0
      %600 = vmatpush1.msra.mxu0 0.0
      %601 = vmatprep.subr.mxu0 0.0
      %602 = vmatpush1.msra.mxu0 0.0
      %603 = vmatprep.subr.mxu0 0.0
      %604 = vmatpush1.msra.mxu0 0.0
      %605 = vmatprep.subr.mxu0 0.0
      %606 = vmatpush1.msra.mxu0 0.0
      %607 = vmatprep.subr.mxu0 0.0
      %608 = vmatpush1.msra.mxu0 0.0
      %609 = vmatprep.subr.mxu0 0.0
      %610 = vmatpush1.msra.mxu0 0.0
      %611 = vmatprep.subr.mxu0 0.0
      %612 = vmatpush1.msra.mxu0 0.0
      %613 = vmatprep.subr.mxu0 0.0
      %614 = vmatpush1.msra.mxu0 0.0
      %615 = vmatprep.subr.mxu0 0.0
      %616 = vmatpush1.msra.mxu0 0.0
      %617 = vmatprep.subr.mxu0 0.0
      %618 = vmatpush1.msra.mxu0 0.0
      %619 = vmatprep.subr.mxu0 0.0
      %620 = vmatpush1.msra.mxu0 0.0
      %621 = vmatprep.subr.mxu0 0.0
      %622 = vmatpush1.msra.mxu0 0.0
      %623 = vmatprep.mubr.f32.mxu0 0.0
      %624 = vmatmul.mubr.f32.gmra.mrb[0].mxu0 %v548
      %v625 = vpop.f32.mrb[0].mxu0
      %v626 = vadd.f32 0.0, %v625
      %v627 = vpop.f32.mrb[0].mxu0
      %628 = vmatprep.mubr.f32.mxu0 0.0
      %629 = vmatmul.mubr.f32.gmra.mrb[0].mxu0 %v551
      %v630 = vpop.f32.mrb[0].mxu0
      %v631 = vadd.f32 0.0, %v630
      %v632 = vpop.f32.mrb[0].mxu0
      %633 = vmatprep.mubr.f32.mxu0 0.0
      %634 = vmatmul.mubr.f32.gmra.mrb[0].mxu0 %v554
      %v635 = vpop.f32.mrb[0].mxu0
      %v636 = vadd.f32 0.0, %v635
      %v637 = vpop.f32.mrb[0].mxu0
      %638 = vmatprep.mubr.f32.mxu0 0.0
      %639 = vmatmul.mubr.f32.gmra.mrb[0].mxu0 %v557
      %v640 = vpop.f32.mrb[0].mxu0
      %v641 = vadd.f32 0.0, %v640
      %v642 = vpop.f32.mrb[0].mxu0
      %643 = vdwg.mxu0
      %v645 = vsel %vm546, %v537, 0
      %v648 = vsel %vm546, %v538, 0
      %v651 = vsel %vm546, %v539, 0
      %v654 = vsel %vm546, %v540, 0
      %656 = vmatprep.subr.mxu0 0.0
      %657 = vmatpush1.msra.mxu0 %v515
      %658 = vmatprep.subr.mxu0 0.0
      %659 = vmatpush1.msra.mxu0 %v516
      %660 = vmatprep.subr.mxu0 0.0
      %661 = vmatpush1.msra.mxu0 %v517
      %662 = vmatprep.subr.mxu0 0.0
      %663 = vmatpush1.msra.mxu0 %v518
      %664 = vmatprep.subr.mxu0 0.0
      %665 = vmatpush1.msra.mxu0 0.0
      %666 = vmatprep.subr.mxu0 0.0
      %667 = vmatpush1.msra.mxu0 0.0
      %668 = vmatprep.subr.mxu0 0.0
      %669 = vmatpush1.msra.mxu0 0.0
      %670 = vmatprep.subr.mxu0 0.0
      %671 = vmatpush1.msra.mxu0 0.0
      %672 = vmatprep.subr.mxu0 0.0
      %673 = vmatpush1.msra.mxu0 0.0
      %674 = vmatprep.subr.mxu0 0.0
      %675 = vmatpush1.msra.mxu0 0.0
      %676 = vmatprep.subr.mxu0 0.0
      %677 = vmatpush1.msra.mxu0 0.0
      %678 = vmatprep.subr.mxu0 0.0
      %679 = vmatpush1.msra.mxu0 0.0
      %680 = vmatprep.subr.mxu0 0.0
      %681 = vmatpush1.msra.mxu0 0.0
      %682 = vmatprep.subr.mxu0 0.0
      %683 = vmatpush1.msra.mxu0 0.0
      %684 = vmatprep.subr.mxu0 0.0
      %685 = vmatpush1.msra.mxu0 0.0
      %686 = vmatprep.subr.mxu0 0.0
      %687 = vmatpush1.msra.mxu0 0.0
      %688 = vmatprep.subr.mxu0 0.0
      %689 = vmatpush1.msra.mxu0 0.0
      %690 = vmatprep.subr.mxu0 0.0
      %691 = vmatpush1.msra.mxu0 0.0
      %692 = vmatprep.subr.mxu0 0.0
      %693 = vmatpush1.msra.mxu0 0.0
      %694 = vmatprep.subr.mxu0 0.0
      %695 = vmatpush1.msra.mxu0 0.0
      %696 = vmatprep.subr.mxu0 0.0
      %697 = vmatpush1.msra.mxu0 0.0
      %698 = vmatprep.subr.mxu0 0.0
      %699 = vmatpush1.msra.mxu0 0.0
      %700 = vmatprep.subr.mxu0 0.0
      %701 = vmatpush1.msra.mxu0 0.0
      %702 = vmatprep.subr.mxu0 0.0
      %703 = vmatpush1.msra.mxu0 0.0
      %704 = vmatprep.subr.mxu0 0.0
      %705 = vmatpush1.msra.mxu0 0.0
      %706 = vmatprep.subr.mxu0 0.0
      %707 = vmatpush1.msra.mxu0 0.0
      %708 = vmatprep.subr.mxu0 0.0
      %709 = vmatpush1.msra.mxu0 0.0
      %710 = vmatprep.subr.mxu0 0.0
      %711 = vmatpush1.msra.mxu0 0.0
      %712 = vmatprep.subr.mxu0 0.0
      %713 = vmatpush1.msra.mxu0 0.0
      %714 = vmatprep.subr.mxu0 0.0
      %715 = vmatpush1.msra.mxu0 0.0
      %716 = vmatprep.subr.mxu0 0.0
      %717 = vmatpush1.msra.mxu0 0.0
      %718 = vmatprep.subr.mxu0 0.0
      %719 = vmatpush1.msra.mxu0 0.0
      %720 = vmatprep.mubr.f32.mxu0 0.0
      %721 = vmatmul.mubr.f32.gmra.mrb[0].mxu0 %v645
      %v722 = vpop.f32.mrb[0].mxu0
      %v723 = vadd.f32 %v626, %v722
      %v724 = vpop.f32.mrb[0].mxu0
      %725 = vmatprep.mubr.f32.mxu0 0.0
      %726 = vmatmul.mubr.f32.gmra.mrb[0].mxu0 %v648
      %v727 = vpop.f32.mrb[0].mxu0
      %v728 = vadd.f32 %v631, %v727
      %v729 = vpop.f32.mrb[0].mxu0
      %730 = vmatprep.mubr.f32.mxu0 0.0
      %731 = vmatmul.mubr.f32.gmra.mrb[0].mxu0 %v651
      %v732 = vpop.f32.mrb[0].mxu0
      %v733 = vadd.f32 %v636, %v732
      %v734 = vpop.f32.mrb[0].mxu0
      %735 = vmatprep.mubr.f32.mxu0 0.0
      %736 = vmatmul.mubr.f32.gmra.mrb[0].mxu0 %v654
      %v737 = vpop.f32.mrb[0].mxu0
      %v738 = vadd.f32 %v641, %v737
      %v739 = vpop.f32.mrb[0].mxu0
      %740 = vdwg.mxu0
      %s741 = scalar_lea.vmem %s441, 64
      %v742 = vld [vmem:[%s741] sm:$0xff]
      %v743 = vld [vmem:[%s741 + $0x8] sm:$0xff]
      %v744 = vld [vmem:[%s741 + $0x10] sm:$0xff]
      %v745 = vld [vmem:[%s741 + $0x18] sm:$0xff]
      %v747 = vsel %vm546, %v742, 0
      %v750 = vsel %vm546, %v743, 0
      %v753 = vsel %vm546, %v744, 0
      %v756 = vsel %vm546, %v745, 0
      %758 = vmatprep.subr.mxu0 0.0
      %759 = vmatpush1.msra.mxu0 %v533
      %760 = vmatprep.subr.mxu0 0.0
      %761 = vmatpush1.msra.mxu0 %v534
      %762 = vmatprep.subr.mxu0 0.0
      %763 = vmatpush1.msra.mxu0 %v535
      %764 = vmatprep.subr.mxu0 0.0
      %765 = vmatpush1.msra.mxu0 %v536
      %766 = vmatprep.subr.mxu0 0.0
      %767 = vmatpush1.msra.mxu0 0.0
      %768 = vmatprep.subr.mxu0 0.0
      %769 = vmatpush1.msra.mxu0 0.0
      %770 = vmatprep.subr.mxu0 0.0
      %771 = vmatpush1.msra.mxu0 0.0
      %772 = vmatprep.subr.mxu0 0.0
      %773 = vmatpush1.msra.mxu0 0.0
      %774 = vmatprep.subr.mxu0 0.0
      %775 = vmatpush1.msra.mxu0 0.0
      %776 = vmatprep.subr.mxu0 0.0
      %777 = vmatpush1.msra.mxu0 0.0
      %778 = vmatprep.subr.mxu0 0.0
      %779 = vmatpush1.msra.mxu0 0.0
      %780 = vmatprep.subr.mxu0 0.0
      %781 = vmatpush1.msra.mxu0 0.0
      %782 = vmatprep.subr.mxu0 0.0
      %783 = vmatpush1.msra.mxu0 0.0
      %784 = vmatprep.subr.mxu0 0.0
      %785 = vmatpush1.msra.mxu0 0.0
      %786 = vmatprep.subr.mxu0 0.0
      %787 = vmatpush1.msra.mxu0 0.0
      %788 = vmatprep.subr.mxu0 0.0
      %789 = vmatpush1.msra.mxu0 0.0
      %790 = vmatprep.subr.mxu0 0.0
      %791 = vmatpush1.msra.mxu0 0.0
      %792 = vmatprep.subr.mxu0 0.0
      %793 = vmatpush1.msra.mxu0 0.0
      %794 = vmatprep.subr.mxu0 0.0
      %795 = vmatpush1.msra.mxu0 0.0
      %796 = vmatprep.subr.mxu0 0.0
      %797 = vmatpush1.msra.mxu0 0.0
      %798 = vmatprep.subr.mxu0 0.0
      %799 = vmatpush1.msra.mxu0 0.0
      %800 = vmatprep.subr.mxu0 0.0
      %801 = vmatpush1.msra.mxu0 0.0
      %802 = vmatprep.subr.mxu0 0.0
      %803 = vmatpush1.msra.mxu0 0.0
      %804 = vmatprep.subr.mxu0 0.0
      %805 = vmatpush1.msra.mxu0 0.0
      %806 = vmatprep.subr.mxu0 0.0
      %807 = vmatpush1.msra.mxu0 0.0
      %808 = vmatprep.subr.mxu0 0.0
      %809 = vmatpush1.msra.mxu0 0.0
      %810 = vmatprep.subr.mxu0 0.0
      %811 = vmatpush1.msra.mxu0 0.0
      %812 = vmatprep.subr.mxu0 0.0
      %813 = vmatpush1.msra.mxu0 0.0
      %814 = vmatprep.subr.mxu0 0.0
      %815 = vmatpush1.msra.mxu0 0.0
      %816 = vmatprep.subr.mxu0 0.0
      %817 = vmatpush1.msra.mxu0 0.0
      %818 = vmatprep.subr.mxu0 0.0
      %819 = vmatpush1.msra.mxu0 0.0
      %820 = vmatprep.subr.mxu0 0.0
      %821 = vmatpush1.msra.mxu0 0.0
      %822 = vmatprep.mubr.f32.mxu0 0.0
      %823 = vmatmul.mubr.f32.gmra.mrb[0].mxu0 %v747
      %v824 = vpop.f32.mrb[0].mxu0
      %v825 = vadd.f32 0.0, %v824
      %v826 = vpop.f32.mrb[0].mxu0
      %827 = vmatprep.mubr.f32.mxu0 0.0
      %828 = vmatmul.mubr.f32.gmra.mrb[0].mxu0 %v750
      %v829 = vpop.f32.mrb[0].mxu0
      %v830 = vadd.f32 0.0, %v829
      %v831 = vpop.f32.mrb[0].mxu0
      %832 = vmatprep.mubr.f32.mxu0 0.0
      %833 = vmatmul.mubr.f32.gmra.mrb[0].mxu0 %v753
      %v834 = vpop.f32.mrb[0].mxu0
      %v835 = vadd.f32 0.0, %v834
      %v836 = vpop.f32.mrb[0].mxu0
      %837 = vmatprep.mubr.f32.mxu0 0.0
      %838 = vmatmul.mubr.f32.gmra.mrb[0].mxu0 %v756
      %v839 = vpop.f32.mrb[0].mxu0
      %v840 = vadd.f32 0.0, %v839
      %v841 = vpop.f32.mrb[0].mxu0
      %842 = vdwg.mxu0
      %v843 = vadd.f32 %v723, %v825
      %v844 = vadd.f32 %v728, %v830
      %v845 = vadd.f32 %v733, %v835
      %v846 = vadd.f32 %v738, %v840
      %v847 = vld [vmem:[%s446] sm:$0xff]
      %v848 = vld [vmem:[%s446 + $0x8] sm:$0xff]
      %v849 = vld [vmem:[%s446 + $0x10] sm:$0xff]
      %v850 = vld [vmem:[%s446 + $0x18] sm:$0xff]
      %852 = vset.pattern.permute.xlu0 0
      %853 = vperm.xlu0 %852, %v847
      %v854 = vpop.permute.xlu0 %853
      %857 = vset.pattern.permute.xlu0 0
      %858 = vperm.xlu0 %857, %v848
      %v859 = vpop.permute.xlu0 %858
      %862 = vset.pattern.permute.xlu0 0
      %863 = vperm.xlu0 %862, %v849
      %v864 = vpop.permute.xlu0 %863
      %867 = vset.pattern.permute.xlu0 0
      %868 = vperm.xlu0 %867, %v850
      %v869 = vpop.permute.xlu0 %868
      %v871 = vadd.f32 %v843, %v854
      %v872 = vadd.f32 %v844, %v859
      %v873 = vadd.f32 %v845, %v864
      %v874 = vadd.f32 %v846, %v869
      %875 = vmatprep.subr.mxu0 0.0
      %876 = vmatpush1.msra.mxu0 %v470
      %877 = vmatprep.subr.mxu0 0.0
      %878 = vmatpush1.msra.mxu0 %v471
      %879 = vmatprep.subr.mxu0 0.0
      %880 = vmatpush1.msra.mxu0 %v472
      %881 = vmatprep.subr.mxu0 0.0
      %882 = vmatpush1.msra.mxu0 %v473
      %883 = vmatprep.subr.mxu0 0.0
      %884 = vmatpush1.msra.mxu0 %v474
      %885 = vmatprep.subr.mxu0 0.0
      %886 = vmatpush1.msra.mxu0 %v475
      %887 = vmatprep.subr.mxu0 0.0
      %888 = vmatpush1.msra.mxu0 %v476
      %889 = vmatprep.subr.mxu0 0.0
      %890 = vmatpush1.msra.mxu0 %v477
      %891 = vmatprep.subr.mxu0 0.0
      %892 = vmatpush1.msra.mxu0 %v478
      %893 = vmatprep.subr.mxu0 0.0
      %894 = vmatpush1.msra.mxu0 %v479
      %895 = vmatprep.subr.mxu0 0.0
      %896 = vmatpush1.msra.mxu0 %v480
      %897 = vmatprep.subr.mxu0 0.0
      %898 = vmatpush1.msra.mxu0 %v481
      %899 = vmatprep.subr.mxu0 0.0
      %900 = vmatpush1.msra.mxu0 %v482
      %901 = vmatprep.subr.mxu0 0.0
      %902 = vmatpush1.msra.mxu0 %v483
      %903 = vmatprep.subr.mxu0 0.0
      %904 = vmatpush1.msra.mxu0 %v484
      %905 = vmatprep.subr.mxu0 0.0
      %906 = vmatpush1.msra.mxu0 %v485
      %907 = vmatprep.subr.mxu0 0.0
      %908 = vmatpush1.msra.mxu0 0.0
      %909 = vmatprep.subr.mxu0 0.0
      %910 = vmatpush1.msra.mxu0 0.0
      %911 = vmatprep.subr.mxu0 0.0
      %912 = vmatpush1.msra.mxu0 0.0
      %913 = vmatprep.subr.mxu0 0.0
      %914 = vmatpush1.msra.mxu0 0.0
      %915 = vmatprep.subr.mxu0 0.0
      %916 = vmatpush1.msra.mxu0 0.0
      %917 = vmatprep.subr.mxu0 0.0
      %918 = vmatpush1.msra.mxu0 0.0
      %919 = vmatprep.subr.mxu0 0.0
      %920 = vmatpush1.msra.mxu0 0.0
      %921 = vmatprep.subr.mxu0 0.0
      %922 = vmatpush1.msra.mxu0 0.0
      %923 = vmatprep.subr.mxu0 0.0
      %924 = vmatpush1.msra.mxu0 0.0
      %925 = vmatprep.subr.mxu0 0.0
      %926 = vmatpush1.msra.mxu0 0.0
      %927 = vmatprep.subr.mxu0 0.0
      %928 = vmatpush1.msra.mxu0 0.0
      %929 = vmatprep.subr.mxu0 0.0
      %930 = vmatpush1.msra.mxu0 0.0
      %931 = vmatprep.subr.mxu0 0.0
      %932 = vmatpush1.msra.mxu0 0.0
      %933 = vmatprep.subr.mxu0 0.0
      %934 = vmatpush1.msra.mxu0 0.0
      %935 = vmatprep.subr.mxu0 0.0
      %936 = vmatpush1.msra.mxu0 0.0
      %937 = vmatprep.subr.mxu0 0.0
      %938 = vmatpush1.msra.mxu0 0.0
      %939 = vmatprep.mubr.f32.mxu0 0.0
      %940 = vmatmul.mubr.f32.gmra.mrb[0].mxu0 %v871
      %v941 = vpop.f32.mrb[0].mxu0
      %v942 = vadd.f32 0.0, %v941
      %v943 = vpop.f32.mrb[0].mxu0
      %944 = vmatprep.mubr.f32.mxu0 0.0
      %945 = vmatmul.mubr.f32.gmra.mrb[0].mxu0 %v872
      %v946 = vpop.f32.mrb[0].mxu0
      %v947 = vadd.f32 0.0, %v946
      %v948 = vpop.f32.mrb[0].mxu0
      %949 = vmatprep.mubr.f32.mxu0 0.0
      %950 = vmatmul.mubr.f32.gmra.mrb[0].mxu0 %v873
      %v951 = vpop.f32.mrb[0].mxu0
      %v952 = vadd.f32 0.0, %v951
      %v953 = vpop.f32.mrb[0].mxu0
      %954 = vmatprep.mubr.f32.mxu0 0.0
      %955 = vmatmul.mubr.f32.gmra.mrb[0].mxu0 %v874
      %v956 = vpop.f32.mrb[0].mxu0
      %v957 = vadd.f32 0.0, %v956
      %v958 = vpop.f32.mrb[0].mxu0
      %959 = vdwg.mxu0
      %vm960 = vcmask 15360
      %v962 = vsel %vm960, %v942, 0
      %v965 = vsel %vm960, %v947, 0
      %v968 = vsel %vm960, %v952, 0
      %v971 = vsel %vm960, %v957, 0
      %vm973 = vcmask 1041408
      %v975 = vsel %vm973, %v486, 0
      %977 = vmatprep.subr.mxu0 0.0
      %978 = vmatpush1.msra.mxu0 %v975
      %979 = vmatprep.subr.mxu0 0.0
      %980 = vmatpush1.msra.mxu0 0.0
      %981 = vmatprep.subr.mxu0 0.0
      %982 = vmatpush1.msra.mxu0 0.0
      %983 = vmatprep.subr.mxu0 0.0
      %984 = vmatpush1.msra.mxu0 0.0
      %985 = vmatprep.subr.mxu0 0.0
      %986 = vmatpush1.msra.mxu0 0.0
      %987 = vmatprep.subr.mxu0 0.0
      %988 = vmatpush1.msra.mxu0 0.0
      %989 = vmatprep.subr.mxu0 0.0
      %990 = vmatpush1.msra.mxu0 0.0
      %991 = vmatprep.subr.mxu0 0.0
      %992 = vmatpush1.msra.mxu0 0.0
      %993 = vmatprep.subr.mxu0 0.0
      %994 = vmatpush1.msra.mxu0 0.0
      %995 = vmatprep.subr.mxu0 0.0
      %996 = vmatpush1.msra.mxu0 0.0
      %997 = vmatprep.subr.mxu0 0.0
      %998 = vmatpush1.msra.mxu0 0.0
      %999 = vmatprep.subr.mxu0 0.0
      %1000 = vmatpush1.msra.mxu0 0.0
      %1001 = vmatprep.subr.mxu0 0.0
      %1002 = vmatpush1.msra.mxu0 0.0
      %1003 = vmatprep.subr.mxu0 0.0
      %1004 = vmatpush1.msra.mxu0 0.0
      %1005 = vmatprep.subr.mxu0 0.0
      %1006 = vmatpush1.msra.mxu0 0.0
      %1007 = vmatprep.subr.mxu0 0.0
      %1008 = vmatpush1.msra.mxu0 0.0
      %1009 = vmatprep.subr.mxu0 0.0
      %1010 = vmatpush1.msra.mxu0 0.0
      %1011 = vmatprep.subr.mxu0 0.0
      %1012 = vmatpush1.msra.mxu0 0.0
      %1013 = vmatprep.subr.mxu0 0.0
      %1014 = vmatpush1.msra.mxu0 0.0
      %1015 = vmatprep.subr.mxu0 0.0
      %1016 = vmatpush1.msra.mxu0 0.0
      %1017 = vmatprep.subr.mxu0 0.0
      %1018 = vmatpush1.msra.mxu0 0.0
      %1019 = vmatprep.subr.mxu0 0.0
      %1020 = vmatpush1.msra.mxu0 0.0
      %1021 = vmatprep.subr.mxu0 0.0
      %1022 = vmatpush1.msra.mxu0 0.0
      %1023 = vmatprep.subr.mxu0 0.0
      %1024 = vmatpush1.msra.mxu0 0.0
      %1025 = vmatprep.subr.mxu0 0.0
      %1026 = vmatpush1.msra.mxu0 0.0
      %1027 = vmatprep.subr.mxu0 0.0
      %1028 = vmatpush1.msra.mxu0 0.0
      %1029 = vmatprep.subr.mxu0 0.0
      %1030 = vmatpush1.msra.mxu0 0.0
      %1031 = vmatprep.subr.mxu0 0.0
      %1032 = vmatpush1.msra.mxu0 0.0
      %1033 = vmatprep.subr.mxu0 0.0
      %1034 = vmatpush1.msra.mxu0 0.0
      %1035 = vmatprep.subr.mxu0 0.0
      %1036 = vmatpush1.msra.mxu0 0.0
      %1037 = vmatprep.subr.mxu0 0.0
      %1038 = vmatpush1.msra.mxu0 0.0
      %1039 = vmatprep.subr.mxu0 0.0
      %1040 = vmatpush1.msra.mxu0 0.0
      %1041 = vmatprep.mubr.f32.mxu0 0.0
      %1042 = vmatmul.mubr.f32.gmra.mrb[0].mxu0 %v962
      %v1043 = vpop.f32.mrb[0].mxu0
      %v1044 = vadd.f32 0.0, %v1043
      %v1045 = vpop.f32.mrb[0].mxu0
      %1046 = vmatprep.mubr.f32.mxu0 0.0
      %1047 = vmatmul.mubr.f32.gmra.mrb[0].mxu0 %v965
      %v1048 = vpop.f32.mrb[0].mxu0
      %v1049 = vadd.f32 0.0, %v1048
      %v1050 = vpop.f32.mrb[0].mxu0
      %1051 = vmatprep.mubr.f32.mxu0 0.0
      %1052 = vmatmul.mubr.f32.gmra.mrb[0].mxu0 %v968
      %v1053 = vpop.f32.mrb[0].mxu0
      %v1054 = vadd.f32 0.0, %v1053
      %v1055 = vpop.f32.mrb[0].mxu0
      %1056 = vmatprep.mubr.f32.mxu0 0.0
      %1057 = vmatmul.mubr.f32.gmra.mrb[0].mxu0 %v971
      %v1058 = vpop.f32.mrb[0].mxu0
      %v1059 = vadd.f32 0.0, %v1058
      %v1060 = vpop.f32.mrb[0].mxu0
      %1061 = vdwg.mxu0
      %v1062 = vsub.f32 %v871, %v1044
      %v1063 = vsub.f32 %v872, %v1049
      %v1064 = vsub.f32 %v873, %v1054
      %v1065 = vsub.f32 %v874, %v1059
      %v1066 = vmul.f32 %v1062, %v1062
      %v1067 = vmul.f32 %v1063, %v1063
      %v1068 = vmul.f32 %v1064, %v1064
      %v1069 = vmul.f32 %v1065, %v1065
      %1070 = vmatprep.subr.mxu0 0.0
      %1071 = vmatpush1.msra.mxu0 %v470
      %1072 = vmatprep.subr.mxu0 0.0
      %1073 = vmatpush1.msra.mxu0 %v471
      %1074 = vmatprep.subr.mxu0 0.0
      %1075 = vmatpush1.msra.mxu0 %v472
      %1076 = vmatprep.subr.mxu0 0.0
      %1077 = vmatpush1.msra.mxu0 %v473
      %1078 = vmatprep.subr.mxu0 0.0
      %1079 = vmatpush1.msra.mxu0 %v474
      %1080 = vmatprep.subr.mxu0 0.0
      %1081 = vmatpush1.msra.mxu0 %v475
      %1082 = vmatprep.subr.mxu0 0.0
      %1083 = vmatpush1.msra.mxu0 %v476
      %1084 = vmatprep.subr.mxu0 0.0
      %1085 = vmatpush1.msra.mxu0 %v477
      %1086 = vmatprep.subr.mxu0 0.0
      %1087 = vmatpush1.msra.mxu0 %v478
      %1088 = vmatprep.subr.mxu0 0.0
      %1089 = vmatpush1.msra.mxu0 %v479
      %1090 = vmatprep.subr.mxu0 0.0
      %1091 = vmatpush1.msra.mxu0 %v480
      %1092 = vmatprep.subr.mxu0 0.0
      %1093 = vmatpush1.msra.mxu0 %v481
      %1094 = vmatprep.subr.mxu0 0.0
      %1095 = vmatpush1.msra.mxu0 %v482
      %1096 = vmatprep.subr.mxu0 0.0
      %1097 = vmatpush1.msra.mxu0 %v483
      %1098 = vmatprep.subr.mxu0 0.0
      %1099 = vmatpush1.msra.mxu0 %v484
      %1100 = vmatprep.subr.mxu0 0.0
      %1101 = vmatpush1.msra.mxu0 %v485
      %1102 = vmatprep.subr.mxu0 0.0
      %1103 = vmatpush1.msra.mxu0 0.0
      %1104 = vmatprep.subr.mxu0 0.0
      %1105 = vmatpush1.msra.mxu0 0.0
      %1106 = vmatprep.subr.mxu0 0.0
      %1107 = vmatpush1.msra.mxu0 0.0
      %1108 = vmatprep.subr.mxu0 0.0
      %1109 = vmatpush1.msra.mxu0 0.0
      %1110 = vmatprep.subr.mxu0 0.0
      %1111 = vmatpush1.msra.mxu0 0.0
      %1112 = vmatprep.subr.mxu0 0.0
      %1113 = vmatpush1.msra.mxu0 0.0
      %1114 = vmatprep.subr.mxu0 0.0
      %1115 = vmatpush1.msra.mxu0 0.0
      %1116 = vmatprep.subr.mxu0 0.0
      %1117 = vmatpush1.msra.mxu0 0.0
      %1118 = vmatprep.subr.mxu0 0.0
      %1119 = vmatpush1.msra.mxu0 0.0
      %1120 = vmatprep.subr.mxu0 0.0
      %1121 = vmatpush1.msra.mxu0 0.0
      %1122 = vmatprep.subr.mxu0 0.0
      %1123 = vmatpush1.msra.mxu0 0.0
      %1124 = vmatprep.subr.mxu0 0.0
      %1125 = vmatpush1.msra.mxu0 0.0
      %1126 = vmatprep.subr.mxu0 0.0
      %1127 = vmatpush1.msra.mxu0 0.0
      %1128 = vmatprep.subr.mxu0 0.0
      %1129 = vmatpush1.msra.mxu0 0.0
      %1130 = vmatprep.subr.mxu0 0.0
      %1131 = vmatpush1.msra.mxu0 0.0
      %1132 = vmatprep.subr.mxu0 0.0
      %1133 = vmatpush1.msra.mxu0 0.0
      %1134 = vmatprep.mubr.f32.mxu0 0.0
      %1135 = vmatmul.mubr.f32.gmra.mrb[0].mxu0 %v1066
      %v1136 = vpop.f32.mrb[0].mxu0
      %v1137 = vadd.f32 0.0, %v1136
      %v1138 = vpop.f32.mrb[0].mxu0
      %1139 = vmatprep.mubr.f32.mxu0 0.0
      %1140 = vmatmul.mubr.f32.gmra.mrb[0].mxu0 %v1067
      %v1141 = vpop.f32.mrb[0].mxu0
      %v1142 = vadd.f32 0.0, %v1141
      %v1143 = vpop.f32.mrb[0].mxu0
      %1144 = vmatprep.mubr.f32.mxu0 0.0
      %1145 = vmatmul.mubr.f32.gmra.mrb[0].mxu0 %v1068
      %v1146 = vpop.f32.mrb[0].mxu0
      %v1147 = vadd.f32 0.0, %v1146
      %v1148 = vpop.f32.mrb[0].mxu0
      %1149 = vmatprep.mubr.f32.mxu0 0.0
      %1150 = vmatmul.mubr.f32.gmra.mrb[0].mxu0 %v1069
      %v1151 = vpop.f32.mrb[0].mxu0
      %v1152 = vadd.f32 0.0, %v1151
      %v1153 = vpop.f32.mrb[0].mxu0
      %1154 = vdwg.mxu0
      %v1156 = vsel %vm960, %v1137, 0
      %v1159 = vsel %vm960, %v1142, 0
      %v1162 = vsel %vm960, %v1147, 0
      %v1165 = vsel %vm960, %v1152, 0
      %1167 = vmatprep.subr.mxu0 0.0
      %1168 = vmatpush1.msra.mxu0 %v975
      %1169 = vmatprep.subr.mxu0 0.0
      %1170 = vmatpush1.msra.mxu0 0.0
      %1171 = vmatprep.subr.mxu0 0.0
      %1172 = vmatpush1.msra.mxu0 0.0
      %1173 = vmatprep.subr.mxu0 0.0
      %1174 = vmatpush1.msra.mxu0 0.0
      %1175 = vmatprep.subr.mxu0 0.0
      %1176 = vmatpush1.msra.mxu0 0.0
      %1177 = vmatprep.subr.mxu0 0.0
      %1178 = vmatpush1.msra.mxu0 0.0
      %1179 = vmatprep.subr.mxu0 0.0
      %1180 = vmatpush1.msra.mxu0 0.0
      %1181 = vmatprep.subr.mxu0 0.0
      %1182 = vmatpush1.msra.mxu0 0.0
      %1183 = vmatprep.subr.mxu0 0.0
      %1184 = vmatpush1.msra.mxu0 0.0
      %1185 = vmatprep.subr.mxu0 0.0
      %1186 = vmatpush1.msra.mxu0 0.0
      %1187 = vmatprep.subr.mxu0 0.0
      %1188 = vmatpush1.msra.mxu0 0.0
      %1189 = vmatprep.subr.mxu0 0.0
      %1190 = vmatpush1.msra.mxu0 0.0
      %1191 = vmatprep.subr.mxu0 0.0
      %1192 = vmatpush1.msra.mxu0 0.0
      %1193 = vmatprep.subr.mxu0 0.0
      %1194 = vmatpush1.msra.mxu0 0.0
      %1195 = vmatprep.subr.mxu0 0.0
      %1196 = vmatpush1.msra.mxu0 0.0
      %1197 = vmatprep.subr.mxu0 0.0
      %1198 = vmatpush1.msra.mxu0 0.0
      %1199 = vmatprep.subr.mxu0 0.0
      %1200 = vmatpush1.msra.mxu0 0.0
      %1201 = vmatprep.subr.mxu0 0.0
      %1202 = vmatpush1.msra.mxu0 0.0
      %1203 = vmatprep.subr.mxu0 0.0
      %1204 = vmatpush1.msra.mxu0 0.0
      %1205 = vmatprep.subr.mxu0 0.0
      %1206 = vmatpush1.msra.mxu0 0.0
      %1207 = vmatprep.subr.mxu0 0.0
      %1208 = vmatpush1.msra.mxu0 0.0
      %1209 = vmatprep.subr.mxu0 0.0
      %1210 = vmatpush1.msra.mxu0 0.0
      %1211 = vmatprep.subr.mxu0 0.0
      %1212 = vmatpush1.msra.mxu0 0.0
      %1213 = vmatprep.subr.mxu0 0.0
      %1214 = vmatpush1.msra.mxu0 0.0
      %1215 = vmatprep.subr.mxu0 0.0
      %1216 = vmatpush1.msra.mxu0 0.0
      %1217 = vmatprep.subr.mxu0 0.0
      %1218 = vmatpush1.msra.mxu0 0.0
      %1219 = vmatprep.subr.mxu0 0.0
      %1220 = vmatpush1.msra.mxu0 0.0
      %1221 = vmatprep.subr.mxu0 0.0
      %1222 = vmatpush1.msra.mxu0 0.0
      %1223 = vmatprep.subr.mxu0 0.0
      %1224 = vmatpush1.msra.mxu0 0.0
      %1225 = vmatprep.subr.mxu0 0.0
      %1226 = vmatpush1.msra.mxu0 0.0
      %1227 = vmatprep.subr.mxu0 0.0
      %1228 = vmatpush1.msra.mxu0 0.0
      %1229 = vmatprep.subr.mxu0 0.0
      %1230 = vmatpush1.msra.mxu0 0.0
      %1231 = vmatprep.mubr.f32.mxu0 0.0
      %1232 = vmatmul.mubr.f32.gmra.mrb[0].mxu0 %v1156
      %v1233 = vpop.f32.mrb[0].mxu0
      %v1234 = vadd.f32 1e-05, %v1233
      %v1235 = vpop.f32.mrb[0].mxu0
      %1236 = vmatprep.mubr.f32.mxu0 0.0
      %1237 = vmatmul.mubr.f32.gmra.mrb[0].mxu0 %v1159
      %v1238 = vpop.f32.mrb[0].mxu0
      %v1239 = vadd.f32 1e-05, %v1238
      %v1240 = vpop.f32.mrb[0].mxu0
      %1241 = vmatprep.mubr.f32.mxu0 0.0
      %1242 = vmatmul.mubr.f32.gmra.mrb[0].mxu0 %v1162
      %v1243 = vpop.f32.mrb[0].mxu0
      %v1244 = vadd.f32 1e-05, %v1243
      %v1245 = vpop.f32.mrb[0].mxu0
      %1246 = vmatprep.mubr.f32.mxu0 0.0
      %1247 = vmatmul.mubr.f32.gmra.mrb[0].mxu0 %v1165
      %v1248 = vpop.f32.mrb[0].mxu0
      %v1249 = vadd.f32 1e-05, %v1248
      %v1250 = vpop.f32.mrb[0].mxu0
      %1251 = vdwg.mxu0
      %v1252 = vrsqrt.pop %v1234
      %v1253 = vrsqrt.pop %v1239
      %v1254 = vrsqrt.pop %v1244
      %v1255 = vrsqrt.pop %v1249
      %v1256 = vmul.f32 %v1062, %v1252
      %v1257 = vmul.f32 %v1063, %v1253
      %v1258 = vmul.f32 %v1064, %v1254
      %v1259 = vmul.f32 %v1065, %v1255
      %v1260 = vld [vmem:[%s451] sm:$0xff]
      %v1261 = vld [vmem:[%s451 + $0x8] sm:$0xff]
      %v1262 = vld [vmem:[%s451 + $0x10] sm:$0xff]
      %v1263 = vld [vmem:[%s451 + $0x18] sm:$0xff]
      %1265 = vset.pattern.permute.xlu0 0
      %1266 = vperm.xlu0 %1265, %v1260
      %v1267 = vpop.permute.xlu0 %1266
      %1270 = vset.pattern.permute.xlu0 0
      %1271 = vperm.xlu0 %1270, %v1261
      %v1272 = vpop.permute.xlu0 %1271
      %1275 = vset.pattern.permute.xlu0 0
      %1276 = vperm.xlu0 %1275, %v1262
      %v1277 = vpop.permute.xlu0 %1276
      %1280 = vset.pattern.permute.xlu0 0
      %1281 = vperm.xlu0 %1280, %v1263
      %v1282 = vpop.permute.xlu0 %1281
      %v1284 = vmul.f32 %v1256, %v1267
      %v1285 = vmul.f32 %v1257, %v1272
      %v1286 = vmul.f32 %v1258, %v1277
      %v1287 = vmul.f32 %v1259, %v1282
      %v1288 = vld [vmem:[%s456] sm:$0xff]
      %v1289 = vld [vmem:[%s456 + $0x8] sm:$0xff]
      %v1290 = vld [vmem:[%s456 + $0x10] sm:$0xff]
      %v1291 = vld [vmem:[%s456 + $0x18] sm:$0xff]
      %1293 = vset.pattern.permute.xlu0 0
      %1294 = vperm.xlu0 %1293, %v1288
      %v1295 = vpop.permute.xlu0 %1294
      %1298 = vset.pattern.permute.xlu0 0
      %1299 = vperm.xlu0 %1298, %v1289
      %v1300 = vpop.permute.xlu0 %1299
      %1303 = vset.pattern.permute.xlu0 0
      %1304 = vperm.xlu0 %1303, %v1290
      %v1305 = vpop.permute.xlu0 %1304
      %1308 = vset.pattern.permute.xlu0 0
      %1309 = vperm.xlu0 %1308, %v1291
      %v1310 = vpop.permute.xlu0 %1309
      %v1312 = vadd.f32 %v1284, %v1295
      %v1313 = vadd.f32 %v1285, %v1300
      %v1314 = vadd.f32 %v1286, %v1305
      %v1315 = vadd.f32 %v1287, %v1310
      %v1316 = vmax.f32 %v1312, 0.0
      %v1317 = vmax.f32 %v1313, 0.0
      %v1318 = vmax.f32 %v1314, 0.0
      %v1319 = vmax.f32 %v1315, 0.0
      %v1320 = vld [vmem:[%s461] sm:$0xff]
      %v1321 = vld [vmem:[%s461 + $0x8] sm:$0xff]
      %v1322 = vld [vmem:[%s461 + $0x10] sm:$0xff]
      %v1323 = vld [vmem:[%s461 + $0x18] sm:$0xff]
      %v1324 = vadd.f32 %v1316, %v1320
      %v1325 = vadd.f32 %v1317, %v1321
      %v1326 = vadd.f32 %v1318, %v1322
      %v1327 = vadd.f32 %v1319, %v1323
      %v1328 = vmul.f32 %v1324, %v495
      %v1329 = vmul.f32 %v1325, %v495
      %v1330 = vmul.f32 %v1326, %v495
      %v1331 = vmul.f32 %v1327, %v495
      %1332 = vrot.lane.b32.xlu0 %v1328, 1
      %v1333 = vpop.permute.xlu0 %1332
      %1334 = vrot.lane.b32.xlu0 %v1329, 1
      %v1335 = vpop.permute.xlu0 %1334
      %1336 = vrot.lane.b32.xlu0 %v1330, 1
      %v1337 = vpop.permute.xlu0 %1336
      %1338 = vrot.lane.b32.xlu0 %v1331, 1
      %v1339 = vpop.permute.xlu0 %1338
      %v1340 = vmul.f32 %v1333, %v513
      %v1341 = vmul.f32 %v1335, %v513
      %v1342 = vmul.f32 %v1337, %v513
      %v1343 = vmul.f32 %v1339, %v513
      %1344 = vrot.lane.b32.xlu0 %v1328, 127
      %v1345 = vpop.permute.xlu0 %1344
      %1346 = vrot.lane.b32.xlu0 %v1329, 127
      %v1347 = vpop.permute.xlu0 %1346
      %1348 = vrot.lane.b32.xlu0 %v1330, 127
      %v1349 = vpop.permute.xlu0 %1348
      %1350 = vrot.lane.b32.xlu0 %v1331, 127
      %v1351 = vpop.permute.xlu0 %1350
      %v1352 = vmul.f32 %v1345, %v531
      %v1353 = vmul.f32 %v1347, %v531
      %v1354 = vmul.f32 %v1349, %v531
      %v1355 = vmul.f32 %v1351, %v531
      %s1356 = scalar_lea.vmem %s441, 96
      %v1357 = vld [vmem:[%s1356] sm:$0xff]
      %v1358 = vld [vmem:[%s1356 + $0x8] sm:$0xff]
      %v1359 = vld [vmem:[%s1356 + $0x10] sm:$0xff]
      %v1360 = vld [vmem:[%s1356 + $0x18] sm:$0xff]
      %s1361 = scalar_lea.vmem %s441, 128
      %v1362 = vld [vmem:[%s1361] sm:$0xff]
      %v1363 = vld [vmem:[%s1361 + $0x8] sm:$0xff]
      %v1364 = vld [vmem:[%s1361 + $0x10] sm:$0xff]
      %v1365 = vld [vmem:[%s1361 + $0x18] sm:$0xff]
      %v1367 = vsel %vm546, %v1362, 0
      %v1370 = vsel %vm546, %v1363, 0
      %v1373 = vsel %vm546, %v1364, 0
      %v1376 = vsel %vm546, %v1365, 0
      %1378 = vmatprep.subr.mxu0 0.0
      %1379 = vmatpush1.msra.mxu0 %v1328
      %1380 = vmatprep.subr.mxu0 0.0
      %1381 = vmatpush1.msra.mxu0 %v1329
      %1382 = vmatprep.subr.mxu0 0.0
      %1383 = vmatpush1.msra.mxu0 %v1330
      %1384 = vmatprep.subr.mxu0 0.0
      %1385 = vmatpush1.msra.mxu0 %v1331
      %1386 = vmatprep.subr.mxu0 0.0
      %1387 = vmatpush1.msra.mxu0 0.0
      %1388 = vmatprep.subr.mxu0 0.0
      %1389 = vmatpush1.msra.mxu0 0.0
      %1390 = vmatprep.subr.mxu0 0.0
      %1391 = vmatpush1.msra.mxu0 0.0
      %1392 = vmatprep.subr.mxu0 0.0
      %1393 = vmatpush1.msra.mxu0 0.0
      %1394 = vmatprep.subr.mxu0 0.0
      %1395 = vmatpush1.msra.mxu0 0.0
      %1396 = vmatprep.subr.mxu0 0.0
      %1397 = vmatpush1.msra.mxu0 0.0
      %1398 = vmatprep.subr.mxu0 0.0
      %1399 = vmatpush1.msra.mxu0 0.0
      %1400 = vmatprep.subr.mxu0 0.0
      %1401 = vmatpush1.msra.mxu0 0.0
      %1402 = vmatprep.subr.mxu0 0.0
      %1403 = vmatpush1.msra.mxu0 0.0
      %1404 = vmatprep.subr.mxu0 0.0
      %1405 = vmatpush1.msra.mxu0 0.0
      %1406 = vmatprep.subr.mxu0 0.0
      %1407 = vmatpush1.msra.mxu0 0.0
      %1408 = vmatprep.subr.mxu0 0.0
      %1409 = vmatpush1.msra.mxu0 0.0
      %1410 = vmatprep.subr.mxu0 0.0
      %1411 = vmatpush1.msra.mxu0 0.0
      %1412 = vmatprep.subr.mxu0 0.0
      %1413 = vmatpush1.msra.mxu0 0.0
      %1414 = vmatprep.subr.mxu0 0.0
      %1415 = vmatpush1.msra.mxu0 0.0
      %1416 = vmatprep.subr.mxu0 0.0
      %1417 = vmatpush1.msra.mxu0 0.0
      %1418 = vmatprep.subr.mxu0 0.0
      %1419 = vmatpush1.msra.mxu0 0.0
      %1420 = vmatprep.subr.mxu0 0.0
      %1421 = vmatpush1.msra.mxu0 0.0
      %1422 = vmatprep.subr.mxu0 0.0
      %1423 = vmatpush1.msra.mxu0 0.0
      %1424 = vmatprep.subr.mxu0 0.0
      %1425 = vmatpush1.msra.mxu0 0.0
      %1426 = vmatprep.subr.mxu0 0.0
      %1427 = vmatpush1.msra.mxu0 0.0
      %1428 = vmatprep.subr.mxu0 0.0
      %1429 = vmatpush1.msra.mxu0 0.0
      %1430 = vmatprep.subr.mxu0 0.0
      %1431 = vmatpush1.msra.mxu0 0.0
      %1432 = vmatprep.subr.mxu0 0.0
      %1433 = vmatpush1.msra.mxu0 0.0
      %1434 = vmatprep.subr.mxu0 0.0
      %1435 = vmatpush1.msra.mxu0 0.0
      %1436 = vmatprep.subr.mxu0 0.0
      %1437 = vmatpush1.msra.mxu0 0.0
      %1438 = vmatprep.subr.mxu0 0.0
      %1439 = vmatpush1.msra.mxu0 0.0
      %1440 = vmatprep.subr.mxu0 0.0
      %1441 = vmatpush1.msra.mxu0 0.0
      %1442 = vmatprep.mubr.f32.mxu0 0.0
      %1443 = vmatmul.mubr.f32.gmra.mrb[0].mxu0 %v1367
      %v1444 = vpop.f32.mrb[0].mxu0
      %v1445 = vadd.f32 0.0, %v1444
      %v1446 = vpop.f32.mrb[0].mxu0
      %1447 = vmatprep.mubr.f32.mxu0 0.0
      %1448 = vmatmul.mubr.f32.gmra.mrb[0].mxu0 %v1370
      %v1449 = vpop.f32.mrb[0].mxu0
      %v1450 = vadd.f32 0.0, %v1449
      %v1451 = vpop.f32.mrb[0].mxu0
      %1452 = vmatprep.mubr.f32.mxu0 0.0
      %1453 = vmatmul.mubr.f32.gmra.mrb[0].mxu0 %v1373
      %v1454 = vpop.f32.mrb[0].mxu0
      %v1455 = vadd.f32 0.0, %v1454
      %v1456 = vpop.f32.mrb[0].mxu0
      %1457 = vmatprep.mubr.f32.mxu0 0.0
      %1458 = vmatmul.mubr.f32.gmra.mrb[0].mxu0 %v1376
      %v1459 = vpop.f32.mrb[0].mxu0
      %v1460 = vadd.f32 0.0, %v1459
      %v1461 = vpop.f32.mrb[0].mxu0
      %1462 = vdwg.mxu0
      %v1464 = vsel %vm546, %v1357, 0
      %v1467 = vsel %vm546, %v1358, 0
      %v1470 = vsel %vm546, %v1359, 0
      %v1473 = vsel %vm546, %v1360, 0
      %1475 = vmatprep.subr.mxu0 0.0
      %1476 = vmatpush1.msra.mxu0 %v1340
      %1477 = vmatprep.subr.mxu0 0.0
      %1478 = vmatpush1.msra.mxu0 %v1341
      %1479 = vmatprep.subr.mxu0 0.0
      %1480 = vmatpush1.msra.mxu0 %v1342
      %1481 = vmatprep.subr.mxu0 0.0
      %1482 = vmatpush1.msra.mxu0 %v1343
      %1483 = vmatprep.subr.mxu0 0.0
      %1484 = vmatpush1.msra.mxu0 0.0
      %1485 = vmatprep.subr.mxu0 0.0
      %1486 = vmatpush1.msra.mxu0 0.0
      %1487 = vmatprep.subr.mxu0 0.0
      %1488 = vmatpush1.msra.mxu0 0.0
      %1489 = vmatprep.subr.mxu0 0.0
      %1490 = vmatpush1.msra.mxu0 0.0
      %1491 = vmatprep.subr.mxu0 0.0
      %1492 = vmatpush1.msra.mxu0 0.0
      %1493 = vmatprep.subr.mxu0 0.0
      %1494 = vmatpush1.msra.mxu0 0.0
      %1495 = vmatprep.subr.mxu0 0.0
      %1496 = vmatpush1.msra.mxu0 0.0
      %1497 = vmatprep.subr.mxu0 0.0
      %1498 = vmatpush1.msra.mxu0 0.0
      %1499 = vmatprep.subr.mxu0 0.0
      %1500 = vmatpush1.msra.mxu0 0.0
      %1501 = vmatprep.subr.mxu0 0.0
      %1502 = vmatpush1.msra.mxu0 0.0
      %1503 = vmatprep.subr.mxu0 0.0
      %1504 = vmatpush1.msra.mxu0 0.0
      %1505 = vmatprep.subr.mxu0 0.0
      %1506 = vmatpush1.msra.mxu0 0.0
      %1507 = vmatprep.subr.mxu0 0.0
      %1508 = vmatpush1.msra.mxu0 0.0
      %1509 = vmatprep.subr.mxu0 0.0
      %1510 = vmatpush1.msra.mxu0 0.0
      %1511 = vmatprep.subr.mxu0 0.0
      %1512 = vmatpush1.msra.mxu0 0.0
      %1513 = vmatprep.subr.mxu0 0.0
      %1514 = vmatpush1.msra.mxu0 0.0
      %1515 = vmatprep.subr.mxu0 0.0
      %1516 = vmatpush1.msra.mxu0 0.0
      %1517 = vmatprep.subr.mxu0 0.0
      %1518 = vmatpush1.msra.mxu0 0.0
      %1519 = vmatprep.subr.mxu0 0.0
      %1520 = vmatpush1.msra.mxu0 0.0
      %1521 = vmatprep.subr.mxu0 0.0
      %1522 = vmatpush1.msra.mxu0 0.0
      %1523 = vmatprep.subr.mxu0 0.0
      %1524 = vmatpush1.msra.mxu0 0.0
      %1525 = vmatprep.subr.mxu0 0.0
      %1526 = vmatpush1.msra.mxu0 0.0
      %1527 = vmatprep.subr.mxu0 0.0
      %1528 = vmatpush1.msra.mxu0 0.0
      %1529 = vmatprep.subr.mxu0 0.0
      %1530 = vmatpush1.msra.mxu0 0.0
      %1531 = vmatprep.subr.mxu0 0.0
      %1532 = vmatpush1.msra.mxu0 0.0
      %1533 = vmatprep.subr.mxu0 0.0
      %1534 = vmatpush1.msra.mxu0 0.0
      %1535 = vmatprep.subr.mxu0 0.0
      %1536 = vmatpush1.msra.mxu0 0.0
      %1537 = vmatprep.subr.mxu0 0.0
      %1538 = vmatpush1.msra.mxu0 0.0
      %1539 = vmatprep.mubr.f32.mxu0 0.0
      %1540 = vmatmul.mubr.f32.gmra.mrb[0].mxu0 %v1464
      %v1541 = vpop.f32.mrb[0].mxu0
      %v1542 = vadd.f32 %v1445, %v1541
      %v1543 = vpop.f32.mrb[0].mxu0
      %1544 = vmatprep.mubr.f32.mxu0 0.0
      %1545 = vmatmul.mubr.f32.gmra.mrb[0].mxu0 %v1467
      %v1546 = vpop.f32.mrb[0].mxu0
      %v1547 = vadd.f32 %v1450, %v1546
      %v1548 = vpop.f32.mrb[0].mxu0
      %1549 = vmatprep.mubr.f32.mxu0 0.0
      %1550 = vmatmul.mubr.f32.gmra.mrb[0].mxu0 %v1470
      %v1551 = vpop.f32.mrb[0].mxu0
      %v1552 = vadd.f32 %v1455, %v1551
      %v1553 = vpop.f32.mrb[0].mxu0
      %1554 = vmatprep.mubr.f32.mxu0 0.0
      %1555 = vmatmul.mubr.f32.gmra.mrb[0].mxu0 %v1473
      %v1556 = vpop.f32.mrb[0].mxu0
      %v1557 = vadd.f32 %v1460, %v1556
      %v1558 = vpop.f32.mrb[0].mxu0
      %1559 = vdwg.mxu0
      %s1560 = scalar_lea.vmem %s441, 160
      %v1561 = vld [vmem:[%s1560] sm:$0xff]
      %v1562 = vld [vmem:[%s1560 + $0x8] sm:$0xff]
      %v1563 = vld [vmem:[%s1560 + $0x10] sm:$0xff]
      %v1564 = vld [vmem:[%s1560 + $0x18] sm:$0xff]
      %v1566 = vsel %vm546, %v1561, 0
      %v1569 = vsel %vm546, %v1562, 0
      %v1572 = vsel %vm546, %v1563, 0
      %v1575 = vsel %vm546, %v1564, 0
      %1577 = vmatprep.subr.mxu0 0.0
      %1578 = vmatpush1.msra.mxu0 %v1352
      %1579 = vmatprep.subr.mxu0 0.0
      %1580 = vmatpush1.msra.mxu0 %v1353
      %1581 = vmatprep.subr.mxu0 0.0
      %1582 = vmatpush1.msra.mxu0 %v1354
      %1583 = vmatprep.subr.mxu0 0.0
      %1584 = vmatpush1.msra.mxu0 %v1355
      %1585 = vmatprep.subr.mxu0 0.0
      %1586 = vmatpush1.msra.mxu0 0.0
      %1587 = vmatprep.subr.mxu0 0.0
      %1588 = vmatpush1.msra.mxu0 0.0
      %1589 = vmatprep.subr.mxu0 0.0
      %1590 = vmatpush1.msra.mxu0 0.0
      %1591 = vmatprep.subr.mxu0 0.0
      %1592 = vmatpush1.msra.mxu0 0.0
      %1593 = vmatprep.subr.mxu0 0.0
      %1594 = vmatpush1.msra.mxu0 0.0
      %1595 = vmatprep.subr.mxu0 0.0
      %1596 = vmatpush1.msra.mxu0 0.0
      %1597 = vmatprep.subr.mxu0 0.0
      %1598 = vmatpush1.msra.mxu0 0.0
      %1599 = vmatprep.subr.mxu0 0.0
      %1600 = vmatpush1.msra.mxu0 0.0
      %1601 = vmatprep.subr.mxu0 0.0
      %1602 = vmatpush1.msra.mxu0 0.0
      %1603 = vmatprep.subr.mxu0 0.0
      %1604 = vmatpush1.msra.mxu0 0.0
      %1605 = vmatprep.subr.mxu0 0.0
      %1606 = vmatpush1.msra.mxu0 0.0
      %1607 = vmatprep.subr.mxu0 0.0
      %1608 = vmatpush1.msra.mxu0 0.0
      %1609 = vmatprep.subr.mxu0 0.0
      %1610 = vmatpush1.msra.mxu0 0.0
      %1611 = vmatprep.subr.mxu0 0.0
      %1612 = vmatpush1.msra.mxu0 0.0
      %1613 = vmatprep.subr.mxu0 0.0
      %1614 = vmatpush1.msra.mxu0 0.0
      %1615 = vmatprep.subr.mxu0 0.0
      %1616 = vmatpush1.msra.mxu0 0.0
      %1617 = vmatprep.subr.mxu0 0.0
      %1618 = vmatpush1.msra.mxu0 0.0
      %1619 = vmatprep.subr.mxu0 0.0
      %1620 = vmatpush1.msra.mxu0 0.0
      %1621 = vmatprep.subr.mxu0 0.0
      %1622 = vmatpush1.msra.mxu0 0.0
      %1623 = vmatprep.subr.mxu0 0.0
      %1624 = vmatpush1.msra.mxu0 0.0
      %1625 = vmatprep.subr.mxu0 0.0
      %1626 = vmatpush1.msra.mxu0 0.0
      %1627 = vmatprep.subr.mxu0 0.0
      %1628 = vmatpush1.msra.mxu0 0.0
      %1629 = vmatprep.subr.mxu0 0.0
      %1630 = vmatpush1.msra.mxu0 0.0
      %1631 = vmatprep.subr.mxu0 0.0
      %1632 = vmatpush1.msra.mxu0 0.0
      %1633 = vmatprep.subr.mxu0 0.0
      %1634 = vmatpush1.msra.mxu0 0.0
      %1635 = vmatprep.subr.mxu0 0.0
      %1636 = vmatpush1.msra.mxu0 0.0
      %1637 = vmatprep.subr.mxu0 0.0
      %1638 = vmatpush1.msra.mxu0 0.0
      %1639 = vmatprep.subr.mxu0 0.0
      %1640 = vmatpush1.msra.mxu0 0.0
      %1641 = vmatprep.mubr.f32.mxu0 0.0
      %1642 = vmatmul.mubr.f32.gmra.mrb[0].mxu0 %v1566
      %v1643 = vpop.f32.mrb[0].mxu0
      %v1644 = vadd.f32 0.0, %v1643
      %v1645 = vpop.f32.mrb[0].mxu0
      %1646 = vmatprep.mubr.f32.mxu0 0.0
      %1647 = vmatmul.mubr.f32.gmra.mrb[0].mxu0 %v1569
      %v1648 = vpop.f32.mrb[0].mxu0
      %v1649 = vadd.f32 0.0, %v1648
      %v1650 = vpop.f32.mrb[0].mxu0
      %1651 = vmatprep.mubr.f32.mxu0 0.0
      %1652 = vmatmul.mubr.f32.gmra.mrb[0].mxu0 %v1572
      %v1653 = vpop.f32.mrb[0].mxu0
      %v1654 = vadd.f32 0.0, %v1653
      %v1655 = vpop.f32.mrb[0].mxu0
      %1656 = vmatprep.mubr.f32.mxu0 0.0
      %1657 = vmatmul.mubr.f32.gmra.mrb[0].mxu0 %v1575
      %v1658 = vpop.f32.mrb[0].mxu0
      %v1659 = vadd.f32 0.0, %v1658
      %v1660 = vpop.f32.mrb[0].mxu0
      %1661 = vdwg.mxu0
      %v1662 = vadd.f32 %v1542, %v1644
      %v1663 = vadd.f32 %v1547, %v1649
      %v1664 = vadd.f32 %v1552, %v1654
      %v1665 = vadd.f32 %v1557, %v1659
      %s1666 = scalar_lea.vmem %s446, 32
      %v1667 = vld [vmem:[%s1666] sm:$0xff]
      %v1668 = vld [vmem:[%s1666 + $0x8] sm:$0xff]
      %v1669 = vld [vmem:[%s1666 + $0x10] sm:$0xff]
      %v1670 = vld [vmem:[%s1666 + $0x18] sm:$0xff]
      %1672 = vset.pattern.permute.xlu0 0
      %1673 = vperm.xlu0 %1672, %v1667
      %v1674 = vpop.permute.xlu0 %1673
      %1677 = vset.pattern.permute.xlu0 0
      %1678 = vperm.xlu0 %1677, %v1668
      %v1679 = vpop.permute.xlu0 %1678
      %1682 = vset.pattern.permute.xlu0 0
      %1683 = vperm.xlu0 %1682, %v1669
      %v1684 = vpop.permute.xlu0 %1683
      %1687 = vset.pattern.permute.xlu0 0
      %1688 = vperm.xlu0 %1687, %v1670
      %v1689 = vpop.permute.xlu0 %1688
      %v1691 = vadd.f32 %v1662, %v1674
      %v1692 = vadd.f32 %v1663, %v1679
      %v1693 = vadd.f32 %v1664, %v1684
      %v1694 = vadd.f32 %v1665, %v1689
      %1695 = vmatprep.subr.mxu0 0.0
      %1696 = vmatpush1.msra.mxu0 %v470
      %1697 = vmatprep.subr.mxu0 0.0
      %1698 = vmatpush1.msra.mxu0 %v471
      %1699 = vmatprep.subr.mxu0 0.0
      %1700 = vmatpush1.msra.mxu0 %v472
      %1701 = vmatprep.subr.mxu0 0.0
      %1702 = vmatpush1.msra.mxu0 %v473
      %1703 = vmatprep.subr.mxu0 0.0
      %1704 = vmatpush1.msra.mxu0 %v474
      %1705 = vmatprep.subr.mxu0 0.0
      %1706 = vmatpush1.msra.mxu0 %v475
      %1707 = vmatprep.subr.mxu0 0.0
      %1708 = vmatpush1.msra.mxu0 %v476
      %1709 = vmatprep.subr.mxu0 0.0
      %1710 = vmatpush1.msra.mxu0 %v477
      %1711 = vmatprep.subr.mxu0 0.0
      %1712 = vmatpush1.msra.mxu0 %v478
      %1713 = vmatprep.subr.mxu0 0.0
      %1714 = vmatpush1.msra.mxu0 %v479
      %1715 = vmatprep.subr.mxu0 0.0
      %1716 = vmatpush1.msra.mxu0 %v480
      %1717 = vmatprep.subr.mxu0 0.0
      %1718 = vmatpush1.msra.mxu0 %v481
      %1719 = vmatprep.subr.mxu0 0.0
      %1720 = vmatpush1.msra.mxu0 %v482
      %1721 = vmatprep.subr.mxu0 0.0
      %1722 = vmatpush1.msra.mxu0 %v483
      %1723 = vmatprep.subr.mxu0 0.0
      %1724 = vmatpush1.msra.mxu0 %v484
      %1725 = vmatprep.subr.mxu0 0.0
      %1726 = vmatpush1.msra.mxu0 %v485
      %1727 = vmatprep.subr.mxu0 0.0
      %1728 = vmatpush1.msra.mxu0 0.0
      %1729 = vmatprep.subr.mxu0 0.0
      %1730 = vmatpush1.msra.mxu0 0.0
      %1731 = vmatprep.subr.mxu0 0.0
      %1732 = vmatpush1.msra.mxu0 0.0
      %1733 = vmatprep.subr.mxu0 0.0
      %1734 = vmatpush1.msra.mxu0 0.0
      %1735 = vmatprep.subr.mxu0 0.0
      %1736 = vmatpush1.msra.mxu0 0.0
      %1737 = vmatprep.subr.mxu0 0.0
      %1738 = vmatpush1.msra.mxu0 0.0
      %1739 = vmatprep.subr.mxu0 0.0
      %1740 = vmatpush1.msra.mxu0 0.0
      %1741 = vmatprep.subr.mxu0 0.0
      %1742 = vmatpush1.msra.mxu0 0.0
      %1743 = vmatprep.subr.mxu0 0.0
      %1744 = vmatpush1.msra.mxu0 0.0
      %1745 = vmatprep.subr.mxu0 0.0
      %1746 = vmatpush1.msra.mxu0 0.0
      %1747 = vmatprep.subr.mxu0 0.0
      %1748 = vmatpush1.msra.mxu0 0.0
      %1749 = vmatprep.subr.mxu0 0.0
      %1750 = vmatpush1.msra.mxu0 0.0
      %1751 = vmatprep.subr.mxu0 0.0
      %1752 = vmatpush1.msra.mxu0 0.0
      %1753 = vmatprep.subr.mxu0 0.0
      %1754 = vmatpush1.msra.mxu0 0.0
      %1755 = vmatprep.subr.mxu0 0.0
      %1756 = vmatpush1.msra.mxu0 0.0
      %1757 = vmatprep.subr.mxu0 0.0
      %1758 = vmatpush1.msra.mxu0 0.0
      %1759 = vmatprep.mubr.f32.mxu0 0.0
      %1760 = vmatmul.mubr.f32.gmra.mrb[0].mxu0 %v1691
      %v1761 = vpop.f32.mrb[0].mxu0
      %v1762 = vadd.f32 0.0, %v1761
      %v1763 = vpop.f32.mrb[0].mxu0
      %1764 = vmatprep.mubr.f32.mxu0 0.0
      %1765 = vmatmul.mubr.f32.gmra.mrb[0].mxu0 %v1692
      %v1766 = vpop.f32.mrb[0].mxu0
      %v1767 = vadd.f32 0.0, %v1766
      %v1768 = vpop.f32.mrb[0].mxu0
      %1769 = vmatprep.mubr.f32.mxu0 0.0
      %1770 = vmatmul.mubr.f32.gmra.mrb[0].mxu0 %v1693
      %v1771 = vpop.f32.mrb[0].mxu0
      %v1772 = vadd.f32 0.0, %v1771
      %v1773 = vpop.f32.mrb[0].mxu0
      %1774 = vmatprep.mubr.f32.mxu0 0.0
      %1775 = vmatmul.mubr.f32.gmra.mrb[0].mxu0 %v1694
      %v1776 = vpop.f32.mrb[0].mxu0
      %v1777 = vadd.f32 0.0, %v1776
      %v1778 = vpop.f32.mrb[0].mxu0
      %1779 = vdwg.mxu0
      %v1781 = vsel %vm960, %v1762, 0
      %v1784 = vsel %vm960, %v1767, 0
      %v1787 = vsel %vm960, %v1772, 0
      %v1790 = vsel %vm960, %v1777, 0
      %1792 = vmatprep.subr.mxu0 0.0
      %1793 = vmatpush1.msra.mxu0 %v975
      %1794 = vmatprep.subr.mxu0 0.0
      %1795 = vmatpush1.msra.mxu0 0.0
      %1796 = vmatprep.subr.mxu0 0.0
      %1797 = vmatpush1.msra.mxu0 0.0
      %1798 = vmatprep.subr.mxu0 0.0
      %1799 = vmatpush1.msra.mxu0 0.0
      %1800 = vmatprep.subr.mxu0 0.0
      %1801 = vmatpush1.msra.mxu0 0.0
      %1802 = vmatprep.subr.mxu0 0.0
      %1803 = vmatpush1.msra.mxu0 0.0
      %1804 = vmatprep.subr.mxu0 0.0
      %1805 = vmatpush1.msra.mxu0 0.0
      %1806 = vmatprep.subr.mxu0 0.0
      %1807 = vmatpush1.msra.mxu0 0.0
      %1808 = vmatprep.subr.mxu0 0.0
      %1809 = vmatpush1.msra.mxu0 0.0
      %1810 = vmatprep.subr.mxu0 0.0
      %1811 = vmatpush1.msra.mxu0 0.0
      %1812 = vmatprep.subr.mxu0 0.0
      %1813 = vmatpush1.msra.mxu0 0.0
      %1814 = vmatprep.subr.mxu0 0.0
      %1815 = vmatpush1.msra.mxu0 0.0
      %1816 = vmatprep.subr.mxu0 0.0
      %1817 = vmatpush1.msra.mxu0 0.0
      %1818 = vmatprep.subr.mxu0 0.0
      %1819 = vmatpush1.msra.mxu0 0.0
      %1820 = vmatprep.subr.mxu0 0.0
      %1821 = vmatpush1.msra.mxu0 0.0
      %1822 = vmatprep.subr.mxu0 0.0
      %1823 = vmatpush1.msra.mxu0 0.0
      %1824 = vmatprep.subr.mxu0 0.0
      %1825 = vmatpush1.msra.mxu0 0.0
      %1826 = vmatprep.subr.mxu0 0.0
      %1827 = vmatpush1.msra.mxu0 0.0
      %1828 = vmatprep.subr.mxu0 0.0
      %1829 = vmatpush1.msra.mxu0 0.0
      %1830 = vmatprep.subr.mxu0 0.0
      %1831 = vmatpush1.msra.mxu0 0.0
      %1832 = vmatprep.subr.mxu0 0.0
      %1833 = vmatpush1.msra.mxu0 0.0
      %1834 = vmatprep.subr.mxu0 0.0
      %1835 = vmatpush1.msra.mxu0 0.0
      %1836 = vmatprep.subr.mxu0 0.0
      %1837 = vmatpush1.msra.mxu0 0.0
      %1838 = vmatprep.subr.mxu0 0.0
      %1839 = vmatpush1.msra.mxu0 0.0
      %1840 = vmatprep.subr.mxu0 0.0
      %1841 = vmatpush1.msra.mxu0 0.0
      %1842 = vmatprep.subr.mxu0 0.0
      %1843 = vmatpush1.msra.mxu0 0.0
      %1844 = vmatprep.subr.mxu0 0.0
      %1845 = vmatpush1.msra.mxu0 0.0
      %1846 = vmatprep.subr.mxu0 0.0
      %1847 = vmatpush1.msra.mxu0 0.0
      %1848 = vmatprep.subr.mxu0 0.0
      %1849 = vmatpush1.msra.mxu0 0.0
      %1850 = vmatprep.subr.mxu0 0.0
      %1851 = vmatpush1.msra.mxu0 0.0
      %1852 = vmatprep.subr.mxu0 0.0
      %1853 = vmatpush1.msra.mxu0 0.0
      %1854 = vmatprep.subr.mxu0 0.0
      %1855 = vmatpush1.msra.mxu0 0.0
      %1856 = vmatprep.mubr.f32.mxu0 0.0
      %1857 = vmatmul.mubr.f32.gmra.mrb[0].mxu0 %v1781
      %v1858 = vpop.f32.mrb[0].mxu0
      %v1859 = vadd.f32 0.0, %v1858
      %v1860 = vpop.f32.mrb[0].mxu0
      %1861 = vmatprep.mubr.f32.mxu0 0.0
      %1862 = vmatmul.mubr.f32.gmra.mrb[0].mxu0 %v1784
      %v1863 = vpop.f32.mrb[0].mxu0
      %v1864 = vadd.f32 0.0, %v1863
      %v1865 = vpop.f32.mrb[0].mxu0
      %1866 = vmatprep.mubr.f32.mxu0 0.0
      %1867 = vmatmul.mubr.f32.gmra.mrb[0].mxu0 %v1787
      %v1868 = vpop.f32.mrb[0].mxu0
      %v1869 = vadd.f32 0.0, %v1868
      %v1870 = vpop.f32.mrb[0].mxu0
      %1871 = vmatprep.mubr.f32.mxu0 0.0
      %1872 = vmatmul.mubr.f32.gmra.mrb[0].mxu0 %v1790
      %v1873 = vpop.f32.mrb[0].mxu0
      %v1874 = vadd.f32 0.0, %v1873
      %v1875 = vpop.f32.mrb[0].mxu0
      %1876 = vdwg.mxu0
      %v1877 = vsub.f32 %v1691, %v1859
      %v1878 = vsub.f32 %v1692, %v1864
      %v1879 = vsub.f32 %v1693, %v1869
      %v1880 = vsub.f32 %v1694, %v1874
      %v1881 = vmul.f32 %v1877, %v1877
      %v1882 = vmul.f32 %v1878, %v1878
      %v1883 = vmul.f32 %v1879, %v1879
      %v1884 = vmul.f32 %v1880, %v1880
      %1885 = vmatprep.subr.mxu0 0.0
      %1886 = vmatpush1.msra.mxu0 %v470
      %1887 = vmatprep.subr.mxu0 0.0
      %1888 = vmatpush1.msra.mxu0 %v471
      %1889 = vmatprep.subr.mxu0 0.0
      %1890 = vmatpush1.msra.mxu0 %v472
      %1891 = vmatprep.subr.mxu0 0.0
      %1892 = vmatpush1.msra.mxu0 %v473
      %1893 = vmatprep.subr.mxu0 0.0
      %1894 = vmatpush1.msra.mxu0 %v474
      %1895 = vmatprep.subr.mxu0 0.0
      %1896 = vmatpush1.msra.mxu0 %v475
      %1897 = vmatprep.subr.mxu0 0.0
      %1898 = vmatpush1.msra.mxu0 %v476
      %1899 = vmatprep.subr.mxu0 0.0
      %1900 = vmatpush1.msra.mxu0 %v477
      %1901 = vmatprep.subr.mxu0 0.0
      %1902 = vmatpush1.msra.mxu0 %v478
      %1903 = vmatprep.subr.mxu0 0.0
      %1904 = vmatpush1.msra.mxu0 %v479
      %1905 = vmatprep.subr.mxu0 0.0
      %1906 = vmatpush1.msra.mxu0 %v480
      %1907 = vmatprep.subr.mxu0 0.0
      %1908 = vmatpush1.msra.mxu0 %v481
      %1909 = vmatprep.subr.mxu0 0.0
      %1910 = vmatpush1.msra.mxu0 %v482
      %1911 = vmatprep.subr.mxu0 0.0
      %1912 = vmatpush1.msra.mxu0 %v483
      %1913 = vmatprep.subr.mxu0 0.0
      %1914 = vmatpush1.msra.mxu0 %v484
      %1915 = vmatprep.subr.mxu0 0.0
      %1916 = vmatpush1.msra.mxu0 %v485
      %1917 = vmatprep.subr.mxu0 0.0
      %1918 = vmatpush1.msra.mxu0 0.0
      %1919 = vmatprep.subr.mxu0 0.0
      %1920 = vmatpush1.msra.mxu0 0.0
      %1921 = vmatprep.subr.mxu0 0.0
      %1922 = vmatpush1.msra.mxu0 0.0
      %1923 = vmatprep.subr.mxu0 0.0
      %1924 = vmatpush1.msra.mxu0 0.0
      %1925 = vmatprep.subr.mxu0 0.0
      %1926 = vmatpush1.msra.mxu0 0.0
      %1927 = vmatprep.subr.mxu0 0.0
      %1928 = vmatpush1.msra.mxu0 0.0
      %1929 = vmatprep.subr.mxu0 0.0
      %1930 = vmatpush1.msra.mxu0 0.0
      %1931 = vmatprep.subr.mxu0 0.0
      %1932 = vmatpush1.msra.mxu0 0.0
      %1933 = vmatprep.subr.mxu0 0.0
      %1934 = vmatpush1.msra.mxu0 0.0
      %1935 = vmatprep.subr.mxu0 0.0
      %1936 = vmatpush1.msra.mxu0 0.0
      %1937 = vmatprep.subr.mxu0 0.0
      %1938 = vmatpush1.msra.mxu0 0.0
      %1939 = vmatprep.subr.mxu0 0.0
      %1940 = vmatpush1.msra.mxu0 0.0
      %1941 = vmatprep.subr.mxu0 0.0
      %1942 = vmatpush1.msra.mxu0 0.0
      %1943 = vmatprep.subr.mxu0 0.0
      %1944 = vmatpush1.msra.mxu0 0.0
      %1945 = vmatprep.subr.mxu0 0.0
      %1946 = vmatpush1.msra.mxu0 0.0
      %1947 = vmatprep.subr.mxu0 0.0
      %1948 = vmatpush1.msra.mxu0 0.0
      %1949 = vmatprep.mubr.f32.mxu0 0.0
      %1950 = vmatmul.mubr.f32.gmra.mrb[0].mxu0 %v1881
      %v1951 = vpop.f32.mrb[0].mxu0
      %v1952 = vadd.f32 0.0, %v1951
      %v1953 = vpop.f32.mrb[0].mxu0
      %1954 = vmatprep.mubr.f32.mxu0 0.0
      %1955 = vmatmul.mubr.f32.gmra.mrb[0].mxu0 %v1882
      %v1956 = vpop.f32.mrb[0].mxu0
      %v1957 = vadd.f32 0.0, %v1956
      %v1958 = vpop.f32.mrb[0].mxu0
      %1959 = vmatprep.mubr.f32.mxu0 0.0
      %1960 = vmatmul.mubr.f32.gmra.mrb[0].mxu0 %v1883
      %v1961 = vpop.f32.mrb[0].mxu0
      %v1962 = vadd.f32 0.0, %v1961
      %v1963 = vpop.f32.mrb[0].mxu0
      %1964 = vmatprep.mubr.f32.mxu0 0.0
      %1965 = vmatmul.mubr.f32.gmra.mrb[0].mxu0 %v1884
      %v1966 = vpop.f32.mrb[0].mxu0
      %v1967 = vadd.f32 0.0, %v1966
      %v1968 = vpop.f32.mrb[0].mxu0
      %1969 = vdwg.mxu0
      %v1971 = vsel %vm960, %v1952, 0
      %v1974 = vsel %vm960, %v1957, 0
      %v1977 = vsel %vm960, %v1962, 0
      %v1980 = vsel %vm960, %v1967, 0
      %1982 = vmatprep.subr.mxu0 0.0
      %1983 = vmatpush1.msra.mxu0 %v975
      %1984 = vmatprep.subr.mxu0 0.0
      %1985 = vmatpush1.msra.mxu0 0.0
      %1986 = vmatprep.subr.mxu0 0.0
      %1987 = vmatpush1.msra.mxu0 0.0
      %1988 = vmatprep.subr.mxu0 0.0
      %1989 = vmatpush1.msra.mxu0 0.0
      %1990 = vmatprep.subr.mxu0 0.0
      %1991 = vmatpush1.msra.mxu0 0.0
      %1992 = vmatprep.subr.mxu0 0.0
      %1993 = vmatpush1.msra.mxu0 0.0
      %1994 = vmatprep.subr.mxu0 0.0
      %1995 = vmatpush1.msra.mxu0 0.0
      %1996 = vmatprep.subr.mxu0 0.0
      %1997 = vmatpush1.msra.mxu0 0.0
      %1998 = vmatprep.subr.mxu0 0.0
      %1999 = vmatpush1.msra.mxu0 0.0
      %2000 = vmatprep.subr.mxu0 0.0
      %2001 = vmatpush1.msra.mxu0 0.0
      %2002 = vmatprep.subr.mxu0 0.0
      %2003 = vmatpush1.msra.mxu0 0.0
      %2004 = vmatprep.subr.mxu0 0.0
      %2005 = vmatpush1.msra.mxu0 0.0
      %2006 = vmatprep.subr.mxu0 0.0
      %2007 = vmatpush1.msra.mxu0 0.0
      %2008 = vmatprep.subr.mxu0 0.0
      %2009 = vmatpush1.msra.mxu0 0.0
      %2010 = vmatprep.subr.mxu0 0.0
      %2011 = vmatpush1.msra.mxu0 0.0
      %2012 = vmatprep.subr.mxu0 0.0
      %2013 = vmatpush1.msra.mxu0 0.0
      %2014 = vmatprep.subr.mxu0 0.0
      %2015 = vmatpush1.msra.mxu0 0.0
      %2016 = vmatprep.subr.mxu0 0.0
      %2017 = vmatpush1.msra.mxu0 0.0
      %2018 = vmatprep.subr.mxu0 0.0
      %2019 = vmatpush1.msra.mxu0 0.0
      %2020 = vmatprep.subr.mxu0 0.0
      %2021 = vmatpush1.msra.mxu0 0.0
      %2022 = vmatprep.subr.mxu0 0.0
      %2023 = vmatpush1.msra.mxu0 0.0
      %2024 = vmatprep.subr.mxu0 0.0
      %2025 = vmatpush1.msra.mxu0 0.0
      %2026 = vmatprep.subr.mxu0 0.0
      %2027 = vmatpush1.msra.mxu0 0.0
      %2028 = vmatprep.subr.mxu0 0.0
      %2029 = vmatpush1.msra.mxu0 0.0
      %2030 = vmatprep.subr.mxu0 0.0
      %2031 = vmatpush1.msra.mxu0 0.0
      %2032 = vmatprep.subr.mxu0 0.0
      %2033 = vmatpush1.msra.mxu0 0.0
      %2034 = vmatprep.subr.mxu0 0.0
      %2035 = vmatpush1.msra.mxu0 0.0
      %2036 = vmatprep.subr.mxu0 0.0
      %2037 = vmatpush1.msra.mxu0 0.0
      %2038 = vmatprep.subr.mxu0 0.0
      %2039 = vmatpush1.msra.mxu0 0.0
      %2040 = vmatprep.subr.mxu0 0.0
      %2041 = vmatpush1.msra.mxu0 0.0
      %2042 = vmatprep.subr.mxu0 0.0
      %2043 = vmatpush1.msra.mxu0 0.0
      %2044 = vmatprep.subr.mxu0 0.0
      %2045 = vmatpush1.msra.mxu0 0.0
      %2046 = vmatprep.mubr.f32.mxu0 0.0
      %2047 = vmatmul.mubr.f32.gmra.mrb[0].mxu0 %v1971
      %v2048 = vpop.f32.mrb[0].mxu0
      %v2049 = vadd.f32 1e-05, %v2048
      %v2050 = vpop.f32.mrb[0].mxu0
      %2051 = vmatprep.mubr.f32.mxu0 0.0
      %2052 = vmatmul.mubr.f32.gmra.mrb[0].mxu0 %v1974
      %v2053 = vpop.f32.mrb[0].mxu0
      %v2054 = vadd.f32 1e-05, %v2053
      %v2055 = vpop.f32.mrb[0].mxu0
      %2056 = vmatprep.mubr.f32.mxu0 0.0
      %2057 = vmatmul.mubr.f32.gmra.mrb[0].mxu0 %v1977
      %v2058 = vpop.f32.mrb[0].mxu0
      %v2059 = vadd.f32 1e-05, %v2058
      %v2060 = vpop.f32.mrb[0].mxu0
      %2061 = vmatprep.mubr.f32.mxu0 0.0
      %2062 = vmatmul.mubr.f32.gmra.mrb[0].mxu0 %v1980
      %v2063 = vpop.f32.mrb[0].mxu0
      %v2064 = vadd.f32 1e-05, %v2063
      %v2065 = vpop.f32.mrb[0].mxu0
      %2066 = vdwg.mxu0
      %v2067 = vrsqrt.pop %v2049
      %v2068 = vrsqrt.pop %v2054
      %v2069 = vrsqrt.pop %v2059
      %v2070 = vrsqrt.pop %v2064
      %v2071 = vmul.f32 %v1877, %v2067
      %v2072 = vmul.f32 %v1878, %v2068
      %v2073 = vmul.f32 %v1879, %v2069
      %v2074 = vmul.f32 %v1880, %v2070
      %s2075 = scalar_lea.vmem %s451, 32
      %v2076 = vld [vmem:[%s2075] sm:$0xff]
      %v2077 = vld [vmem:[%s2075 + $0x8] sm:$0xff]
      %v2078 = vld [vmem:[%s2075 + $0x10] sm:$0xff]
      %v2079 = vld [vmem:[%s2075 + $0x18] sm:$0xff]
      %2081 = vset.pattern.permute.xlu0 0
      %2082 = vperm.xlu0 %2081, %v2076
      %v2083 = vpop.permute.xlu0 %2082
      %2086 = vset.pattern.permute.xlu0 0
      %2087 = vperm.xlu0 %2086, %v2077
      %v2088 = vpop.permute.xlu0 %2087
      %2091 = vset.pattern.permute.xlu0 0
      %2092 = vperm.xlu0 %2091, %v2078
      %v2093 = vpop.permute.xlu0 %2092
      %2096 = vset.pattern.permute.xlu0 0
      %2097 = vperm.xlu0 %2096, %v2079
      %v2098 = vpop.permute.xlu0 %2097
      %v2100 = vmul.f32 %v2071, %v2083
      %v2101 = vmul.f32 %v2072, %v2088
      %v2102 = vmul.f32 %v2073, %v2093
      %v2103 = vmul.f32 %v2074, %v2098
      %s2104 = scalar_lea.vmem %s456, 32
      %v2105 = vld [vmem:[%s2104] sm:$0xff]
      %v2106 = vld [vmem:[%s2104 + $0x8] sm:$0xff]
      %v2107 = vld [vmem:[%s2104 + $0x10] sm:$0xff]
      %v2108 = vld [vmem:[%s2104 + $0x18] sm:$0xff]
      %2110 = vset.pattern.permute.xlu0 0
      %2111 = vperm.xlu0 %2110, %v2105
      %v2112 = vpop.permute.xlu0 %2111
      %2115 = vset.pattern.permute.xlu0 0
      %2116 = vperm.xlu0 %2115, %v2106
      %v2117 = vpop.permute.xlu0 %2116
      %2120 = vset.pattern.permute.xlu0 0
      %2121 = vperm.xlu0 %2120, %v2107
      %v2122 = vpop.permute.xlu0 %2121
      %2125 = vset.pattern.permute.xlu0 0
      %2126 = vperm.xlu0 %2125, %v2108
      %v2127 = vpop.permute.xlu0 %2126
      %v2129 = vadd.f32 %v2100, %v2112
      %v2130 = vadd.f32 %v2101, %v2117
      %v2131 = vadd.f32 %v2102, %v2122
      %v2132 = vadd.f32 %v2103, %v2127
      %v2133 = vmax.f32 %v2129, 0.0
      %v2134 = vmax.f32 %v2130, 0.0
      %v2135 = vmax.f32 %v2131, 0.0
      %v2136 = vmax.f32 %v2132, 0.0
      %s2137 = scalar_lea.vmem %s461, 32
      %v2138 = vld [vmem:[%s2137] sm:$0xff]
      %v2139 = vld [vmem:[%s2137 + $0x8] sm:$0xff]
      %v2140 = vld [vmem:[%s2137 + $0x10] sm:$0xff]
      %v2141 = vld [vmem:[%s2137 + $0x18] sm:$0xff]
      %v2142 = vadd.f32 %v2133, %v2138
      %v2143 = vadd.f32 %v2134, %v2139
      %v2144 = vadd.f32 %v2135, %v2140
      %v2145 = vadd.f32 %v2136, %v2141
      %v2146 = vadd.f32 %v2142, %v1328
      %v2147 = vadd.f32 %v2143, %v1329
      %v2148 = vadd.f32 %v2144, %v1330
      %v2149 = vadd.f32 %v2145, %v1331
      %v2150 = vmul.f32 %v2146, %v495
      %v2151 = vmul.f32 %v2147, %v495
      %v2152 = vmul.f32 %v2148, %v495
      %v2153 = vmul.f32 %v2149, %v495
      %2154 = vrot.lane.b32.xlu0 %v2150, 1
      %v2155 = vpop.permute.xlu0 %2154
      %2156 = vrot.lane.b32.xlu0 %v2151, 1
      %v2157 = vpop.permute.xlu0 %2156
      %2158 = vrot.lane.b32.xlu0 %v2152, 1
      %v2159 = vpop.permute.xlu0 %2158
      %2160 = vrot.lane.b32.xlu0 %v2153, 1
      %v2161 = vpop.permute.xlu0 %2160
      %v2162 = vmul.f32 %v2155, %v513
      %v2163 = vmul.f32 %v2157, %v513
      %v2164 = vmul.f32 %v2159, %v513
      %v2165 = vmul.f32 %v2161, %v513
      %2166 = vrot.lane.b32.xlu0 %v2150, 127
      %v2167 = vpop.permute.xlu0 %2166
      %2168 = vrot.lane.b32.xlu0 %v2151, 127
      %v2169 = vpop.permute.xlu0 %2168
      %2170 = vrot.lane.b32.xlu0 %v2152, 127
      %v2171 = vpop.permute.xlu0 %2170
      %2172 = vrot.lane.b32.xlu0 %v2153, 127
      %v2173 = vpop.permute.xlu0 %2172
      %v2174 = vmul.f32 %v2167, %v531
      %v2175 = vmul.f32 %v2169, %v531
      %v2176 = vmul.f32 %v2171, %v531
      %v2177 = vmul.f32 %v2173, %v531
      %s2178 = scalar_lea.vmem %s441, 192
      %v2179 = vld [vmem:[%s2178] sm:$0xff]
      %v2180 = vld [vmem:[%s2178 + $0x8] sm:$0xff]
      %v2181 = vld [vmem:[%s2178 + $0x10] sm:$0xff]
      %v2182 = vld [vmem:[%s2178 + $0x18] sm:$0xff]
      %s2183 = scalar_lea.vmem %s441, 224
      %v2184 = vld [vmem:[%s2183] sm:$0xff]
      %v2185 = vld [vmem:[%s2183 + $0x8] sm:$0xff]
      %v2186 = vld [vmem:[%s2183 + $0x10] sm:$0xff]
      %v2187 = vld [vmem:[%s2183 + $0x18] sm:$0xff]
      %v2189 = vsel %vm546, %v2184, 0
      %v2192 = vsel %vm546, %v2185, 0
      %v2195 = vsel %vm546, %v2186, 0
      %v2198 = vsel %vm546, %v2187, 0
      %2200 = vmatprep.subr.mxu0 0.0
      %2201 = vmatpush1.msra.mxu0 %v2150
      %2202 = vmatprep.subr.mxu0 0.0
      %2203 = vmatpush1.msra.mxu0 %v2151
      %2204 = vmatprep.subr.mxu0 0.0
      %2205 = vmatpush1.msra.mxu0 %v2152
      %2206 = vmatprep.subr.mxu0 0.0
      %2207 = vmatpush1.msra.mxu0 %v2153
      %2208 = vmatprep.subr.mxu0 0.0
      %2209 = vmatpush1.msra.mxu0 0.0
      %2210 = vmatprep.subr.mxu0 0.0
      %2211 = vmatpush1.msra.mxu0 0.0
      %2212 = vmatprep.subr.mxu0 0.0
      %2213 = vmatpush1.msra.mxu0 0.0
      %2214 = vmatprep.subr.mxu0 0.0
      %2215 = vmatpush1.msra.mxu0 0.0
      %2216 = vmatprep.subr.mxu0 0.0
      %2217 = vmatpush1.msra.mxu0 0.0
      %2218 = vmatprep.subr.mxu0 0.0
      %2219 = vmatpush1.msra.mxu0 0.0
      %2220 = vmatprep.subr.mxu0 0.0
      %2221 = vmatpush1.msra.mxu0 0.0
      %2222 = vmatprep.subr.mxu0 0.0
      %2223 = vmatpush1.msra.mxu0 0.0
      %2224 = vmatprep.subr.mxu0 0.0
      %2225 = vmatpush1.msra.mxu0 0.0
      %2226 = vmatprep.subr.mxu0 0.0
      %2227 = vmatpush1.msra.mxu0 0.0
      %2228 = vmatprep.subr.mxu0 0.0
      %2229 = vmatpush1.msra.mxu0 0.0
      %2230 = vmatprep.subr.mxu0 0.0
      %2231 = vmatpush1.msra.mxu0 0.0
      %2232 = vmatprep.subr.mxu0 0.0
      %2233 = vmatpush1.msra.mxu0 0.0
      %2234 = vmatprep.subr.mxu0 0.0
      %2235 = vmatpush1.msra.mxu0 0.0
      %2236 = vmatprep.subr.mxu0 0.0
      %2237 = vmatpush1.msra.mxu0 0.0
      %2238 = vmatprep.subr.mxu0 0.0
      %2239 = vmatpush1.msra.mxu0 0.0
      %2240 = vmatprep.subr.mxu0 0.0
      %2241 = vmatpush1.msra.mxu0 0.0
      %2242 = vmatprep.subr.mxu0 0.0
      %2243 = vmatpush1.msra.mxu0 0.0
      %2244 = vmatprep.subr.mxu0 0.0
      %2245 = vmatpush1.msra.mxu0 0.0
      %2246 = vmatprep.subr.mxu0 0.0
      %2247 = vmatpush1.msra.mxu0 0.0
      %2248 = vmatprep.subr.mxu0 0.0
      %2249 = vmatpush1.msra.mxu0 0.0
      %2250 = vmatprep.subr.mxu0 0.0
      %2251 = vmatpush1.msra.mxu0 0.0
      %2252 = vmatprep.subr.mxu0 0.0
      %2253 = vmatpush1.msra.mxu0 0.0
      %2254 = vmatprep.subr.mxu0 0.0
      %2255 = vmatpush1.msra.mxu0 0.0
      %2256 = vmatprep.subr.mxu0 0.0
      %2257 = vmatpush1.msra.mxu0 0.0
      %2258 = vmatprep.subr.mxu0 0.0
      %2259 = vmatpush1.msra.mxu0 0.0
      %2260 = vmatprep.subr.mxu0 0.0
      %2261 = vmatpush1.msra.mxu0 0.0
      %2262 = vmatprep.subr.mxu0 0.0
      %2263 = vmatpush1.msra.mxu0 0.0
      %2264 = vmatprep.mubr.f32.mxu0 0.0
      %2265 = vmatmul.mubr.f32.gmra.mrb[0].mxu0 %v2189
      %v2266 = vpop.f32.mrb[0].mxu0
      %v2267 = vadd.f32 0.0, %v2266
      %v2268 = vpop.f32.mrb[0].mxu0
      %2269 = vmatprep.mubr.f32.mxu0 0.0
      %2270 = vmatmul.mubr.f32.gmra.mrb[0].mxu0 %v2192
      %v2271 = vpop.f32.mrb[0].mxu0
      %v2272 = vadd.f32 0.0, %v2271
      %v2273 = vpop.f32.mrb[0].mxu0
      %2274 = vmatprep.mubr.f32.mxu0 0.0
      %2275 = vmatmul.mubr.f32.gmra.mrb[0].mxu0 %v2195
      %v2276 = vpop.f32.mrb[0].mxu0
      %v2277 = vadd.f32 0.0, %v2276
      %v2278 = vpop.f32.mrb[0].mxu0
      %2279 = vmatprep.mubr.f32.mxu0 0.0
      %2280 = vmatmul.mubr.f32.gmra.mrb[0].mxu0 %v2198
      %v2281 = vpop.f32.mrb[0].mxu0
      %v2282 = vadd.f32 0.0, %v2281
      %v2283 = vpop.f32.mrb[0].mxu0
      %2284 = vdwg.mxu0
      %v2286 = vsel %vm546, %v2179, 0
      %v2289 = vsel %vm546, %v2180, 0
      %v2292 = vsel %vm546, %v2181, 0
      %v2295 = vsel %vm546, %v2182, 0
      %2297 = vmatprep.subr.mxu0 0.0
      %2298 = vmatpush1.msra.mxu0 %v2162
      %2299 = vmatprep.subr.mxu0 0.0
      %2300 = vmatpush1.msra.mxu0 %v2163
      %2301 = vmatprep.subr.mxu0 0.0
      %2302 = vmatpush1.msra.mxu0 %v2164
      %2303 = vmatprep.subr.mxu0 0.0
      %2304 = vmatpush1.msra.mxu0 %v2165
      %2305 = vmatprep.subr.mxu0 0.0
      %2306 = vmatpush1.msra.mxu0 0.0
      %2307 = vmatprep.subr.mxu0 0.0
      %2308 = vmatpush1.msra.mxu0 0.0
      %2309 = vmatprep.subr.mxu0 0.0
      %2310 = vmatpush1.msra.mxu0 0.0
      %2311 = vmatprep.subr.mxu0 0.0
      %2312 = vmatpush1.msra.mxu0 0.0
      %2313 = vmatprep.subr.mxu0 0.0
      %2314 = vmatpush1.msra.mxu0 0.0
      %2315 = vmatprep.subr.mxu0 0.0
      %2316 = vmatpush1.msra.mxu0 0.0
      %2317 = vmatprep.subr.mxu0 0.0
      %2318 = vmatpush1.msra.mxu0 0.0
      %2319 = vmatprep.subr.mxu0 0.0
      %2320 = vmatpush1.msra.mxu0 0.0
      %2321 = vmatprep.subr.mxu0 0.0
      %2322 = vmatpush1.msra.mxu0 0.0
      %2323 = vmatprep.subr.mxu0 0.0
      %2324 = vmatpush1.msra.mxu0 0.0
      %2325 = vmatprep.subr.mxu0 0.0
      %2326 = vmatpush1.msra.mxu0 0.0
      %2327 = vmatprep.subr.mxu0 0.0
      %2328 = vmatpush1.msra.mxu0 0.0
      %2329 = vmatprep.subr.mxu0 0.0
      %2330 = vmatpush1.msra.mxu0 0.0
      %2331 = vmatprep.subr.mxu0 0.0
      %2332 = vmatpush1.msra.mxu0 0.0
      %2333 = vmatprep.subr.mxu0 0.0
      %2334 = vmatpush1.msra.mxu0 0.0
      %2335 = vmatprep.subr.mxu0 0.0
      %2336 = vmatpush1.msra.mxu0 0.0
      %2337 = vmatprep.subr.mxu0 0.0
      %2338 = vmatpush1.msra.mxu0 0.0
      %2339 = vmatprep.subr.mxu0 0.0
      %2340 = vmatpush1.msra.mxu0 0.0
      %2341 = vmatprep.subr.mxu0 0.0
      %2342 = vmatpush1.msra.mxu0 0.0
      %2343 = vmatprep.subr.mxu0 0.0
      %2344 = vmatpush1.msra.mxu0 0.0
      %2345 = vmatprep.subr.mxu0 0.0
      %2346 = vmatpush1.msra.mxu0 0.0
      %2347 = vmatprep.subr.mxu0 0.0
      %2348 = vmatpush1.msra.mxu0 0.0
      %2349 = vmatprep.subr.mxu0 0.0
      %2350 = vmatpush1.msra.mxu0 0.0
      %2351 = vmatprep.subr.mxu0 0.0
      %2352 = vmatpush1.msra.mxu0 0.0
      %2353 = vmatprep.subr.mxu0 0.0
      %2354 = vmatpush1.msra.mxu0 0.0
      %2355 = vmatprep.subr.mxu0 0.0
      %2356 = vmatpush1.msra.mxu0 0.0
      %2357 = vmatprep.subr.mxu0 0.0
      %2358 = vmatpush1.msra.mxu0 0.0
      %2359 = vmatprep.subr.mxu0 0.0
      %2360 = vmatpush1.msra.mxu0 0.0
      %2361 = vmatprep.mubr.f32.mxu0 0.0
      %2362 = vmatmul.mubr.f32.gmra.mrb[0].mxu0 %v2286
      %v2363 = vpop.f32.mrb[0].mxu0
      %v2364 = vadd.f32 %v2267, %v2363
      %v2365 = vpop.f32.mrb[0].mxu0
      %2366 = vmatprep.mubr.f32.mxu0 0.0
      %2367 = vmatmul.mubr.f32.gmra.mrb[0].mxu0 %v2289
      %v2368 = vpop.f32.mrb[0].mxu0
      %v2369 = vadd.f32 %v2272, %v2368
      %v2370 = vpop.f32.mrb[0].mxu0
      %2371 = vmatprep.mubr.f32.mxu0 0.0
      %2372 = vmatmul.mubr.f32.gmra.mrb[0].mxu0 %v2292
      %v2373 = vpop.f32.mrb[0].mxu0
      %v2374 = vadd.f32 %v2277, %v2373
      %v2375 = vpop.f32.mrb[0].mxu0
      %2376 = vmatprep.mubr.f32.mxu0 0.0
      %2377 = vmatmul.mubr.f32.gmra.mrb[0].mxu0 %v2295
      %v2378 = vpop.f32.mrb[0].mxu0
      %v2379 = vadd.f32 %v2282, %v2378
      %v2380 = vpop.f32.mrb[0].mxu0
      %2381 = vdwg.mxu0
      %s2382 = scalar_lea.vmem %s441, 256
      %v2383 = vld [vmem:[%s2382] sm:$0xff]
      %v2384 = vld [vmem:[%s2382 + $0x8] sm:$0xff]
      %v2385 = vld [vmem:[%s2382 + $0x10] sm:$0xff]
      %v2386 = vld [vmem:[%s2382 + $0x18] sm:$0xff]
      %v2388 = vsel %vm546, %v2383, 0
      %v2391 = vsel %vm546, %v2384, 0
      %v2394 = vsel %vm546, %v2385, 0
      %v2397 = vsel %vm546, %v2386, 0
      %2399 = vmatprep.subr.mxu0 0.0
      %2400 = vmatpush1.msra.mxu0 %v2174
      %2401 = vmatprep.subr.mxu0 0.0
      %2402 = vmatpush1.msra.mxu0 %v2175
      %2403 = vmatprep.subr.mxu0 0.0
      %2404 = vmatpush1.msra.mxu0 %v2176
      %2405 = vmatprep.subr.mxu0 0.0
      %2406 = vmatpush1.msra.mxu0 %v2177
      %2407 = vmatprep.subr.mxu0 0.0
      %2408 = vmatpush1.msra.mxu0 0.0
      %2409 = vmatprep.subr.mxu0 0.0
      %2410 = vmatpush1.msra.mxu0 0.0
      %2411 = vmatprep.subr.mxu0 0.0
      %2412 = vmatpush1.msra.mxu0 0.0
      %2413 = vmatprep.subr.mxu0 0.0
      %2414 = vmatpush1.msra.mxu0 0.0
      %2415 = vmatprep.subr.mxu0 0.0
      %2416 = vmatpush1.msra.mxu0 0.0
      %2417 = vmatprep.subr.mxu0 0.0
      %2418 = vmatpush1.msra.mxu0 0.0
      %2419 = vmatprep.subr.mxu0 0.0
      %2420 = vmatpush1.msra.mxu0 0.0
      %2421 = vmatprep.subr.mxu0 0.0
      %2422 = vmatpush1.msra.mxu0 0.0
      %2423 = vmatprep.subr.mxu0 0.0
      %2424 = vmatpush1.msra.mxu0 0.0
      %2425 = vmatprep.subr.mxu0 0.0
      %2426 = vmatpush1.msra.mxu0 0.0
      %2427 = vmatprep.subr.mxu0 0.0
      %2428 = vmatpush1.msra.mxu0 0.0
      %2429 = vmatprep.subr.mxu0 0.0
      %2430 = vmatpush1.msra.mxu0 0.0
      %2431 = vmatprep.subr.mxu0 0.0
      %2432 = vmatpush1.msra.mxu0 0.0
      %2433 = vmatprep.subr.mxu0 0.0
      %2434 = vmatpush1.msra.mxu0 0.0
      %2435 = vmatprep.subr.mxu0 0.0
      %2436 = vmatpush1.msra.mxu0 0.0
      %2437 = vmatprep.subr.mxu0 0.0
      %2438 = vmatpush1.msra.mxu0 0.0
      %2439 = vmatprep.subr.mxu0 0.0
      %2440 = vmatpush1.msra.mxu0 0.0
      %2441 = vmatprep.subr.mxu0 0.0
      %2442 = vmatpush1.msra.mxu0 0.0
      %2443 = vmatprep.subr.mxu0 0.0
      %2444 = vmatpush1.msra.mxu0 0.0
      %2445 = vmatprep.subr.mxu0 0.0
      %2446 = vmatpush1.msra.mxu0 0.0
      %2447 = vmatprep.subr.mxu0 0.0
      %2448 = vmatpush1.msra.mxu0 0.0
      %2449 = vmatprep.subr.mxu0 0.0
      %2450 = vmatpush1.msra.mxu0 0.0
      %2451 = vmatprep.subr.mxu0 0.0
      %2452 = vmatpush1.msra.mxu0 0.0
      %2453 = vmatprep.subr.mxu0 0.0
      %2454 = vmatpush1.msra.mxu0 0.0
      %2455 = vmatprep.subr.mxu0 0.0
      %2456 = vmatpush1.msra.mxu0 0.0
      %2457 = vmatprep.subr.mxu0 0.0
      %2458 = vmatpush1.msra.mxu0 0.0
      %2459 = vmatprep.subr.mxu0 0.0
      %2460 = vmatpush1.msra.mxu0 0.0
      %2461 = vmatprep.subr.mxu0 0.0
      %2462 = vmatpush1.msra.mxu0 0.0
      %2463 = vmatprep.mubr.f32.mxu0 0.0
      %2464 = vmatmul.mubr.f32.gmra.mrb[0].mxu0 %v2388
      %v2465 = vpop.f32.mrb[0].mxu0
      %v2466 = vadd.f32 0.0, %v2465
      %v2467 = vpop.f32.mrb[0].mxu0
      %2468 = vmatprep.mubr.f32.mxu0 0.0
      %2469 = vmatmul.mubr.f32.gmra.mrb[0].mxu0 %v2391
      %v2470 = vpop.f32.mrb[0].mxu0
      %v2471 = vadd.f32 0.0, %v2470
      %v2472 = vpop.f32.mrb[0].mxu0
      %2473 = vmatprep.mubr.f32.mxu0 0.0
      %2474 = vmatmul.mubr.f32.gmra.mrb[0].mxu0 %v2394
      %v2475 = vpop.f32.mrb[0].mxu0
      %v2476 = vadd.f32 0.0, %v2475
      %v2477 = vpop.f32.mrb[0].mxu0
      %2478 = vmatprep.mubr.f32.mxu0 0.0
      %2479 = vmatmul.mubr.f32.gmra.mrb[0].mxu0 %v2397
      %v2480 = vpop.f32.mrb[0].mxu0
      %v2481 = vadd.f32 0.0, %v2480
      %v2482 = vpop.f32.mrb[0].mxu0
      %2483 = vdwg.mxu0
      %v2484 = vadd.f32 %v2364, %v2466
      %v2485 = vadd.f32 %v2369, %v2471
      %v2486 = vadd.f32 %v2374, %v2476
      %v2487 = vadd.f32 %v2379, %v2481
      %s2488 = scalar_lea.vmem %s446, 64
      %v2489 = vld [vmem:[%s2488] sm:$0xff]
      %v2490 = vld [vmem:[%s2488 + $0x8] sm:$0xff]
      %v2491 = vld [vmem:[%s2488 + $0x10] sm:$0xff]
      %v2492 = vld [vmem:[%s2488 + $0x18] sm:$0xff]
      %2494 = vset.pattern.permute.xlu0 0
      %2495 = vperm.xlu0 %2494, %v2489
      %v2496 = vpop.permute.xlu0 %2495
      %2499 = vset.pattern.permute.xlu0 0
      %2500 = vperm.xlu0 %2499, %v2490
      %v2501 = vpop.permute.xlu0 %2500
      %2504 = vset.pattern.permute.xlu0 0
      %2505 = vperm.xlu0 %2504, %v2491
      %v2506 = vpop.permute.xlu0 %2505
      %2509 = vset.pattern.permute.xlu0 0
      %2510 = vperm.xlu0 %2509, %v2492
      %v2511 = vpop.permute.xlu0 %2510
      %v2513 = vadd.f32 %v2484, %v2496
      %v2514 = vadd.f32 %v2485, %v2501
      %v2515 = vadd.f32 %v2486, %v2506
      %v2516 = vadd.f32 %v2487, %v2511
      %2517 = vmatprep.subr.mxu0 0.0
      %2518 = vmatpush1.msra.mxu0 %v470
      %2519 = vmatprep.subr.mxu0 0.0
      %2520 = vmatpush1.msra.mxu0 %v471
      %2521 = vmatprep.subr.mxu0 0.0
      %2522 = vmatpush1.msra.mxu0 %v472
      %2523 = vmatprep.subr.mxu0 0.0
      %2524 = vmatpush1.msra.mxu0 %v473
      %2525 = vmatprep.subr.mxu0 0.0
      %2526 = vmatpush1.msra.mxu0 %v474
      %2527 = vmatprep.subr.mxu0 0.0
      %2528 = vmatpush1.msra.mxu0 %v475
      %2529 = vmatprep.subr.mxu0 0.0
      %2530 = vmatpush1.msra.mxu0 %v476
      %2531 = vmatprep.subr.mxu0 0.0
      %2532 = vmatpush1.msra.mxu0 %v477
      %2533 = vmatprep.subr.mxu0 0.0
      %2534 = vmatpush1.msra.mxu0 %v478
      %2535 = vmatprep.subr.mxu0 0.0
      %2536 = vmatpush1.msra.mxu0 %v479
      %2537 = vmatprep.subr.mxu0 0.0
      %2538 = vmatpush1.msra.mxu0 %v480
      %2539 = vmatprep.subr.mxu0 0.0
      %2540 = vmatpush1.msra.mxu0 %v481
      %2541 = vmatprep.subr.mxu0 0.0
      %2542 = vmatpush1.msra.mxu0 %v482
      %2543 = vmatprep.subr.mxu0 0.0
      %2544 = vmatpush1.msra.mxu0 %v483
      %2545 = vmatprep.subr.mxu0 0.0
      %2546 = vmatpush1.msra.mxu0 %v484
      %2547 = vmatprep.subr.mxu0 0.0
      %2548 = vmatpush1.msra.mxu0 %v485
      %2549 = vmatprep.subr.mxu0 0.0
      %2550 = vmatpush1.msra.mxu0 0.0
      %2551 = vmatprep.subr.mxu0 0.0
      %2552 = vmatpush1.msra.mxu0 0.0
      %2553 = vmatprep.subr.mxu0 0.0
      %2554 = vmatpush1.msra.mxu0 0.0
      %2555 = vmatprep.subr.mxu0 0.0
      %2556 = vmatpush1.msra.mxu0 0.0
      %2557 = vmatprep.subr.mxu0 0.0
      %2558 = vmatpush1.msra.mxu0 0.0
      %2559 = vmatprep.subr.mxu0 0.0
      %2560 = vmatpush1.msra.mxu0 0.0
      %2561 = vmatprep.subr.mxu0 0.0
      %2562 = vmatpush1.msra.mxu0 0.0
      %2563 = vmatprep.subr.mxu0 0.0
      %2564 = vmatpush1.msra.mxu0 0.0
      %2565 = vmatprep.subr.mxu0 0.0
      %2566 = vmatpush1.msra.mxu0 0.0
      %2567 = vmatprep.subr.mxu0 0.0
      %2568 = vmatpush1.msra.mxu0 0.0
      %2569 = vmatprep.subr.mxu0 0.0
      %2570 = vmatpush1.msra.mxu0 0.0
      %2571 = vmatprep.subr.mxu0 0.0
      %2572 = vmatpush1.msra.mxu0 0.0
      %2573 = vmatprep.subr.mxu0 0.0
      %2574 = vmatpush1.msra.mxu0 0.0
      %2575 = vmatprep.subr.mxu0 0.0
      %2576 = vmatpush1.msra.mxu0 0.0
      %2577 = vmatprep.subr.mxu0 0.0
      %2578 = vmatpush1.msra.mxu0 0.0
      %2579 = vmatprep.subr.mxu0 0.0
      %2580 = vmatpush1.msra.mxu0 0.0
      %2581 = vmatprep.mubr.f32.mxu0 0.0
      %2582 = vmatmul.mubr.f32.gmra.mrb[0].mxu0 %v2513
      %v2583 = vpop.f32.mrb[0].mxu0
      %v2584 = vadd.f32 0.0, %v2583
      %v2585 = vpop.f32.mrb[0].mxu0
      %2586 = vmatprep.mubr.f32.mxu0 0.0
      %2587 = vmatmul.mubr.f32.gmra.mrb[0].mxu0 %v2514
      %v2588 = vpop.f32.mrb[0].mxu0
      %v2589 = vadd.f32 0.0, %v2588
      %v2590 = vpop.f32.mrb[0].mxu0
      %2591 = vmatprep.mubr.f32.mxu0 0.0
      %2592 = vmatmul.mubr.f32.gmra.mrb[0].mxu0 %v2515
      %v2593 = vpop.f32.mrb[0].mxu0
      %v2594 = vadd.f32 0.0, %v2593
      %v2595 = vpop.f32.mrb[0].mxu0
      %2596 = vmatprep.mubr.f32.mxu0 0.0
      %2597 = vmatmul.mubr.f32.gmra.mrb[0].mxu0 %v2516
      %v2598 = vpop.f32.mrb[0].mxu0
      %v2599 = vadd.f32 0.0, %v2598
      %v2600 = vpop.f32.mrb[0].mxu0
      %2601 = vdwg.mxu0
      %v2603 = vsel %vm960, %v2584, 0
      %v2606 = vsel %vm960, %v2589, 0
      %v2609 = vsel %vm960, %v2594, 0
      %v2612 = vsel %vm960, %v2599, 0
      %2614 = vmatprep.subr.mxu0 0.0
      %2615 = vmatpush1.msra.mxu0 %v975
      %2616 = vmatprep.subr.mxu0 0.0
      %2617 = vmatpush1.msra.mxu0 0.0
      %2618 = vmatprep.subr.mxu0 0.0
      %2619 = vmatpush1.msra.mxu0 0.0
      %2620 = vmatprep.subr.mxu0 0.0
      %2621 = vmatpush1.msra.mxu0 0.0
      %2622 = vmatprep.subr.mxu0 0.0
      %2623 = vmatpush1.msra.mxu0 0.0
      %2624 = vmatprep.subr.mxu0 0.0
      %2625 = vmatpush1.msra.mxu0 0.0
      %2626 = vmatprep.subr.mxu0 0.0
      %2627 = vmatpush1.msra.mxu0 0.0
      %2628 = vmatprep.subr.mxu0 0.0
      %2629 = vmatpush1.msra.mxu0 0.0
      %2630 = vmatprep.subr.mxu0 0.0
      %2631 = vmatpush1.msra.mxu0 0.0
      %2632 = vmatprep.subr.mxu0 0.0
      %2633 = vmatpush1.msra.mxu0 0.0
      %2634 = vmatprep.subr.mxu0 0.0
      %2635 = vmatpush1.msra.mxu0 0.0
      %2636 = vmatprep.subr.mxu0 0.0
      %2637 = vmatpush1.msra.mxu0 0.0
      %2638 = vmatprep.subr.mxu0 0.0
      %2639 = vmatpush1.msra.mxu0 0.0
      %2640 = vmatprep.subr.mxu0 0.0
      %2641 = vmatpush1.msra.mxu0 0.0
      %2642 = vmatprep.subr.mxu0 0.0
      %2643 = vmatpush1.msra.mxu0 0.0
      %2644 = vmatprep.subr.mxu0 0.0
      %2645 = vmatpush1.msra.mxu0 0.0
      %2646 = vmatprep.subr.mxu0 0.0
      %2647 = vmatpush1.msra.mxu0 0.0
      %2648 = vmatprep.subr.mxu0 0.0
      %2649 = vmatpush1.msra.mxu0 0.0
      %2650 = vmatprep.subr.mxu0 0.0
      %2651 = vmatpush1.msra.mxu0 0.0
      %2652 = vmatprep.subr.mxu0 0.0
      %2653 = vmatpush1.msra.mxu0 0.0
      %2654 = vmatprep.subr.mxu0 0.0
      %2655 = vmatpush1.msra.mxu0 0.0
      %2656 = vmatprep.subr.mxu0 0.0
      %2657 = vmatpush1.msra.mxu0 0.0
      %2658 = vmatprep.subr.mxu0 0.0
      %2659 = vmatpush1.msra.mxu0 0.0
      %2660 = vmatprep.subr.mxu0 0.0
      %2661 = vmatpush1.msra.mxu0 0.0
      %2662 = vmatprep.subr.mxu0 0.0
      %2663 = vmatpush1.msra.mxu0 0.0
      %2664 = vmatprep.subr.mxu0 0.0
      %2665 = vmatpush1.msra.mxu0 0.0
      %2666 = vmatprep.subr.mxu0 0.0
      %2667 = vmatpush1.msra.mxu0 0.0
      %2668 = vmatprep.subr.mxu0 0.0
      %2669 = vmatpush1.msra.mxu0 0.0
      %2670 = vmatprep.subr.mxu0 0.0
      %2671 = vmatpush1.msra.mxu0 0.0
      %2672 = vmatprep.subr.mxu0 0.0
      %2673 = vmatpush1.msra.mxu0 0.0
      %2674 = vmatprep.subr.mxu0 0.0
      %2675 = vmatpush1.msra.mxu0 0.0
      %2676 = vmatprep.subr.mxu0 0.0
      %2677 = vmatpush1.msra.mxu0 0.0
      %2678 = vmatprep.mubr.f32.mxu0 0.0
      %2679 = vmatmul.mubr.f32.gmra.mrb[0].mxu0 %v2603
      %v2680 = vpop.f32.mrb[0].mxu0
      %v2681 = vadd.f32 0.0, %v2680
      %v2682 = vpop.f32.mrb[0].mxu0
      %2683 = vmatprep.mubr.f32.mxu0 0.0
      %2684 = vmatmul.mubr.f32.gmra.mrb[0].mxu0 %v2606
      %v2685 = vpop.f32.mrb[0].mxu0
      %v2686 = vadd.f32 0.0, %v2685
      %v2687 = vpop.f32.mrb[0].mxu0
      %2688 = vmatprep.mubr.f32.mxu0 0.0
      %2689 = vmatmul.mubr.f32.gmra.mrb[0].mxu0 %v2609
      %v2690 = vpop.f32.mrb[0].mxu0
      %v2691 = vadd.f32 0.0, %v2690
      %v2692 = vpop.f32.mrb[0].mxu0
      %2693 = vmatprep.mubr.f32.mxu0 0.0
      %2694 = vmatmul.mubr.f32.gmra.mrb[0].mxu0 %v2612
      %v2695 = vpop.f32.mrb[0].mxu0
      %v2696 = vadd.f32 0.0, %v2695
      %v2697 = vpop.f32.mrb[0].mxu0
      %2698 = vdwg.mxu0
      %v2699 = vsub.f32 %v2513, %v2681
      %v2700 = vsub.f32 %v2514, %v2686
      %v2701 = vsub.f32 %v2515, %v2691
      %v2702 = vsub.f32 %v2516, %v2696
      %v2703 = vmul.f32 %v2699, %v2699
      %v2704 = vmul.f32 %v2700, %v2700
      %v2705 = vmul.f32 %v2701, %v2701
      %v2706 = vmul.f32 %v2702, %v2702
      %2707 = vmatprep.subr.mxu0 0.0
      %2708 = vmatpush1.msra.mxu0 %v470
      %2709 = vmatprep.subr.mxu0 0.0
      %2710 = vmatpush1.msra.mxu0 %v471
      %2711 = vmatprep.subr.mxu0 0.0
      %2712 = vmatpush1.msra.mxu0 %v472
      %2713 = vmatprep.subr.mxu0 0.0
      %2714 = vmatpush1.msra.mxu0 %v473
      %2715 = vmatprep.subr.mxu0 0.0
      %2716 = vmatpush1.msra.mxu0 %v474
      %2717 = vmatprep.subr.mxu0 0.0
      %2718 = vmatpush1.msra.mxu0 %v475
      %2719 = vmatprep.subr.mxu0 0.0
      %2720 = vmatpush1.msra.mxu0 %v476
      %2721 = vmatprep.subr.mxu0 0.0
      %2722 = vmatpush1.msra.mxu0 %v477
      %2723 = vmatprep.subr.mxu0 0.0
      %2724 = vmatpush1.msra.mxu0 %v478
      %2725 = vmatprep.subr.mxu0 0.0
      %2726 = vmatpush1.msra.mxu0 %v479
      %2727 = vmatprep.subr.mxu0 0.0
      %2728 = vmatpush1.msra.mxu0 %v480
      %2729 = vmatprep.subr.mxu0 0.0
      %2730 = vmatpush1.msra.mxu0 %v481
      %2731 = vmatprep.subr.mxu0 0.0
      %2732 = vmatpush1.msra.mxu0 %v482
      %2733 = vmatprep.subr.mxu0 0.0
      %2734 = vmatpush1.msra.mxu0 %v483
      %2735 = vmatprep.subr.mxu0 0.0
      %2736 = vmatpush1.msra.mxu0 %v484
      %2737 = vmatprep.subr.mxu0 0.0
      %2738 = vmatpush1.msra.mxu0 %v485
      %2739 = vmatprep.subr.mxu0 0.0
      %2740 = vmatpush1.msra.mxu0 0.0
      %2741 = vmatprep.subr.mxu0 0.0
      %2742 = vmatpush1.msra.mxu0 0.0
      %2743 = vmatprep.subr.mxu0 0.0
      %2744 = vmatpush1.msra.mxu0 0.0
      %2745 = vmatprep.subr.mxu0 0.0
      %2746 = vmatpush1.msra.mxu0 0.0
      %2747 = vmatprep.subr.mxu0 0.0
      %2748 = vmatpush1.msra.mxu0 0.0
      %2749 = vmatprep.subr.mxu0 0.0
      %2750 = vmatpush1.msra.mxu0 0.0
      %2751 = vmatprep.subr.mxu0 0.0
      %2752 = vmatpush1.msra.mxu0 0.0
      %2753 = vmatprep.subr.mxu0 0.0
      %2754 = vmatpush1.msra.mxu0 0.0
      %2755 = vmatprep.subr.mxu0 0.0
      %2756 = vmatpush1.msra.mxu0 0.0
      %2757 = vmatprep.subr.mxu0 0.0
      %2758 = vmatpush1.msra.mxu0 0.0
      %2759 = vmatprep.subr.mxu0 0.0
      %2760 = vmatpush1.msra.mxu0 0.0
      %2761 = vmatprep.subr.mxu0 0.0
      %2762 = vmatpush1.msra.mxu0 0.0
      %2763 = vmatprep.subr.mxu0 0.0
      %2764 = vmatpush1.msra.mxu0 0.0
      %2765 = vmatprep.subr.mxu0 0.0
      %2766 = vmatpush1.msra.mxu0 0.0
      %2767 = vmatprep.subr.mxu0 0.0
      %2768 = vmatpush1.msra.mxu0 0.0
      %2769 = vmatprep.subr.mxu0 0.0
      %2770 = vmatpush1.msra.mxu0 0.0
      %2771 = vmatprep.mubr.f32.mxu0 0.0
      %2772 = vmatmul.mubr.f32.gmra.mrb[0].mxu0 %v2703
      %v2773 = vpop.f32.mrb[0].mxu0
      %v2774 = vadd.f32 0.0, %v2773
      %v2775 = vpop.f32.mrb[0].mxu0
      %2776 = vmatprep.mubr.f32.mxu0 0.0
      %2777 = vmatmul.mubr.f32.gmra.mrb[0].mxu0 %v2704
      %v2778 = vpop.f32.mrb[0].mxu0
      %v2779 = vadd.f32 0.0, %v2778
      %v2780 = vpop.f32.mrb[0].mxu0
      %2781 = vmatprep.mubr.f32.mxu0 0.0
      %2782 = vmatmul.mubr.f32.gmra.mrb[0].mxu0 %v2705
      %v2783 = vpop.f32.mrb[0].mxu0
      %v2784 = vadd.f32 0.0, %v2783
      %v2785 = vpop.f32.mrb[0].mxu0
      %2786 = vmatprep.mubr.f32.mxu0 0.0
      %2787 = vmatmul.mubr.f32.gmra.mrb[0].mxu0 %v2706
      %v2788 = vpop.f32.mrb[0].mxu0
      %v2789 = vadd.f32 0.0, %v2788
      %v2790 = vpop.f32.mrb[0].mxu0
      %2791 = vdwg.mxu0
      %v2793 = vsel %vm960, %v2774, 0
      %v2796 = vsel %vm960, %v2779, 0
      %v2799 = vsel %vm960, %v2784, 0
      %v2802 = vsel %vm960, %v2789, 0
      %2804 = vmatprep.subr.mxu0 0.0
      %2805 = vmatpush1.msra.mxu0 %v975
      %2806 = vmatprep.subr.mxu0 0.0
      %2807 = vmatpush1.msra.mxu0 0.0
      %2808 = vmatprep.subr.mxu0 0.0
      %2809 = vmatpush1.msra.mxu0 0.0
      %2810 = vmatprep.subr.mxu0 0.0
      %2811 = vmatpush1.msra.mxu0 0.0
      %2812 = vmatprep.subr.mxu0 0.0
      %2813 = vmatpush1.msra.mxu0 0.0
      %2814 = vmatprep.subr.mxu0 0.0
      %2815 = vmatpush1.msra.mxu0 0.0
      %2816 = vmatprep.subr.mxu0 0.0
      %2817 = vmatpush1.msra.mxu0 0.0
      %2818 = vmatprep.subr.mxu0 0.0
      %2819 = vmatpush1.msra.mxu0 0.0
      %2820 = vmatprep.subr.mxu0 0.0
      %2821 = vmatpush1.msra.mxu0 0.0
      %2822 = vmatprep.subr.mxu0 0.0
      %2823 = vmatpush1.msra.mxu0 0.0
      %2824 = vmatprep.subr.mxu0 0.0
      %2825 = vmatpush1.msra.mxu0 0.0
      %2826 = vmatprep.subr.mxu0 0.0
      %2827 = vmatpush1.msra.mxu0 0.0
      %2828 = vmatprep.subr.mxu0 0.0
      %2829 = vmatpush1.msra.mxu0 0.0
      %2830 = vmatprep.subr.mxu0 0.0
      %2831 = vmatpush1.msra.mxu0 0.0
      %2832 = vmatprep.subr.mxu0 0.0
      %2833 = vmatpush1.msra.mxu0 0.0
      %2834 = vmatprep.subr.mxu0 0.0
      %2835 = vmatpush1.msra.mxu0 0.0
      %2836 = vmatprep.subr.mxu0 0.0
      %2837 = vmatpush1.msra.mxu0 0.0
      %2838 = vmatprep.subr.mxu0 0.0
      %2839 = vmatpush1.msra.mxu0 0.0
      %2840 = vmatprep.subr.mxu0 0.0
      %2841 = vmatpush1.msra.mxu0 0.0
      %2842 = vmatprep.subr.mxu0 0.0
      %2843 = vmatpush1.msra.mxu0 0.0
      %2844 = vmatprep.subr.mxu0 0.0
      %2845 = vmatpush1.msra.mxu0 0.0
      %2846 = vmatprep.subr.mxu0 0.0
      %2847 = vmatpush1.msra.mxu0 0.0
      %2848 = vmatprep.subr.mxu0 0.0
      %2849 = vmatpush1.msra.mxu0 0.0
      %2850 = vmatprep.subr.mxu0 0.0
      %2851 = vmatpush1.msra.mxu0 0.0
      %2852 = vmatprep.subr.mxu0 0.0
      %2853 = vmatpush1.msra.mxu0 0.0
      %2854 = vmatprep.subr.mxu0 0.0
      %2855 = vmatpush1.msra.mxu0 0.0
      %2856 = vmatprep.subr.mxu0 0.0
      %2857 = vmatpush1.msra.mxu0 0.0
      %2858 = vmatprep.subr.mxu0 0.0
      %2859 = vmatpush1.msra.mxu0 0.0
      %2860 = vmatprep.subr.mxu0 0.0
      %2861 = vmatpush1.msra.mxu0 0.0
      %2862 = vmatprep.subr.mxu0 0.0
      %2863 = vmatpush1.msra.mxu0 0.0
      %2864 = vmatprep.subr.mxu0 0.0
      %2865 = vmatpush1.msra.mxu0 0.0
      %2866 = vmatprep.subr.mxu0 0.0
      %2867 = vmatpush1.msra.mxu0 0.0
      %2868 = vmatprep.mubr.f32.mxu0 0.0
      %2869 = vmatmul.mubr.f32.gmra.mrb[0].mxu0 %v2793
      %v2870 = vpop.f32.mrb[0].mxu0
      %v2871 = vadd.f32 1e-05, %v2870
      %v2872 = vpop.f32.mrb[0].mxu0
      %2873 = vmatprep.mubr.f32.mxu0 0.0
      %2874 = vmatmul.mubr.f32.gmra.mrb[0].mxu0 %v2796
      %v2875 = vpop.f32.mrb[0].mxu0
      %v2876 = vadd.f32 1e-05, %v2875
      %v2877 = vpop.f32.mrb[0].mxu0
      %2878 = vmatprep.mubr.f32.mxu0 0.0
      %2879 = vmatmul.mubr.f32.gmra.mrb[0].mxu0 %v2799
      %v2880 = vpop.f32.mrb[0].mxu0
      %v2881 = vadd.f32 1e-05, %v2880
      %v2882 = vpop.f32.mrb[0].mxu0
      %2883 = vmatprep.mubr.f32.mxu0 0.0
      %2884 = vmatmul.mubr.f32.gmra.mrb[0].mxu0 %v2802
      %v2885 = vpop.f32.mrb[0].mxu0
      %v2886 = vadd.f32 1e-05, %v2885
      %v2887 = vpop.f32.mrb[0].mxu0
      %2888 = vdwg.mxu0
      %v2889 = vrsqrt.pop %v2871
      %v2890 = vrsqrt.pop %v2876
      %v2891 = vrsqrt.pop %v2881
      %v2892 = vrsqrt.pop %v2886
      %v2893 = vmul.f32 %v2699, %v2889
      %v2894 = vmul.f32 %v2700, %v2890
      %v2895 = vmul.f32 %v2701, %v2891
      %v2896 = vmul.f32 %v2702, %v2892
      %s2897 = scalar_lea.vmem %s451, 64
      %v2898 = vld [vmem:[%s2897] sm:$0xff]
      %v2899 = vld [vmem:[%s2897 + $0x8] sm:$0xff]
      %v2900 = vld [vmem:[%s2897 + $0x10] sm:$0xff]
      %v2901 = vld [vmem:[%s2897 + $0x18] sm:$0xff]
      %2903 = vset.pattern.permute.xlu0 0
      %2904 = vperm.xlu0 %2903, %v2898
      %v2905 = vpop.permute.xlu0 %2904
      %2908 = vset.pattern.permute.xlu0 0
      %2909 = vperm.xlu0 %2908, %v2899
      %v2910 = vpop.permute.xlu0 %2909
      %2913 = vset.pattern.permute.xlu0 0
      %2914 = vperm.xlu0 %2913, %v2900
      %v2915 = vpop.permute.xlu0 %2914
      %2918 = vset.pattern.permute.xlu0 0
      %2919 = vperm.xlu0 %2918, %v2901
      %v2920 = vpop.permute.xlu0 %2919
      %v2922 = vmul.f32 %v2893, %v2905
      %v2923 = vmul.f32 %v2894, %v2910
      %v2924 = vmul.f32 %v2895, %v2915
      %v2925 = vmul.f32 %v2896, %v2920
      %s2926 = scalar_lea.vmem %s456, 64
      %v2927 = vld [vmem:[%s2926] sm:$0xff]
      %v2928 = vld [vmem:[%s2926 + $0x8] sm:$0xff]
      %v2929 = vld [vmem:[%s2926 + $0x10] sm:$0xff]
      %v2930 = vld [vmem:[%s2926 + $0x18] sm:$0xff]
      %2932 = vset.pattern.permute.xlu0 0
      %2933 = vperm.xlu0 %2932, %v2927
      %v2934 = vpop.permute.xlu0 %2933
      %2937 = vset.pattern.permute.xlu0 0
      %2938 = vperm.xlu0 %2937, %v2928
      %v2939 = vpop.permute.xlu0 %2938
      %2942 = vset.pattern.permute.xlu0 0
      %2943 = vperm.xlu0 %2942, %v2929
      %v2944 = vpop.permute.xlu0 %2943
      %2947 = vset.pattern.permute.xlu0 0
      %2948 = vperm.xlu0 %2947, %v2930
      %v2949 = vpop.permute.xlu0 %2948
      %v2951 = vadd.f32 %v2922, %v2934
      %v2952 = vadd.f32 %v2923, %v2939
      %v2953 = vadd.f32 %v2924, %v2944
      %v2954 = vadd.f32 %v2925, %v2949
      %v2955 = vmax.f32 %v2951, 0.0
      %v2956 = vmax.f32 %v2952, 0.0
      %v2957 = vmax.f32 %v2953, 0.0
      %v2958 = vmax.f32 %v2954, 0.0
      %s2959 = scalar_lea.vmem %s461, 64
      %v2960 = vld [vmem:[%s2959] sm:$0xff]
      %v2961 = vld [vmem:[%s2959 + $0x8] sm:$0xff]
      %v2962 = vld [vmem:[%s2959 + $0x10] sm:$0xff]
      %v2963 = vld [vmem:[%s2959 + $0x18] sm:$0xff]
      %v2964 = vadd.f32 %v2955, %v2960
      %v2965 = vadd.f32 %v2956, %v2961
      %v2966 = vadd.f32 %v2957, %v2962
      %v2967 = vadd.f32 %v2958, %v2963
      %v2968 = vmul.f32 %v2964, %v495
      %v2969 = vmul.f32 %v2965, %v495
      %v2970 = vmul.f32 %v2966, %v495
      %v2971 = vmul.f32 %v2967, %v495
      %2972 = vrot.lane.b32.xlu0 %v2968, 1
      %v2973 = vpop.permute.xlu0 %2972
      %2974 = vrot.lane.b32.xlu0 %v2969, 1
      %v2975 = vpop.permute.xlu0 %2974
      %2976 = vrot.lane.b32.xlu0 %v2970, 1
      %v2977 = vpop.permute.xlu0 %2976
      %2978 = vrot.lane.b32.xlu0 %v2971, 1
      %v2979 = vpop.permute.xlu0 %2978
      %v2980 = vmul.f32 %v2973, %v513
      %v2981 = vmul.f32 %v2975, %v513
      %v2982 = vmul.f32 %v2977, %v513
      %v2983 = vmul.f32 %v2979, %v513
      %2984 = vrot.lane.b32.xlu0 %v2968, 127
      %v2985 = vpop.permute.xlu0 %2984
      %2986 = vrot.lane.b32.xlu0 %v2969, 127
      %v2987 = vpop.permute.xlu0 %2986
      %2988 = vrot.lane.b32.xlu0 %v2970, 127
      %v2989 = vpop.permute.xlu0 %2988
      %2990 = vrot.lane.b32.xlu0 %v2971, 127
      %v2991 = vpop.permute.xlu0 %2990
      %v2992 = vmul.f32 %v2985, %v531
      %v2993 = vmul.f32 %v2987, %v531
      %v2994 = vmul.f32 %v2989, %v531
      %v2995 = vmul.f32 %v2991, %v531
      %s2996 = scalar_lea.vmem %s441, 288
      %v2997 = vld [vmem:[%s2996] sm:$0xff]
      %v2998 = vld [vmem:[%s2996 + $0x8] sm:$0xff]
      %v2999 = vld [vmem:[%s2996 + $0x10] sm:$0xff]
      %v3000 = vld [vmem:[%s2996 + $0x18] sm:$0xff]
      %s3001 = scalar_lea.vmem %s441, 320
      %v3002 = vld [vmem:[%s3001] sm:$0xff]
      %v3003 = vld [vmem:[%s3001 + $0x8] sm:$0xff]
      %v3004 = vld [vmem:[%s3001 + $0x10] sm:$0xff]
      %v3005 = vld [vmem:[%s3001 + $0x18] sm:$0xff]
      %v3007 = vsel %vm546, %v3002, 0
      %v3010 = vsel %vm546, %v3003, 0
      %v3013 = vsel %vm546, %v3004, 0
      %v3016 = vsel %vm546, %v3005, 0
      %3018 = vmatprep.subr.mxu0 0.0
      %3019 = vmatpush1.msra.mxu0 %v2968
      %3020 = vmatprep.subr.mxu0 0.0
      %3021 = vmatpush1.msra.mxu0 %v2969
      %3022 = vmatprep.subr.mxu0 0.0
      %3023 = vmatpush1.msra.mxu0 %v2970
      %3024 = vmatprep.subr.mxu0 0.0
      %3025 = vmatpush1.msra.mxu0 %v2971
      %3026 = vmatprep.subr.mxu0 0.0
      %3027 = vmatpush1.msra.mxu0 0.0
      %3028 = vmatprep.subr.mxu0 0.0
      %3029 = vmatpush1.msra.mxu0 0.0
      %3030 = vmatprep.subr.mxu0 0.0
      %3031 = vmatpush1.msra.mxu0 0.0
      %3032 = vmatprep.subr.mxu0 0.0
      %3033 = vmatpush1.msra.mxu0 0.0
      %3034 = vmatprep.subr.mxu0 0.0
      %3035 = vmatpush1.msra.mxu0 0.0
      %3036 = vmatprep.subr.mxu0 0.0
      %3037 = vmatpush1.msra.mxu0 0.0
      %3038 = vmatprep.subr.mxu0 0.0
      %3039 = vmatpush1.msra.mxu0 0.0
      %3040 = vmatprep.subr.mxu0 0.0
      %3041 = vmatpush1.msra.mxu0 0.0
      %3042 = vmatprep.subr.mxu0 0.0
      %3043 = vmatpush1.msra.mxu0 0.0
      %3044 = vmatprep.subr.mxu0 0.0
      %3045 = vmatpush1.msra.mxu0 0.0
      %3046 = vmatprep.subr.mxu0 0.0
      %3047 = vmatpush1.msra.mxu0 0.0
      %3048 = vmatprep.subr.mxu0 0.0
      %3049 = vmatpush1.msra.mxu0 0.0
      %3050 = vmatprep.subr.mxu0 0.0
      %3051 = vmatpush1.msra.mxu0 0.0
      %3052 = vmatprep.subr.mxu0 0.0
      %3053 = vmatpush1.msra.mxu0 0.0
      %3054 = vmatprep.subr.mxu0 0.0
      %3055 = vmatpush1.msra.mxu0 0.0
      %3056 = vmatprep.subr.mxu0 0.0
      %3057 = vmatpush1.msra.mxu0 0.0
      %3058 = vmatprep.subr.mxu0 0.0
      %3059 = vmatpush1.msra.mxu0 0.0
      %3060 = vmatprep.subr.mxu0 0.0
      %3061 = vmatpush1.msra.mxu0 0.0
      %3062 = vmatprep.subr.mxu0 0.0
      %3063 = vmatpush1.msra.mxu0 0.0
      %3064 = vmatprep.subr.mxu0 0.0
      %3065 = vmatpush1.msra.mxu0 0.0
      %3066 = vmatprep.subr.mxu0 0.0
      %3067 = vmatpush1.msra.mxu0 0.0
      %3068 = vmatprep.subr.mxu0 0.0
      %3069 = vmatpush1.msra.mxu0 0.0
      %3070 = vmatprep.subr.mxu0 0.0
      %3071 = vmatpush1.msra.mxu0 0.0
      %3072 = vmatprep.subr.mxu0 0.0
      %3073 = vmatpush1.msra.mxu0 0.0
      %3074 = vmatprep.subr.mxu0 0.0
      %3075 = vmatpush1.msra.mxu0 0.0
      %3076 = vmatprep.subr.mxu0 0.0
      %3077 = vmatpush1.msra.mxu0 0.0
      %3078 = vmatprep.subr.mxu0 0.0
      %3079 = vmatpush1.msra.mxu0 0.0
      %3080 = vmatprep.subr.mxu0 0.0
      %3081 = vmatpush1.msra.mxu0 0.0
      %3082 = vmatprep.mubr.f32.mxu0 0.0
      %3083 = vmatmul.mubr.f32.gmra.mrb[0].mxu0 %v3007
      %v3084 = vpop.f32.mrb[0].mxu0
      %v3085 = vadd.f32 0.0, %v3084
      %v3086 = vpop.f32.mrb[0].mxu0
      %3087 = vmatprep.mubr.f32.mxu0 0.0
      %3088 = vmatmul.mubr.f32.gmra.mrb[0].mxu0 %v3010
      %v3089 = vpop.f32.mrb[0].mxu0
      %v3090 = vadd.f32 0.0, %v3089
      %v3091 = vpop.f32.mrb[0].mxu0
      %3092 = vmatprep.mubr.f32.mxu0 0.0
      %3093 = vmatmul.mubr.f32.gmra.mrb[0].mxu0 %v3013
      %v3094 = vpop.f32.mrb[0].mxu0
      %v3095 = vadd.f32 0.0, %v3094
      %v3096 = vpop.f32.mrb[0].mxu0
      %3097 = vmatprep.mubr.f32.mxu0 0.0
      %3098 = vmatmul.mubr.f32.gmra.mrb[0].mxu0 %v3016
      %v3099 = vpop.f32.mrb[0].mxu0
      %v3100 = vadd.f32 0.0, %v3099
      %v3101 = vpop.f32.mrb[0].mxu0
      %3102 = vdwg.mxu0
      %v3104 = vsel %vm546, %v2997, 0
      %v3107 = vsel %vm546, %v2998, 0
      %v3110 = vsel %vm546, %v2999, 0
      %v3113 = vsel %vm546, %v3000, 0
      %3115 = vmatprep.subr.mxu0 0.0
      %3116 = vmatpush1.msra.mxu0 %v2980
      %3117 = vmatprep.subr.mxu0 0.0
      %3118 = vmatpush1.msra.mxu0 %v2981
      %3119 = vmatprep.subr.mxu0 0.0
      %3120 = vmatpush1.msra.mxu0 %v2982
      %3121 = vmatprep.subr.mxu0 0.0
      %3122 = vmatpush1.msra.mxu0 %v2983
      %3123 = vmatprep.subr.mxu0 0.0
      %3124 = vmatpush1.msra.mxu0 0.0
      %3125 = vmatprep.subr.mxu0 0.0
      %3126 = vmatpush1.msra.mxu0 0.0
      %3127 = vmatprep.subr.mxu0 0.0
      %3128 = vmatpush1.msra.mxu0 0.0
      %3129 = vmatprep.subr.mxu0 0.0
      %3130 = vmatpush1.msra.mxu0 0.0
      %3131 = vmatprep.subr.mxu0 0.0
      %3132 = vmatpush1.msra.mxu0 0.0
      %3133 = vmatprep.subr.mxu0 0.0
      %3134 = vmatpush1.msra.mxu0 0.0
      %3135 = vmatprep.subr.mxu0 0.0
      %3136 = vmatpush1.msra.mxu0 0.0
      %3137 = vmatprep.subr.mxu0 0.0
      %3138 = vmatpush1.msra.mxu0 0.0
      %3139 = vmatprep.subr.mxu0 0.0
      %3140 = vmatpush1.msra.mxu0 0.0
      %3141 = vmatprep.subr.mxu0 0.0
      %3142 = vmatpush1.msra.mxu0 0.0
      %3143 = vmatprep.subr.mxu0 0.0
      %3144 = vmatpush1.msra.mxu0 0.0
      %3145 = vmatprep.subr.mxu0 0.0
      %3146 = vmatpush1.msra.mxu0 0.0
      %3147 = vmatprep.subr.mxu0 0.0
      %3148 = vmatpush1.msra.mxu0 0.0
      %3149 = vmatprep.subr.mxu0 0.0
      %3150 = vmatpush1.msra.mxu0 0.0
      %3151 = vmatprep.subr.mxu0 0.0
      %3152 = vmatpush1.msra.mxu0 0.0
      %3153 = vmatprep.subr.mxu0 0.0
      %3154 = vmatpush1.msra.mxu0 0.0
      %3155 = vmatprep.subr.mxu0 0.0
      %3156 = vmatpush1.msra.mxu0 0.0
      %3157 = vmatprep.subr.mxu0 0.0
      %3158 = vmatpush1.msra.mxu0 0.0
      %3159 = vmatprep.subr.mxu0 0.0
      %3160 = vmatpush1.msra.mxu0 0.0
      %3161 = vmatprep.subr.mxu0 0.0
      %3162 = vmatpush1.msra.mxu0 0.0
      %3163 = vmatprep.subr.mxu0 0.0
      %3164 = vmatpush1.msra.mxu0 0.0
      %3165 = vmatprep.subr.mxu0 0.0
      %3166 = vmatpush1.msra.mxu0 0.0
      %3167 = vmatprep.subr.mxu0 0.0
      %3168 = vmatpush1.msra.mxu0 0.0
      %3169 = vmatprep.subr.mxu0 0.0
      %3170 = vmatpush1.msra.mxu0 0.0
      %3171 = vmatprep.subr.mxu0 0.0
      %3172 = vmatpush1.msra.mxu0 0.0
      %3173 = vmatprep.subr.mxu0 0.0
      %3174 = vmatpush1.msra.mxu0 0.0
      %3175 = vmatprep.subr.mxu0 0.0
      %3176 = vmatpush1.msra.mxu0 0.0
      %3177 = vmatprep.subr.mxu0 0.0
      %3178 = vmatpush1.msra.mxu0 0.0
      %3179 = vmatprep.mubr.f32.mxu0 0.0
      %3180 = vmatmul.mubr.f32.gmra.mrb[0].mxu0 %v3104
      %v3181 = vpop.f32.mrb[0].mxu0
      %v3182 = vadd.f32 %v3085, %v3181
      %v3183 = vpop.f32.mrb[0].mxu0
      %3184 = vmatprep.mubr.f32.mxu0 0.0
      %3185 = vmatmul.mubr.f32.gmra.mrb[0].mxu0 %v3107
      %v3186 = vpop.f32.mrb[0].mxu0
      %v3187 = vadd.f32 %v3090, %v3186
      %v3188 = vpop.f32.mrb[0].mxu0
      %3189 = vmatprep.mubr.f32.mxu0 0.0
      %3190 = vmatmul.mubr.f32.gmra.mrb[0].mxu0 %v3110
      %v3191 = vpop.f32.mrb[0].mxu0
      %v3192 = vadd.f32 %v3095, %v3191
      %v3193 = vpop.f32.mrb[0].mxu0
      %3194 = vmatprep.mubr.f32.mxu0 0.0
      %3195 = vmatmul.mubr.f32.gmra.mrb[0].mxu0 %v3113
      %v3196 = vpop.f32.mrb[0].mxu0
      %v3197 = vadd.f32 %v3100, %v3196
      %v3198 = vpop.f32.mrb[0].mxu0
      %3199 = vdwg.mxu0
      %s3200 = scalar_lea.vmem %s441, 352
      %v3201 = vld [vmem:[%s3200] sm:$0xff]
      %v3202 = vld [vmem:[%s3200 + $0x8] sm:$0xff]
      %v3203 = vld [vmem:[%s3200 + $0x10] sm:$0xff]
      %v3204 = vld [vmem:[%s3200 + $0x18] sm:$0xff]
      %v3206 = vsel %vm546, %v3201, 0
      %v3209 = vsel %vm546, %v3202, 0
      %v3212 = vsel %vm546, %v3203, 0
      %v3215 = vsel %vm546, %v3204, 0
      %3217 = vmatprep.subr.mxu0 0.0
      %3218 = vmatpush1.msra.mxu0 %v2992
      %3219 = vmatprep.subr.mxu0 0.0
      %3220 = vmatpush1.msra.mxu0 %v2993
      %3221 = vmatprep.subr.mxu0 0.0
      %3222 = vmatpush1.msra.mxu0 %v2994
      %3223 = vmatprep.subr.mxu0 0.0
      %3224 = vmatpush1.msra.mxu0 %v2995
      %3225 = vmatprep.subr.mxu0 0.0
      %3226 = vmatpush1.msra.mxu0 0.0
      %3227 = vmatprep.subr.mxu0 0.0
      %3228 = vmatpush1.msra.mxu0 0.0
      %3229 = vmatprep.subr.mxu0 0.0
      %3230 = vmatpush1.msra.mxu0 0.0
      %3231 = vmatprep.subr.mxu0 0.0
      %3232 = vmatpush1.msra.mxu0 0.0
      %3233 = vmatprep.subr.mxu0 0.0
      %3234 = vmatpush1.msra.mxu0 0.0
      %3235 = vmatprep.subr.mxu0 0.0
      %3236 = vmatpush1.msra.mxu0 0.0
      %3237 = vmatprep.subr.mxu0 0.0
      %3238 = vmatpush1.msra.mxu0 0.0
      %3239 = vmatprep.subr.mxu0 0.0
      %3240 = vmatpush1.msra.mxu0 0.0
      %3241 = vmatprep.subr.mxu0 0.0
      %3242 = vmatpush1.msra.mxu0 0.0
      %3243 = vmatprep.subr.mxu0 0.0
      %3244 = vmatpush1.msra.mxu0 0.0
      %3245 = vmatprep.subr.mxu0 0.0
      %3246 = vmatpush1.msra.mxu0 0.0
      %3247 = vmatprep.subr.mxu0 0.0
      %3248 = vmatpush1.msra.mxu0 0.0
      %3249 = vmatprep.subr.mxu0 0.0
      %3250 = vmatpush1.msra.mxu0 0.0
      %3251 = vmatprep.subr.mxu0 0.0
      %3252 = vmatpush1.msra.mxu0 0.0
      %3253 = vmatprep.subr.mxu0 0.0
      %3254 = vmatpush1.msra.mxu0 0.0
      %3255 = vmatprep.subr.mxu0 0.0
      %3256 = vmatpush1.msra.mxu0 0.0
      %3257 = vmatprep.subr.mxu0 0.0
      %3258 = vmatpush1.msra.mxu0 0.0
      %3259 = vmatprep.subr.mxu0 0.0
      %3260 = vmatpush1.msra.mxu0 0.0
      %3261 = vmatprep.subr.mxu0 0.0
      %3262 = vmatpush1.msra.mxu0 0.0
      %3263 = vmatprep.subr.mxu0 0.0
      %3264 = vmatpush1.msra.mxu0 0.0
      %3265 = vmatprep.subr.mxu0 0.0
      %3266 = vmatpush1.msra.mxu0 0.0
      %3267 = vmatprep.subr.mxu0 0.0
      %3268 = vmatpush1.msra.mxu0 0.0
      %3269 = vmatprep.subr.mxu0 0.0
      %3270 = vmatpush1.msra.mxu0 0.0
      %3271 = vmatprep.subr.mxu0 0.0
      %3272 = vmatpush1.msra.mxu0 0.0
      %3273 = vmatprep.subr.mxu0 0.0
      %3274 = vmatpush1.msra.mxu0 0.0
      %3275 = vmatprep.subr.mxu0 0.0
      %3276 = vmatpush1.msra.mxu0 0.0
      %3277 = vmatprep.subr.mxu0 0.0
      %3278 = vmatpush1.msra.mxu0 0.0
      %3279 = vmatprep.subr.mxu0 0.0
      %3280 = vmatpush1.msra.mxu0 0.0
      %3281 = vmatprep.mubr.f32.mxu0 0.0
      %3282 = vmatmul.mubr.f32.gmra.mrb[0].mxu0 %v3206
      %v3283 = vpop.f32.mrb[0].mxu0
      %v3284 = vadd.f32 0.0, %v3283
      %v3285 = vpop.f32.mrb[0].mxu0
      %3286 = vmatprep.mubr.f32.mxu0 0.0
      %3287 = vmatmul.mubr.f32.gmra.mrb[0].mxu0 %v3209
      %v3288 = vpop.f32.mrb[0].mxu0
      %v3289 = vadd.f32 0.0, %v3288
      %v3290 = vpop.f32.mrb[0].mxu0
      %3291 = vmatprep.mubr.f32.mxu0 0.0
      %3292 = vmatmul.mubr.f32.gmra.mrb[0].mxu0 %v3212
      %v3293 = vpop.f32.mrb[0].mxu0
      %v3294 = vadd.f32 0.0, %v3293
      %v3295 = vpop.f32.mrb[0].mxu0
      %3296 = vmatprep.mubr.f32.mxu0 0.0
      %3297 = vmatmul.mubr.f32.gmra.mrb[0].mxu0 %v3215
      %v3298 = vpop.f32.mrb[0].mxu0
      %v3299 = vadd.f32 0.0, %v3298
      %v3300 = vpop.f32.mrb[0].mxu0
      %3301 = vdwg.mxu0
      %v3302 = vadd.f32 %v3182, %v3284
      %v3303 = vadd.f32 %v3187, %v3289
      %v3304 = vadd.f32 %v3192, %v3294
      %v3305 = vadd.f32 %v3197, %v3299
      %s3306 = scalar_lea.vmem %s446, 96
      %v3307 = vld [vmem:[%s3306] sm:$0xff]
      %v3308 = vld [vmem:[%s3306 + $0x8] sm:$0xff]
      %v3309 = vld [vmem:[%s3306 + $0x10] sm:$0xff]
      %v3310 = vld [vmem:[%s3306 + $0x18] sm:$0xff]
      %3312 = vset.pattern.permute.xlu0 0
      %3313 = vperm.xlu0 %3312, %v3307
      %v3314 = vpop.permute.xlu0 %3313
      %3317 = vset.pattern.permute.xlu0 0
      %3318 = vperm.xlu0 %3317, %v3308
      %v3319 = vpop.permute.xlu0 %3318
      %3322 = vset.pattern.permute.xlu0 0
      %3323 = vperm.xlu0 %3322, %v3309
      %v3324 = vpop.permute.xlu0 %3323
      %3327 = vset.pattern.permute.xlu0 0
      %3328 = vperm.xlu0 %3327, %v3310
      %v3329 = vpop.permute.xlu0 %3328
      %v3331 = vadd.f32 %v3302, %v3314
      %v3332 = vadd.f32 %v3303, %v3319
      %v3333 = vadd.f32 %v3304, %v3324
      %v3334 = vadd.f32 %v3305, %v3329
      %3335 = vmatprep.subr.mxu0 0.0
      %3336 = vmatpush1.msra.mxu0 %v470
      %3337 = vmatprep.subr.mxu0 0.0
      %3338 = vmatpush1.msra.mxu0 %v471
      %3339 = vmatprep.subr.mxu0 0.0
      %3340 = vmatpush1.msra.mxu0 %v472
      %3341 = vmatprep.subr.mxu0 0.0
      %3342 = vmatpush1.msra.mxu0 %v473
      %3343 = vmatprep.subr.mxu0 0.0
      %3344 = vmatpush1.msra.mxu0 %v474
      %3345 = vmatprep.subr.mxu0 0.0
      %3346 = vmatpush1.msra.mxu0 %v475
      %3347 = vmatprep.subr.mxu0 0.0
      %3348 = vmatpush1.msra.mxu0 %v476
      %3349 = vmatprep.subr.mxu0 0.0
      %3350 = vmatpush1.msra.mxu0 %v477
      %3351 = vmatprep.subr.mxu0 0.0
      %3352 = vmatpush1.msra.mxu0 %v478
      %3353 = vmatprep.subr.mxu0 0.0
      %3354 = vmatpush1.msra.mxu0 %v479
      %3355 = vmatprep.subr.mxu0 0.0
      %3356 = vmatpush1.msra.mxu0 %v480
      %3357 = vmatprep.subr.mxu0 0.0
      %3358 = vmatpush1.msra.mxu0 %v481
      %3359 = vmatprep.subr.mxu0 0.0
      %3360 = vmatpush1.msra.mxu0 %v482
      %3361 = vmatprep.subr.mxu0 0.0
      %3362 = vmatpush1.msra.mxu0 %v483
      %3363 = vmatprep.subr.mxu0 0.0
      %3364 = vmatpush1.msra.mxu0 %v484
      %3365 = vmatprep.subr.mxu0 0.0
      %3366 = vmatpush1.msra.mxu0 %v485
      %3367 = vmatprep.subr.mxu0 0.0
      %3368 = vmatpush1.msra.mxu0 0.0
      %3369 = vmatprep.subr.mxu0 0.0
      %3370 = vmatpush1.msra.mxu0 0.0
      %3371 = vmatprep.subr.mxu0 0.0
      %3372 = vmatpush1.msra.mxu0 0.0
      %3373 = vmatprep.subr.mxu0 0.0
      %3374 = vmatpush1.msra.mxu0 0.0
      %3375 = vmatprep.subr.mxu0 0.0
      %3376 = vmatpush1.msra.mxu0 0.0
      %3377 = vmatprep.subr.mxu0 0.0
      %3378 = vmatpush1.msra.mxu0 0.0
      %3379 = vmatprep.subr.mxu0 0.0
      %3380 = vmatpush1.msra.mxu0 0.0
      %3381 = vmatprep.subr.mxu0 0.0
      %3382 = vmatpush1.msra.mxu0 0.0
      %3383 = vmatprep.subr.mxu0 0.0
      %3384 = vmatpush1.msra.mxu0 0.0
      %3385 = vmatprep.subr.mxu0 0.0
      %3386 = vmatpush1.msra.mxu0 0.0
      %3387 = vmatprep.subr.mxu0 0.0
      %3388 = vmatpush1.msra.mxu0 0.0
      %3389 = vmatprep.subr.mxu0 0.0
      %3390 = vmatpush1.msra.mxu0 0.0
      %3391 = vmatprep.subr.mxu0 0.0
      %3392 = vmatpush1.msra.mxu0 0.0
      %3393 = vmatprep.subr.mxu0 0.0
      %3394 = vmatpush1.msra.mxu0 0.0
      %3395 = vmatprep.subr.mxu0 0.0
      %3396 = vmatpush1.msra.mxu0 0.0
      %3397 = vmatprep.subr.mxu0 0.0
      %3398 = vmatpush1.msra.mxu0 0.0
      %3399 = vmatprep.mubr.f32.mxu0 0.0
      %3400 = vmatmul.mubr.f32.gmra.mrb[0].mxu0 %v3331
      %v3401 = vpop.f32.mrb[0].mxu0
      %v3402 = vadd.f32 0.0, %v3401
      %v3403 = vpop.f32.mrb[0].mxu0
      %3404 = vmatprep.mubr.f32.mxu0 0.0
      %3405 = vmatmul.mubr.f32.gmra.mrb[0].mxu0 %v3332
      %v3406 = vpop.f32.mrb[0].mxu0
      %v3407 = vadd.f32 0.0, %v3406
      %v3408 = vpop.f32.mrb[0].mxu0
      %3409 = vmatprep.mubr.f32.mxu0 0.0
      %3410 = vmatmul.mubr.f32.gmra.mrb[0].mxu0 %v3333
      %v3411 = vpop.f32.mrb[0].mxu0
      %v3412 = vadd.f32 0.0, %v3411
      %v3413 = vpop.f32.mrb[0].mxu0
      %3414 = vmatprep.mubr.f32.mxu0 0.0
      %3415 = vmatmul.mubr.f32.gmra.mrb[0].mxu0 %v3334
      %v3416 = vpop.f32.mrb[0].mxu0
      %v3417 = vadd.f32 0.0, %v3416
      %v3418 = vpop.f32.mrb[0].mxu0
      %3419 = vdwg.mxu0
      %v3421 = vsel %vm960, %v3402, 0
      %v3424 = vsel %vm960, %v3407, 0
      %v3427 = vsel %vm960, %v3412, 0
      %v3430 = vsel %vm960, %v3417, 0
      %3432 = vmatprep.subr.mxu0 0.0
      %3433 = vmatpush1.msra.mxu0 %v975
      %3434 = vmatprep.subr.mxu0 0.0
      %3435 = vmatpush1.msra.mxu0 0.0
      %3436 = vmatprep.subr.mxu0 0.0
      %3437 = vmatpush1.msra.mxu0 0.0
      %3438 = vmatprep.subr.mxu0 0.0
      %3439 = vmatpush1.msra.mxu0 0.0
      %3440 = vmatprep.subr.mxu0 0.0
      %3441 = vmatpush1.msra.mxu0 0.0
      %3442 = vmatprep.subr.mxu0 0.0
      %3443 = vmatpush1.msra.mxu0 0.0
      %3444 = vmatprep.subr.mxu0 0.0
      %3445 = vmatpush1.msra.mxu0 0.0
      %3446 = vmatprep.subr.mxu0 0.0
      %3447 = vmatpush1.msra.mxu0 0.0
      %3448 = vmatprep.subr.mxu0 0.0
      %3449 = vmatpush1.msra.mxu0 0.0
      %3450 = vmatprep.subr.mxu0 0.0
      %3451 = vmatpush1.msra.mxu0 0.0
      %3452 = vmatprep.subr.mxu0 0.0
      %3453 = vmatpush1.msra.mxu0 0.0
      %3454 = vmatprep.subr.mxu0 0.0
      %3455 = vmatpush1.msra.mxu0 0.0
      %3456 = vmatprep.subr.mxu0 0.0
      %3457 = vmatpush1.msra.mxu0 0.0
      %3458 = vmatprep.subr.mxu0 0.0
      %3459 = vmatpush1.msra.mxu0 0.0
      %3460 = vmatprep.subr.mxu0 0.0
      %3461 = vmatpush1.msra.mxu0 0.0
      %3462 = vmatprep.subr.mxu0 0.0
      %3463 = vmatpush1.msra.mxu0 0.0
      %3464 = vmatprep.subr.mxu0 0.0
      %3465 = vmatpush1.msra.mxu0 0.0
      %3466 = vmatprep.subr.mxu0 0.0
      %3467 = vmatpush1.msra.mxu0 0.0
      %3468 = vmatprep.subr.mxu0 0.0
      %3469 = vmatpush1.msra.mxu0 0.0
      %3470 = vmatprep.subr.mxu0 0.0
      %3471 = vmatpush1.msra.mxu0 0.0
      %3472 = vmatprep.subr.mxu0 0.0
      %3473 = vmatpush1.msra.mxu0 0.0
      %3474 = vmatprep.subr.mxu0 0.0
      %3475 = vmatpush1.msra.mxu0 0.0
      %3476 = vmatprep.subr.mxu0 0.0
      %3477 = vmatpush1.msra.mxu0 0.0
      %3478 = vmatprep.subr.mxu0 0.0
      %3479 = vmatpush1.msra.mxu0 0.0
      %3480 = vmatprep.subr.mxu0 0.0
      %3481 = vmatpush1.msra.mxu0 0.0
      %3482 = vmatprep.subr.mxu0 0.0
      %3483 = vmatpush1.msra.mxu0 0.0
      %3484 = vmatprep.subr.mxu0 0.0
      %3485 = vmatpush1.msra.mxu0 0.0
      %3486 = vmatprep.subr.mxu0 0.0
      %3487 = vmatpush1.msra.mxu0 0.0
      %3488 = vmatprep.subr.mxu0 0.0
      %3489 = vmatpush1.msra.mxu0 0.0
      %3490 = vmatprep.subr.mxu0 0.0
      %3491 = vmatpush1.msra.mxu0 0.0
      %3492 = vmatprep.subr.mxu0 0.0
      %3493 = vmatpush1.msra.mxu0 0.0
      %3494 = vmatprep.subr.mxu0 0.0
      %3495 = vmatpush1.msra.mxu0 0.0
      %3496 = vmatprep.mubr.f32.mxu0 0.0
      %3497 = vmatmul.mubr.f32.gmra.mrb[0].mxu0 %v3421
      %v3498 = vpop.f32.mrb[0].mxu0
      %v3499 = vadd.f32 0.0, %v3498
      %v3500 = vpop.f32.mrb[0].mxu0
      %3501 = vmatprep.mubr.f32.mxu0 0.0
      %3502 = vmatmul.mubr.f32.gmra.mrb[0].mxu0 %v3424
      %v3503 = vpop.f32.mrb[0].mxu0
      %v3504 = vadd.f32 0.0, %v3503
      %v3505 = vpop.f32.mrb[0].mxu0
      %3506 = vmatprep.mubr.f32.mxu0 0.0
      %3507 = vmatmul.mubr.f32.gmra.mrb[0].mxu0 %v3427
      %v3508 = vpop.f32.mrb[0].mxu0
      %v3509 = vadd.f32 0.0, %v3508
      %v3510 = vpop.f32.mrb[0].mxu0
      %3511 = vmatprep.mubr.f32.mxu0 0.0
      %3512 = vmatmul.mubr.f32.gmra.mrb[0].mxu0 %v3430
      %v3513 = vpop.f32.mrb[0].mxu0
      %v3514 = vadd.f32 0.0, %v3513
      %v3515 = vpop.f32.mrb[0].mxu0
      %3516 = vdwg.mxu0
      %v3517 = vsub.f32 %v3331, %v3499
      %v3518 = vsub.f32 %v3332, %v3504
      %v3519 = vsub.f32 %v3333, %v3509
      %v3520 = vsub.f32 %v3334, %v3514
      %v3521 = vmul.f32 %v3517, %v3517
      %v3522 = vmul.f32 %v3518, %v3518
      %v3523 = vmul.f32 %v3519, %v3519
      %v3524 = vmul.f32 %v3520, %v3520
      %3525 = vmatprep.subr.mxu0 0.0
      %3526 = vmatpush1.msra.mxu0 %v470
      %3527 = vmatprep.subr.mxu0 0.0
      %3528 = vmatpush1.msra.mxu0 %v471
      %3529 = vmatprep.subr.mxu0 0.0
      %3530 = vmatpush1.msra.mxu0 %v472
      %3531 = vmatprep.subr.mxu0 0.0
      %3532 = vmatpush1.msra.mxu0 %v473
      %3533 = vmatprep.subr.mxu0 0.0
      %3534 = vmatpush1.msra.mxu0 %v474
      %3535 = vmatprep.subr.mxu0 0.0
      %3536 = vmatpush1.msra.mxu0 %v475
      %3537 = vmatprep.subr.mxu0 0.0
      %3538 = vmatpush1.msra.mxu0 %v476
      %3539 = vmatprep.subr.mxu0 0.0
      %3540 = vmatpush1.msra.mxu0 %v477
      %3541 = vmatprep.subr.mxu0 0.0
      %3542 = vmatpush1.msra.mxu0 %v478
      %3543 = vmatprep.subr.mxu0 0.0
      %3544 = vmatpush1.msra.mxu0 %v479
      %3545 = vmatprep.subr.mxu0 0.0
      %3546 = vmatpush1.msra.mxu0 %v480
      %3547 = vmatprep.subr.mxu0 0.0
      %3548 = vmatpush1.msra.mxu0 %v481
      %3549 = vmatprep.subr.mxu0 0.0
      %3550 = vmatpush1.msra.mxu0 %v482
      %3551 = vmatprep.subr.mxu0 0.0
      %3552 = vmatpush1.msra.mxu0 %v483
      %3553 = vmatprep.subr.mxu0 0.0
      %3554 = vmatpush1.msra.mxu0 %v484
      %3555 = vmatprep.subr.mxu0 0.0
      %3556 = vmatpush1.msra.mxu0 %v485
      %3557 = vmatprep.subr.mxu0 0.0
      %3558 = vmatpush1.msra.mxu0 0.0
      %3559 = vmatprep.subr.mxu0 0.0
      %3560 = vmatpush1.msra.mxu0 0.0
      %3561 = vmatprep.subr.mxu0 0.0
      %3562 = vmatpush1.msra.mxu0 0.0
      %3563 = vmatprep.subr.mxu0 0.0
      %3564 = vmatpush1.msra.mxu0 0.0
      %3565 = vmatprep.subr.mxu0 0.0
      %3566 = vmatpush1.msra.mxu0 0.0
      %3567 = vmatprep.subr.mxu0 0.0
      %3568 = vmatpush1.msra.mxu0 0.0
      %3569 = vmatprep.subr.mxu0 0.0
      %3570 = vmatpush1.msra.mxu0 0.0
      %3571 = vmatprep.subr.mxu0 0.0
      %3572 = vmatpush1.msra.mxu0 0.0
      %3573 = vmatprep.subr.mxu0 0.0
      %3574 = vmatpush1.msra.mxu0 0.0
      %3575 = vmatprep.subr.mxu0 0.0
      %3576 = vmatpush1.msra.mxu0 0.0
      %3577 = vmatprep.subr.mxu0 0.0
      %3578 = vmatpush1.msra.mxu0 0.0
      %3579 = vmatprep.subr.mxu0 0.0
      %3580 = vmatpush1.msra.mxu0 0.0
      %3581 = vmatprep.subr.mxu0 0.0
      %3582 = vmatpush1.msra.mxu0 0.0
      %3583 = vmatprep.subr.mxu0 0.0
      %3584 = vmatpush1.msra.mxu0 0.0
      %3585 = vmatprep.subr.mxu0 0.0
      %3586 = vmatpush1.msra.mxu0 0.0
      %3587 = vmatprep.subr.mxu0 0.0
      %3588 = vmatpush1.msra.mxu0 0.0
      %3589 = vmatprep.mubr.f32.mxu0 0.0
      %3590 = vmatmul.mubr.f32.gmra.mrb[0].mxu0 %v3521
      %v3591 = vpop.f32.mrb[0].mxu0
      %v3592 = vadd.f32 0.0, %v3591
      %v3593 = vpop.f32.mrb[0].mxu0
      %3594 = vmatprep.mubr.f32.mxu0 0.0
      %3595 = vmatmul.mubr.f32.gmra.mrb[0].mxu0 %v3522
      %v3596 = vpop.f32.mrb[0].mxu0
      %v3597 = vadd.f32 0.0, %v3596
      %v3598 = vpop.f32.mrb[0].mxu0
      %3599 = vmatprep.mubr.f32.mxu0 0.0
      %3600 = vmatmul.mubr.f32.gmra.mrb[0].mxu0 %v3523
      %v3601 = vpop.f32.mrb[0].mxu0
      %v3602 = vadd.f32 0.0, %v3601
      %v3603 = vpop.f32.mrb[0].mxu0
      %3604 = vmatprep.mubr.f32.mxu0 0.0
      %3605 = vmatmul.mubr.f32.gmra.mrb[0].mxu0 %v3524
      %v3606 = vpop.f32.mrb[0].mxu0
      %v3607 = vadd.f32 0.0, %v3606
      %v3608 = vpop.f32.mrb[0].mxu0
      %3609 = vdwg.mxu0
      %v3611 = vsel %vm960, %v3592, 0
      %v3614 = vsel %vm960, %v3597, 0
      %v3617 = vsel %vm960, %v3602, 0
      %v3620 = vsel %vm960, %v3607, 0
      %3622 = vmatprep.subr.mxu0 0.0
      %3623 = vmatpush1.msra.mxu0 %v975
      %3624 = vmatprep.subr.mxu0 0.0
      %3625 = vmatpush1.msra.mxu0 0.0
      %3626 = vmatprep.subr.mxu0 0.0
      %3627 = vmatpush1.msra.mxu0 0.0
      %3628 = vmatprep.subr.mxu0 0.0
      %3629 = vmatpush1.msra.mxu0 0.0
      %3630 = vmatprep.subr.mxu0 0.0
      %3631 = vmatpush1.msra.mxu0 0.0
      %3632 = vmatprep.subr.mxu0 0.0
      %3633 = vmatpush1.msra.mxu0 0.0
      %3634 = vmatprep.subr.mxu0 0.0
      %3635 = vmatpush1.msra.mxu0 0.0
      %3636 = vmatprep.subr.mxu0 0.0
      %3637 = vmatpush1.msra.mxu0 0.0
      %3638 = vmatprep.subr.mxu0 0.0
      %3639 = vmatpush1.msra.mxu0 0.0
      %3640 = vmatprep.subr.mxu0 0.0
      %3641 = vmatpush1.msra.mxu0 0.0
      %3642 = vmatprep.subr.mxu0 0.0
      %3643 = vmatpush1.msra.mxu0 0.0
      %3644 = vmatprep.subr.mxu0 0.0
      %3645 = vmatpush1.msra.mxu0 0.0
      %3646 = vmatprep.subr.mxu0 0.0
      %3647 = vmatpush1.msra.mxu0 0.0
      %3648 = vmatprep.subr.mxu0 0.0
      %3649 = vmatpush1.msra.mxu0 0.0
      %3650 = vmatprep.subr.mxu0 0.0
      %3651 = vmatpush1.msra.mxu0 0.0
      %3652 = vmatprep.subr.mxu0 0.0
      %3653 = vmatpush1.msra.mxu0 0.0
      %3654 = vmatprep.subr.mxu0 0.0
      %3655 = vmatpush1.msra.mxu0 0.0
      %3656 = vmatprep.subr.mxu0 0.0
      %3657 = vmatpush1.msra.mxu0 0.0
      %3658 = vmatprep.subr.mxu0 0.0
      %3659 = vmatpush1.msra.mxu0 0.0
      %3660 = vmatprep.subr.mxu0 0.0
      %3661 = vmatpush1.msra.mxu0 0.0
      %3662 = vmatprep.subr.mxu0 0.0
      %3663 = vmatpush1.msra.mxu0 0.0
      %3664 = vmatprep.subr.mxu0 0.0
      %3665 = vmatpush1.msra.mxu0 0.0
      %3666 = vmatprep.subr.mxu0 0.0
      %3667 = vmatpush1.msra.mxu0 0.0
      %3668 = vmatprep.subr.mxu0 0.0
      %3669 = vmatpush1.msra.mxu0 0.0
      %3670 = vmatprep.subr.mxu0 0.0
      %3671 = vmatpush1.msra.mxu0 0.0
      %3672 = vmatprep.subr.mxu0 0.0
      %3673 = vmatpush1.msra.mxu0 0.0
      %3674 = vmatprep.subr.mxu0 0.0
      %3675 = vmatpush1.msra.mxu0 0.0
      %3676 = vmatprep.subr.mxu0 0.0
      %3677 = vmatpush1.msra.mxu0 0.0
      %3678 = vmatprep.subr.mxu0 0.0
      %3679 = vmatpush1.msra.mxu0 0.0
      %3680 = vmatprep.subr.mxu0 0.0
      %3681 = vmatpush1.msra.mxu0 0.0
      %3682 = vmatprep.subr.mxu0 0.0
      %3683 = vmatpush1.msra.mxu0 0.0
      %3684 = vmatprep.subr.mxu0 0.0
      %3685 = vmatpush1.msra.mxu0 0.0
      %3686 = vmatprep.mubr.f32.mxu0 0.0
      %3687 = vmatmul.mubr.f32.gmra.mrb[0].mxu0 %v3611
      %v3688 = vpop.f32.mrb[0].mxu0
      %v3689 = vadd.f32 1e-05, %v3688
      %v3690 = vpop.f32.mrb[0].mxu0
      %3691 = vmatprep.mubr.f32.mxu0 0.0
      %3692 = vmatmul.mubr.f32.gmra.mrb[0].mxu0 %v3614
      %v3693 = vpop.f32.mrb[0].mxu0
      %v3694 = vadd.f32 1e-05, %v3693
      %v3695 = vpop.f32.mrb[0].mxu0
      %3696 = vmatprep.mubr.f32.mxu0 0.0
      %3697 = vmatmul.mubr.f32.gmra.mrb[0].mxu0 %v3617
      %v3698 = vpop.f32.mrb[0].mxu0
      %v3699 = vadd.f32 1e-05, %v3698
      %v3700 = vpop.f32.mrb[0].mxu0
      %3701 = vmatprep.mubr.f32.mxu0 0.0
      %3702 = vmatmul.mubr.f32.gmra.mrb[0].mxu0 %v3620
      %v3703 = vpop.f32.mrb[0].mxu0
      %v3704 = vadd.f32 1e-05, %v3703
      %v3705 = vpop.f32.mrb[0].mxu0
      %3706 = vdwg.mxu0
      %v3707 = vrsqrt.pop %v3689
      %v3708 = vrsqrt.pop %v3694
      %v3709 = vrsqrt.pop %v3699
      %v3710 = vrsqrt.pop %v3704
      %v3711 = vmul.f32 %v3517, %v3707
      %v3712 = vmul.f32 %v3518, %v3708
      %v3713 = vmul.f32 %v3519, %v3709
      %v3714 = vmul.f32 %v3520, %v3710
      %s3715 = scalar_lea.vmem %s451, 96
      %v3716 = vld [vmem:[%s3715] sm:$0xff]
      %v3717 = vld [vmem:[%s3715 + $0x8] sm:$0xff]
      %v3718 = vld [vmem:[%s3715 + $0x10] sm:$0xff]
      %v3719 = vld [vmem:[%s3715 + $0x18] sm:$0xff]
      %3721 = vset.pattern.permute.xlu0 0
      %3722 = vperm.xlu0 %3721, %v3716
      %v3723 = vpop.permute.xlu0 %3722
      %3726 = vset.pattern.permute.xlu0 0
      %3727 = vperm.xlu0 %3726, %v3717
      %v3728 = vpop.permute.xlu0 %3727
      %3731 = vset.pattern.permute.xlu0 0
      %3732 = vperm.xlu0 %3731, %v3718
      %v3733 = vpop.permute.xlu0 %3732
      %3736 = vset.pattern.permute.xlu0 0
      %3737 = vperm.xlu0 %3736, %v3719
      %v3738 = vpop.permute.xlu0 %3737
      %v3740 = vmul.f32 %v3711, %v3723
      %v3741 = vmul.f32 %v3712, %v3728
      %v3742 = vmul.f32 %v3713, %v3733
      %v3743 = vmul.f32 %v3714, %v3738
      %s3744 = scalar_lea.vmem %s456, 96
      %v3745 = vld [vmem:[%s3744] sm:$0xff]
      %v3746 = vld [vmem:[%s3744 + $0x8] sm:$0xff]
      %v3747 = vld [vmem:[%s3744 + $0x10] sm:$0xff]
      %v3748 = vld [vmem:[%s3744 + $0x18] sm:$0xff]
      %3750 = vset.pattern.permute.xlu0 0
      %3751 = vperm.xlu0 %3750, %v3745
      %v3752 = vpop.permute.xlu0 %3751
      %3755 = vset.pattern.permute.xlu0 0
      %3756 = vperm.xlu0 %3755, %v3746
      %v3757 = vpop.permute.xlu0 %3756
      %3760 = vset.pattern.permute.xlu0 0
      %3761 = vperm.xlu0 %3760, %v3747
      %v3762 = vpop.permute.xlu0 %3761
      %3765 = vset.pattern.permute.xlu0 0
      %3766 = vperm.xlu0 %3765, %v3748
      %v3767 = vpop.permute.xlu0 %3766
      %v3769 = vadd.f32 %v3740, %v3752
      %v3770 = vadd.f32 %v3741, %v3757
      %v3771 = vadd.f32 %v3742, %v3762
      %v3772 = vadd.f32 %v3743, %v3767
      %v3773 = vmax.f32 %v3769, 0.0
      %v3774 = vmax.f32 %v3770, 0.0
      %v3775 = vmax.f32 %v3771, 0.0
      %v3776 = vmax.f32 %v3772, 0.0
      %s3777 = scalar_lea.vmem %s461, 96
      %v3778 = vld [vmem:[%s3777] sm:$0xff]
      %v3779 = vld [vmem:[%s3777 + $0x8] sm:$0xff]
      %v3780 = vld [vmem:[%s3777 + $0x10] sm:$0xff]
      %v3781 = vld [vmem:[%s3777 + $0x18] sm:$0xff]
      %v3782 = vadd.f32 %v3773, %v3778
      %v3783 = vadd.f32 %v3774, %v3779
      %v3784 = vadd.f32 %v3775, %v3780
      %v3785 = vadd.f32 %v3776, %v3781
      %v3786 = vadd.f32 %v3782, %v2968
      %v3787 = vadd.f32 %v3783, %v2969
      %v3788 = vadd.f32 %v3784, %v2970
      %v3789 = vadd.f32 %v3785, %v2971
      %v3790 = vmul.f32 %v3786, %v495
      %v3791 = vmul.f32 %v3787, %v495
      %v3792 = vmul.f32 %v3788, %v495
      %v3793 = vmul.f32 %v3789, %v495
      %3794 = vrot.lane.b32.xlu0 %v3790, 1
      %v3795 = vpop.permute.xlu0 %3794
      %3796 = vrot.lane.b32.xlu0 %v3791, 1
      %v3797 = vpop.permute.xlu0 %3796
      %3798 = vrot.lane.b32.xlu0 %v3792, 1
      %v3799 = vpop.permute.xlu0 %3798
      %3800 = vrot.lane.b32.xlu0 %v3793, 1
      %v3801 = vpop.permute.xlu0 %3800
      %v3802 = vmul.f32 %v3795, %v513
      %v3803 = vmul.f32 %v3797, %v513
      %v3804 = vmul.f32 %v3799, %v513
      %v3805 = vmul.f32 %v3801, %v513
      %3806 = vrot.lane.b32.xlu0 %v3790, 127
      %v3807 = vpop.permute.xlu0 %3806
      %3808 = vrot.lane.b32.xlu0 %v3791, 127
      %v3809 = vpop.permute.xlu0 %3808
      %3810 = vrot.lane.b32.xlu0 %v3792, 127
      %v3811 = vpop.permute.xlu0 %3810
      %3812 = vrot.lane.b32.xlu0 %v3793, 127
      %v3813 = vpop.permute.xlu0 %3812
      %v3814 = vmul.f32 %v3807, %v531
      %v3815 = vmul.f32 %v3809, %v531
      %v3816 = vmul.f32 %v3811, %v531
      %v3817 = vmul.f32 %v3813, %v531
      %s3818 = scalar_lea.vmem %s441, 384
      %v3819 = vld [vmem:[%s3818] sm:$0xff]
      %v3820 = vld [vmem:[%s3818 + $0x8] sm:$0xff]
      %v3821 = vld [vmem:[%s3818 + $0x10] sm:$0xff]
      %v3822 = vld [vmem:[%s3818 + $0x18] sm:$0xff]
      %s3823 = scalar_lea.vmem %s441, 416
      %v3824 = vld [vmem:[%s3823] sm:$0xff]
      %v3825 = vld [vmem:[%s3823 + $0x8] sm:$0xff]
      %v3826 = vld [vmem:[%s3823 + $0x10] sm:$0xff]
      %v3827 = vld [vmem:[%s3823 + $0x18] sm:$0xff]
      %v3829 = vsel %vm546, %v3824, 0
      %v3832 = vsel %vm546, %v3825, 0
      %v3835 = vsel %vm546, %v3826, 0
      %v3838 = vsel %vm546, %v3827, 0
      %3840 = vmatprep.subr.mxu0 0.0
      %3841 = vmatpush1.msra.mxu0 %v3790
      %3842 = vmatprep.subr.mxu0 0.0
      %3843 = vmatpush1.msra.mxu0 %v3791
      %3844 = vmatprep.subr.mxu0 0.0
      %3845 = vmatpush1.msra.mxu0 %v3792
      %3846 = vmatprep.subr.mxu0 0.0
      %3847 = vmatpush1.msra.mxu0 %v3793
      %3848 = vmatprep.subr.mxu0 0.0
      %3849 = vmatpush1.msra.mxu0 0.0
      %3850 = vmatprep.subr.mxu0 0.0
      %3851 = vmatpush1.msra.mxu0 0.0
      %3852 = vmatprep.subr.mxu0 0.0
      %3853 = vmatpush1.msra.mxu0 0.0
      %3854 = vmatprep.subr.mxu0 0.0
      %3855 = vmatpush1.msra.mxu0 0.0
      %3856 = vmatprep.subr.mxu0 0.0
      %3857 = vmatpush1.msra.mxu0 0.0
      %3858 = vmatprep.subr.mxu0 0.0
      %3859 = vmatpush1.msra.mxu0 0.0
      %3860 = vmatprep.subr.mxu0 0.0
      %3861 = vmatpush1.msra.mxu0 0.0
      %3862 = vmatprep.subr.mxu0 0.0
      %3863 = vmatpush1.msra.mxu0 0.0
      %3864 = vmatprep.subr.mxu0 0.0
      %3865 = vmatpush1.msra.mxu0 0.0
      %3866 = vmatprep.subr.mxu0 0.0
      %3867 = vmatpush1.msra.mxu0 0.0
      %3868 = vmatprep.subr.mxu0 0.0
      %3869 = vmatpush1.msra.mxu0 0.0
      %3870 = vmatprep.subr.mxu0 0.0
      %3871 = vmatpush1.msra.mxu0 0.0
      %3872 = vmatprep.subr.mxu0 0.0
      %3873 = vmatpush1.msra.mxu0 0.0
      %3874 = vmatprep.subr.mxu0 0.0
      %3875 = vmatpush1.msra.mxu0 0.0
      %3876 = vmatprep.subr.mxu0 0.0
      %3877 = vmatpush1.msra.mxu0 0.0
      %3878 = vmatprep.subr.mxu0 0.0
      %3879 = vmatpush1.msra.mxu0 0.0
      %3880 = vmatprep.subr.mxu0 0.0
      %3881 = vmatpush1.msra.mxu0 0.0
      %3882 = vmatprep.subr.mxu0 0.0
      %3883 = vmatpush1.msra.mxu0 0.0
      %3884 = vmatprep.subr.mxu0 0.0
      %3885 = vmatpush1.msra.mxu0 0.0
      %3886 = vmatprep.subr.mxu0 0.0
      %3887 = vmatpush1.msra.mxu0 0.0
      %3888 = vmatprep.subr.mxu0 0.0
      %3889 = vmatpush1.msra.mxu0 0.0
      %3890 = vmatprep.subr.mxu0 0.0
      %3891 = vmatpush1.msra.mxu0 0.0
      %3892 = vmatprep.subr.mxu0 0.0
      %3893 = vmatpush1.msra.mxu0 0.0
      %3894 = vmatprep.subr.mxu0 0.0
      %3895 = vmatpush1.msra.mxu0 0.0
      %3896 = vmatprep.subr.mxu0 0.0
      %3897 = vmatpush1.msra.mxu0 0.0
      %3898 = vmatprep.subr.mxu0 0.0
      %3899 = vmatpush1.msra.mxu0 0.0
      %3900 = vmatprep.subr.mxu0 0.0
      %3901 = vmatpush1.msra.mxu0 0.0
      %3902 = vmatprep.subr.mxu0 0.0
      %3903 = vmatpush1.msra.mxu0 0.0
      %3904 = vmatprep.mubr.f32.mxu0 0.0
      %3905 = vmatmul.mubr.f32.gmra.mrb[0].mxu0 %v3829
      %v3906 = vpop.f32.mrb[0].mxu0
      %v3907 = vadd.f32 0.0, %v3906
      %v3908 = vpop.f32.mrb[0].mxu0
      %3909 = vmatprep.mubr.f32.mxu0 0.0
      %3910 = vmatmul.mubr.f32.gmra.mrb[0].mxu0 %v3832
      %v3911 = vpop.f32.mrb[0].mxu0
      %v3912 = vadd.f32 0.0, %v3911
      %v3913 = vpop.f32.mrb[0].mxu0
      %3914 = vmatprep.mubr.f32.mxu0 0.0
      %3915 = vmatmul.mubr.f32.gmra.mrb[0].mxu0 %v3835
      %v3916 = vpop.f32.mrb[0].mxu0
      %v3917 = vadd.f32 0.0, %v3916
      %v3918 = vpop.f32.mrb[0].mxu0
      %3919 = vmatprep.mubr.f32.mxu0 0.0
      %3920 = vmatmul.mubr.f32.gmra.mrb[0].mxu0 %v3838
      %v3921 = vpop.f32.mrb[0].mxu0
      %v3922 = vadd.f32 0.0, %v3921
      %v3923 = vpop.f32.mrb[0].mxu0
      %3924 = vdwg.mxu0
      %v3926 = vsel %vm546, %v3819, 0
      %v3929 = vsel %vm546, %v3820, 0
      %v3932 = vsel %vm546, %v3821, 0
      %v3935 = vsel %vm546, %v3822, 0
      %3937 = vmatprep.subr.mxu0 0.0
      %3938 = vmatpush1.msra.mxu0 %v3802
      %3939 = vmatprep.subr.mxu0 0.0
      %3940 = vmatpush1.msra.mxu0 %v3803
      %3941 = vmatprep.subr.mxu0 0.0
      %3942 = vmatpush1.msra.mxu0 %v3804
      %3943 = vmatprep.subr.mxu0 0.0
      %3944 = vmatpush1.msra.mxu0 %v3805
      %3945 = vmatprep.subr.mxu0 0.0
      %3946 = vmatpush1.msra.mxu0 0.0
      %3947 = vmatprep.subr.mxu0 0.0
      %3948 = vmatpush1.msra.mxu0 0.0
      %3949 = vmatprep.subr.mxu0 0.0
      %3950 = vmatpush1.msra.mxu0 0.0
      %3951 = vmatprep.subr.mxu0 0.0
      %3952 = vmatpush1.msra.mxu0 0.0
      %3953 = vmatprep.subr.mxu0 0.0
      %3954 = vmatpush1.msra.mxu0 0.0
      %3955 = vmatprep.subr.mxu0 0.0
      %3956 = vmatpush1.msra.mxu0 0.0
      %3957 = vmatprep.subr.mxu0 0.0
      %3958 = vmatpush1.msra.mxu0 0.0
      %3959 = vmatprep.subr.mxu0 0.0
      %3960 = vmatpush1.msra.mxu0 0.0
      %3961 = vmatprep.subr.mxu0 0.0
      %3962 = vmatpush1.msra.mxu0 0.0
      %3963 = vmatprep.subr.mxu0 0.0
      %3964 = vmatpush1.msra.mxu0 0.0
      %3965 = vmatprep.subr.mxu0 0.0
      %3966 = vmatpush1.msra.mxu0 0.0
      %3967 = vmatprep.subr.mxu0 0.0
      %3968 = vmatpush1.msra.mxu0 0.0
      %3969 = vmatprep.subr.mxu0 0.0
      %3970 = vmatpush1.msra.mxu0 0.0
      %3971 = vmatprep.subr.mxu0 0.0
      %3972 = vmatpush1.msra.mxu0 0.0
      %3973 = vmatprep.subr.mxu0 0.0
      %3974 = vmatpush1.msra.mxu0 0.0
      %3975 = vmatprep.subr.mxu0 0.0
      %3976 = vmatpush1.msra.mxu0 0.0
      %3977 = vmatprep.subr.mxu0 0.0
      %3978 = vmatpush1.msra.mxu0 0.0
      %3979 = vmatprep.subr.mxu0 0.0
      %3980 = vmatpush1.msra.mxu0 0.0
      %3981 = vmatprep.subr.mxu0 0.0
      %3982 = vmatpush1.msra.mxu0 0.0
      %3983 = vmatprep.subr.mxu0 0.0
      %3984 = vmatpush1.msra.mxu0 0.0
      %3985 = vmatprep.subr.mxu0 0.0
      %3986 = vmatpush1.msra.mxu0 0.0
      %3987 = vmatprep.subr.mxu0 0.0
      %3988 = vmatpush1.msra.mxu0 0.0
      %3989 = vmatprep.subr.mxu0 0.0
      %3990 = vmatpush1.msra.mxu0 0.0
      %3991 = vmatprep.subr.mxu0 0.0
      %3992 = vmatpush1.msra.mxu0 0.0
      %3993 = vmatprep.subr.mxu0 0.0
      %3994 = vmatpush1.msra.mxu0 0.0
      %3995 = vmatprep.subr.mxu0 0.0
      %3996 = vmatpush1.msra.mxu0 0.0
      %3997 = vmatprep.subr.mxu0 0.0
      %3998 = vmatpush1.msra.mxu0 0.0
      %3999 = vmatprep.subr.mxu0 0.0
      %4000 = vmatpush1.msra.mxu0 0.0
      %4001 = vmatprep.mubr.f32.mxu0 0.0
      %4002 = vmatmul.mubr.f32.gmra.mrb[0].mxu0 %v3926
      %v4003 = vpop.f32.mrb[0].mxu0
      %v4004 = vadd.f32 %v3907, %v4003
      %v4005 = vpop.f32.mrb[0].mxu0
      %4006 = vmatprep.mubr.f32.mxu0 0.0
      %4007 = vmatmul.mubr.f32.gmra.mrb[0].mxu0 %v3929
      %v4008 = vpop.f32.mrb[0].mxu0
      %v4009 = vadd.f32 %v3912, %v4008
      %v4010 = vpop.f32.mrb[0].mxu0
      %4011 = vmatprep.mubr.f32.mxu0 0.0
      %4012 = vmatmul.mubr.f32.gmra.mrb[0].mxu0 %v3932
      %v4013 = vpop.f32.mrb[0].mxu0
      %v4014 = vadd.f32 %v3917, %v4013
      %v4015 = vpop.f32.mrb[0].mxu0
      %4016 = vmatprep.mubr.f32.mxu0 0.0
      %4017 = vmatmul.mubr.f32.gmra.mrb[0].mxu0 %v3935
      %v4018 = vpop.f32.mrb[0].mxu0
      %v4019 = vadd.f32 %v3922, %v4018
      %v4020 = vpop.f32.mrb[0].mxu0
      %4021 = vdwg.mxu0
      %s4022 = scalar_lea.vmem %s441, 448
      %v4023 = vld [vmem:[%s4022] sm:$0xff]
      %v4024 = vld [vmem:[%s4022 + $0x8] sm:$0xff]
      %v4025 = vld [vmem:[%s4022 + $0x10] sm:$0xff]
      %v4026 = vld [vmem:[%s4022 + $0x18] sm:$0xff]
      %v4028 = vsel %vm546, %v4023, 0
      %v4031 = vsel %vm546, %v4024, 0
      %v4034 = vsel %vm546, %v4025, 0
      %v4037 = vsel %vm546, %v4026, 0
      %4039 = vmatprep.subr.mxu0 0.0
      %4040 = vmatpush1.msra.mxu0 %v3814
      %4041 = vmatprep.subr.mxu0 0.0
      %4042 = vmatpush1.msra.mxu0 %v3815
      %4043 = vmatprep.subr.mxu0 0.0
      %4044 = vmatpush1.msra.mxu0 %v3816
      %4045 = vmatprep.subr.mxu0 0.0
      %4046 = vmatpush1.msra.mxu0 %v3817
      %4047 = vmatprep.subr.mxu0 0.0
      %4048 = vmatpush1.msra.mxu0 0.0
      %4049 = vmatprep.subr.mxu0 0.0
      %4050 = vmatpush1.msra.mxu0 0.0
      %4051 = vmatprep.subr.mxu0 0.0
      %4052 = vmatpush1.msra.mxu0 0.0
      %4053 = vmatprep.subr.mxu0 0.0
      %4054 = vmatpush1.msra.mxu0 0.0
      %4055 = vmatprep.subr.mxu0 0.0
      %4056 = vmatpush1.msra.mxu0 0.0
      %4057 = vmatprep.subr.mxu0 0.0
      %4058 = vmatpush1.msra.mxu0 0.0
      %4059 = vmatprep.subr.mxu0 0.0
      %4060 = vmatpush1.msra.mxu0 0.0
      %4061 = vmatprep.subr.mxu0 0.0
      %4062 = vmatpush1.msra.mxu0 0.0
      %4063 = vmatprep.subr.mxu0 0.0
      %4064 = vmatpush1.msra.mxu0 0.0
      %4065 = vmatprep.subr.mxu0 0.0
      %4066 = vmatpush1.msra.mxu0 0.0
      %4067 = vmatprep.subr.mxu0 0.0
      %4068 = vmatpush1.msra.mxu0 0.0
      %4069 = vmatprep.subr.mxu0 0.0
      %4070 = vmatpush1.msra.mxu0 0.0
      %4071 = vmatprep.subr.mxu0 0.0
      %4072 = vmatpush1.msra.mxu0 0.0
      %4073 = vmatprep.subr.mxu0 0.0
      %4074 = vmatpush1.msra.mxu0 0.0
      %4075 = vmatprep.subr.mxu0 0.0
      %4076 = vmatpush1.msra.mxu0 0.0
      %4077 = vmatprep.subr.mxu0 0.0
      %4078 = vmatpush1.msra.mxu0 0.0
      %4079 = vmatprep.subr.mxu0 0.0
      %4080 = vmatpush1.msra.mxu0 0.0
      %4081 = vmatprep.subr.mxu0 0.0
      %4082 = vmatpush1.msra.mxu0 0.0
      %4083 = vmatprep.subr.mxu0 0.0
      %4084 = vmatpush1.msra.mxu0 0.0
      %4085 = vmatprep.subr.mxu0 0.0
      %4086 = vmatpush1.msra.mxu0 0.0
      %4087 = vmatprep.subr.mxu0 0.0
      %4088 = vmatpush1.msra.mxu0 0.0
      %4089 = vmatprep.subr.mxu0 0.0
      %4090 = vmatpush1.msra.mxu0 0.0
      %4091 = vmatprep.subr.mxu0 0.0
      %4092 = vmatpush1.msra.mxu0 0.0
      %4093 = vmatprep.subr.mxu0 0.0
      %4094 = vmatpush1.msra.mxu0 0.0
      %4095 = vmatprep.subr.mxu0 0.0
      %4096 = vmatpush1.msra.mxu0 0.0
      %4097 = vmatprep.subr.mxu0 0.0
      %4098 = vmatpush1.msra.mxu0 0.0
      %4099 = vmatprep.subr.mxu0 0.0
      %4100 = vmatpush1.msra.mxu0 0.0
      %4101 = vmatprep.subr.mxu0 0.0
      %4102 = vmatpush1.msra.mxu0 0.0
      %4103 = vmatprep.mubr.f32.mxu0 0.0
      %4104 = vmatmul.mubr.f32.gmra.mrb[0].mxu0 %v4028
      %v4105 = vpop.f32.mrb[0].mxu0
      %v4106 = vadd.f32 0.0, %v4105
      %v4107 = vpop.f32.mrb[0].mxu0
      %4108 = vmatprep.mubr.f32.mxu0 0.0
      %4109 = vmatmul.mubr.f32.gmra.mrb[0].mxu0 %v4031
      %v4110 = vpop.f32.mrb[0].mxu0
      %v4111 = vadd.f32 0.0, %v4110
      %v4112 = vpop.f32.mrb[0].mxu0
      %4113 = vmatprep.mubr.f32.mxu0 0.0
      %4114 = vmatmul.mubr.f32.gmra.mrb[0].mxu0 %v4034
      %v4115 = vpop.f32.mrb[0].mxu0
      %v4116 = vadd.f32 0.0, %v4115
      %v4117 = vpop.f32.mrb[0].mxu0
      %4118 = vmatprep.mubr.f32.mxu0 0.0
      %4119 = vmatmul.mubr.f32.gmra.mrb[0].mxu0 %v4037
      %v4120 = vpop.f32.mrb[0].mxu0
      %v4121 = vadd.f32 0.0, %v4120
      %v4122 = vpop.f32.mrb[0].mxu0
      %4123 = vdwg.mxu0
      %v4124 = vadd.f32 %v4004, %v4106
      %v4125 = vadd.f32 %v4009, %v4111
      %v4126 = vadd.f32 %v4014, %v4116
      %v4127 = vadd.f32 %v4019, %v4121
      %s4128 = scalar_lea.vmem %s446, 128
      %v4129 = vld [vmem:[%s4128] sm:$0xff]
      %v4130 = vld [vmem:[%s4128 + $0x8] sm:$0xff]
      %v4131 = vld [vmem:[%s4128 + $0x10] sm:$0xff]
      %v4132 = vld [vmem:[%s4128 + $0x18] sm:$0xff]
      %4134 = vset.pattern.permute.xlu0 0
      %4135 = vperm.xlu0 %4134, %v4129
      %v4136 = vpop.permute.xlu0 %4135
      %4139 = vset.pattern.permute.xlu0 0
      %4140 = vperm.xlu0 %4139, %v4130
      %v4141 = vpop.permute.xlu0 %4140
      %4144 = vset.pattern.permute.xlu0 0
      %4145 = vperm.xlu0 %4144, %v4131
      %v4146 = vpop.permute.xlu0 %4145
      %4149 = vset.pattern.permute.xlu0 0
      %4150 = vperm.xlu0 %4149, %v4132
      %v4151 = vpop.permute.xlu0 %4150
      %v4153 = vadd.f32 %v4124, %v4136
      %v4154 = vadd.f32 %v4125, %v4141
      %v4155 = vadd.f32 %v4126, %v4146
      %v4156 = vadd.f32 %v4127, %v4151
      %4157 = vmatprep.subr.mxu0 0.0
      %4158 = vmatpush1.msra.mxu0 %v470
      %4159 = vmatprep.subr.mxu0 0.0
      %4160 = vmatpush1.msra.mxu0 %v471
      %4161 = vmatprep.subr.mxu0 0.0
      %4162 = vmatpush1.msra.mxu0 %v472
      %4163 = vmatprep.subr.mxu0 0.0
      %4164 = vmatpush1.msra.mxu0 %v473
      %4165 = vmatprep.subr.mxu0 0.0
      %4166 = vmatpush1.msra.mxu0 %v474
      %4167 = vmatprep.subr.mxu0 0.0
      %4168 = vmatpush1.msra.mxu0 %v475
      %4169 = vmatprep.subr.mxu0 0.0
      %4170 = vmatpush1.msra.mxu0 %v476
      %4171 = vmatprep.subr.mxu0 0.0
      %4172 = vmatpush1.msra.mxu0 %v477
      %4173 = vmatprep.subr.mxu0 0.0
      %4174 = vmatpush1.msra.mxu0 %v478
      %4175 = vmatprep.subr.mxu0 0.0
      %4176 = vmatpush1.msra.mxu0 %v479
      %4177 = vmatprep.subr.mxu0 0.0
      %4178 = vmatpush1.msra.mxu0 %v480
      %4179 = vmatprep.subr.mxu0 0.0
      %4180 = vmatpush1.msra.mxu0 %v481
      %4181 = vmatprep.subr.mxu0 0.0
      %4182 = vmatpush1.msra.mxu0 %v482
      %4183 = vmatprep.subr.mxu0 0.0
      %4184 = vmatpush1.msra.mxu0 %v483
      %4185 = vmatprep.subr.mxu0 0.0
      %4186 = vmatpush1.msra.mxu0 %v484
      %4187 = vmatprep.subr.mxu0 0.0
      %4188 = vmatpush1.msra.mxu0 %v485
      %4189 = vmatprep.subr.mxu0 0.0
      %4190 = vmatpush1.msra.mxu0 0.0
      %4191 = vmatprep.subr.mxu0 0.0
      %4192 = vmatpush1.msra.mxu0 0.0
      %4193 = vmatprep.subr.mxu0 0.0
      %4194 = vmatpush1.msra.mxu0 0.0
      %4195 = vmatprep.subr.mxu0 0.0
      %4196 = vmatpush1.msra.mxu0 0.0
      %4197 = vmatprep.subr.mxu0 0.0
      %4198 = vmatpush1.msra.mxu0 0.0
      %4199 = vmatprep.subr.mxu0 0.0
      %4200 = vmatpush1.msra.mxu0 0.0
      %4201 = vmatprep.subr.mxu0 0.0
      %4202 = vmatpush1.msra.mxu0 0.0
      %4203 = vmatprep.subr.mxu0 0.0
      %4204 = vmatpush1.msra.mxu0 0.0
      %4205 = vmatprep.subr.mxu0 0.0
      %4206 = vmatpush1.msra.mxu0 0.0
      %4207 = vmatprep.subr.mxu0 0.0
      %4208 = vmatpush1.msra.mxu0 0.0
      %4209 = vmatprep.subr.mxu0 0.0
      %4210 = vmatpush1.msra.mxu0 0.0
      %4211 = vmatprep.subr.mxu0 0.0
      %4212 = vmatpush1.msra.mxu0 0.0
      %4213 = vmatprep.subr.mxu0 0.0
      %4214 = vmatpush1.msra.mxu0 0.0
      %4215 = vmatprep.subr.mxu0 0.0
      %4216 = vmatpush1.msra.mxu0 0.0
      %4217 = vmatprep.subr.mxu0 0.0
      %4218 = vmatpush1.msra.mxu0 0.0
      %4219 = vmatprep.subr.mxu0 0.0
      %4220 = vmatpush1.msra.mxu0 0.0
      %4221 = vmatprep.mubr.f32.mxu0 0.0
      %4222 = vmatmul.mubr.f32.gmra.mrb[0].mxu0 %v4153
      %v4223 = vpop.f32.mrb[0].mxu0
      %v4224 = vadd.f32 0.0, %v4223
      %v4225 = vpop.f32.mrb[0].mxu0
      %4226 = vmatprep.mubr.f32.mxu0 0.0
      %4227 = vmatmul.mubr.f32.gmra.mrb[0].mxu0 %v4154
      %v4228 = vpop.f32.mrb[0].mxu0
      %v4229 = vadd.f32 0.0, %v4228
      %v4230 = vpop.f32.mrb[0].mxu0
      %4231 = vmatprep.mubr.f32.mxu0 0.0
      %4232 = vmatmul.mubr.f32.gmra.mrb[0].mxu0 %v4155
      %v4233 = vpop.f32.mrb[0].mxu0
      %v4234 = vadd.f32 0.0, %v4233
      %v4235 = vpop.f32.mrb[0].mxu0
      %4236 = vmatprep.mubr.f32.mxu0 0.0
      %4237 = vmatmul.mubr.f32.gmra.mrb[0].mxu0 %v4156
      %v4238 = vpop.f32.mrb[0].mxu0
      %v4239 = vadd.f32 0.0, %v4238
      %v4240 = vpop.f32.mrb[0].mxu0
      %4241 = vdwg.mxu0
      %v4243 = vsel %vm960, %v4224, 0
      %v4246 = vsel %vm960, %v4229, 0
      %v4249 = vsel %vm960, %v4234, 0
      %v4252 = vsel %vm960, %v4239, 0
      %4254 = vmatprep.subr.mxu0 0.0
      %4255 = vmatpush1.msra.mxu0 %v975
      %4256 = vmatprep.subr.mxu0 0.0
      %4257 = vmatpush1.msra.mxu0 0.0
      %4258 = vmatprep.subr.mxu0 0.0
      %4259 = vmatpush1.msra.mxu0 0.0
      %4260 = vmatprep.subr.mxu0 0.0
      %4261 = vmatpush1.msra.mxu0 0.0
      %4262 = vmatprep.subr.mxu0 0.0
      %4263 = vmatpush1.msra.mxu0 0.0
      %4264 = vmatprep.subr.mxu0 0.0
      %4265 = vmatpush1.msra.mxu0 0.0
      %4266 = vmatprep.subr.mxu0 0.0
      %4267 = vmatpush1.msra.mxu0 0.0
      %4268 = vmatprep.subr.mxu0 0.0
      %4269 = vmatpush1.msra.mxu0 0.0
      %4270 = vmatprep.subr.mxu0 0.0
      %4271 = vmatpush1.msra.mxu0 0.0
      %4272 = vmatprep.subr.mxu0 0.0
      %4273 = vmatpush1.msra.mxu0 0.0
      %4274 = vmatprep.subr.mxu0 0.0
      %4275 = vmatpush1.msra.mxu0 0.0
      %4276 = vmatprep.subr.mxu0 0.0
      %4277 = vmatpush1.msra.mxu0 0.0
      %4278 = vmatprep.subr.mxu0 0.0
      %4279 = vmatpush1.msra.mxu0 0.0
      %4280 = vmatprep.subr.mxu0 0.0
      %4281 = vmatpush1.msra.mxu0 0.0
      %4282 = vmatprep.subr.mxu0 0.0
      %4283 = vmatpush1.msra.mxu0 0.0
      %4284 = vmatprep.subr.mxu0 0.0
      %4285 = vmatpush1.msra.mxu0 0.0
      %4286 = vmatprep.subr.mxu0 0.0
      %4287 = vmatpush1.msra.mxu0 0.0
      %4288 = vmatprep.subr.mxu0 0.0
      %4289 = vmatpush1.msra.mxu0 0.0
      %4290 = vmatprep.subr.mxu0 0.0
      %4291 = vmatpush1.msra.mxu0 0.0
      %4292 = vmatprep.subr.mxu0 0.0
      %4293 = vmatpush1.msra.mxu0 0.0
      %4294 = vmatprep.subr.mxu0 0.0
      %4295 = vmatpush1.msra.mxu0 0.0
      %4296 = vmatprep.subr.mxu0 0.0
      %4297 = vmatpush1.msra.mxu0 0.0
      %4298 = vmatprep.subr.mxu0 0.0
      %4299 = vmatpush1.msra.mxu0 0.0
      %4300 = vmatprep.subr.mxu0 0.0
      %4301 = vmatpush1.msra.mxu0 0.0
      %4302 = vmatprep.subr.mxu0 0.0
      %4303 = vmatpush1.msra.mxu0 0.0
      %4304 = vmatprep.subr.mxu0 0.0
      %4305 = vmatpush1.msra.mxu0 0.0
      %4306 = vmatprep.subr.mxu0 0.0
      %4307 = vmatpush1.msra.mxu0 0.0
      %4308 = vmatprep.subr.mxu0 0.0
      %4309 = vmatpush1.msra.mxu0 0.0
      %4310 = vmatprep.subr.mxu0 0.0
      %4311 = vmatpush1.msra.mxu0 0.0
      %4312 = vmatprep.subr.mxu0 0.0
      %4313 = vmatpush1.msra.mxu0 0.0
      %4314 = vmatprep.subr.mxu0 0.0
      %4315 = vmatpush1.msra.mxu0 0.0
      %4316 = vmatprep.subr.mxu0 0.0
      %4317 = vmatpush1.msra.mxu0 0.0
      %4318 = vmatprep.mubr.f32.mxu0 0.0
      %4319 = vmatmul.mubr.f32.gmra.mrb[0].mxu0 %v4243
      %v4320 = vpop.f32.mrb[0].mxu0
      %v4321 = vadd.f32 0.0, %v4320
      %v4322 = vpop.f32.mrb[0].mxu0
      %4323 = vmatprep.mubr.f32.mxu0 0.0
      %4324 = vmatmul.mubr.f32.gmra.mrb[0].mxu0 %v4246
      %v4325 = vpop.f32.mrb[0].mxu0
      %v4326 = vadd.f32 0.0, %v4325
      %v4327 = vpop.f32.mrb[0].mxu0
      %4328 = vmatprep.mubr.f32.mxu0 0.0
      %4329 = vmatmul.mubr.f32.gmra.mrb[0].mxu0 %v4249
      %v4330 = vpop.f32.mrb[0].mxu0
      %v4331 = vadd.f32 0.0, %v4330
      %v4332 = vpop.f32.mrb[0].mxu0
      %4333 = vmatprep.mubr.f32.mxu0 0.0
      %4334 = vmatmul.mubr.f32.gmra.mrb[0].mxu0 %v4252
      %v4335 = vpop.f32.mrb[0].mxu0
      %v4336 = vadd.f32 0.0, %v4335
      %v4337 = vpop.f32.mrb[0].mxu0
      %4338 = vdwg.mxu0
      %v4339 = vsub.f32 %v4153, %v4321
      %v4340 = vsub.f32 %v4154, %v4326
      %v4341 = vsub.f32 %v4155, %v4331
      %v4342 = vsub.f32 %v4156, %v4336
      %v4343 = vmul.f32 %v4339, %v4339
      %v4344 = vmul.f32 %v4340, %v4340
      %v4345 = vmul.f32 %v4341, %v4341
      %v4346 = vmul.f32 %v4342, %v4342
      %4347 = vmatprep.subr.mxu0 0.0
      %4348 = vmatpush1.msra.mxu0 %v470
      %4349 = vmatprep.subr.mxu0 0.0
      %4350 = vmatpush1.msra.mxu0 %v471
      %4351 = vmatprep.subr.mxu0 0.0
      %4352 = vmatpush1.msra.mxu0 %v472
      %4353 = vmatprep.subr.mxu0 0.0
      %4354 = vmatpush1.msra.mxu0 %v473
      %4355 = vmatprep.subr.mxu0 0.0
      %4356 = vmatpush1.msra.mxu0 %v474
      %4357 = vmatprep.subr.mxu0 0.0
      %4358 = vmatpush1.msra.mxu0 %v475
      %4359 = vmatprep.subr.mxu0 0.0
      %4360 = vmatpush1.msra.mxu0 %v476
      %4361 = vmatprep.subr.mxu0 0.0
      %4362 = vmatpush1.msra.mxu0 %v477
      %4363 = vmatprep.subr.mxu0 0.0
      %4364 = vmatpush1.msra.mxu0 %v478
      %4365 = vmatprep.subr.mxu0 0.0
      %4366 = vmatpush1.msra.mxu0 %v479
      %4367 = vmatprep.subr.mxu0 0.0
      %4368 = vmatpush1.msra.mxu0 %v480
      %4369 = vmatprep.subr.mxu0 0.0
      %4370 = vmatpush1.msra.mxu0 %v481
      %4371 = vmatprep.subr.mxu0 0.0
      %4372 = vmatpush1.msra.mxu0 %v482
      %4373 = vmatprep.subr.mxu0 0.0
      %4374 = vmatpush1.msra.mxu0 %v483
      %4375 = vmatprep.subr.mxu0 0.0
      %4376 = vmatpush1.msra.mxu0 %v484
      %4377 = vmatprep.subr.mxu0 0.0
      %4378 = vmatpush1.msra.mxu0 %v485
      %4379 = vmatprep.subr.mxu0 0.0
      %4380 = vmatpush1.msra.mxu0 0.0
      %4381 = vmatprep.subr.mxu0 0.0
      %4382 = vmatpush1.msra.mxu0 0.0
      %4383 = vmatprep.subr.mxu0 0.0
      %4384 = vmatpush1.msra.mxu0 0.0
      %4385 = vmatprep.subr.mxu0 0.0
      %4386 = vmatpush1.msra.mxu0 0.0
      %4387 = vmatprep.subr.mxu0 0.0
      %4388 = vmatpush1.msra.mxu0 0.0
      %4389 = vmatprep.subr.mxu0 0.0
      %4390 = vmatpush1.msra.mxu0 0.0
      %4391 = vmatprep.subr.mxu0 0.0
      %4392 = vmatpush1.msra.mxu0 0.0
      %4393 = vmatprep.subr.mxu0 0.0
      %4394 = vmatpush1.msra.mxu0 0.0
      %4395 = vmatprep.subr.mxu0 0.0
      %4396 = vmatpush1.msra.mxu0 0.0
      %4397 = vmatprep.subr.mxu0 0.0
      %4398 = vmatpush1.msra.mxu0 0.0
      %4399 = vmatprep.subr.mxu0 0.0
      %4400 = vmatpush1.msra.mxu0 0.0
      %4401 = vmatprep.subr.mxu0 0.0
      %4402 = vmatpush1.msra.mxu0 0.0
      %4403 = vmatprep.subr.mxu0 0.0
      %4404 = vmatpush1.msra.mxu0 0.0
      %4405 = vmatprep.subr.mxu0 0.0
      %4406 = vmatpush1.msra.mxu0 0.0
      %4407 = vmatprep.subr.mxu0 0.0
      %4408 = vmatpush1.msra.mxu0 0.0
      %4409 = vmatprep.subr.mxu0 0.0
      %4410 = vmatpush1.msra.mxu0 0.0
      %4411 = vmatprep.mubr.f32.mxu0 0.0
      %4412 = vmatmul.mubr.f32.gmra.mrb[0].mxu0 %v4343
      %v4413 = vpop.f32.mrb[0].mxu0
      %v4414 = vadd.f32 0.0, %v4413
      %v4415 = vpop.f32.mrb[0].mxu0
      %4416 = vmatprep.mubr.f32.mxu0 0.0
      %4417 = vmatmul.mubr.f32.gmra.mrb[0].mxu0 %v4344
      %v4418 = vpop.f32.mrb[0].mxu0
      %v4419 = vadd.f32 0.0, %v4418
      %v4420 = vpop.f32.mrb[0].mxu0
      %4421 = vmatprep.mubr.f32.mxu0 0.0
      %4422 = vmatmul.mubr.f32.gmra.mrb[0].mxu0 %v4345
      %v4423 = vpop.f32.mrb[0].mxu0
      %v4424 = vadd.f32 0.0, %v4423
      %v4425 = vpop.f32.mrb[0].mxu0
      %4426 = vmatprep.mubr.f32.mxu0 0.0
      %4427 = vmatmul.mubr.f32.gmra.mrb[0].mxu0 %v4346
      %v4428 = vpop.f32.mrb[0].mxu0
      %v4429 = vadd.f32 0.0, %v4428
      %v4430 = vpop.f32.mrb[0].mxu0
      %4431 = vdwg.mxu0
      %v4433 = vsel %vm960, %v4414, 0
      %v4436 = vsel %vm960, %v4419, 0
      %v4439 = vsel %vm960, %v4424, 0
      %v4442 = vsel %vm960, %v4429, 0
      %4444 = vmatprep.subr.mxu0 0.0
      %4445 = vmatpush1.msra.mxu0 %v975
      %4446 = vmatprep.subr.mxu0 0.0
      %4447 = vmatpush1.msra.mxu0 0.0
      %4448 = vmatprep.subr.mxu0 0.0
      %4449 = vmatpush1.msra.mxu0 0.0
      %4450 = vmatprep.subr.mxu0 0.0
      %4451 = vmatpush1.msra.mxu0 0.0
      %4452 = vmatprep.subr.mxu0 0.0
      %4453 = vmatpush1.msra.mxu0 0.0
      %4454 = vmatprep.subr.mxu0 0.0
      %4455 = vmatpush1.msra.mxu0 0.0
      %4456 = vmatprep.subr.mxu0 0.0
      %4457 = vmatpush1.msra.mxu0 0.0
      %4458 = vmatprep.subr.mxu0 0.0
      %4459 = vmatpush1.msra.mxu0 0.0
      %4460 = vmatprep.subr.mxu0 0.0
      %4461 = vmatpush1.msra.mxu0 0.0
      %4462 = vmatprep.subr.mxu0 0.0
      %4463 = vmatpush1.msra.mxu0 0.0
      %4464 = vmatprep.subr.mxu0 0.0
      %4465 = vmatpush1.msra.mxu0 0.0
      %4466 = vmatprep.subr.mxu0 0.0
      %4467 = vmatpush1.msra.mxu0 0.0
      %4468 = vmatprep.subr.mxu0 0.0
      %4469 = vmatpush1.msra.mxu0 0.0
      %4470 = vmatprep.subr.mxu0 0.0
      %4471 = vmatpush1.msra.mxu0 0.0
      %4472 = vmatprep.subr.mxu0 0.0
      %4473 = vmatpush1.msra.mxu0 0.0
      %4474 = vmatprep.subr.mxu0 0.0
      %4475 = vmatpush1.msra.mxu0 0.0
      %4476 = vmatprep.subr.mxu0 0.0
      %4477 = vmatpush1.msra.mxu0 0.0
      %4478 = vmatprep.subr.mxu0 0.0
      %4479 = vmatpush1.msra.mxu0 0.0
      %4480 = vmatprep.subr.mxu0 0.0
      %4481 = vmatpush1.msra.mxu0 0.0
      %4482 = vmatprep.subr.mxu0 0.0
      %4483 = vmatpush1.msra.mxu0 0.0
      %4484 = vmatprep.subr.mxu0 0.0
      %4485 = vmatpush1.msra.mxu0 0.0
      %4486 = vmatprep.subr.mxu0 0.0
      %4487 = vmatpush1.msra.mxu0 0.0
      %4488 = vmatprep.subr.mxu0 0.0
      %4489 = vmatpush1.msra.mxu0 0.0
      %4490 = vmatprep.subr.mxu0 0.0
      %4491 = vmatpush1.msra.mxu0 0.0
      %4492 = vmatprep.subr.mxu0 0.0
      %4493 = vmatpush1.msra.mxu0 0.0
      %4494 = vmatprep.subr.mxu0 0.0
      %4495 = vmatpush1.msra.mxu0 0.0
      %4496 = vmatprep.subr.mxu0 0.0
      %4497 = vmatpush1.msra.mxu0 0.0
      %4498 = vmatprep.subr.mxu0 0.0
      %4499 = vmatpush1.msra.mxu0 0.0
      %4500 = vmatprep.subr.mxu0 0.0
      %4501 = vmatpush1.msra.mxu0 0.0
      %4502 = vmatprep.subr.mxu0 0.0
      %4503 = vmatpush1.msra.mxu0 0.0
      %4504 = vmatprep.subr.mxu0 0.0
      %4505 = vmatpush1.msra.mxu0 0.0
      %4506 = vmatprep.subr.mxu0 0.0
      %4507 = vmatpush1.msra.mxu0 0.0
      %4508 = vmatprep.mubr.f32.mxu0 0.0
      %4509 = vmatmul.mubr.f32.gmra.mrb[0].mxu0 %v4433
      %v4510 = vpop.f32.mrb[0].mxu0
      %v4511 = vadd.f32 1e-05, %v4510
      %v4512 = vpop.f32.mrb[0].mxu0
      %4513 = vmatprep.mubr.f32.mxu0 0.0
      %4514 = vmatmul.mubr.f32.gmra.mrb[0].mxu0 %v4436
      %v4515 = vpop.f32.mrb[0].mxu0
      %v4516 = vadd.f32 1e-05, %v4515
      %v4517 = vpop.f32.mrb[0].mxu0
      %4518 = vmatprep.mubr.f32.mxu0 0.0
      %4519 = vmatmul.mubr.f32.gmra.mrb[0].mxu0 %v4439
      %v4520 = vpop.f32.mrb[0].mxu0
      %v4521 = vadd.f32 1e-05, %v4520
      %v4522 = vpop.f32.mrb[0].mxu0
      %4523 = vmatprep.mubr.f32.mxu0 0.0
      %4524 = vmatmul.mubr.f32.gmra.mrb[0].mxu0 %v4442
      %v4525 = vpop.f32.mrb[0].mxu0
      %v4526 = vadd.f32 1e-05, %v4525
      %v4527 = vpop.f32.mrb[0].mxu0
      %4528 = vdwg.mxu0
      %v4529 = vrsqrt.pop %v4511
      %v4530 = vrsqrt.pop %v4516
      %v4531 = vrsqrt.pop %v4521
      %v4532 = vrsqrt.pop %v4526
      %v4533 = vmul.f32 %v4339, %v4529
      %v4534 = vmul.f32 %v4340, %v4530
      %v4535 = vmul.f32 %v4341, %v4531
      %v4536 = vmul.f32 %v4342, %v4532
      %s4537 = scalar_lea.vmem %s451, 128
      %v4538 = vld [vmem:[%s4537] sm:$0xff]
      %v4539 = vld [vmem:[%s4537 + $0x8] sm:$0xff]
      %v4540 = vld [vmem:[%s4537 + $0x10] sm:$0xff]
      %v4541 = vld [vmem:[%s4537 + $0x18] sm:$0xff]
      %4543 = vset.pattern.permute.xlu0 0
      %4544 = vperm.xlu0 %4543, %v4538
      %v4545 = vpop.permute.xlu0 %4544
      %4548 = vset.pattern.permute.xlu0 0
      %4549 = vperm.xlu0 %4548, %v4539
      %v4550 = vpop.permute.xlu0 %4549
      %4553 = vset.pattern.permute.xlu0 0
      %4554 = vperm.xlu0 %4553, %v4540
      %v4555 = vpop.permute.xlu0 %4554
      %4558 = vset.pattern.permute.xlu0 0
      %4559 = vperm.xlu0 %4558, %v4541
      %v4560 = vpop.permute.xlu0 %4559
      %v4562 = vmul.f32 %v4533, %v4545
      %v4563 = vmul.f32 %v4534, %v4550
      %v4564 = vmul.f32 %v4535, %v4555
      %v4565 = vmul.f32 %v4536, %v4560
      %s4566 = scalar_lea.vmem %s456, 128
      %v4567 = vld [vmem:[%s4566] sm:$0xff]
      %v4568 = vld [vmem:[%s4566 + $0x8] sm:$0xff]
      %v4569 = vld [vmem:[%s4566 + $0x10] sm:$0xff]
      %v4570 = vld [vmem:[%s4566 + $0x18] sm:$0xff]
      %4572 = vset.pattern.permute.xlu0 0
      %4573 = vperm.xlu0 %4572, %v4567
      %v4574 = vpop.permute.xlu0 %4573
      %4577 = vset.pattern.permute.xlu0 0
      %4578 = vperm.xlu0 %4577, %v4568
      %v4579 = vpop.permute.xlu0 %4578
      %4582 = vset.pattern.permute.xlu0 0
      %4583 = vperm.xlu0 %4582, %v4569
      %v4584 = vpop.permute.xlu0 %4583
      %4587 = vset.pattern.permute.xlu0 0
      %4588 = vperm.xlu0 %4587, %v4570
      %v4589 = vpop.permute.xlu0 %4588
      %v4591 = vadd.f32 %v4562, %v4574
      %v4592 = vadd.f32 %v4563, %v4579
      %v4593 = vadd.f32 %v4564, %v4584
      %v4594 = vadd.f32 %v4565, %v4589
      %v4595 = vmax.f32 %v4591, 0.0
      %v4596 = vmax.f32 %v4592, 0.0
      %v4597 = vmax.f32 %v4593, 0.0
      %v4598 = vmax.f32 %v4594, 0.0
      %s4599 = scalar_lea.vmem %s461, 128
      %v4600 = vld [vmem:[%s4599] sm:$0xff]
      %v4601 = vld [vmem:[%s4599 + $0x8] sm:$0xff]
      %v4602 = vld [vmem:[%s4599 + $0x10] sm:$0xff]
      %v4603 = vld [vmem:[%s4599 + $0x18] sm:$0xff]
      %v4604 = vadd.f32 %v4595, %v4600
      %v4605 = vadd.f32 %v4596, %v4601
      %v4606 = vadd.f32 %v4597, %v4602
      %v4607 = vadd.f32 %v4598, %v4603
      %v4608 = vmul.f32 %v4604, %v495
      %v4609 = vmul.f32 %v4605, %v495
      %v4610 = vmul.f32 %v4606, %v495
      %v4611 = vmul.f32 %v4607, %v495
      %4612 = vrot.lane.b32.xlu0 %v4608, 1
      %v4613 = vpop.permute.xlu0 %4612
      %4614 = vrot.lane.b32.xlu0 %v4609, 1
      %v4615 = vpop.permute.xlu0 %4614
      %4616 = vrot.lane.b32.xlu0 %v4610, 1
      %v4617 = vpop.permute.xlu0 %4616
      %4618 = vrot.lane.b32.xlu0 %v4611, 1
      %v4619 = vpop.permute.xlu0 %4618
      %v4620 = vmul.f32 %v4613, %v513
      %v4621 = vmul.f32 %v4615, %v513
      %v4622 = vmul.f32 %v4617, %v513
      %v4623 = vmul.f32 %v4619, %v513
      %4624 = vrot.lane.b32.xlu0 %v4608, 127
      %v4625 = vpop.permute.xlu0 %4624
      %4626 = vrot.lane.b32.xlu0 %v4609, 127
      %v4627 = vpop.permute.xlu0 %4626
      %4628 = vrot.lane.b32.xlu0 %v4610, 127
      %v4629 = vpop.permute.xlu0 %4628
      %4630 = vrot.lane.b32.xlu0 %v4611, 127
      %v4631 = vpop.permute.xlu0 %4630
      %v4632 = vmul.f32 %v4625, %v531
      %v4633 = vmul.f32 %v4627, %v531
      %v4634 = vmul.f32 %v4629, %v531
      %v4635 = vmul.f32 %v4631, %v531
      %s4636 = scalar_lea.vmem %s441, 480
      %v4637 = vld [vmem:[%s4636] sm:$0xff]
      %v4638 = vld [vmem:[%s4636 + $0x8] sm:$0xff]
      %v4639 = vld [vmem:[%s4636 + $0x10] sm:$0xff]
      %v4640 = vld [vmem:[%s4636 + $0x18] sm:$0xff]
      %s4641 = scalar_lea.vmem %s441, 512
      %v4642 = vld [vmem:[%s4641] sm:$0xff]
      %v4643 = vld [vmem:[%s4641 + $0x8] sm:$0xff]
      %v4644 = vld [vmem:[%s4641 + $0x10] sm:$0xff]
      %v4645 = vld [vmem:[%s4641 + $0x18] sm:$0xff]
      %v4647 = vsel %vm546, %v4642, 0
      %v4650 = vsel %vm546, %v4643, 0
      %v4653 = vsel %vm546, %v4644, 0
      %v4656 = vsel %vm546, %v4645, 0
      %4658 = vmatprep.subr.mxu0 0.0
      %4659 = vmatpush1.msra.mxu0 %v4608
      %4660 = vmatprep.subr.mxu0 0.0
      %4661 = vmatpush1.msra.mxu0 %v4609
      %4662 = vmatprep.subr.mxu0 0.0
      %4663 = vmatpush1.msra.mxu0 %v4610
      %4664 = vmatprep.subr.mxu0 0.0
      %4665 = vmatpush1.msra.mxu0 %v4611
      %4666 = vmatprep.subr.mxu0 0.0
      %4667 = vmatpush1.msra.mxu0 0.0
      %4668 = vmatprep.subr.mxu0 0.0
      %4669 = vmatpush1.msra.mxu0 0.0
      %4670 = vmatprep.subr.mxu0 0.0
      %4671 = vmatpush1.msra.mxu0 0.0
      %4672 = vmatprep.subr.mxu0 0.0
      %4673 = vmatpush1.msra.mxu0 0.0
      %4674 = vmatprep.subr.mxu0 0.0
      %4675 = vmatpush1.msra.mxu0 0.0
      %4676 = vmatprep.subr.mxu0 0.0
      %4677 = vmatpush1.msra.mxu0 0.0
      %4678 = vmatprep.subr.mxu0 0.0
      %4679 = vmatpush1.msra.mxu0 0.0
      %4680 = vmatprep.subr.mxu0 0.0
      %4681 = vmatpush1.msra.mxu0 0.0
      %4682 = vmatprep.subr.mxu0 0.0
      %4683 = vmatpush1.msra.mxu0 0.0
      %4684 = vmatprep.subr.mxu0 0.0
      %4685 = vmatpush1.msra.mxu0 0.0
      %4686 = vmatprep.subr.mxu0 0.0
      %4687 = vmatpush1.msra.mxu0 0.0
      %4688 = vmatprep.subr.mxu0 0.0
      %4689 = vmatpush1.msra.mxu0 0.0
      %4690 = vmatprep.subr.mxu0 0.0
      %4691 = vmatpush1.msra.mxu0 0.0
      %4692 = vmatprep.subr.mxu0 0.0
      %4693 = vmatpush1.msra.mxu0 0.0
      %4694 = vmatprep.subr.mxu0 0.0
      %4695 = vmatpush1.msra.mxu0 0.0
      %4696 = vmatprep.subr.mxu0 0.0
      %4697 = vmatpush1.msra.mxu0 0.0
      %4698 = vmatprep.subr.mxu0 0.0
      %4699 = vmatpush1.msra.mxu0 0.0
      %4700 = vmatprep.subr.mxu0 0.0
      %4701 = vmatpush1.msra.mxu0 0.0
      %4702 = vmatprep.subr.mxu0 0.0
      %4703 = vmatpush1.msra.mxu0 0.0
      %4704 = vmatprep.subr.mxu0 0.0
      %4705 = vmatpush1.msra.mxu0 0.0
      %4706 = vmatprep.subr.mxu0 0.0
      %4707 = vmatpush1.msra.mxu0 0.0
      %4708 = vmatprep.subr.mxu0 0.0
      %4709 = vmatpush1.msra.mxu0 0.0
      %4710 = vmatprep.subr.mxu0 0.0
      %4711 = vmatpush1.msra.mxu0 0.0
      %4712 = vmatprep.subr.mxu0 0.0
      %4713 = vmatpush1.msra.mxu0 0.0
      %4714 = vmatprep.subr.mxu0 0.0
      %4715 = vmatpush1.msra.mxu0 0.0
      %4716 = vmatprep.subr.mxu0 0.0
      %4717 = vmatpush1.msra.mxu0 0.0
      %4718 = vmatprep.subr.mxu0 0.0
      %4719 = vmatpush1.msra.mxu0 0.0
      %4720 = vmatprep.subr.mxu0 0.0
      %4721 = vmatpush1.msra.mxu0 0.0
      %4722 = vmatprep.mubr.f32.mxu0 0.0
      %4723 = vmatmul.mubr.f32.gmra.mrb[0].mxu0 %v4647
      %v4724 = vpop.f32.mrb[0].mxu0
      %v4725 = vadd.f32 0.0, %v4724
      %v4726 = vpop.f32.mrb[0].mxu0
      %4727 = vmatprep.mubr.f32.mxu0 0.0
      %4728 = vmatmul.mubr.f32.gmra.mrb[0].mxu0 %v4650
      %v4729 = vpop.f32.mrb[0].mxu0
      %v4730 = vadd.f32 0.0, %v4729
      %v4731 = vpop.f32.mrb[0].mxu0
      %4732 = vmatprep.mubr.f32.mxu0 0.0
      %4733 = vmatmul.mubr.f32.gmra.mrb[0].mxu0 %v4653
      %v4734 = vpop.f32.mrb[0].mxu0
      %v4735 = vadd.f32 0.0, %v4734
      %v4736 = vpop.f32.mrb[0].mxu0
      %4737 = vmatprep.mubr.f32.mxu0 0.0
      %4738 = vmatmul.mubr.f32.gmra.mrb[0].mxu0 %v4656
      %v4739 = vpop.f32.mrb[0].mxu0
      %v4740 = vadd.f32 0.0, %v4739
      %v4741 = vpop.f32.mrb[0].mxu0
      %4742 = vdwg.mxu0
      %v4744 = vsel %vm546, %v4637, 0
      %v4747 = vsel %vm546, %v4638, 0
      %v4750 = vsel %vm546, %v4639, 0
      %v4753 = vsel %vm546, %v4640, 0
      %4755 = vmatprep.subr.mxu0 0.0
      %4756 = vmatpush1.msra.mxu0 %v4620
      %4757 = vmatprep.subr.mxu0 0.0
      %4758 = vmatpush1.msra.mxu0 %v4621
      %4759 = vmatprep.subr.mxu0 0.0
      %4760 = vmatpush1.msra.mxu0 %v4622
      %4761 = vmatprep.subr.mxu0 0.0
      %4762 = vmatpush1.msra.mxu0 %v4623
      %4763 = vmatprep.subr.mxu0 0.0
      %4764 = vmatpush1.msra.mxu0 0.0
      %4765 = vmatprep.subr.mxu0 0.0
      %4766 = vmatpush1.msra.mxu0 0.0
      %4767 = vmatprep.subr.mxu0 0.0
      %4768 = vmatpush1.msra.mxu0 0.0
      %4769 = vmatprep.subr.mxu0 0.0
      %4770 = vmatpush1.msra.mxu0 0.0
      %4771 = vmatprep.subr.mxu0 0.0
      %4772 = vmatpush1.msra.mxu0 0.0
      %4773 = vmatprep.subr.mxu0 0.0
      %4774 = vmatpush1.msra.mxu0 0.0
      %4775 = vmatprep.subr.mxu0 0.0
      %4776 = vmatpush1.msra.mxu0 0.0
      %4777 = vmatprep.subr.mxu0 0.0
      %4778 = vmatpush1.msra.mxu0 0.0
      %4779 = vmatprep.subr.mxu0 0.0
      %4780 = vmatpush1.msra.mxu0 0.0
      %4781 = vmatprep.subr.mxu0 0.0
      %4782 = vmatpush1.msra.mxu0 0.0
      %4783 = vmatprep.subr.mxu0 0.0
      %4784 = vmatpush1.msra.mxu0 0.0
      %4785 = vmatprep.subr.mxu0 0.0
      %4786 = vmatpush1.msra.mxu0 0.0
      %4787 = vmatprep.subr.mxu0 0.0
      %4788 = vmatpush1.msra.mxu0 0.0
      %4789 = vmatprep.subr.mxu0 0.0
      %4790 = vmatpush1.msra.mxu0 0.0
      %4791 = vmatprep.subr.mxu0 0.0
      %4792 = vmatpush1.msra.mxu0 0.0
      %4793 = vmatprep.subr.mxu0 0.0
      %4794 = vmatpush1.msra.mxu0 0.0
      %4795 = vmatprep.subr.mxu0 0.0
      %4796 = vmatpush1.msra.mxu0 0.0
      %4797 = vmatprep.subr.mxu0 0.0
      %4798 = vmatpush1.msra.mxu0 0.0
      %4799 = vmatprep.subr.mxu0 0.0
      %4800 = vmatpush1.msra.mxu0 0.0
      %4801 = vmatprep.subr.mxu0 0.0
      %4802 = vmatpush1.msra.mxu0 0.0
      %4803 = vmatprep.subr.mxu0 0.0
      %4804 = vmatpush1.msra.mxu0 0.0
      %4805 = vmatprep.subr.mxu0 0.0
      %4806 = vmatpush1.msra.mxu0 0.0
      %4807 = vmatprep.subr.mxu0 0.0
      %4808 = vmatpush1.msra.mxu0 0.0
      %4809 = vmatprep.subr.mxu0 0.0
      %4810 = vmatpush1.msra.mxu0 0.0
      %4811 = vmatprep.subr.mxu0 0.0
      %4812 = vmatpush1.msra.mxu0 0.0
      %4813 = vmatprep.subr.mxu0 0.0
      %4814 = vmatpush1.msra.mxu0 0.0
      %4815 = vmatprep.subr.mxu0 0.0
      %4816 = vmatpush1.msra.mxu0 0.0
      %4817 = vmatprep.subr.mxu0 0.0
      %4818 = vmatpush1.msra.mxu0 0.0
      %4819 = vmatprep.mubr.f32.mxu0 0.0
      %4820 = vmatmul.mubr.f32.gmra.mrb[0].mxu0 %v4744
      %v4821 = vpop.f32.mrb[0].mxu0
      %v4822 = vadd.f32 %v4725, %v4821
      %v4823 = vpop.f32.mrb[0].mxu0
      %4824 = vmatprep.mubr.f32.mxu0 0.0
      %4825 = vmatmul.mubr.f32.gmra.mrb[0].mxu0 %v4747
      %v4826 = vpop.f32.mrb[0].mxu0
      %v4827 = vadd.f32 %v4730, %v4826
      %v4828 = vpop.f32.mrb[0].mxu0
      %4829 = vmatprep.mubr.f32.mxu0 0.0
      %4830 = vmatmul.mubr.f32.gmra.mrb[0].mxu0 %v4750
      %v4831 = vpop.f32.mrb[0].mxu0
      %v4832 = vadd.f32 %v4735, %v4831
      %v4833 = vpop.f32.mrb[0].mxu0
      %4834 = vmatprep.mubr.f32.mxu0 0.0
      %4835 = vmatmul.mubr.f32.gmra.mrb[0].mxu0 %v4753
      %v4836 = vpop.f32.mrb[0].mxu0
      %v4837 = vadd.f32 %v4740, %v4836
      %v4838 = vpop.f32.mrb[0].mxu0
      %4839 = vdwg.mxu0
      %s4840 = scalar_lea.vmem %s441, 544
      %v4841 = vld [vmem:[%s4840] sm:$0xff]
      %v4842 = vld [vmem:[%s4840 + $0x8] sm:$0xff]
      %v4843 = vld [vmem:[%s4840 + $0x10] sm:$0xff]
      %v4844 = vld [vmem:[%s4840 + $0x18] sm:$0xff]
      %v4846 = vsel %vm546, %v4841, 0
      %v4849 = vsel %vm546, %v4842, 0
      %v4852 = vsel %vm546, %v4843, 0
      %v4855 = vsel %vm546, %v4844, 0
      %4857 = vmatprep.subr.mxu0 0.0
      %4858 = vmatpush1.msra.mxu0 %v4632
      %4859 = vmatprep.subr.mxu0 0.0
      %4860 = vmatpush1.msra.mxu0 %v4633
      %4861 = vmatprep.subr.mxu0 0.0
      %4862 = vmatpush1.msra.mxu0 %v4634
      %4863 = vmatprep.subr.mxu0 0.0
      %4864 = vmatpush1.msra.mxu0 %v4635
      %4865 = vmatprep.subr.mxu0 0.0
      %4866 = vmatpush1.msra.mxu0 0.0
      %4867 = vmatprep.subr.mxu0 0.0
      %4868 = vmatpush1.msra.mxu0 0.0
      %4869 = vmatprep.subr.mxu0 0.0
      %4870 = vmatpush1.msra.mxu0 0.0
      %4871 = vmatprep.subr.mxu0 0.0
      %4872 = vmatpush1.msra.mxu0 0.0
      %4873 = vmatprep.subr.mxu0 0.0
      %4874 = vmatpush1.msra.mxu0 0.0
      %4875 = vmatprep.subr.mxu0 0.0
      %4876 = vmatpush1.msra.mxu0 0.0
      %4877 = vmatprep.subr.mxu0 0.0
      %4878 = vmatpush1.msra.mxu0 0.0
      %4879 = vmatprep.subr.mxu0 0.0
      %4880 = vmatpush1.msra.mxu0 0.0
      %4881 = vmatprep.subr.mxu0 0.0
      %4882 = vmatpush1.msra.mxu0 0.0
      %4883 = vmatprep.subr.mxu0 0.0
      %4884 = vmatpush1.msra.mxu0 0.0
      %4885 = vmatprep.subr.mxu0 0.0
      %4886 = vmatpush1.msra.mxu0 0.0
      %4887 = vmatprep.subr.mxu0 0.0
      %4888 = vmatpush1.msra.mxu0 0.0
      %4889 = vmatprep.subr.mxu0 0.0
      %4890 = vmatpush1.msra.mxu0 0.0
      %4891 = vmatprep.subr.mxu0 0.0
      %4892 = vmatpush1.msra.mxu0 0.0
      %4893 = vmatprep.subr.mxu0 0.0
      %4894 = vmatpush1.msra.mxu0 0.0
      %4895 = vmatprep.subr.mxu0 0.0
      %4896 = vmatpush1.msra.mxu0 0.0
      %4897 = vmatprep.subr.mxu0 0.0
      %4898 = vmatpush1.msra.mxu0 0.0
      %4899 = vmatprep.subr.mxu0 0.0
      %4900 = vmatpush1.msra.mxu0 0.0
      %4901 = vmatprep.subr.mxu0 0.0
      %4902 = vmatpush1.msra.mxu0 0.0
      %4903 = vmatprep.subr.mxu0 0.0
      %4904 = vmatpush1.msra.mxu0 0.0
      %4905 = vmatprep.subr.mxu0 0.0
      %4906 = vmatpush1.msra.mxu0 0.0
      %4907 = vmatprep.subr.mxu0 0.0
      %4908 = vmatpush1.msra.mxu0 0.0
      %4909 = vmatprep.subr.mxu0 0.0
      %4910 = vmatpush1.msra.mxu0 0.0
      %4911 = vmatprep.subr.mxu0 0.0
      %4912 = vmatpush1.msra.mxu0 0.0
      %4913 = vmatprep.subr.mxu0 0.0
      %4914 = vmatpush1.msra.mxu0 0.0
      %4915 = vmatprep.subr.mxu0 0.0
      %4916 = vmatpush1.msra.mxu0 0.0
      %4917 = vmatprep.subr.mxu0 0.0
      %4918 = vmatpush1.msra.mxu0 0.0
      %4919 = vmatprep.subr.mxu0 0.0
      %4920 = vmatpush1.msra.mxu0 0.0
      %4921 = vmatprep.mubr.f32.mxu0 0.0
      %4922 = vmatmul.mubr.f32.gmra.mrb[0].mxu0 %v4846
      %v4923 = vpop.f32.mrb[0].mxu0
      %v4924 = vadd.f32 0.0, %v4923
      %v4925 = vpop.f32.mrb[0].mxu0
      %4926 = vmatprep.mubr.f32.mxu0 0.0
      %4927 = vmatmul.mubr.f32.gmra.mrb[0].mxu0 %v4849
      %v4928 = vpop.f32.mrb[0].mxu0
      %v4929 = vadd.f32 0.0, %v4928
      %v4930 = vpop.f32.mrb[0].mxu0
      %4931 = vmatprep.mubr.f32.mxu0 0.0
      %4932 = vmatmul.mubr.f32.gmra.mrb[0].mxu0 %v4852
      %v4933 = vpop.f32.mrb[0].mxu0
      %v4934 = vadd.f32 0.0, %v4933
      %v4935 = vpop.f32.mrb[0].mxu0
      %4936 = vmatprep.mubr.f32.mxu0 0.0
      %4937 = vmatmul.mubr.f32.gmra.mrb[0].mxu0 %v4855
      %v4938 = vpop.f32.mrb[0].mxu0
      %v4939 = vadd.f32 0.0, %v4938
      %v4940 = vpop.f32.mrb[0].mxu0
      %4941 = vdwg.mxu0
      %v4942 = vadd.f32 %v4822, %v4924
      %v4943 = vadd.f32 %v4827, %v4929
      %v4944 = vadd.f32 %v4832, %v4934
      %v4945 = vadd.f32 %v4837, %v4939
      %s4946 = scalar_lea.vmem %s446, 160
      %v4947 = vld [vmem:[%s4946] sm:$0xff]
      %v4948 = vld [vmem:[%s4946 + $0x8] sm:$0xff]
      %v4949 = vld [vmem:[%s4946 + $0x10] sm:$0xff]
      %v4950 = vld [vmem:[%s4946 + $0x18] sm:$0xff]
      %4952 = vset.pattern.permute.xlu0 0
      %4953 = vperm.xlu0 %4952, %v4947
      %v4954 = vpop.permute.xlu0 %4953
      %4957 = vset.pattern.permute.xlu0 0
      %4958 = vperm.xlu0 %4957, %v4948
      %v4959 = vpop.permute.xlu0 %4958
      %4962 = vset.pattern.permute.xlu0 0
      %4963 = vperm.xlu0 %4962, %v4949
      %v4964 = vpop.permute.xlu0 %4963
      %4967 = vset.pattern.permute.xlu0 0
      %4968 = vperm.xlu0 %4967, %v4950
      %v4969 = vpop.permute.xlu0 %4968
      %v4971 = vadd.f32 %v4942, %v4954
      %v4972 = vadd.f32 %v4943, %v4959
      %v4973 = vadd.f32 %v4944, %v4964
      %v4974 = vadd.f32 %v4945, %v4969
      %4975 = vmatprep.subr.mxu0 0.0
      %4976 = vmatpush1.msra.mxu0 %v470
      %4977 = vmatprep.subr.mxu0 0.0
      %4978 = vmatpush1.msra.mxu0 %v471
      %4979 = vmatprep.subr.mxu0 0.0
      %4980 = vmatpush1.msra.mxu0 %v472
      %4981 = vmatprep.subr.mxu0 0.0
      %4982 = vmatpush1.msra.mxu0 %v473
      %4983 = vmatprep.subr.mxu0 0.0
      %4984 = vmatpush1.msra.mxu0 %v474
      %4985 = vmatprep.subr.mxu0 0.0
      %4986 = vmatpush1.msra.mxu0 %v475
      %4987 = vmatprep.subr.mxu0 0.0
      %4988 = vmatpush1.msra.mxu0 %v476
      %4989 = vmatprep.subr.mxu0 0.0
      %4990 = vmatpush1.msra.mxu0 %v477
      %4991 = vmatprep.subr.mxu0 0.0
      %4992 = vmatpush1.msra.mxu0 %v478
      %4993 = vmatprep.subr.mxu0 0.0
      %4994 = vmatpush1.msra.mxu0 %v479
      %4995 = vmatprep.subr.mxu0 0.0
      %4996 = vmatpush1.msra.mxu0 %v480
      %4997 = vmatprep.subr.mxu0 0.0
      %4998 = vmatpush1.msra.mxu0 %v481
      %4999 = vmatprep.subr.mxu0 0.0
      %5000 = vmatpush1.msra.mxu0 %v482
      %5001 = vmatprep.subr.mxu0 0.0
      %5002 = vmatpush1.msra.mxu0 %v483
      %5003 = vmatprep.subr.mxu0 0.0
      %5004 = vmatpush1.msra.mxu0 %v484
      %5005 = vmatprep.subr.mxu0 0.0
      %5006 = vmatpush1.msra.mxu0 %v485
      %5007 = vmatprep.subr.mxu0 0.0
      %5008 = vmatpush1.msra.mxu0 0.0
      %5009 = vmatprep.subr.mxu0 0.0
      %5010 = vmatpush1.msra.mxu0 0.0
      %5011 = vmatprep.subr.mxu0 0.0
      %5012 = vmatpush1.msra.mxu0 0.0
      %5013 = vmatprep.subr.mxu0 0.0
      %5014 = vmatpush1.msra.mxu0 0.0
      %5015 = vmatprep.subr.mxu0 0.0
      %5016 = vmatpush1.msra.mxu0 0.0
      %5017 = vmatprep.subr.mxu0 0.0
      %5018 = vmatpush1.msra.mxu0 0.0
      %5019 = vmatprep.subr.mxu0 0.0
      %5020 = vmatpush1.msra.mxu0 0.0
      %5021 = vmatprep.subr.mxu0 0.0
      %5022 = vmatpush1.msra.mxu0 0.0
      %5023 = vmatprep.subr.mxu0 0.0
      %5024 = vmatpush1.msra.mxu0 0.0
      %5025 = vmatprep.subr.mxu0 0.0
      %5026 = vmatpush1.msra.mxu0 0.0
      %5027 = vmatprep.subr.mxu0 0.0
      %5028 = vmatpush1.msra.mxu0 0.0
      %5029 = vmatprep.subr.mxu0 0.0
      %5030 = vmatpush1.msra.mxu0 0.0
      %5031 = vmatprep.subr.mxu0 0.0
      %5032 = vmatpush1.msra.mxu0 0.0
      %5033 = vmatprep.subr.mxu0 0.0
      %5034 = vmatpush1.msra.mxu0 0.0
      %5035 = vmatprep.subr.mxu0 0.0
      %5036 = vmatpush1.msra.mxu0 0.0
      %5037 = vmatprep.subr.mxu0 0.0
      %5038 = vmatpush1.msra.mxu0 0.0
      %5039 = vmatprep.mubr.f32.mxu0 0.0
      %5040 = vmatmul.mubr.f32.gmra.mrb[0].mxu0 %v4971
      %v5041 = vpop.f32.mrb[0].mxu0
      %v5042 = vadd.f32 0.0, %v5041
      %v5043 = vpop.f32.mrb[0].mxu0
      %5044 = vmatprep.mubr.f32.mxu0 0.0
      %5045 = vmatmul.mubr.f32.gmra.mrb[0].mxu0 %v4972
      %v5046 = vpop.f32.mrb[0].mxu0
      %v5047 = vadd.f32 0.0, %v5046
      %v5048 = vpop.f32.mrb[0].mxu0
      %5049 = vmatprep.mubr.f32.mxu0 0.0
      %5050 = vmatmul.mubr.f32.gmra.mrb[0].mxu0 %v4973
      %v5051 = vpop.f32.mrb[0].mxu0
      %v5052 = vadd.f32 0.0, %v5051
      %v5053 = vpop.f32.mrb[0].mxu0
      %5054 = vmatprep.mubr.f32.mxu0 0.0
      %5055 = vmatmul.mubr.f32.gmra.mrb[0].mxu0 %v4974
      %v5056 = vpop.f32.mrb[0].mxu0
      %v5057 = vadd.f32 0.0, %v5056
      %v5058 = vpop.f32.mrb[0].mxu0
      %5059 = vdwg.mxu0
      %v5061 = vsel %vm960, %v5042, 0
      %v5064 = vsel %vm960, %v5047, 0
      %v5067 = vsel %vm960, %v5052, 0
      %v5070 = vsel %vm960, %v5057, 0
      %5072 = vmatprep.subr.mxu0 0.0
      %5073 = vmatpush1.msra.mxu0 %v975
      %5074 = vmatprep.subr.mxu0 0.0
      %5075 = vmatpush1.msra.mxu0 0.0
      %5076 = vmatprep.subr.mxu0 0.0
      %5077 = vmatpush1.msra.mxu0 0.0
      %5078 = vmatprep.subr.mxu0 0.0
      %5079 = vmatpush1.msra.mxu0 0.0
      %5080 = vmatprep.subr.mxu0 0.0
      %5081 = vmatpush1.msra.mxu0 0.0
      %5082 = vmatprep.subr.mxu0 0.0
      %5083 = vmatpush1.msra.mxu0 0.0
      %5084 = vmatprep.subr.mxu0 0.0
      %5085 = vmatpush1.msra.mxu0 0.0
      %5086 = vmatprep.subr.mxu0 0.0
      %5087 = vmatpush1.msra.mxu0 0.0
      %5088 = vmatprep.subr.mxu0 0.0
      %5089 = vmatpush1.msra.mxu0 0.0
      %5090 = vmatprep.subr.mxu0 0.0
      %5091 = vmatpush1.msra.mxu0 0.0
      %5092 = vmatprep.subr.mxu0 0.0
      %5093 = vmatpush1.msra.mxu0 0.0
      %5094 = vmatprep.subr.mxu0 0.0
      %5095 = vmatpush1.msra.mxu0 0.0
      %5096 = vmatprep.subr.mxu0 0.0
      %5097 = vmatpush1.msra.mxu0 0.0
      %5098 = vmatprep.subr.mxu0 0.0
      %5099 = vmatpush1.msra.mxu0 0.0
      %5100 = vmatprep.subr.mxu0 0.0
      %5101 = vmatpush1.msra.mxu0 0.0
      %5102 = vmatprep.subr.mxu0 0.0
      %5103 = vmatpush1.msra.mxu0 0.0
      %5104 = vmatprep.subr.mxu0 0.0
      %5105 = vmatpush1.msra.mxu0 0.0
      %5106 = vmatprep.subr.mxu0 0.0
      %5107 = vmatpush1.msra.mxu0 0.0
      %5108 = vmatprep.subr.mxu0 0.0
      %5109 = vmatpush1.msra.mxu0 0.0
      %5110 = vmatprep.subr.mxu0 0.0
      %5111 = vmatpush1.msra.mxu0 0.0
      %5112 = vmatprep.subr.mxu0 0.0
      %5113 = vmatpush1.msra.mxu0 0.0
      %5114 = vmatprep.subr.mxu0 0.0
      %5115 = vmatpush1.msra.mxu0 0.0
      %5116 = vmatprep.subr.mxu0 0.0
      %5117 = vmatpush1.msra.mxu0 0.0
      %5118 = vmatprep.subr.mxu0 0.0
      %5119 = vmatpush1.msra.mxu0 0.0
      %5120 = vmatprep.subr.mxu0 0.0
      %5121 = vmatpush1.msra.mxu0 0.0
      %5122 = vmatprep.subr.mxu0 0.0
      %5123 = vmatpush1.msra.mxu0 0.0
      %5124 = vmatprep.subr.mxu0 0.0
      %5125 = vmatpush1.msra.mxu0 0.0
      %5126 = vmatprep.subr.mxu0 0.0
      %5127 = vmatpush1.msra.mxu0 0.0
      %5128 = vmatprep.subr.mxu0 0.0
      %5129 = vmatpush1.msra.mxu0 0.0
      %5130 = vmatprep.subr.mxu0 0.0
      %5131 = vmatpush1.msra.mxu0 0.0
      %5132 = vmatprep.subr.mxu0 0.0
      %5133 = vmatpush1.msra.mxu0 0.0
      %5134 = vmatprep.subr.mxu0 0.0
      %5135 = vmatpush1.msra.mxu0 0.0
      %5136 = vmatprep.mubr.f32.mxu0 0.0
      %5137 = vmatmul.mubr.f32.gmra.mrb[0].mxu0 %v5061
      %v5138 = vpop.f32.mrb[0].mxu0
      %v5139 = vadd.f32 0.0, %v5138
      %v5140 = vpop.f32.mrb[0].mxu0
      %5141 = vmatprep.mubr.f32.mxu0 0.0
      %5142 = vmatmul.mubr.f32.gmra.mrb[0].mxu0 %v5064
      %v5143 = vpop.f32.mrb[0].mxu0
      %v5144 = vadd.f32 0.0, %v5143
      %v5145 = vpop.f32.mrb[0].mxu0
      %5146 = vmatprep.mubr.f32.mxu0 0.0
      %5147 = vmatmul.mubr.f32.gmra.mrb[0].mxu0 %v5067
      %v5148 = vpop.f32.mrb[0].mxu0
      %v5149 = vadd.f32 0.0, %v5148
      %v5150 = vpop.f32.mrb[0].mxu0
      %5151 = vmatprep.mubr.f32.mxu0 0.0
      %5152 = vmatmul.mubr.f32.gmra.mrb[0].mxu0 %v5070
      %v5153 = vpop.f32.mrb[0].mxu0
      %v5154 = vadd.f32 0.0, %v5153
      %v5155 = vpop.f32.mrb[0].mxu0
      %5156 = vdwg.mxu0
      %v5157 = vsub.f32 %v4971, %v5139
      %v5158 = vsub.f32 %v4972, %v5144
      %v5159 = vsub.f32 %v4973, %v5149
      %v5160 = vsub.f32 %v4974, %v5154
      %v5161 = vmul.f32 %v5157, %v5157
      %v5162 = vmul.f32 %v5158, %v5158
      %v5163 = vmul.f32 %v5159, %v5159
      %v5164 = vmul.f32 %v5160, %v5160
      %5165 = vmatprep.subr.mxu0 0.0
      %5166 = vmatpush1.msra.mxu0 %v470
      %5167 = vmatprep.subr.mxu0 0.0
      %5168 = vmatpush1.msra.mxu0 %v471
      %5169 = vmatprep.subr.mxu0 0.0
      %5170 = vmatpush1.msra.mxu0 %v472
      %5171 = vmatprep.subr.mxu0 0.0
      %5172 = vmatpush1.msra.mxu0 %v473
      %5173 = vmatprep.subr.mxu0 0.0
      %5174 = vmatpush1.msra.mxu0 %v474
      %5175 = vmatprep.subr.mxu0 0.0
      %5176 = vmatpush1.msra.mxu0 %v475
      %5177 = vmatprep.subr.mxu0 0.0
      %5178 = vmatpush1.msra.mxu0 %v476
      %5179 = vmatprep.subr.mxu0 0.0
      %5180 = vmatpush1.msra.mxu0 %v477
      %5181 = vmatprep.subr.mxu0 0.0
      %5182 = vmatpush1.msra.mxu0 %v478
      %5183 = vmatprep.subr.mxu0 0.0
      %5184 = vmatpush1.msra.mxu0 %v479
      %5185 = vmatprep.subr.mxu0 0.0
      %5186 = vmatpush1.msra.mxu0 %v480
      %5187 = vmatprep.subr.mxu0 0.0
      %5188 = vmatpush1.msra.mxu0 %v481
      %5189 = vmatprep.subr.mxu0 0.0
      %5190 = vmatpush1.msra.mxu0 %v482
      %5191 = vmatprep.subr.mxu0 0.0
      %5192 = vmatpush1.msra.mxu0 %v483
      %5193 = vmatprep.subr.mxu0 0.0
      %5194 = vmatpush1.msra.mxu0 %v484
      %5195 = vmatprep.subr.mxu0 0.0
      %5196 = vmatpush1.msra.mxu0 %v485
      %5197 = vmatprep.subr.mxu0 0.0
      %5198 = vmatpush1.msra.mxu0 0.0
      %5199 = vmatprep.subr.mxu0 0.0
      %5200 = vmatpush1.msra.mxu0 0.0
      %5201 = vmatprep.subr.mxu0 0.0
      %5202 = vmatpush1.msra.mxu0 0.0
      %5203 = vmatprep.subr.mxu0 0.0
      %5204 = vmatpush1.msra.mxu0 0.0
      %5205 = vmatprep.subr.mxu0 0.0
      %5206 = vmatpush1.msra.mxu0 0.0
      %5207 = vmatprep.subr.mxu0 0.0
      %5208 = vmatpush1.msra.mxu0 0.0
      %5209 = vmatprep.subr.mxu0 0.0
      %5210 = vmatpush1.msra.mxu0 0.0
      %5211 = vmatprep.subr.mxu0 0.0
      %5212 = vmatpush1.msra.mxu0 0.0
      %5213 = vmatprep.subr.mxu0 0.0
      %5214 = vmatpush1.msra.mxu0 0.0
      %5215 = vmatprep.subr.mxu0 0.0
      %5216 = vmatpush1.msra.mxu0 0.0
      %5217 = vmatprep.subr.mxu0 0.0
      %5218 = vmatpush1.msra.mxu0 0.0
      %5219 = vmatprep.subr.mxu0 0.0
      %5220 = vmatpush1.msra.mxu0 0.0
      %5221 = vmatprep.subr.mxu0 0.0
      %5222 = vmatpush1.msra.mxu0 0.0
      %5223 = vmatprep.subr.mxu0 0.0
      %5224 = vmatpush1.msra.mxu0 0.0
      %5225 = vmatprep.subr.mxu0 0.0
      %5226 = vmatpush1.msra.mxu0 0.0
      %5227 = vmatprep.subr.mxu0 0.0
      %5228 = vmatpush1.msra.mxu0 0.0
      %5229 = vmatprep.mubr.f32.mxu0 0.0
      %5230 = vmatmul.mubr.f32.gmra.mrb[0].mxu0 %v5161
      %v5231 = vpop.f32.mrb[0].mxu0
      %v5232 = vadd.f32 0.0, %v5231
      %v5233 = vpop.f32.mrb[0].mxu0
      %5234 = vmatprep.mubr.f32.mxu0 0.0
      %5235 = vmatmul.mubr.f32.gmra.mrb[0].mxu0 %v5162
      %v5236 = vpop.f32.mrb[0].mxu0
      %v5237 = vadd.f32 0.0, %v5236
      %v5238 = vpop.f32.mrb[0].mxu0
      %5239 = vmatprep.mubr.f32.mxu0 0.0
      %5240 = vmatmul.mubr.f32.gmra.mrb[0].mxu0 %v5163
      %v5241 = vpop.f32.mrb[0].mxu0
      %v5242 = vadd.f32 0.0, %v5241
      %v5243 = vpop.f32.mrb[0].mxu0
      %5244 = vmatprep.mubr.f32.mxu0 0.0
      %5245 = vmatmul.mubr.f32.gmra.mrb[0].mxu0 %v5164
      %v5246 = vpop.f32.mrb[0].mxu0
      %v5247 = vadd.f32 0.0, %v5246
      %v5248 = vpop.f32.mrb[0].mxu0
      %5249 = vdwg.mxu0
      %v5251 = vsel %vm960, %v5232, 0
      %v5254 = vsel %vm960, %v5237, 0
      %v5257 = vsel %vm960, %v5242, 0
      %v5260 = vsel %vm960, %v5247, 0
      %5262 = vmatprep.subr.mxu0 0.0
      %5263 = vmatpush1.msra.mxu0 %v975
      %5264 = vmatprep.subr.mxu0 0.0
      %5265 = vmatpush1.msra.mxu0 0.0
      %5266 = vmatprep.subr.mxu0 0.0
      %5267 = vmatpush1.msra.mxu0 0.0
      %5268 = vmatprep.subr.mxu0 0.0
      %5269 = vmatpush1.msra.mxu0 0.0
      %5270 = vmatprep.subr.mxu0 0.0
      %5271 = vmatpush1.msra.mxu0 0.0
      %5272 = vmatprep.subr.mxu0 0.0
      %5273 = vmatpush1.msra.mxu0 0.0
      %5274 = vmatprep.subr.mxu0 0.0
      %5275 = vmatpush1.msra.mxu0 0.0
      %5276 = vmatprep.subr.mxu0 0.0
      %5277 = vmatpush1.msra.mxu0 0.0
      %5278 = vmatprep.subr.mxu0 0.0
      %5279 = vmatpush1.msra.mxu0 0.0
      %5280 = vmatprep.subr.mxu0 0.0
      %5281 = vmatpush1.msra.mxu0 0.0
      %5282 = vmatprep.subr.mxu0 0.0
      %5283 = vmatpush1.msra.mxu0 0.0
      %5284 = vmatprep.subr.mxu0 0.0
      %5285 = vmatpush1.msra.mxu0 0.0
      %5286 = vmatprep.subr.mxu0 0.0
      %5287 = vmatpush1.msra.mxu0 0.0
      %5288 = vmatprep.subr.mxu0 0.0
      %5289 = vmatpush1.msra.mxu0 0.0
      %5290 = vmatprep.subr.mxu0 0.0
      %5291 = vmatpush1.msra.mxu0 0.0
      %5292 = vmatprep.subr.mxu0 0.0
      %5293 = vmatpush1.msra.mxu0 0.0
      %5294 = vmatprep.subr.mxu0 0.0
      %5295 = vmatpush1.msra.mxu0 0.0
      %5296 = vmatprep.subr.mxu0 0.0
      %5297 = vmatpush1.msra.mxu0 0.0
      %5298 = vmatprep.subr.mxu0 0.0
      %5299 = vmatpush1.msra.mxu0 0.0
      %5300 = vmatprep.subr.mxu0 0.0
      %5301 = vmatpush1.msra.mxu0 0.0
      %5302 = vmatprep.subr.mxu0 0.0
      %5303 = vmatpush1.msra.mxu0 0.0
      %5304 = vmatprep.subr.mxu0 0.0
      %5305 = vmatpush1.msra.mxu0 0.0
      %5306 = vmatprep.subr.mxu0 0.0
      %5307 = vmatpush1.msra.mxu0 0.0
      %5308 = vmatprep.subr.mxu0 0.0
      %5309 = vmatpush1.msra.mxu0 0.0
      %5310 = vmatprep.subr.mxu0 0.0
      %5311 = vmatpush1.msra.mxu0 0.0
      %5312 = vmatprep.subr.mxu0 0.0
      %5313 = vmatpush1.msra.mxu0 0.0
      %5314 = vmatprep.subr.mxu0 0.0
      %5315 = vmatpush1.msra.mxu0 0.0
      %5316 = vmatprep.subr.mxu0 0.0
      %5317 = vmatpush1.msra.mxu0 0.0
      %5318 = vmatprep.subr.mxu0 0.0
      %5319 = vmatpush1.msra.mxu0 0.0
      %5320 = vmatprep.subr.mxu0 0.0
      %5321 = vmatpush1.msra.mxu0 0.0
      %5322 = vmatprep.subr.mxu0 0.0
      %5323 = vmatpush1.msra.mxu0 0.0
      %5324 = vmatprep.subr.mxu0 0.0
      %5325 = vmatpush1.msra.mxu0 0.0
      %5326 = vmatprep.mubr.f32.mxu0 0.0
      %5327 = vmatmul.mubr.f32.gmra.mrb[0].mxu0 %v5251
      %v5328 = vpop.f32.mrb[0].mxu0
      %v5329 = vadd.f32 1e-05, %v5328
      %v5330 = vpop.f32.mrb[0].mxu0
      %5331 = vmatprep.mubr.f32.mxu0 0.0
      %5332 = vmatmul.mubr.f32.gmra.mrb[0].mxu0 %v5254
      %v5333 = vpop.f32.mrb[0].mxu0
      %v5334 = vadd.f32 1e-05, %v5333
      %v5335 = vpop.f32.mrb[0].mxu0
      %5336 = vmatprep.mubr.f32.mxu0 0.0
      %5337 = vmatmul.mubr.f32.gmra.mrb[0].mxu0 %v5257
      %v5338 = vpop.f32.mrb[0].mxu0
      %v5339 = vadd.f32 1e-05, %v5338
      %v5340 = vpop.f32.mrb[0].mxu0
      %5341 = vmatprep.mubr.f32.mxu0 0.0
      %5342 = vmatmul.mubr.f32.gmra.mrb[0].mxu0 %v5260
      %v5343 = vpop.f32.mrb[0].mxu0
      %v5344 = vadd.f32 1e-05, %v5343
      %v5345 = vpop.f32.mrb[0].mxu0
      %5346 = vdwg.mxu0
      %v5347 = vrsqrt.pop %v5329
      %v5348 = vrsqrt.pop %v5334
      %v5349 = vrsqrt.pop %v5339
      %v5350 = vrsqrt.pop %v5344
      %v5351 = vmul.f32 %v5157, %v5347
      %v5352 = vmul.f32 %v5158, %v5348
      %v5353 = vmul.f32 %v5159, %v5349
      %v5354 = vmul.f32 %v5160, %v5350
      %s5355 = scalar_lea.vmem %s451, 160
      %v5356 = vld [vmem:[%s5355] sm:$0xff]
      %v5357 = vld [vmem:[%s5355 + $0x8] sm:$0xff]
      %v5358 = vld [vmem:[%s5355 + $0x10] sm:$0xff]
      %v5359 = vld [vmem:[%s5355 + $0x18] sm:$0xff]
      %5361 = vset.pattern.permute.xlu0 0
      %5362 = vperm.xlu0 %5361, %v5356
      %v5363 = vpop.permute.xlu0 %5362
      %5366 = vset.pattern.permute.xlu0 0
      %5367 = vperm.xlu0 %5366, %v5357
      %v5368 = vpop.permute.xlu0 %5367
      %5371 = vset.pattern.permute.xlu0 0
      %5372 = vperm.xlu0 %5371, %v5358
      %v5373 = vpop.permute.xlu0 %5372
      %5376 = vset.pattern.permute.xlu0 0
      %5377 = vperm.xlu0 %5376, %v5359
      %v5378 = vpop.permute.xlu0 %5377
      %v5380 = vmul.f32 %v5351, %v5363
      %v5381 = vmul.f32 %v5352, %v5368
      %v5382 = vmul.f32 %v5353, %v5373
      %v5383 = vmul.f32 %v5354, %v5378
      %s5384 = scalar_lea.vmem %s456, 160
      %v5385 = vld [vmem:[%s5384] sm:$0xff]
      %v5386 = vld [vmem:[%s5384 + $0x8] sm:$0xff]
      %v5387 = vld [vmem:[%s5384 + $0x10] sm:$0xff]
      %v5388 = vld [vmem:[%s5384 + $0x18] sm:$0xff]
      %5390 = vset.pattern.permute.xlu0 0
      %5391 = vperm.xlu0 %5390, %v5385
      %v5392 = vpop.permute.xlu0 %5391
      %5395 = vset.pattern.permute.xlu0 0
      %5396 = vperm.xlu0 %5395, %v5386
      %v5397 = vpop.permute.xlu0 %5396
      %5400 = vset.pattern.permute.xlu0 0
      %5401 = vperm.xlu0 %5400, %v5387
      %v5402 = vpop.permute.xlu0 %5401
      %5405 = vset.pattern.permute.xlu0 0
      %5406 = vperm.xlu0 %5405, %v5388
      %v5407 = vpop.permute.xlu0 %5406
      %v5409 = vadd.f32 %v5380, %v5392
      %v5410 = vadd.f32 %v5381, %v5397
      %v5411 = vadd.f32 %v5382, %v5402
      %v5412 = vadd.f32 %v5383, %v5407
      %v5413 = vmax.f32 %v5409, 0.0
      %v5414 = vmax.f32 %v5410, 0.0
      %v5415 = vmax.f32 %v5411, 0.0
      %v5416 = vmax.f32 %v5412, 0.0
      %s5417 = scalar_lea.vmem %s461, 160
      %v5418 = vld [vmem:[%s5417] sm:$0xff]
      %v5419 = vld [vmem:[%s5417 + $0x8] sm:$0xff]
      %v5420 = vld [vmem:[%s5417 + $0x10] sm:$0xff]
      %v5421 = vld [vmem:[%s5417 + $0x18] sm:$0xff]
      %v5422 = vadd.f32 %v5413, %v5418
      %v5423 = vadd.f32 %v5414, %v5419
      %v5424 = vadd.f32 %v5415, %v5420
      %v5425 = vadd.f32 %v5416, %v5421
      %v5426 = vadd.f32 %v5422, %v4608
      %v5427 = vadd.f32 %v5423, %v4609
      %v5428 = vadd.f32 %v5424, %v4610
      %v5429 = vadd.f32 %v5425, %v4611
      %5430 = vst [vmem:[%s466] sm:$0xff] %v5426
      %5431 = vst [vmem:[%s466 + $0x8] sm:$0xff] %v5427
      %5432 = vst [vmem:[%s466 + $0x10] sm:$0xff] %v5428
      %5433 = vst [vmem:[%s466 + $0x18] sm:$0xff] %v5429
      %p5434 = scmp.lt.s32.totalorder %s22, 1
      %s5435 = scalar_select %p5434, %s22, 1
      %s5436 = smul.addr %s5435, 4
      %s5437 = smul.addr %s5436, 8
      %s5438 = scalar_lea.vmem %s11, %s5437
      // Predicated region
      $region65: #{attention_forward.2} parent=63 // pred_check
        %p5439 = pneg %p296
      $region66: #{attention_forward.2} parent=63 // pred_check_branch
        %5441 = sbr.rel (%p5439) target = $region68
      $region67: #{attention_forward.2} parent=63 // pred_region
        _
      $region68: #{attention_forward.2} parent=63 // pred_fallthru
        _
    $region64: #{attention_forward.2} parent=5 // pred_fallthru
      _
    %p5442 = scmp.le.s32.totalorder 2, %s17
    // Predicated region
    $region69: #{attention_forward.2} parent=5 // pred_check
      %p5443 = pneg %p5442
    $region70: #{attention_forward.2} parent=5 // pred_check_branch
      %5445 = sbr.rel (%p5443) target = $region72
    $region71: #{attention_forward.2} parent=5 // pred_region
      %s5446 = ssub.s32 %s17, 2
      // Predicated region
      $region73: #{attention_forward.2} parent=71 // pred_check
        %p5447 = pneg %p302
      $region74: #{attention_forward.2} parent=71 // pred_check_branch
        %5449 = sbr.rel (%p5447) target = $region76
      $region75: #{attention_forward.2} parent=71 // pred_region
        %p5450 = scmp.lt.s32.totalorder %s23, 1
        %s5451 = scalar_select %p5450, %s23, 1
        %s5452 = smul.addr %s5451, 4
        %s5453 = smul.addr %s5452, 8
        %s5454 = scalar_lea.vmem %s11, %s5453
      $region76: #{attention_forward.2} parent=71 // pred_fallthru
        _
    $region72: #{attention_forward.2} parent=5 // pred_fallthru
      _
  $region6: #{attention_forward.2} parent=0 // loop_footer
    %s21 = sadd.s32 1, %s17
  $region7: #{attention_forward.2} parent=0 // loop_footer_branch
    %16 = sbr.rel target = $region3
  $region8: #{attention_forward.2} parent=0 // loop_exit
    _

</llo_original>
